<compile_context>
chip_gen: v7x
topology: tpu7x:2x2x1
jax: 0.10.0
libtpu: 0.0.40
codegen_flags: <defaults>
</compile_context>

<pallas_src>
import functools
import math

import jax
import jax.numpy as jnp
from jax.experimental import pallas as pl
from jax.experimental.pallas import tpu as pltpu


# Tile targets: sized so double-buffered tiles stay well inside the v7x VMEM
# budget (64 MiB physical / 32 MiB scoped default); they shrink automatically
# to divisors of the problem dims for small problems.
LIN_TM = 256
LIN_TN = 256
LIN_TK = 512
ATTN_TQ = 128
ATTN_TK = 128
FFN_TF = 512

LN_EPS = 1e-5


def _tile(dim, target):
    """Largest divisor of `dim` that is <= target (prefer target itself)."""
    if dim <= target:
        return dim
    for t in range(target, 0, -1):
        if dim % t == 0:
            return t
    return dim


def _layernorm_f32(y, g, b, eps):
    mean = jnp.mean(y, axis=-1, keepdims=True)
    cen = y - mean
    var = jnp.mean(cen * cen, axis=-1, keepdims=True)
    return cen * jax.lax.rsqrt(var + eps) * g + b


# --------------------------- tiled linear (+relu) ---------------------------

def _linear_kernel(x_ref, w_ref, b_ref, o_ref, acc_ref, *, activation):
    @pl.when(pl.program_id(2) == 0)
    def _():
        acc_ref[...] = jnp.zeros(acc_ref.shape, acc_ref.dtype)

    acc_ref[...] += jnp.dot(x_ref[...], w_ref[...],
                            preferred_element_type=jnp.float32)

    @pl.when(pl.program_id(2) == pl.num_programs(2) - 1)
    def _():
        y = acc_ref[...] + b_ref[...].astype(jnp.float32)
        if activation == "relu":
            y = jnp.maximum(y, 0.0)
        o_ref[...] = y.astype(o_ref.dtype)


def linear(x, w, b, activation="none"):
    """x: (M, K) @ w: (K, N) + b, optional relu. Tiled over (M, N, K)."""
    M, K = x.shape
    N = w.shape[1]
    tm, tn, tk = _tile(M, LIN_TM), _tile(N, LIN_TN), _tile(K, LIN_TK)
    cost = pl.CostEstimate(
        flops=2 * M * N * K, transcendentals=0,
        bytes_accessed=(M * K + K * N + M * N + N) * x.dtype.itemsize)
    return pl.pallas_call(
        functools.partial(_linear_kernel, activation=activation),
        out_shape=jax.ShapeDtypeStruct((M, N), x.dtype),
        grid=(M // tm, N // tn, K // tk),
        in_specs=[
            pl.BlockSpec((tm, tk), lambda i, j, k: (i, k)),
            pl.BlockSpec((tk, tn), lambda i, j, k: (k, j)),
            pl.BlockSpec((1, tn), lambda i, j, k: (0, j)),
        ],
        out_specs=pl.BlockSpec((tm, tn), lambda i, j, k: (i, j)),
        scratch_shapes=[pltpu.VMEM((tm, tn), jnp.float32)],
        compiler_params=pltpu.CompilerParams(
            dimension_semantics=("parallel", "parallel", "arbitrary")),
        cost_estimate=cost,
    )(x, w, b.reshape(1, N))


# ----------------- tiled linear + residual + LayerNorm (fused) --------------

def _linear_res_ln_kernel(x_ref, w_ref, b_ref, res_ref, g_ref, beta_ref,
                          o_ref, acc_ref, *, eps):
    @pl.when(pl.program_id(1) == 0)
    def _():
        acc_ref[...] = jnp.zeros(acc_ref.shape, acc_ref.dtype)

    acc_ref[...] += jnp.dot(x_ref[...], w_ref[...],
                            preferred_element_type=jnp.float32)

    @pl.when(pl.program_id(1) == pl.num_programs(1) - 1)
    def _():
        y = (acc_ref[...] + b_ref[...].astype(jnp.float32)
             + res_ref[...].astype(jnp.float32))
        y = _layernorm_f32(y, g_ref[...].astype(jnp.float32),
                           beta_ref[...].astype(jnp.float32), eps)
        o_ref[...] = y.astype(o_ref.dtype)


def linear_residual_layernorm(x, w, b, res, gamma, beta, eps=LN_EPS):
    """LayerNorm(res + x @ w + b). Residual add + LN are fused into the matmul
    epilogue; N is kept whole per tile so the LN row stays resident in VMEM."""
    M, K = x.shape
    N = w.shape[1]
    tm, tk = _tile(M, LIN_TM), _tile(K, LIN_TK)
    cost = pl.CostEstimate(
        flops=2 * M * N * K + 8 * M * N, transcendentals=M,
        bytes_accessed=(M * K + K * N + 2 * M * N + 3 * N) * x.dtype.itemsize)
    return pl.pallas_call(
        functools.partial(_linear_res_ln_kernel, eps=eps),
        out_shape=jax.ShapeDtypeStruct((M, N), x.dtype),
        grid=(M // tm, K // tk),
        in_specs=[
            pl.BlockSpec((tm, tk), lambda i, k: (i, k)),
            pl.BlockSpec((tk, N), lambda i, k: (k, 0)),
            pl.BlockSpec((1, N), lambda i, k: (0, 0)),
            pl.BlockSpec((tm, N), lambda i, k: (i, 0)),
            pl.BlockSpec((1, N), lambda i, k: (0, 0)),
            pl.BlockSpec((1, N), lambda i, k: (0, 0)),
        ],
        out_specs=pl.BlockSpec((tm, N), lambda i, k: (i, 0)),
        scratch_shapes=[pltpu.VMEM((tm, N), jnp.float32)],
        compiler_params=pltpu.CompilerParams(
            dimension_semantics=("parallel", "arbitrary")),
        cost_estimate=cost,
    )(x, w, b.reshape(1, N), res, gamma.reshape(1, N), beta.reshape(1, N))


# ---------------- fused FFN: w1 -> relu -> w2 -> +res -> LayerNorm ----------

def _ffn_kernel(x_ref, w1_ref, b1_ref, w2_ref, b2_ref, g_ref, beta_ref,
                o_ref, acc_ref, *, eps):
    @pl.when(pl.program_id(1) == 0)
    def _():
        acc_ref[...] = jnp.zeros(acc_ref.shape, acc_ref.dtype)

    h = jnp.dot(x_ref[...], w1_ref[...], preferred_element_type=jnp.float32)
    h = jnp.maximum(h + b1_ref[...].astype(jnp.float32), 0.0)
    acc_ref[...] += jnp.dot(h.astype(x_ref.dtype), w2_ref[...],
                            preferred_element_type=jnp.float32)

    @pl.when(pl.program_id(1) == pl.num_programs(1) - 1)
    def _():
        y = (acc_ref[...] + b2_ref[...].astype(jnp.float32)
             + x_ref[...].astype(jnp.float32))          # residual = FFN input
        y = _layernorm_f32(y, g_ref[...].astype(jnp.float32),
                           beta_ref[...].astype(jnp.float32), eps)
        o_ref[...] = y.astype(o_ref.dtype)


def ffn_residual_layernorm(x, w1, b1, w2, b2, gamma, beta, eps=LN_EPS):
    """LayerNorm(x + relu(x@w1+b1)@w2 + b2). The (tm, tf) hidden tile never
    leaves VMEM; d_ff is streamed as the reduction grid axis."""
    M, D = x.shape
    F = w1.shape[1]
    tm, tf = _tile(M, LIN_TM), _tile(F, FFN_TF)
    cost = pl.CostEstimate(
        flops=4 * M * D * F + 8 * M * D, transcendentals=M,
        bytes_accessed=(2 * M * D + 2 * D * F + F + 3 * D) * x.dtype.itemsize)
    return pl.pallas_call(
        functools.partial(_ffn_kernel, eps=eps),
        out_shape=jax.ShapeDtypeStruct((M, D), x.dtype),
        grid=(M // tm, F // tf),
        in_specs=[
            pl.BlockSpec((tm, D), lambda i, f: (i, 0)),
            pl.BlockSpec((D, tf), lambda i, f: (0, f)),
            pl.BlockSpec((1, tf), lambda i, f: (0, f)),
            pl.BlockSpec((tf, D), lambda i, f: (f, 0)),
            pl.BlockSpec((1, D), lambda i, f: (0, 0)),
            pl.BlockSpec((1, D), lambda i, f: (0, 0)),
            pl.BlockSpec((1, D), lambda i, f: (0, 0)),
        ],
        out_specs=pl.BlockSpec((tm, D), lambda i, f: (i, 0)),
        scratch_shapes=[pltpu.VMEM((tm, D), jnp.float32)],
        compiler_params=pltpu.CompilerParams(
            dimension_semantics=("parallel", "arbitrary")),
        cost_estimate=cost,
    )(x, w1, b1.reshape(1, F), w2, b2.reshape(1, D),
      gamma.reshape(1, D), beta.reshape(1, D))


# --------------------------- flash-style attention --------------------------

def _flash_attn_kernel(q_ref, k_ref, v_ref, o_ref, m_sc, l_sc, acc_sc,
                       *, causal, scale, tq, tk):
    qi = pl.program_id(2)
    ki = pl.program_id(3)

    @pl.when(ki == 0)
    def _():
        m_sc[...] = jnp.full(m_sc.shape, -jnp.inf, m_sc.dtype)
        l_sc[...] = jnp.zeros(l_sc.shape, l_sc.dtype)
        acc_sc[...] = jnp.zeros(acc_sc.shape, acc_sc.dtype)

    def _compute():
        q = q_ref[...].astype(jnp.float32)                          # (tq, Dh)
        k = k_ref[...].astype(jnp.float32)                          # (tk, Dh)
        s = jax.lax.dot_general(q, k, (((1,), (1,)), ((), ())),
                                preferred_element_type=jnp.float32) * scale
        if causal:
            row = qi * tq + jax.lax.broadcasted_iota(jnp.int32, s.shape, 0)
            col = ki * tk + jax.lax.broadcasted_iota(jnp.int32, s.shape, 1)
            s = jnp.where(col <= row, s, jnp.float32(-1e30))
        m_prev = m_sc[...]
        m_new = jnp.maximum(m_prev, jnp.max(s, axis=-1, keepdims=True))
        alpha = jnp.exp(m_prev - m_new)
        p = jnp.exp(s - m_new)
        l_sc[...] = alpha * l_sc[...] + jnp.sum(p, axis=-1, keepdims=True)
        acc_sc[...] = alpha * acc_sc[...] + jnp.dot(
            p.astype(v_ref.dtype), v_ref[...],
            preferred_element_type=jnp.float32)
        m_sc[...] = m_new

    if causal:
        # skip key blocks that lie entirely above the causal diagonal
        pl.when(ki * tk <= qi * tq + (tq - 1))(_compute)
    else:
        _compute()

    @pl.when(ki == pl.num_programs(3) - 1)
    def _():
        inv_l = pl.reciprocal(l_sc[...], approx=True)
        o_ref[...] = (acc_sc[...] * inv_l).astype(o_ref.dtype)


def flash_attention(q_src, kv_src, *, B, H, Dh, Sq, Sk,
                    q_blk, k_blk, v_blk, causal, out_dtype):
    """Flash-style multi-head attention. Heads are sliced directly out of the
    packed projection arrays by the BlockSpec index_map (no XLA transposes):
      q_src : (B, Sq, nq*Dh)  head h of Q at last-dim block (q_blk + h)
      kv_src: (B, Sk, nk*Dh)  head h of K at (k_blk + h), of V at (v_blk + h)
    Output is (B, Sq, H*Dh) with heads packed along features (wo-ready)."""
    assert Dh % 128 == 0, "head_dim must be a multiple of 128 (lane-dense)"
    # TODO(synk): support head_dim < 128 by packing two heads per 128-lane blk.
    tq = _tile(Sq, ATTN_TQ)
    tk = _tile(Sk, ATTN_TK)
    scale = 1.0 / math.sqrt(Dh)
    D = H * Dh
    itemsize = jnp.dtype(out_dtype).itemsize
    cost = pl.CostEstimate(
        flops=4 * B * H * Sq * Sk * Dh,
        transcendentals=B * H * Sq * Sk,
        bytes_accessed=(2 * B * Sq * D + 2 * B * Sk * D) * itemsize)
    return pl.pallas_call(
        functools.partial(_flash_attn_kernel, causal=causal, scale=scale,
                          tq=tq, tk=tk),
        out_shape=jax.ShapeDtypeStruct((B, Sq, D), out_dtype),
        grid=(B, H, Sq // tq, Sk // tk),
        in_specs=[
            pl.BlockSpec((None, tq, Dh), lambda b, h, qi, ki: (b, qi, q_blk + h)),
            pl.BlockSpec((None, tk, Dh), lambda b, h, qi, ki: (b, ki, k_blk + h)),
            pl.BlockSpec((None, tk, Dh), lambda b, h, qi, ki: (b, ki, v_blk + h)),
        ],
        out_specs=pl.BlockSpec((None, tq, Dh), lambda b, h, qi, ki: (b, qi, h)),
        scratch_shapes=[
            pltpu.VMEM((tq, 1), jnp.float32),    # running max m
            pltpu.VMEM((tq, 1), jnp.float32),    # running sum l
            pltpu.VMEM((tq, Dh), jnp.float32),   # output accumulator
        ],
        compiler_params=pltpu.CompilerParams(
            dimension_semantics=("parallel", "parallel", "parallel",
                                 "arbitrary")),
        cost_estimate=cost,
    )(q_src, kv_src, kv_src)


# ------------------------------ model (glue) --------------------------------

def _self_attention_sublayer(x, p, ln_g, ln_b, n_heads):
    B, S, D = x.shape
    Dh = D // n_heads
    x2d = x.reshape(B * S, D)
    qkv = linear(x2d, p["wqkv"], p["bqkv"]).reshape(B, S, 3 * D)   # fused QKV
    attn = flash_attention(qkv, qkv, B=B, H=n_heads, Dh=Dh, Sq=S, Sk=S,
                           q_blk=0, k_blk=n_heads, v_blk=2 * n_heads,
                           causal=True, out_dtype=x.dtype)
    out = linear_residual_layernorm(attn.reshape(B * S, D), p["wo"], p["bo"],
                                    x2d, ln_g, ln_b)
    return out.reshape(B, S, D)


def _cross_attention_sublayer(x, memory, p, ln_g, ln_b, n_heads):
    B, Sq, D = x.shape
    Sk = memory.shape[1]
    Dh = D // n_heads
    x2d = x.reshape(B * Sq, D)
    q = linear(x2d, p["wq"], p["bq"]).reshape(B, Sq, D)
    kv = linear(memory.reshape(B * Sk, D), p["wkv"],
                p["bkv"]).reshape(B, Sk, 2 * D)                    # fused KV
    attn = flash_attention(q, kv, B=B, H=n_heads, Dh=Dh, Sq=Sq, Sk=Sk,
                           q_blk=0, k_blk=0, v_blk=n_heads,
                           causal=False, out_dtype=x.dtype)
    out = linear_residual_layernorm(attn.reshape(B * Sq, D), p["wo"], p["bo"],
                                    x2d, ln_g, ln_b)
    return out.reshape(B, Sq, D)


def decoder_layer(x, memory, p, n_heads):
    B, S, D = x.shape
    x = _self_attention_sublayer(x, p["self_attn"],
                                 p["ln1_g"], p["ln1_b"], n_heads)
    x = _cross_attention_sublayer(x, memory, p["cross_attn"],
                                  p["ln2_g"], p["ln2_b"], n_heads)
    x = ffn_residual_layernorm(x.reshape(B * S, D), p["w1"], p["b1"],
                               p["w2"], p["b2"], p["ln3_g"], p["ln3_b"])
    return x.reshape(B, S, D)


def transformer_decoder(x, memory, layer_params, n_heads, compute_dtype=None):
    """TransformerDecoder.forward: apply each decoder layer in sequence."""
    if compute_dtype is not None:   # e.g. jnp.bfloat16 for full MXU throughput
        x = x.astype(compute_dtype)
        memory = memory.astype(compute_dtype)
        layer_params = jax.tree_util.tree_map(
            lambda a: a.astype(compute_dtype), layer_params)
    for p in layer_params:
        x = decoder_layer(x, memory, p, n_heads)
    return x
# TODO(synk): external tgt_mask / key-padding masks and one_step_forward
#             incremental decoding state are not implemented; self-attention
#             uses the standard built-in causal mask.


# ------------------------------ parameters ----------------------------------

def _init_self_attn_params(key, d_model):
    k1, k2 = jax.random.split(key)
    std = 0.02
    return {
        "wqkv": std * jax.random.normal(k1, (d_model, 3 * d_model), jnp.float32),
        "bqkv": jnp.zeros((3 * d_model,), jnp.float32),
        "wo": std * jax.random.normal(k2, (d_model, d_model), jnp.float32),
        "bo": jnp.zeros((d_model,), jnp.float32),
    }


def _init_cross_attn_params(key, d_model):
    k1, k2, k3 = jax.random.split(key, 3)
    std = 0.02
    return {
        "wq": std * jax.random.normal(k1, (d_model, d_model), jnp.float32),
        "bq": jnp.zeros((d_model,), jnp.float32),
        "wkv": std * jax.random.normal(k2, (d_model, 2 * d_model), jnp.float32),
        "bkv": jnp.zeros((2 * d_model,), jnp.float32),
        "wo": std * jax.random.normal(k3, (d_model, d_model), jnp.float32),
        "bo": jnp.zeros((d_model,), jnp.float32),
    }


def init_layer_params(key, d_model, d_ff):
    ks = jax.random.split(key, 4)
    std = 0.02
    return {
        "self_attn": _init_self_attn_params(ks[0], d_model),
        "cross_attn": _init_cross_attn_params(ks[1], d_model),
        "w1": std * jax.random.normal(ks[2], (d_model, d_ff), jnp.float32),
        "b1": jnp.zeros((d_ff,), jnp.float32),
        "w2": std * jax.random.normal(ks[3], (d_ff, d_model), jnp.float32),
        "b2": jnp.zeros((d_model,), jnp.float32),
        "ln1_g": jnp.ones((d_model,), jnp.float32),
        "ln1_b": jnp.zeros((d_model,), jnp.float32),
        "ln2_g": jnp.ones((d_model,), jnp.float32),
        "ln2_b": jnp.zeros((d_model,), jnp.float32),
        "ln3_g": jnp.ones((d_model,), jnp.float32),
        "ln3_b": jnp.zeros((d_model,), jnp.float32),
    }


# --------------------------------- main --------------------------------------

if __name__ == "__main__":
    # small but lane-dense shapes: head_dim = 256/2 = 128
    B, S, S_MEM = 2, 8, 16
    D_MODEL, N_HEADS, D_FF, N_LAYERS = 256, 2, 512, 2

    key = jax.random.PRNGKey(0)
    kx, kmem, kp = jax.random.split(key, 3)
    x = jax.random.normal(kx, (B, S, D_MODEL), jnp.float32)
    memory = jax.random.normal(kmem, (B, S_MEM, D_MODEL), jnp.float32)

    layer_keys = jax.random.split(kp, N_LAYERS)
    params = [init_layer_params(k, D_MODEL, D_FF) for k in layer_keys]

    fwd = jax.jit(lambda x_, m_, p_: transformer_decoder(x_, m_, p_, N_HEADS))
    out = fwd(x, memory, params)
    jax.block_until_ready(out)
    assert out.shape == (B, S, D_MODEL)
    assert bool(jnp.isfinite(out).all())
    print("KERNEL_OK")
</pallas_src>

<mosaic_0001>
module attributes {stable_mosaic.version = 11 : i64} {
  func.func @_flash_attn_kernel(%arg0: i32, %arg1: i32, %arg2: i32, %arg3: i32, %arg4: memref<1x8x128xf32, #tpu.memory_space<vmem>>, %arg5: memref<1x8x128xf32, #tpu.memory_space<vmem>>, %arg6: memref<1x8x128xf32, #tpu.memory_space<vmem>>, %arg7: memref<1x8x128xf32, #tpu.memory_space<vmem>>, %arg8: memref<8x1xf32, #tpu.memory_space<vmem>>, %arg9: memref<8x1xf32, #tpu.memory_space<vmem>>, %arg10: memref<8x128xf32, #tpu.memory_space<vmem>>) attributes {dimension_semantics = [#tpu.dimension_semantics<parallel>, #tpu.dimension_semantics<parallel>, #tpu.dimension_semantics<parallel>, #tpu.dimension_semantics<arbitrary>], iteration_bounds = array<i64: 2, 2, 1, 1>, scalar_prefetch = 0 : i64, scratch_operands = 3 : i64, tpu.core_type = #tpu.core_type<tc>, window_params = [{transform_indices = @transform_0, window_bounds = array<i64: 1, 8, 128>}, {transform_indices = @transform_1, window_bounds = array<i64: 1, 8, 128>}, {transform_indices = @transform_2, window_bounds = array<i64: 1, 8, 128>}, {transform_indices = @transform_3, window_bounds = array<i64: 1, 8, 128>}]} {
    %c0_i32 = arith.constant 0 : i32
    %0 = arith.cmpi eq, %arg3, %c0_i32 : i32
    %1 = arith.extui %0 : i1 to i32
    %c0_i32_0 = arith.constant 0 : i32
    %2 = arith.cmpi ne, %1, %c0_i32_0 : i32
    scf.if %2 {
      %cst = arith.constant 0xFF800000 : f32
      %12 = vector.broadcast %cst : f32 to vector<8x1xf32>
      %c0 = arith.constant 0 : index
      %c0_5 = arith.constant 0 : index
      %13 = vector.load %arg8[%c0, %c0_5] : memref<8x1xf32, #tpu.memory_space<vmem>>, vector<8x1xf32>
      tpu.vector_store %arg8[%c0, %c0_5], %12 {strides = array<i32>} : memref<8x1xf32, #tpu.memory_space<vmem>>, vector<8x1xf32>,
      %cst_6 = arith.constant 0.000000e+00 : f32
      %14 = vector.broadcast %cst_6 : f32 to vector<8x1xf32>
      %c0_7 = arith.constant 0 : index
      %c0_8 = arith.constant 0 : index
      %15 = vector.load %arg9[%c0_7, %c0_8] : memref<8x1xf32, #tpu.memory_space<vmem>>, vector<8x1xf32>
      tpu.vector_store %arg9[%c0_7, %c0_8], %14 {strides = array<i32>} : memref<8x1xf32, #tpu.memory_space<vmem>>, vector<8x1xf32>,
      %cst_9 = arith.constant 0.000000e+00 : f32
      %16 = vector.broadcast %cst_9 : f32 to vector<8x128xf32>
      %c0_10 = arith.constant 0 : index
      %c0_11 = arith.constant 0 : index
      %17 = vector.load %arg10[%c0_10, %c0_11] : memref<8x128xf32, #tpu.memory_space<vmem>>, vector<8x128xf32>
      tpu.vector_store %arg10[%c0_10, %c0_11], %16 {strides = array<i32>} : memref<8x128xf32, #tpu.memory_space<vmem>>, vector<8x128xf32>,
    } else {
    }
    %c8_i32 = arith.constant 8 : i32
    %3 = arith.muli %arg3, %c8_i32 : i32
    %c8_i32_1 = arith.constant 8 : i32
    %4 = arith.muli %arg2, %c8_i32_1 : i32
    %c7_i32 = arith.constant 7 : i32
    %5 = arith.addi %4, %c7_i32 : i32
    %6 = arith.cmpi sle, %3, %5 : i32
    %7 = arith.extui %6 : i1 to i32
    %c0_i32_2 = arith.constant 0 : i32
    %8 = arith.cmpi ne, %7, %c0_i32_2 : i32
    scf.if %8 {
      %c0 = arith.constant 0 : index
      %c0_5 = arith.constant 0 : index
      %c0_6 = arith.constant 0 : index
      %12 = vector.load %arg4[%c0, %c0_5, %c0_6] : memref<1x8x128xf32, #tpu.memory_space<vmem>>, vector<1x8x128xf32>
      %13 = vector.shape_cast %12 : vector<1x8x128xf32> to vector<8x128xf32>
      %c0_7 = arith.constant 0 : index
      %c0_8 = arith.constant 0 : index
      %c0_9 = arith.constant 0 : index
      %14 = vector.load %arg5[%c0_7, %c0_8, %c0_9] : memref<1x8x128xf32, #tpu.memory_space<vmem>>, vector<1x8x128xf32>
      %15 = vector.shape_cast %14 : vector<1x8x128xf32> to vector<8x128xf32>
      %cst = arith.constant dense<0.000000e+00> : vector<8x8xf32>
      %16 = tpu.matmul %13, %15, %cst {dimension_numbers = #tpu.dot_dimension_numbers<[1], [1], [0], [0], [0, 0, 1, 0], [], []>} : vector<8x128xf32>, vector<8x128xf32>, vector<8x8xf32> -> vector<8x8xf32>
      %cst_10 = arith.constant 0.0883883461 : f32
      %17 = vector.broadcast %cst_10 : f32 to vector<8x8xf32>
      %18 = arith.mulf %16, %17 : vector<8x8xf32>
      %c8_i32_11 = arith.constant 8 : i32
      %19 = arith.muli %arg2, %c8_i32_11 : i32
      %20 = tpu.iota {dimensions = array<i32: 0>} : vector<8x8xi32>
      %21 = vector.broadcast %19 : i32 to vector<8x8xi32>
      %22 = arith.addi %21, %20 : vector<8x8xi32>
      %c8_i32_12 = arith.constant 8 : i32
      %23 = arith.muli %arg3, %c8_i32_12 : i32
      %24 = tpu.iota {dimensions = array<i32: 1>} : vector<8x8xi32>
      %25 = vector.broadcast %23 : i32 to vector<8x8xi32>
      %26 = arith.addi %25, %24 : vector<8x8xi32>
      %27 = arith.cmpi sle, %26, %22 : vector<8x8xi32>
      %cst_13 = arith.constant -1.000000e+30 : f32
      %28 = vector.broadcast %cst_13 : f32 to vector<8x8xf32>
      %29 = arith.select %27, %18, %28 : vector<8x8xi1>, vector<8x8xf32>
      %c0_14 = arith.constant 0 : index
      %c0_15 = arith.constant 0 : index
      %30 = vector.load %arg8[%c0_14, %c0_15] : memref<8x1xf32, #tpu.memory_space<vmem>>, vector<8x1xf32>
      %cst_16 = arith.constant dense<0xFF800000> : vector<8xf32>
      %31 = vector.multi_reduction <maximumf>, %29, %cst_16 [1] : vector<8x8xf32> to vector<8xf32>
      %32 = vector.shape_cast %31 : vector<8xf32> to vector<8x1xf32>
      %33 = arith.maximumf %30, %32 : vector<8x1xf32>
      %34 = arith.subf %30, %33 : vector<8x1xf32>
      %35 = math.exp %34 : vector<8x1xf32>
      %36 = vector.broadcast %33 : vector<8x1xf32> to vector<8x8xf32>
      %37 = arith.subf %29, %36 : vector<8x8xf32>
      %38 = math.exp %37 : vector<8x8xf32>
      %c0_17 = arith.constant 0 : index
      %c0_18 = arith.constant 0 : index
      %39 = vector.load %arg9[%c0_17, %c0_18] : memref<8x1xf32, #tpu.memory_space<vmem>>, vector<8x1xf32>
      %40 = arith.mulf %35, %39 : vector<8x1xf32>
      %cst_19 = arith.constant dense<0.000000e+00> : vector<8xf32>
      %41 = vector.multi_reduction <add>, %38, %cst_19 [1] : vector<8x8xf32> to vector<8xf32>
      %42 = vector.shape_cast %41 : vector<8xf32> to vector<8x1xf32>
      %43 = arith.addf %40, %42 : vector<8x1xf32>
      %c0_20 = arith.constant 0 : index
      %c0_21 = arith.constant 0 : index
      %44 = vector.load %arg9[%c0_20, %c0_21] : memref<8x1xf32, #tpu.memory_space<vmem>>, vector<8x1xf32>
      tpu.vector_store %arg9[%c0_20, %c0_21], %43 {strides = array<i32>} : memref<8x1xf32, #tpu.memory_space<vmem>>, vector<8x1xf32>,
      %c0_22 = arith.constant 0 : index
      %c0_23 = arith.constant 0 : index
      %45 = vector.load %arg10[%c0_22, %c0_23] : memref<8x128xf32, #tpu.memory_space<vmem>>, vector<8x128xf32>
      %46 = vector.broadcast %35 : vector<8x1xf32> to vector<8x128xf32>
      %47 = arith.mulf %46, %45 : vector<8x128xf32>
      %c0_24 = arith.constant 0 : index
      %c0_25 = arith.constant 0 : index
      %c0_26 = arith.constant 0 : index
      %48 = vector.load %arg6[%c0_24, %c0_25, %c0_26] : memref<1x8x128xf32, #tpu.memory_space<vmem>>, vector<1x8x128xf32>
      %49 = vector.shape_cast %48 : vector<1x8x128xf32> to vector<8x128xf32>
      %cst_27 = arith.constant dense<0.000000e+00> : vector<8x128xf32>
      %50 = tpu.matmul %38, %49, %cst_27 {dimension_numbers = #tpu.dot_dimension_numbers<[1], [0], [0], [1], [0, 0, 1, 1], [], []>} : vector<8x8xf32>, vector<8x128xf32>, vector<8x128xf32> -> vector<8x128xf32>
      %51 = arith.addf %47, %50 : vector<8x128xf32>
      %c0_28 = arith.constant 0 : index
      %c0_29 = arith.constant 0 : index
      %52 = vector.load %arg10[%c0_28, %c0_29] : memref<8x128xf32, #tpu.memory_space<vmem>>, vector<8x128xf32>
      tpu.vector_store %arg10[%c0_28, %c0_29], %51 {strides = array<i32>} : memref<8x128xf32, #tpu.memory_space<vmem>>, vector<8x128xf32>,
      %c0_30 = arith.constant 0 : index
      %c0_31 = arith.constant 0 : index
      %53 = vector.load %arg8[%c0_30, %c0_31] : memref<8x1xf32, #tpu.memory_space<vmem>>, vector<8x1xf32>
      tpu.vector_store %arg8[%c0_30, %c0_31], %33 {strides = array<i32>} : memref<8x1xf32, #tpu.memory_space<vmem>>, vector<8x1xf32>,
    } else {
    }
    %c0_i32_3 = arith.constant 0 : i32
    %9 = arith.cmpi eq, %arg3, %c0_i32_3 : i32
    %10 = arith.extui %9 : i1 to i32
    %c0_i32_4 = arith.constant 0 : i32
    %11 = arith.cmpi ne, %10, %c0_i32_4 : i32
    scf.if %11 {
      %c0 = arith.constant 0 : index
      %c0_5 = arith.constant 0 : index
      %12 = vector.load %arg9[%c0, %c0_5] : memref<8x1xf32, #tpu.memory_space<vmem>>, vector<8x1xf32>
      %13 = tpu.reciprocal %12 {approx = true} : vector<8x1xf32> -> vector<8x1xf32>
      %c0_6 = arith.constant 0 : index
      %c0_7 = arith.constant 0 : index
      %14 = vector.load %arg10[%c0_6, %c0_7] : memref<8x128xf32, #tpu.memory_space<vmem>>, vector<8x128xf32>
      %15 = vector.broadcast %13 : vector<8x1xf32> to vector<8x128xf32>
      %16 = arith.mulf %14, %15 : vector<8x128xf32>
      %c0_8 = arith.constant 0 : index
      %c0_9 = arith.constant 0 : index
      %c0_10 = arith.constant 0 : index
      %17 = vector.load %arg7[%c0_8, %c0_9, %c0_10] : memref<1x8x128xf32, #tpu.memory_space<vmem>>, vector<1x8x128xf32>
      %18 = vector.shape_cast %17 : vector<1x8x128xf32> to vector<8x128xf32>
      %19 = vector.shape_cast %16 : vector<8x128xf32> to vector<1x8x128xf32>
      tpu.vector_store %arg7[%c0_8, %c0_9, %c0_10], %19 {strides = array<i32>} : memref<1x8x128xf32, #tpu.memory_space<vmem>>, vector<1x8x128xf32>,
    } else {
    }
    return
  }
  func.func @transform_0(%arg0: i32, %arg1: i32, %arg2: i32, %arg3: i32) -> (i32, i32, i32) {
    %c0_i32 = arith.constant 0 : i32
    %0 = arith.addi %c0_i32, %arg1 : i32
    %c0_i32_0 = arith.constant 0 : i32
    return %arg0, %arg2, %0 : i32, i32, i32
  }
  func.func @transform_1(%arg0: i32, %arg1: i32, %arg2: i32, %arg3: i32) -> (i32, i32, i32) {
    %c2_i32 = arith.constant 2 : i32
    %0 = arith.addi %c2_i32, %arg1 : i32
    %c0_i32 = arith.constant 0 : i32
    return %arg0, %arg3, %0 : i32, i32, i32
  }
  func.func @transform_2(%arg0: i32, %arg1: i32, %arg2: i32, %arg3: i32) -> (i32, i32, i32) {
    %c4_i32 = arith.constant 4 : i32
    %0 = arith.addi %c4_i32, %arg1 : i32
    %c0_i32 = arith.constant 0 : i32
    return %arg0, %arg3, %0 : i32, i32, i32
  }
  func.func @transform_3(%arg0: i32, %arg1: i32, %arg2: i32, %arg3: i32) -> (i32, i32, i32) {
    %c0_i32 = arith.constant 0 : i32
    return %arg0, %arg2, %arg1 : i32, i32, i32
  }
}

module attributes {stable_mosaic.version = 11 : i64} {
  func.func @_linear_kernel(%arg0: i32, %arg1: i32, %arg2: i32, %arg3: memref<16x256xf32, #tpu.memory_space<vmem>>, %arg4: memref<256x256xf32, #tpu.memory_space<vmem>>, %arg5: memref<1x256xf32, #tpu.memory_space<vmem>>, %arg6: memref<16x256xf32, #tpu.memory_space<vmem>>, %arg7: memref<16x256xf32, #tpu.memory_space<vmem>>) attributes {dimension_semantics = [#tpu.dimension_semantics<parallel>, #tpu.dimension_semantics<parallel>, #tpu.dimension_semantics<arbitrary>], iteration_bounds = array<i64: 1, 3, 1>, scalar_prefetch = 0 : i64, scratch_operands = 1 : i64, tpu.core_type = #tpu.core_type<tc>, window_params = [{transform_indices = @transform_0, window_bounds = array<i64: 16, 256>}, {transform_indices = @transform_1, window_bounds = array<i64: 256, 256>}, {transform_indices = @transform_2, window_bounds = array<i64: 1, 256>}, {transform_indices = @transform_3, window_bounds = array<i64: 16, 256>}]} {
    %c0_i32 = arith.constant 0 : i32
    %0 = arith.cmpi eq, %arg2, %c0_i32 : i32
    %1 = arith.extui %0 : i1 to i32
    %c0_i32_0 = arith.constant 0 : i32
    %2 = arith.cmpi ne, %1, %c0_i32_0 : i32
    scf.if %2 {
      %cst_10 = arith.constant 0.000000e+00 : f32
      %12 = vector.broadcast %cst_10 : f32 to vector<16x256xf32>
      %c0_11 = arith.constant 0 : index
      %c0_12 = arith.constant 0 : index
      %13 = vector.load %arg7[%c0_11, %c0_12] : memref<16x256xf32, #tpu.memory_space<vmem>>, vector<16x256xf32>
      tpu.vector_store %arg7[%c0_11, %c0_12], %12 {strides = array<i32>} : memref<16x256xf32, #tpu.memory_space<vmem>>, vector<16x256xf32>,
    } else {
    }
    %c0 = arith.constant 0 : index
    %c0_1 = arith.constant 0 : index
    %3 = vector.load %arg7[%c0, %c0_1] : memref<16x256xf32, #tpu.memory_space<vmem>>, vector<16x256xf32>
    %c0_2 = arith.constant 0 : index
    %c0_3 = arith.constant 0 : index
    %4 = vector.load %arg3[%c0_2, %c0_3] : memref<16x256xf32, #tpu.memory_space<vmem>>, vector<16x256xf32>
    %c0_4 = arith.constant 0 : index
    %c0_5 = arith.constant 0 : index
    %5 = vector.load %arg4[%c0_4, %c0_5] : memref<256x256xf32, #tpu.memory_space<vmem>>, vector<256x256xf32>
    %cst = arith.constant dense<0.000000e+00> : vector<16x256xf32>
    %6 = tpu.matmul %4, %5, %cst {dimension_numbers = #tpu.dot_dimension_numbers<[1], [0], [0], [1], [0, 0, 1, 1], [], []>} : vector<16x256xf32>, vector<256x256xf32>, vector<16x256xf32> -> vector<16x256xf32>
    %7 = arith.addf %3, %6 : vector<16x256xf32>
    %c0_6 = arith.constant 0 : index
    %c0_7 = arith.constant 0 : index
    %8 = vector.load %arg7[%c0_6, %c0_7] : memref<16x256xf32, #tpu.memory_space<vmem>>, vector<16x256xf32>
    tpu.vector_store %arg7[%c0_6, %c0_7], %7 {strides = array<i32>} : memref<16x256xf32, #tpu.memory_space<vmem>>, vector<16x256xf32>,
    %c0_i32_8 = arith.constant 0 : i32
    %9 = arith.cmpi eq, %arg2, %c0_i32_8 : i32
    %10 = arith.extui %9 : i1 to i32
    %c0_i32_9 = arith.constant 0 : i32
    %11 = arith.cmpi ne, %10, %c0_i32_9 : i32
    scf.if %11 {
      %c0_10 = arith.constant 0 : index
      %c0_11 = arith.constant 0 : index
      %12 = vector.load %arg7[%c0_10, %c0_11] : memref<16x256xf32, #tpu.memory_space<vmem>>, vector<16x256xf32>
      %c0_12 = arith.constant 0 : index
      %c0_13 = arith.constant 0 : index
      %13 = vector.load %arg5[%c0_12, %c0_13] : memref<1x256xf32, #tpu.memory_space<vmem>>, vector<1x256xf32>
      %14 = vector.broadcast %13 : vector<1x256xf32> to vector<16x256xf32>
      %15 = arith.addf %12, %14 : vector<16x256xf32>
      %c0_14 = arith.constant 0 : index
      %c0_15 = arith.constant 0 : index
      %16 = vector.load %arg6[%c0_14, %c0_15] : memref<16x256xf32, #tpu.memory_space<vmem>>, vector<16x256xf32>
      tpu.vector_store %arg6[%c0_14, %c0_15], %15 {strides = array<i32>} : memref<16x256xf32, #tpu.memory_space<vmem>>, vector<16x256xf32>,
    } else {
    }
    return
  }
  func.func @transform_0(%arg0: i32, %arg1: i32, %arg2: i32) -> (i32, i32) {
    %c0_i32 = arith.constant 0 : i32
    return %arg0, %arg2 : i32, i32
  }
  func.func @transform_1(%arg0: i32, %arg1: i32, %arg2: i32) -> (i32, i32) {
    %c0_i32 = arith.constant 0 : i32
    return %arg2, %arg1 : i32, i32
  }
  func.func @transform_2(%arg0: i32, %arg1: i32, %arg2: i32) -> (i32, i32) {
    %c0_i32 = arith.constant 0 : i32
    %c0_i32_0 = arith.constant 0 : i32
    return %c0_i32, %arg1 : i32, i32
  }
  func.func @transform_3(%arg0: i32, %arg1: i32, %arg2: i32) -> (i32, i32) {
    %c0_i32 = arith.constant 0 : i32
    return %arg0, %arg1 : i32, i32
  }
}

module attributes {stable_mosaic.version = 11 : i64} {
  func.func @_linear_res_ln_kernel(%arg0: i32, %arg1: i32, %arg2: memref<16x256xf32, #tpu.memory_space<vmem>>, %arg3: memref<256x256xf32, #tpu.memory_space<vmem>>, %arg4: memref<1x256xf32, #tpu.memory_space<vmem>>, %arg5: memref<16x256xf32, #tpu.memory_space<vmem>>, %arg6: memref<1x256xf32, #tpu.memory_space<vmem>>, %arg7: memref<1x256xf32, #tpu.memory_space<vmem>>, %arg8: memref<16x256xf32, #tpu.memory_space<vmem>>, %arg9: memref<16x256xf32, #tpu.memory_space<vmem>>) attributes {dimension_semantics = [#tpu.dimension_semantics<parallel>, #tpu.dimension_semantics<arbitrary>], iteration_bounds = array<i64: 1, 1>, scalar_prefetch = 0 : i64, scratch_operands = 1 : i64, tpu.core_type = #tpu.core_type<tc>, window_params = [{transform_indices = @transform_0, window_bounds = array<i64: 16, 256>}, {transform_indices = @transform_1, window_bounds = array<i64: 256, 256>}, {pipeline_mode = #tpu.pipeline_mode<synchronous>, transform_indices = @transform_2, window_bounds = array<i64: 1, 256>}, {transform_indices = @transform_3, window_bounds = array<i64: 16, 256>}, {pipeline_mode = #tpu.pipeline_mode<synchronous>, transform_indices = @transform_4, window_bounds = array<i64: 1, 256>}, {pipeline_mode = #tpu.pipeline_mode<synchronous>, transform_indices = @transform_5, window_bounds = array<i64: 1, 256>}, {transform_indices = @transform_6, window_bounds = array<i64: 16, 256>}]} {
    %c0_i32 = arith.constant 0 : i32
    %0 = arith.cmpi eq, %arg1, %c0_i32 : i32
    %1 = arith.extui %0 : i1 to i32
    %c0_i32_0 = arith.constant 0 : i32
    %2 = arith.cmpi ne, %1, %c0_i32_0 : i32
    scf.if %2 {
      %cst_10 = arith.constant 0.000000e+00 : f32
      %12 = vector.broadcast %cst_10 : f32 to vector<16x256xf32>
      %c0_11 = arith.constant 0 : index
      %c0_12 = arith.constant 0 : index
      %13 = vector.load %arg9[%c0_11, %c0_12] : memref<16x256xf32, #tpu.memory_space<vmem>>, vector<16x256xf32>
      tpu.vector_store %arg9[%c0_11, %c0_12], %12 {strides = array<i32>} : memref<16x256xf32, #tpu.memory_space<vmem>>, vector<16x256xf32>,
    } else {
    }
    %c0 = arith.constant 0 : index
    %c0_1 = arith.constant 0 : index
    %3 = vector.load %arg9[%c0, %c0_1] : memref<16x256xf32, #tpu.memory_space<vmem>>, vector<16x256xf32>
    %c0_2 = arith.constant 0 : index
    %c0_3 = arith.constant 0 : index
    %4 = vector.load %arg2[%c0_2, %c0_3] : memref<16x256xf32, #tpu.memory_space<vmem>>, vector<16x256xf32>
    %c0_4 = arith.constant 0 : index
    %c0_5 = arith.constant 0 : index
    %5 = vector.load %arg3[%c0_4, %c0_5] : memref<256x256xf32, #tpu.memory_space<vmem>>, vector<256x256xf32>
    %cst = arith.constant dense<0.000000e+00> : vector<16x256xf32>
    %6 = tpu.matmul %4, %5, %cst {dimension_numbers = #tpu.dot_dimension_numbers<[1], [0], [0], [1], [0, 0, 1, 1], [], []>} : vector<16x256xf32>, vector<256x256xf32>, vector<16x256xf32> -> vector<16x256xf32>
    %7 = arith.addf %3, %6 : vector<16x256xf32>
    %c0_6 = arith.constant 0 : index
    %c0_7 = arith.constant 0 : index
    %8 = vector.load %arg9[%c0_6, %c0_7] : memref<16x256xf32, #tpu.memory_space<vmem>>, vector<16x256xf32>
    tpu.vector_store %arg9[%c0_6, %c0_7], %7 {strides = array<i32>} : memref<16x256xf32, #tpu.memory_space<vmem>>, vector<16x256xf32>,
    %c0_i32_8 = arith.constant 0 : i32
    %9 = arith.cmpi eq, %arg1, %c0_i32_8 : i32
    %10 = arith.extui %9 : i1 to i32
    %c0_i32_9 = arith.constant 0 : i32
    %11 = arith.cmpi ne, %10, %c0_i32_9 : i32
    scf.if %11 {
      %c0_10 = arith.constant 0 : index
      %c0_11 = arith.constant 0 : index
      %12 = vector.load %arg9[%c0_10, %c0_11] : memref<16x256xf32, #tpu.memory_space<vmem>>, vector<16x256xf32>
      %c0_12 = arith.constant 0 : index
      %c0_13 = arith.constant 0 : index
      %13 = vector.load %arg4[%c0_12, %c0_13] : memref<1x256xf32, #tpu.memory_space<vmem>>, vector<1x256xf32>
      %14 = vector.broadcast %13 : vector<1x256xf32> to vector<16x256xf32>
      %15 = arith.addf %12, %14 : vector<16x256xf32>
      %c0_14 = arith.constant 0 : index
      %c0_15 = arith.constant 0 : index
      %16 = vector.load %arg5[%c0_14, %c0_15] : memref<16x256xf32, #tpu.memory_space<vmem>>, vector<16x256xf32>
      %17 = arith.addf %15, %16 : vector<16x256xf32>
      %c0_16 = arith.constant 0 : index
      %c0_17 = arith.constant 0 : index
      %18 = vector.load %arg6[%c0_16, %c0_17] : memref<1x256xf32, #tpu.memory_space<vmem>>, vector<1x256xf32>
      %c0_18 = arith.constant 0 : index
      %c0_19 = arith.constant 0 : index
      %19 = vector.load %arg7[%c0_18, %c0_19] : memref<1x256xf32, #tpu.memory_space<vmem>>, vector<1x256xf32>
      %cst_20 = arith.constant dense<0.000000e+00> : vector<16xf32>
      %20 = vector.multi_reduction <add>, %17, %cst_20 [1] : vector<16x256xf32> to vector<16xf32>
      %21 = vector.shape_cast %20 : vector<16xf32> to vector<16x1xf32>
      %cst_21 = arith.constant 2.560000e+02 : f32
      %22 = vector.broadcast %cst_21 : f32 to vector<16x1xf32>
      %23 = arith.divf %21, %22 : vector<16x1xf32>
      %24 = vector.broadcast %23 : vector<16x1xf32> to vector<16x256xf32>
      %25 = arith.subf %17, %24 : vector<16x256xf32>
      %26 = arith.mulf %25, %25 : vector<16x256xf32>
      %cst_22 = arith.constant dense<0.000000e+00> : vector<16xf32>
      %27 = vector.multi_reduction <add>, %26, %cst_22 [1] : vector<16x256xf32> to vector<16xf32>
      %28 = vector.shape_cast %27 : vector<16xf32> to vector<16x1xf32>
      %cst_23 = arith.constant 2.560000e+02 : f32
      %29 = vector.broadcast %cst_23 : f32 to vector<16x1xf32>
      %30 = arith.divf %28, %29 : vector<16x1xf32>
      %cst_24 = arith.constant 9.99999974E-6 : f32
      %31 = vector.broadcast %cst_24 : f32 to vector<16x1xf32>
      %32 = arith.addf %30, %31 : vector<16x1xf32>
      %33 = math.rsqrt %32 : vector<16x1xf32>
      %34 = vector.broadcast %33 : vector<16x1xf32> to vector<16x256xf32>
      %35 = arith.mulf %25, %34 : vector<16x256xf32>
      %36 = vector.broadcast %18 : vector<1x256xf32> to vector<16x256xf32>
      %37 = arith.mulf %35, %36 : vector<16x256xf32>
      %38 = vector.broadcast %19 : vector<1x256xf32> to vector<16x256xf32>
      %39 = arith.addf %37, %38 : vector<16x256xf32>
      %c0_25 = arith.constant 0 : index
      %c0_26 = arith.constant 0 : index
      %40 = vector.load %arg8[%c0_25, %c0_26] : memref<16x256xf32, #tpu.memory_space<vmem>>, vector<16x256xf32>
      tpu.vector_store %arg8[%c0_25, %c0_26], %39 {strides = array<i32>} : memref<16x256xf32, #tpu.memory_space<vmem>>, vector<16x256xf32>,
    } else {
    }
    return
  }
  func.func @transform_0(%arg0: i32, %arg1: i32) -> (i32, i32) {
    %c0_i32 = arith.constant 0 : i32
    return %arg0, %arg1 : i32, i32
  }
  func.func @transform_1(%arg0: i32, %arg1: i32) -> (i32, i32) {
    %c0_i32 = arith.constant 0 : i32
    %c0_i32_0 = arith.constant 0 : i32
    return %arg1, %c0_i32 : i32, i32
  }
  func.func @transform_2(%arg0: i32, %arg1: i32) -> (i32, i32) {
    %c0_i32 = arith.constant 0 : i32
    %c0_i32_0 = arith.constant 0 : i32
    %c0_i32_1 = arith.constant 0 : i32
    return %c0_i32, %c0_i32_0 : i32, i32
  }
  func.func @transform_3(%arg0: i32, %arg1: i32) -> (i32, i32) {
    %c0_i32 = arith.constant 0 : i32
    %c0_i32_0 = arith.constant 0 : i32
    return %arg0, %c0_i32 : i32, i32
  }
  func.func @transform_4(%arg0: i32, %arg1: i32) -> (i32, i32) {
    %c0_i32 = arith.constant 0 : i32
    %c0_i32_0 = arith.constant 0 : i32
    %c0_i32_1 = arith.constant 0 : i32
    return %c0_i32, %c0_i32_0 : i32, i32
  }
  func.func @transform_5(%arg0: i32, %arg1: i32) -> (i32, i32) {
    %c0_i32 = arith.constant 0 : i32
    %c0_i32_0 = arith.constant 0 : i32
    %c0_i32_1 = arith.constant 0 : i32
    return %c0_i32, %c0_i32_0 : i32, i32
  }
  func.func @transform_6(%arg0: i32, %arg1: i32) -> (i32, i32) {
    %c0_i32 = arith.constant 0 : i32
    %c0_i32_0 = arith.constant 0 : i32
    return %arg0, %c0_i32 : i32, i32
  }
}

module attributes {stable_mosaic.version = 11 : i64} {
  func.func @_linear_kernel(%arg0: i32, %arg1: i32, %arg2: i32, %arg3: memref<16x256xf32, #tpu.memory_space<vmem>>, %arg4: memref<256x256xf32, #tpu.memory_space<vmem>>, %arg5: memref<1x256xf32, #tpu.memory_space<vmem>>, %arg6: memref<16x256xf32, #tpu.memory_space<vmem>>, %arg7: memref<16x256xf32, #tpu.memory_space<vmem>>) attributes {dimension_semantics = [#tpu.dimension_semantics<parallel>, #tpu.dimension_semantics<parallel>, #tpu.dimension_semantics<arbitrary>], iteration_bounds = array<i64: 1, 1, 1>, scalar_prefetch = 0 : i64, scratch_operands = 1 : i64, tpu.core_type = #tpu.core_type<tc>, window_params = [{transform_indices = @transform_0, window_bounds = array<i64: 16, 256>}, {transform_indices = @transform_1, window_bounds = array<i64: 256, 256>}, {transform_indices = @transform_2, window_bounds = array<i64: 1, 256>}, {transform_indices = @transform_3, window_bounds = array<i64: 16, 256>}]} {
    %c0_i32 = arith.constant 0 : i32
    %0 = arith.cmpi eq, %arg2, %c0_i32 : i32
    %1 = arith.extui %0 : i1 to i32
    %c0_i32_0 = arith.constant 0 : i32
    %2 = arith.cmpi ne, %1, %c0_i32_0 : i32
    scf.if %2 {
      %cst_10 = arith.constant 0.000000e+00 : f32
      %12 = vector.broadcast %cst_10 : f32 to vector<16x256xf32>
      %c0_11 = arith.constant 0 : index
      %c0_12 = arith.constant 0 : index
      %13 = vector.load %arg7[%c0_11, %c0_12] : memref<16x256xf32, #tpu.memory_space<vmem>>, vector<16x256xf32>
      tpu.vector_store %arg7[%c0_11, %c0_12], %12 {strides = array<i32>} : memref<16x256xf32, #tpu.memory_space<vmem>>, vector<16x256xf32>,
    } else {
    }
    %c0 = arith.constant 0 : index
    %c0_1 = arith.constant 0 : index
    %3 = vector.load %arg7[%c0, %c0_1] : memref<16x256xf32, #tpu.memory_space<vmem>>, vector<16x256xf32>
    %c0_2 = arith.constant 0 : index
    %c0_3 = arith.constant 0 : index
    %4 = vector.load %arg3[%c0_2, %c0_3] : memref<16x256xf32, #tpu.memory_space<vmem>>, vector<16x256xf32>
    %c0_4 = arith.constant 0 : index
    %c0_5 = arith.constant 0 : index
    %5 = vector.load %arg4[%c0_4, %c0_5] : memref<256x256xf32, #tpu.memory_space<vmem>>, vector<256x256xf32>
    %cst = arith.constant dense<0.000000e+00> : vector<16x256xf32>
    %6 = tpu.matmul %4, %5, %cst {dimension_numbers = #tpu.dot_dimension_numbers<[1], [0], [0], [1], [0, 0, 1, 1], [], []>} : vector<16x256xf32>, vector<256x256xf32>, vector<16x256xf32> -> vector<16x256xf32>
    %7 = arith.addf %3, %6 : vector<16x256xf32>
    %c0_6 = arith.constant 0 : index
    %c0_7 = arith.constant 0 : index
    %8 = vector.load %arg7[%c0_6, %c0_7] : memref<16x256xf32, #tpu.memory_space<vmem>>, vector<16x256xf32>
    tpu.vector_store %arg7[%c0_6, %c0_7], %7 {strides = array<i32>} : memref<16x256xf32, #tpu.memory_space<vmem>>, vector<16x256xf32>,
    %c0_i32_8 = arith.constant 0 : i32
    %9 = arith.cmpi eq, %arg2, %c0_i32_8 : i32
    %10 = arith.extui %9 : i1 to i32
    %c0_i32_9 = arith.constant 0 : i32
    %11 = arith.cmpi ne, %10, %c0_i32_9 : i32
    scf.if %11 {
      %c0_10 = arith.constant 0 : index
      %c0_11 = arith.constant 0 : index
      %12 = vector.load %arg7[%c0_10, %c0_11] : memref<16x256xf32, #tpu.memory_space<vmem>>, vector<16x256xf32>
      %c0_12 = arith.constant 0 : index
      %c0_13 = arith.constant 0 : index
      %13 = vector.load %arg5[%c0_12, %c0_13] : memref<1x256xf32, #tpu.memory_space<vmem>>, vector<1x256xf32>
      %14 = vector.broadcast %13 : vector<1x256xf32> to vector<16x256xf32>
      %15 = arith.addf %12, %14 : vector<16x256xf32>
      %c0_14 = arith.constant 0 : index
      %c0_15 = arith.constant 0 : index
      %16 = vector.load %arg6[%c0_14, %c0_15] : memref<16x256xf32, #tpu.memory_space<vmem>>, vector<16x256xf32>
      tpu.vector_store %arg6[%c0_14, %c0_15], %15 {strides = array<i32>} : memref<16x256xf32, #tpu.memory_space<vmem>>, vector<16x256xf32>,
    } else {
    }
    return
  }
  func.func @transform_0(%arg0: i32, %arg1: i32, %arg2: i32) -> (i32, i32) {
    %c0_i32 = arith.constant 0 : i32
    return %arg0, %arg2 : i32, i32
  }
  func.func @transform_1(%arg0: i32, %arg1: i32, %arg2: i32) -> (i32, i32) {
    %c0_i32 = arith.constant 0 : i32
    return %arg2, %arg1 : i32, i32
  }
  func.func @transform_2(%arg0: i32, %arg1: i32, %arg2: i32) -> (i32, i32) {
    %c0_i32 = arith.constant 0 : i32
    %c0_i32_0 = arith.constant 0 : i32
    return %c0_i32, %arg1 : i32, i32
  }
  func.func @transform_3(%arg0: i32, %arg1: i32, %arg2: i32) -> (i32, i32) {
    %c0_i32 = arith.constant 0 : i32
    return %arg0, %arg1 : i32, i32
  }
}

module attributes {stable_mosaic.version = 11 : i64} {
  func.func @_linear_kernel(%arg0: i32, %arg1: i32, %arg2: i32, %arg3: memref<32x256xf32, #tpu.memory_space<vmem>>, %arg4: memref<256x256xf32, #tpu.memory_space<vmem>>, %arg5: memref<1x256xf32, #tpu.memory_space<vmem>>, %arg6: memref<32x256xf32, #tpu.memory_space<vmem>>, %arg7: memref<32x256xf32, #tpu.memory_space<vmem>>) attributes {dimension_semantics = [#tpu.dimension_semantics<parallel>, #tpu.dimension_semantics<parallel>, #tpu.dimension_semantics<arbitrary>], iteration_bounds = array<i64: 1, 2, 1>, scalar_prefetch = 0 : i64, scratch_operands = 1 : i64, tpu.core_type = #tpu.core_type<tc>, window_params = [{transform_indices = @transform_0, window_bounds = array<i64: 32, 256>}, {transform_indices = @transform_1, window_bounds = array<i64: 256, 256>}, {transform_indices = @transform_2, window_bounds = array<i64: 1, 256>}, {transform_indices = @transform_3, window_bounds = array<i64: 32, 256>}]} {
    %c0_i32 = arith.constant 0 : i32
    %0 = arith.cmpi eq, %arg2, %c0_i32 : i32
    %1 = arith.extui %0 : i1 to i32
    %c0_i32_0 = arith.constant 0 : i32
    %2 = arith.cmpi ne, %1, %c0_i32_0 : i32
    scf.if %2 {
      %cst_10 = arith.constant 0.000000e+00 : f32
      %12 = vector.broadcast %cst_10 : f32 to vector<32x256xf32>
      %c0_11 = arith.constant 0 : index
      %c0_12 = arith.constant 0 : index
      %13 = vector.load %arg7[%c0_11, %c0_12] : memref<32x256xf32, #tpu.memory_space<vmem>>, vector<32x256xf32>
      tpu.vector_store %arg7[%c0_11, %c0_12], %12 {strides = array<i32>} : memref<32x256xf32, #tpu.memory_space<vmem>>, vector<32x256xf32>,
    } else {
    }
    %c0 = arith.constant 0 : index
    %c0_1 = arith.constant 0 : index
    %3 = vector.load %arg7[%c0, %c0_1] : memref<32x256xf32, #tpu.memory_space<vmem>>, vector<32x256xf32>
    %c0_2 = arith.constant 0 : index
    %c0_3 = arith.constant 0 : index
    %4 = vector.load %arg3[%c0_2, %c0_3] : memref<32x256xf32, #tpu.memory_space<vmem>>, vector<32x256xf32>
    %c0_4 = arith.constant 0 : index
    %c0_5 = arith.constant 0 : index
    %5 = vector.load %arg4[%c0_4, %c0_5] : memref<256x256xf32, #tpu.memory_space<vmem>>, vector<256x256xf32>
    %cst = arith.constant dense<0.000000e+00> : vector<32x256xf32>
    %6 = tpu.matmul %4, %5, %cst {dimension_numbers = #tpu.dot_dimension_numbers<[1], [0], [0], [1], [0, 0, 1, 1], [], []>} : vector<32x256xf32>, vector<256x256xf32>, vector<32x256xf32> -> vector<32x256xf32>
    %7 = arith.addf %3, %6 : vector<32x256xf32>
    %c0_6 = arith.constant 0 : index
    %c0_7 = arith.constant 0 : index
    %8 = vector.load %arg7[%c0_6, %c0_7] : memref<32x256xf32, #tpu.memory_space<vmem>>, vector<32x256xf32>
    tpu.vector_store %arg7[%c0_6, %c0_7], %7 {strides = array<i32>} : memref<32x256xf32, #tpu.memory_space<vmem>>, vector<32x256xf32>,
    %c0_i32_8 = arith.constant 0 : i32
    %9 = arith.cmpi eq, %arg2, %c0_i32_8 : i32
    %10 = arith.extui %9 : i1 to i32
    %c0_i32_9 = arith.constant 0 : i32
    %11 = arith.cmpi ne, %10, %c0_i32_9 : i32
    scf.if %11 {
      %c0_10 = arith.constant 0 : index
      %c0_11 = arith.constant 0 : index
      %12 = vector.load %arg7[%c0_10, %c0_11] : memref<32x256xf32, #tpu.memory_space<vmem>>, vector<32x256xf32>
      %c0_12 = arith.constant 0 : index
      %c0_13 = arith.constant 0 : index
      %13 = vector.load %arg5[%c0_12, %c0_13] : memref<1x256xf32, #tpu.memory_space<vmem>>, vector<1x256xf32>
      %14 = vector.broadcast %13 : vector<1x256xf32> to vector<32x256xf32>
      %15 = arith.addf %12, %14 : vector<32x256xf32>
      %c0_14 = arith.constant 0 : index
      %c0_15 = arith.constant 0 : index
      %16 = vector.load %arg6[%c0_14, %c0_15] : memref<32x256xf32, #tpu.memory_space<vmem>>, vector<32x256xf32>
      tpu.vector_store %arg6[%c0_14, %c0_15], %15 {strides = array<i32>} : memref<32x256xf32, #tpu.memory_space<vmem>>, vector<32x256xf32>,
    } else {
    }
    return
  }
  func.func @transform_0(%arg0: i32, %arg1: i32, %arg2: i32) -> (i32, i32) {
    %c0_i32 = arith.constant 0 : i32
    return %arg0, %arg2 : i32, i32
  }
  func.func @transform_1(%arg0: i32, %arg1: i32, %arg2: i32) -> (i32, i32) {
    %c0_i32 = arith.constant 0 : i32
    return %arg2, %arg1 : i32, i32
  }
  func.func @transform_2(%arg0: i32, %arg1: i32, %arg2: i32) -> (i32, i32) {
    %c0_i32 = arith.constant 0 : i32
    %c0_i32_0 = arith.constant 0 : i32
    return %c0_i32, %arg1 : i32, i32
  }
  func.func @transform_3(%arg0: i32, %arg1: i32, %arg2: i32) -> (i32, i32) {
    %c0_i32 = arith.constant 0 : i32
    return %arg0, %arg1 : i32, i32
  }
}

module attributes {stable_mosaic.version = 11 : i64} {
  func.func @_flash_attn_kernel(%arg0: i32, %arg1: i32, %arg2: i32, %arg3: i32, %arg4: memref<1x8x128xf32, #tpu.memory_space<vmem>>, %arg5: memref<1x16x128xf32, #tpu.memory_space<vmem>>, %arg6: memref<1x16x128xf32, #tpu.memory_space<vmem>>, %arg7: memref<1x8x128xf32, #tpu.memory_space<vmem>>, %arg8: memref<8x1xf32, #tpu.memory_space<vmem>>, %arg9: memref<8x1xf32, #tpu.memory_space<vmem>>, %arg10: memref<8x128xf32, #tpu.memory_space<vmem>>) attributes {dimension_semantics = [#tpu.dimension_semantics<parallel>, #tpu.dimension_semantics<parallel>, #tpu.dimension_semantics<parallel>, #tpu.dimension_semantics<arbitrary>], iteration_bounds = array<i64: 2, 2, 1, 1>, scalar_prefetch = 0 : i64, scratch_operands = 3 : i64, tpu.core_type = #tpu.core_type<tc>, window_params = [{transform_indices = @transform_0, window_bounds = array<i64: 1, 8, 128>}, {transform_indices = @transform_1, window_bounds = array<i64: 1, 16, 128>}, {transform_indices = @transform_2, window_bounds = array<i64: 1, 16, 128>}, {transform_indices = @transform_3, window_bounds = array<i64: 1, 8, 128>}]} {
    %c0_i32 = arith.constant 0 : i32
    %0 = arith.cmpi eq, %arg3, %c0_i32 : i32
    %1 = arith.extui %0 : i1 to i32
    %c0_i32_0 = arith.constant 0 : i32
    %2 = arith.cmpi ne, %1, %c0_i32_0 : i32
    scf.if %2 {
      %cst_27 = arith.constant 0xFF800000 : f32
      %37 = vector.broadcast %cst_27 : f32 to vector<8x1xf32>
      %c0_28 = arith.constant 0 : index
      %c0_29 = arith.constant 0 : index
      %38 = vector.load %arg8[%c0_28, %c0_29] : memref<8x1xf32, #tpu.memory_space<vmem>>, vector<8x1xf32>
      tpu.vector_store %arg8[%c0_28, %c0_29], %37 {strides = array<i32>} : memref<8x1xf32, #tpu.memory_space<vmem>>, vector<8x1xf32>,
      %cst_30 = arith.constant 0.000000e+00 : f32
      %39 = vector.broadcast %cst_30 : f32 to vector<8x1xf32>
      %c0_31 = arith.constant 0 : index
      %c0_32 = arith.constant 0 : index
      %40 = vector.load %arg9[%c0_31, %c0_32] : memref<8x1xf32, #tpu.memory_space<vmem>>, vector<8x1xf32>
      tpu.vector_store %arg9[%c0_31, %c0_32], %39 {strides = array<i32>} : memref<8x1xf32, #tpu.memory_space<vmem>>, vector<8x1xf32>,
      %cst_33 = arith.constant 0.000000e+00 : f32
      %41 = vector.broadcast %cst_33 : f32 to vector<8x128xf32>
      %c0_34 = arith.constant 0 : index
      %c0_35 = arith.constant 0 : index
      %42 = vector.load %arg10[%c0_34, %c0_35] : memref<8x128xf32, #tpu.memory_space<vmem>>, vector<8x128xf32>
      tpu.vector_store %arg10[%c0_34, %c0_35], %41 {strides = array<i32>} : memref<8x128xf32, #tpu.memory_space<vmem>>, vector<8x128xf32>,
    } else {
    }
    %c0 = arith.constant 0 : index
    %c0_1 = arith.constant 0 : index
    %c0_2 = arith.constant 0 : index
    %3 = vector.load %arg4[%c0, %c0_1, %c0_2] : memref<1x8x128xf32, #tpu.memory_space<vmem>>, vector<1x8x128xf32>
    %4 = vector.shape_cast %3 : vector<1x8x128xf32> to vector<8x128xf32>
    %c0_3 = arith.constant 0 : index
    %c0_4 = arith.constant 0 : index
    %c0_5 = arith.constant 0 : index
    %5 = vector.load %arg5[%c0_3, %c0_4, %c0_5] : memref<1x16x128xf32, #tpu.memory_space<vmem>>, vector<1x16x128xf32>
    %6 = vector.shape_cast %5 : vector<1x16x128xf32> to vector<16x128xf32>
    %cst = arith.constant dense<0.000000e+00> : vector<8x16xf32>
    %7 = tpu.matmul %4, %6, %cst {dimension_numbers = #tpu.dot_dimension_numbers<[1], [1], [0], [0], [0, 0, 1, 0], [], []>} : vector<8x128xf32>, vector<16x128xf32>, vector<8x16xf32> -> vector<8x16xf32>
    %cst_6 = arith.constant 0.0883883461 : f32
    %8 = vector.broadcast %cst_6 : f32 to vector<8x16xf32>
    %9 = arith.mulf %7, %8 : vector<8x16xf32>
    %c0_7 = arith.constant 0 : index
    %c0_8 = arith.constant 0 : index
    %10 = vector.load %arg8[%c0_7, %c0_8] : memref<8x1xf32, #tpu.memory_space<vmem>>, vector<8x1xf32>
    %cst_9 = arith.constant dense<0xFF800000> : vector<8xf32>
    %11 = vector.multi_reduction <maximumf>, %9, %cst_9 [1] : vector<8x16xf32> to vector<8xf32>
    %12 = vector.shape_cast %11 : vector<8xf32> to vector<8x1xf32>
    %13 = arith.maximumf %10, %12 : vector<8x1xf32>
    %14 = arith.subf %10, %13 : vector<8x1xf32>
    %15 = math.exp %14 : vector<8x1xf32>
    %16 = vector.broadcast %13 : vector<8x1xf32> to vector<8x16xf32>
    %17 = arith.subf %9, %16 : vector<8x16xf32>
    %18 = math.exp %17 : vector<8x16xf32>
    %c0_10 = arith.constant 0 : index
    %c0_11 = arith.constant 0 : index
    %19 = vector.load %arg9[%c0_10, %c0_11] : memref<8x1xf32, #tpu.memory_space<vmem>>, vector<8x1xf32>
    %20 = arith.mulf %15, %19 : vector<8x1xf32>
    %cst_12 = arith.constant dense<0.000000e+00> : vector<8xf32>
    %21 = vector.multi_reduction <add>, %18, %cst_12 [1] : vector<8x16xf32> to vector<8xf32>
    %22 = vector.shape_cast %21 : vector<8xf32> to vector<8x1xf32>
    %23 = arith.addf %20, %22 : vector<8x1xf32>
    %c0_13 = arith.constant 0 : index
    %c0_14 = arith.constant 0 : index
    %24 = vector.load %arg9[%c0_13, %c0_14] : memref<8x1xf32, #tpu.memory_space<vmem>>, vector<8x1xf32>
    tpu.vector_store %arg9[%c0_13, %c0_14], %23 {strides = array<i32>} : memref<8x1xf32, #tpu.memory_space<vmem>>, vector<8x1xf32>,
    %c0_15 = arith.constant 0 : index
    %c0_16 = arith.constant 0 : index
    %25 = vector.load %arg10[%c0_15, %c0_16] : memref<8x128xf32, #tpu.memory_space<vmem>>, vector<8x128xf32>
    %26 = vector.broadcast %15 : vector<8x1xf32> to vector<8x128xf32>
    %27 = arith.mulf %26, %25 : vector<8x128xf32>
    %c0_17 = arith.constant 0 : index
    %c0_18 = arith.constant 0 : index
    %c0_19 = arith.constant 0 : index
    %28 = vector.load %arg6[%c0_17, %c0_18, %c0_19] : memref<1x16x128xf32, #tpu.memory_space<vmem>>, vector<1x16x128xf32>
    %29 = vector.shape_cast %28 : vector<1x16x128xf32> to vector<16x128xf32>
    %cst_20 = arith.constant dense<0.000000e+00> : vector<8x128xf32>
    %30 = tpu.matmul %18, %29, %cst_20 {dimension_numbers = #tpu.dot_dimension_numbers<[1], [0], [0], [1], [0, 0, 1, 1], [], []>} : vector<8x16xf32>, vector<16x128xf32>, vector<8x128xf32> -> vector<8x128xf32>
    %31 = arith.addf %27, %30 : vector<8x128xf32>
    %c0_21 = arith.constant 0 : index
    %c0_22 = arith.constant 0 : index
    %32 = vector.load %arg10[%c0_21, %c0_22] : memref<8x128xf32, #tpu.memory_space<vmem>>, vector<8x128xf32>
    tpu.vector_store %arg10[%c0_21, %c0_22], %31 {strides = array<i32>} : memref<8x128xf32, #tpu.memory_space<vmem>>, vector<8x128xf32>,
    %c0_23 = arith.constant 0 : index
    %c0_24 = arith.constant 0 : index
    %33 = vector.load %arg8[%c0_23, %c0_24] : memref<8x1xf32, #tpu.memory_space<vmem>>, vector<8x1xf32>
    tpu.vector_store %arg8[%c0_23, %c0_24], %13 {strides = array<i32>} : memref<8x1xf32, #tpu.memory_space<vmem>>, vector<8x1xf32>,
    %c0_i32_25 = arith.constant 0 : i32
    %34 = arith.cmpi eq, %arg3, %c0_i32_25 : i32
    %35 = arith.extui %34 : i1 to i32
    %c0_i32_26 = arith.constant 0 : i32
    %36 = arith.cmpi ne, %35, %c0_i32_26 : i32
    scf.if %36 {
      %c0_27 = arith.constant 0 : index
      %c0_28 = arith.constant 0 : index
      %37 = vector.load %arg9[%c0_27, %c0_28] : memref<8x1xf32, #tpu.memory_space<vmem>>, vector<8x1xf32>
      %38 = tpu.reciprocal %37 {approx = true} : vector<8x1xf32> -> vector<8x1xf32>
      %c0_29 = arith.constant 0 : index
      %c0_30 = arith.constant 0 : index
      %39 = vector.load %arg10[%c0_29, %c0_30] : memref<8x128xf32, #tpu.memory_space<vmem>>, vector<8x128xf32>
      %40 = vector.broadcast %38 : vector<8x1xf32> to vector<8x128xf32>
      %41 = arith.mulf %39, %40 : vector<8x128xf32>
      %c0_31 = arith.constant 0 : index
      %c0_32 = arith.constant 0 : index
      %c0_33 = arith.constant 0 : index
      %42 = vector.load %arg7[%c0_31, %c0_32, %c0_33] : memref<1x8x128xf32, #tpu.memory_space<vmem>>, vector<1x8x128xf32>
      %43 = vector.shape_cast %42 : vector<1x8x128xf32> to vector<8x128xf32>
      %44 = vector.shape_cast %41 : vector<8x128xf32> to vector<1x8x128xf32>
      tpu.vector_store %arg7[%c0_31, %c0_32, %c0_33], %44 {strides = array<i32>} : memref<1x8x128xf32, #tpu.memory_space<vmem>>, vector<1x8x128xf32>,
    } else {
    }
    return
  }
  func.func @transform_0(%arg0: i32, %arg1: i32, %arg2: i32, %arg3: i32) -> (i32, i32, i32) {
    %c0_i32 = arith.constant 0 : i32
    %0 = arith.addi %c0_i32, %arg1 : i32
    %c0_i32_0 = arith.constant 0 : i32
    return %arg0, %arg2, %0 : i32, i32, i32
  }
  func.func @transform_1(%arg0: i32, %arg1: i32, %arg2: i32, %arg3: i32) -> (i32, i32, i32) {
    %c0_i32 = arith.constant 0 : i32
    %0 = arith.addi %c0_i32, %arg1 : i32
    %c0_i32_0 = arith.constant 0 : i32
    return %arg0, %arg3, %0 : i32, i32, i32
  }
  func.func @transform_2(%arg0: i32, %arg1: i32, %arg2: i32, %arg3: i32) -> (i32, i32, i32) {
    %c2_i32 = arith.constant 2 : i32
    %0 = arith.addi %c2_i32, %arg1 : i32
    %c0_i32 = arith.constant 0 : i32
    return %arg0, %arg3, %0 : i32, i32, i32
  }
  func.func @transform_3(%arg0: i32, %arg1: i32, %arg2: i32, %arg3: i32) -> (i32, i32, i32) {
    %c0_i32 = arith.constant 0 : i32
    return %arg0, %arg2, %arg1 : i32, i32, i32
  }
}

module attributes {stable_mosaic.version = 11 : i64} {
  func.func @_ffn_kernel(%arg0: i32, %arg1: i32, %arg2: memref<16x256xf32, #tpu.memory_space<vmem>>, %arg3: memref<256x512xf32, #tpu.memory_space<vmem>>, %arg4: memref<1x512xf32, #tpu.memory_space<vmem>>, %arg5: memref<512x256xf32, #tpu.memory_space<vmem>>, %arg6: memref<1x256xf32, #tpu.memory_space<vmem>>, %arg7: memref<1x256xf32, #tpu.memory_space<vmem>>, %arg8: memref<1x256xf32, #tpu.memory_space<vmem>>, %arg9: memref<16x256xf32, #tpu.memory_space<vmem>>, %arg10: memref<16x256xf32, #tpu.memory_space<vmem>>) attributes {dimension_semantics = [#tpu.dimension_semantics<parallel>, #tpu.dimension_semantics<arbitrary>], iteration_bounds = array<i64: 1, 1>, scalar_prefetch = 0 : i64, scratch_operands = 1 : i64, tpu.core_type = #tpu.core_type<tc>, window_params = [{transform_indices = @transform_0, window_bounds = array<i64: 16, 256>}, {transform_indices = @transform_1, window_bounds = array<i64: 256, 512>}, {transform_indices = @transform_2, window_bounds = array<i64: 1, 512>}, {transform_indices = @transform_3, window_bounds = array<i64: 512, 256>}, {pipeline_mode = #tpu.pipeline_mode<synchronous>, transform_indices = @transform_4, window_bounds = array<i64: 1, 256>}, {pipeline_mode = #tpu.pipeline_mode<synchronous>, transform_indices = @transform_5, window_bounds = array<i64: 1, 256>}, {pipeline_mode = #tpu.pipeline_mode<synchronous>, transform_indices = @transform_6, window_bounds = array<i64: 1, 256>}, {transform_indices = @transform_7, window_bounds = array<i64: 16, 256>}]} {
    %c0_i32 = arith.constant 0 : i32
    %0 = arith.cmpi eq, %arg1, %c0_i32 : i32
    %1 = arith.extui %0 : i1 to i32
    %c0_i32_0 = arith.constant 0 : i32
    %2 = arith.cmpi ne, %1, %c0_i32_0 : i32
    scf.if %2 {
      %cst_16 = arith.constant 0.000000e+00 : f32
      %19 = vector.broadcast %cst_16 : f32 to vector<16x256xf32>
      %c0_17 = arith.constant 0 : index
      %c0_18 = arith.constant 0 : index
      %20 = vector.load %arg10[%c0_17, %c0_18] : memref<16x256xf32, #tpu.memory_space<vmem>>, vector<16x256xf32>
      tpu.vector_store %arg10[%c0_17, %c0_18], %19 {strides = array<i32>} : memref<16x256xf32, #tpu.memory_space<vmem>>, vector<16x256xf32>,
    } else {
    }
    %c0 = arith.constant 0 : index
    %c0_1 = arith.constant 0 : index
    %3 = vector.load %arg2[%c0, %c0_1] : memref<16x256xf32, #tpu.memory_space<vmem>>, vector<16x256xf32>
    %c0_2 = arith.constant 0 : index
    %c0_3 = arith.constant 0 : index
    %4 = vector.load %arg3[%c0_2, %c0_3] : memref<256x512xf32, #tpu.memory_space<vmem>>, vector<256x512xf32>
    %cst = arith.constant dense<0.000000e+00> : vector<16x512xf32>
    %5 = tpu.matmul %3, %4, %cst {dimension_numbers = #tpu.dot_dimension_numbers<[1], [0], [0], [1], [0, 0, 1, 1], [], []>} : vector<16x256xf32>, vector<256x512xf32>, vector<16x512xf32> -> vector<16x512xf32>
    %c0_4 = arith.constant 0 : index
    %c0_5 = arith.constant 0 : index
    %6 = vector.load %arg4[%c0_4, %c0_5] : memref<1x512xf32, #tpu.memory_space<vmem>>, vector<1x512xf32>
    %7 = vector.broadcast %6 : vector<1x512xf32> to vector<16x512xf32>
    %8 = arith.addf %5, %7 : vector<16x512xf32>
    %cst_6 = arith.constant 0.000000e+00 : f32
    %9 = vector.broadcast %cst_6 : f32 to vector<16x512xf32>
    %10 = arith.maximumf %8, %9 : vector<16x512xf32>
    %c0_7 = arith.constant 0 : index
    %c0_8 = arith.constant 0 : index
    %11 = vector.load %arg10[%c0_7, %c0_8] : memref<16x256xf32, #tpu.memory_space<vmem>>, vector<16x256xf32>
    %c0_9 = arith.constant 0 : index
    %c0_10 = arith.constant 0 : index
    %12 = vector.load %arg5[%c0_9, %c0_10] : memref<512x256xf32, #tpu.memory_space<vmem>>, vector<512x256xf32>
    %cst_11 = arith.constant dense<0.000000e+00> : vector<16x256xf32>
    %13 = tpu.matmul %10, %12, %cst_11 {dimension_numbers = #tpu.dot_dimension_numbers<[1], [0], [0], [1], [0, 0, 1, 1], [], []>} : vector<16x512xf32>, vector<512x256xf32>, vector<16x256xf32> -> vector<16x256xf32>
    %14 = arith.addf %11, %13 : vector<16x256xf32>
    %c0_12 = arith.constant 0 : index
    %c0_13 = arith.constant 0 : index
    %15 = vector.load %arg10[%c0_12, %c0_13] : memref<16x256xf32, #tpu.memory_space<vmem>>, vector<16x256xf32>
    tpu.vector_store %arg10[%c0_12, %c0_13], %14 {strides = array<i32>} : memref<16x256xf32, #tpu.memory_space<vmem>>, vector<16x256xf32>,
    %c0_i32_14 = arith.constant 0 : i32
    %16 = arith.cmpi eq, %arg1, %c0_i32_14 : i32
    %17 = arith.extui %16 : i1 to i32
    %c0_i32_15 = arith.constant 0 : i32
    %18 = arith.cmpi ne, %17, %c0_i32_15 : i32
    scf.if %18 {
      %c0_16 = arith.constant 0 : index
      %c0_17 = arith.constant 0 : index
      %19 = vector.load %arg10[%c0_16, %c0_17] : memref<16x256xf32, #tpu.memory_space<vmem>>, vector<16x256xf32>
      %c0_18 = arith.constant 0 : index
      %c0_19 = arith.constant 0 : index
      %20 = vector.load %arg6[%c0_18, %c0_19] : memref<1x256xf32, #tpu.memory_space<vmem>>, vector<1x256xf32>
      %21 = vector.broadcast %20 : vector<1x256xf32> to vector<16x256xf32>
      %22 = arith.addf %19, %21 : vector<16x256xf32>
      %c0_20 = arith.constant 0 : index
      %c0_21 = arith.constant 0 : index
      %23 = vector.load %arg2[%c0_20, %c0_21] : memref<16x256xf32, #tpu.memory_space<vmem>>, vector<16x256xf32>
      %24 = arith.addf %22, %23 : vector<16x256xf32>
      %c0_22 = arith.constant 0 : index
      %c0_23 = arith.constant 0 : index
      %25 = vector.load %arg7[%c0_22, %c0_23] : memref<1x256xf32, #tpu.memory_space<vmem>>, vector<1x256xf32>
      %c0_24 = arith.constant 0 : index
      %c0_25 = arith.constant 0 : index
      %26 = vector.load %arg8[%c0_24, %c0_25] : memref<1x256xf32, #tpu.memory_space<vmem>>, vector<1x256xf32>
      %cst_26 = arith.constant dense<0.000000e+00> : vector<16xf32>
      %27 = vector.multi_reduction <add>, %24, %cst_26 [1] : vector<16x256xf32> to vector<16xf32>
      %28 = vector.shape_cast %27 : vector<16xf32> to vector<16x1xf32>
      %cst_27 = arith.constant 2.560000e+02 : f32
      %29 = vector.broadcast %cst_27 : f32 to vector<16x1xf32>
      %30 = arith.divf %28, %29 : vector<16x1xf32>
      %31 = vector.broadcast %30 : vector<16x1xf32> to vector<16x256xf32>
      %32 = arith.subf %24, %31 : vector<16x256xf32>
      %33 = arith.mulf %32, %32 : vector<16x256xf32>
      %cst_28 = arith.constant dense<0.000000e+00> : vector<16xf32>
      %34 = vector.multi_reduction <add>, %33, %cst_28 [1] : vector<16x256xf32> to vector<16xf32>
      %35 = vector.shape_cast %34 : vector<16xf32> to vector<16x1xf32>
      %cst_29 = arith.constant 2.560000e+02 : f32
      %36 = vector.broadcast %cst_29 : f32 to vector<16x1xf32>
      %37 = arith.divf %35, %36 : vector<16x1xf32>
      %cst_30 = arith.constant 9.99999974E-6 : f32
      %38 = vector.broadcast %cst_30 : f32 to vector<16x1xf32>
      %39 = arith.addf %37, %38 : vector<16x1xf32>
      %40 = math.rsqrt %39 : vector<16x1xf32>
      %41 = vector.broadcast %40 : vector<16x1xf32> to vector<16x256xf32>
      %42 = arith.mulf %32, %41 : vector<16x256xf32>
      %43 = vector.broadcast %25 : vector<1x256xf32> to vector<16x256xf32>
      %44 = arith.mulf %42, %43 : vector<16x256xf32>
      %45 = vector.broadcast %26 : vector<1x256xf32> to vector<16x256xf32>
      %46 = arith.addf %44, %45 : vector<16x256xf32>
      %c0_31 = arith.constant 0 : index
      %c0_32 = arith.constant 0 : index
      %47 = vector.load %arg9[%c0_31, %c0_32] : memref<16x256xf32, #tpu.memory_space<vmem>>, vector<16x256xf32>
      tpu.vector_store %arg9[%c0_31, %c0_32], %46 {strides = array<i32>} : memref<16x256xf32, #tpu.memory_space<vmem>>, vector<16x256xf32>,
    } else {
    }
    return
  }
  func.func @transform_0(%arg0: i32, %arg1: i32) -> (i32, i32) {
    %c0_i32 = arith.constant 0 : i32
    %c0_i32_0 = arith.constant 0 : i32
    return %arg0, %c0_i32 : i32, i32
  }
  func.func @transform_1(%arg0: i32, %arg1: i32) -> (i32, i32) {
    %c0_i32 = arith.constant 0 : i32
    %c0_i32_0 = arith.constant 0 : i32
    return %c0_i32, %arg1 : i32, i32
  }
  func.func @transform_2(%arg0: i32, %arg1: i32) -> (i32, i32) {
    %c0_i32 = arith.constant 0 : i32
    %c0_i32_0 = arith.constant 0 : i32
    return %c0_i32, %arg1 : i32, i32
  }
  func.func @transform_3(%arg0: i32, %arg1: i32) -> (i32, i32) {
    %c0_i32 = arith.constant 0 : i32
    %c0_i32_0 = arith.constant 0 : i32
    return %arg1, %c0_i32 : i32, i32
  }
  func.func @transform_4(%arg0: i32, %arg1: i32) -> (i32, i32) {
    %c0_i32 = arith.constant 0 : i32
    %c0_i32_0 = arith.constant 0 : i32
    %c0_i32_1 = arith.constant 0 : i32
    return %c0_i32, %c0_i32_0 : i32, i32
  }
  func.func @transform_5(%arg0: i32, %arg1: i32) -> (i32, i32) {
    %c0_i32 = arith.constant 0 : i32
    %c0_i32_0 = arith.constant 0 : i32
    %c0_i32_1 = arith.constant 0 : i32
    return %c0_i32, %c0_i32_0 : i32, i32
  }
  func.func @transform_6(%arg0: i32, %arg1: i32) -> (i32, i32) {
    %c0_i32 = arith.constant 0 : i32
    %c0_i32_0 = arith.constant 0 : i32
    %c0_i32_1 = arith.constant 0 : i32
    return %c0_i32, %c0_i32_0 : i32, i32
  }
  func.func @transform_7(%arg0: i32, %arg1: i32) -> (i32, i32) {
    %c0_i32 = arith.constant 0 : i32
    %c0_i32_0 = arith.constant 0 : i32
    return %arg0, %c0_i32 : i32, i32
  }
}

module attributes {stable_mosaic.version = 11 : i64} {
  func.func @_linear_kernel(%arg0: i32, %arg1: i32, %arg2: i32, %arg3: memref<16x256xf32, #tpu.memory_space<vmem>>, %arg4: memref<256x256xf32, #tpu.memory_space<vmem>>, %arg5: memref<1x256xf32, #tpu.memory_space<vmem>>, %arg6: memref<16x256xf32, #tpu.memory_space<vmem>>, %arg7: memref<16x256xf32, #tpu.memory_space<vmem>>) attributes {dimension_semantics = [#tpu.dimension_semantics<parallel>, #tpu.dimension_semantics<parallel>, #tpu.dimension_semantics<arbitrary>], iteration_bounds = array<i64: 1, 3, 1>, scalar_prefetch = 0 : i64, scratch_operands = 1 : i64, tpu.core_type = #tpu.core_type<tc>, window_params = [{transform_indices = @transform_0, window_bounds = array<i64: 16, 256>}, {transform_indices = @transform_1, window_bounds = array<i64: 256, 256>}, {transform_indices = @transform_2, window_bounds = array<i64: 1, 256>}, {transform_indices = @transform_3, window_bounds = array<i64: 16, 256>}]} {
    %c0_i32 = arith.constant 0 : i32
    %0 = arith.cmpi eq, %arg2, %c0_i32 : i32
    %1 = arith.extui %0 : i1 to i32
    %c0_i32_0 = arith.constant 0 : i32
    %2 = arith.cmpi ne, %1, %c0_i32_0 : i32
    scf.if %2 {
      %cst_10 = arith.constant 0.000000e+00 : f32
      %12 = vector.broadcast %cst_10 : f32 to vector<16x256xf32>
      %c0_11 = arith.constant 0 : index
      %c0_12 = arith.constant 0 : index
      %13 = vector.load %arg7[%c0_11, %c0_12] : memref<16x256xf32, #tpu.memory_space<vmem>>, vector<16x256xf32>
      tpu.vector_store %arg7[%c0_11, %c0_12], %12 {strides = array<i32>} : memref<16x256xf32, #tpu.memory_space<vmem>>, vector<16x256xf32>,
    } else {
    }
    %c0 = arith.constant 0 : index
    %c0_1 = arith.constant 0 : index
    %3 = vector.load %arg7[%c0, %c0_1] : memref<16x256xf32, #tpu.memory_space<vmem>>, vector<16x256xf32>
    %c0_2 = arith.constant 0 : index
    %c0_3 = arith.constant 0 : index
    %4 = vector.load %arg3[%c0_2, %c0_3] : memref<16x256xf32, #tpu.memory_space<vmem>>, vector<16x256xf32>
    %c0_4 = arith.constant 0 : index
    %c0_5 = arith.constant 0 : index
    %5 = vector.load %arg4[%c0_4, %c0_5] : memref<256x256xf32, #tpu.memory_space<vmem>>, vector<256x256xf32>
    %cst = arith.constant dense<0.000000e+00> : vector<16x256xf32>
    %6 = tpu.matmul %4, %5, %cst {dimension_numbers = #tpu.dot_dimension_numbers<[1], [0], [0], [1], [0, 0, 1, 1], [], []>} : vector<16x256xf32>, vector<256x256xf32>, vector<16x256xf32> -> vector<16x256xf32>
    %7 = arith.addf %3, %6 : vector<16x256xf32>
    %c0_6 = arith.constant 0 : index
    %c0_7 = arith.constant 0 : index
    %8 = vector.load %arg7[%c0_6, %c0_7] : memref<16x256xf32, #tpu.memory_space<vmem>>, vector<16x256xf32>
    tpu.vector_store %arg7[%c0_6, %c0_7], %7 {strides = array<i32>} : memref<16x256xf32, #tpu.memory_space<vmem>>, vector<16x256xf32>,
    %c0_i32_8 = arith.constant 0 : i32
    %9 = arith.cmpi eq, %arg2, %c0_i32_8 : i32
    %10 = arith.extui %9 : i1 to i32
    %c0_i32_9 = arith.constant 0 : i32
    %11 = arith.cmpi ne, %10, %c0_i32_9 : i32
    scf.if %11 {
      %c0_10 = arith.constant 0 : index
      %c0_11 = arith.constant 0 : index
      %12 = vector.load %arg7[%c0_10, %c0_11] : memref<16x256xf32, #tpu.memory_space<vmem>>, vector<16x256xf32>
      %c0_12 = arith.constant 0 : index
      %c0_13 = arith.constant 0 : index
      %13 = vector.load %arg5[%c0_12, %c0_13] : memref<1x256xf32, #tpu.memory_space<vmem>>, vector<1x256xf32>
      %14 = vector.broadcast %13 : vector<1x256xf32> to vector<16x256xf32>
      %15 = arith.addf %12, %14 : vector<16x256xf32>
      %c0_14 = arith.constant 0 : index
      %c0_15 = arith.constant 0 : index
      %16 = vector.load %arg6[%c0_14, %c0_15] : memref<16x256xf32, #tpu.memory_space<vmem>>, vector<16x256xf32>
      tpu.vector_store %arg6[%c0_14, %c0_15], %15 {strides = array<i32>} : memref<16x256xf32, #tpu.memory_space<vmem>>, vector<16x256xf32>,
    } else {
    }
    return
  }
  func.func @transform_0(%arg0: i32, %arg1: i32, %arg2: i32) -> (i32, i32) {
    %c0_i32 = arith.constant 0 : i32
    return %arg0, %arg2 : i32, i32
  }
  func.func @transform_1(%arg0: i32, %arg1: i32, %arg2: i32) -> (i32, i32) {
    %c0_i32 = arith.constant 0 : i32
    return %arg2, %arg1 : i32, i32
  }
  func.func @transform_2(%arg0: i32, %arg1: i32, %arg2: i32) -> (i32, i32) {
    %c0_i32 = arith.constant 0 : i32
    %c0_i32_0 = arith.constant 0 : i32
    return %c0_i32, %arg1 : i32, i32
  }
  func.func @transform_3(%arg0: i32, %arg1: i32, %arg2: i32) -> (i32, i32) {
    %c0_i32 = arith.constant 0 : i32
    return %arg0, %arg1 : i32, i32
  }
}

module attributes {stable_mosaic.version = 11 : i64} {
  func.func @_ffn_kernel(%arg0: i32, %arg1: i32, %arg2: memref<16x256xf32, #tpu.memory_space<vmem>>, %arg3: memref<256x512xf32, #tpu.memory_space<vmem>>, %arg4: memref<1x512xf32, #tpu.memory_space<vmem>>, %arg5: memref<512x256xf32, #tpu.memory_space<vmem>>, %arg6: memref<1x256xf32, #tpu.memory_space<vmem>>, %arg7: memref<1x256xf32, #tpu.memory_space<vmem>>, %arg8: memref<1x256xf32, #tpu.memory_space<vmem>>, %arg9: memref<16x256xf32, #tpu.memory_space<vmem>>, %arg10: memref<16x256xf32, #tpu.memory_space<vmem>>) attributes {dimension_semantics = [#tpu.dimension_semantics<parallel>, #tpu.dimension_semantics<arbitrary>], iteration_bounds = array<i64: 1, 1>, scalar_prefetch = 0 : i64, scratch_operands = 1 : i64, tpu.core_type = #tpu.core_type<tc>, window_params = [{transform_indices = @transform_0, window_bounds = array<i64: 16, 256>}, {transform_indices = @transform_1, window_bounds = array<i64: 256, 512>}, {transform_indices = @transform_2, window_bounds = array<i64: 1, 512>}, {transform_indices = @transform_3, window_bounds = array<i64: 512, 256>}, {pipeline_mode = #tpu.pipeline_mode<synchronous>, transform_indices = @transform_4, window_bounds = array<i64: 1, 256>}, {pipeline_mode = #tpu.pipeline_mode<synchronous>, transform_indices = @transform_5, window_bounds = array<i64: 1, 256>}, {pipeline_mode = #tpu.pipeline_mode<synchronous>, transform_indices = @transform_6, window_bounds = array<i64: 1, 256>}, {transform_indices = @transform_7, window_bounds = array<i64: 16, 256>}]} {
    %c0_i32 = arith.constant 0 : i32
    %0 = arith.cmpi eq, %arg1, %c0_i32 : i32
    %1 = arith.extui %0 : i1 to i32
    %c0_i32_0 = arith.constant 0 : i32
    %2 = arith.cmpi ne, %1, %c0_i32_0 : i32
    scf.if %2 {
      %cst_16 = arith.constant 0.000000e+00 : f32
      %19 = vector.broadcast %cst_16 : f32 to vector<16x256xf32>
      %c0_17 = arith.constant 0 : index
      %c0_18 = arith.constant 0 : index
      %20 = vector.load %arg10[%c0_17, %c0_18] : memref<16x256xf32, #tpu.memory_space<vmem>>, vector<16x256xf32>
      tpu.vector_store %arg10[%c0_17, %c0_18], %19 {strides = array<i32>} : memref<16x256xf32, #tpu.memory_space<vmem>>, vector<16x256xf32>,
    } else {
    }
    %c0 = arith.constant 0 : index
    %c0_1 = arith.constant 0 : index
    %3 = vector.load %arg2[%c0, %c0_1] : memref<16x256xf32, #tpu.memory_space<vmem>>, vector<16x256xf32>
    %c0_2 = arith.constant 0 : index
    %c0_3 = arith.constant 0 : index
    %4 = vector.load %arg3[%c0_2, %c0_3] : memref<256x512xf32, #tpu.memory_space<vmem>>, vector<256x512xf32>
    %cst = arith.constant dense<0.000000e+00> : vector<16x512xf32>
    %5 = tpu.matmul %3, %4, %cst {dimension_numbers = #tpu.dot_dimension_numbers<[1], [0], [0], [1], [0, 0, 1, 1], [], []>} : vector<16x256xf32>, vector<256x512xf32>, vector<16x512xf32> -> vector<16x512xf32>
    %c0_4 = arith.constant 0 : index
    %c0_5 = arith.constant 0 : index
    %6 = vector.load %arg4[%c0_4, %c0_5] : memref<1x512xf32, #tpu.memory_space<vmem>>, vector<1x512xf32>
    %7 = vector.broadcast %6 : vector<1x512xf32> to vector<16x512xf32>
    %8 = arith.addf %5, %7 : vector<16x512xf32>
    %cst_6 = arith.constant 0.000000e+00 : f32
    %9 = vector.broadcast %cst_6 : f32 to vector<16x512xf32>
    %10 = arith.maximumf %8, %9 : vector<16x512xf32>
    %c0_7 = arith.constant 0 : index
    %c0_8 = arith.constant 0 : index
    %11 = vector.load %arg10[%c0_7, %c0_8] : memref<16x256xf32, #tpu.memory_space<vmem>>, vector<16x256xf32>
    %c0_9 = arith.constant 0 : index
    %c0_10 = arith.constant 0 : index
    %12 = vector.load %arg5[%c0_9, %c0_10] : memref<512x256xf32, #tpu.memory_space<vmem>>, vector<512x256xf32>
    %cst_11 = arith.constant dense<0.000000e+00> : vector<16x256xf32>
    %13 = tpu.matmul %10, %12, %cst_11 {dimension_numbers = #tpu.dot_dimension_numbers<[1], [0], [0], [1], [0, 0, 1, 1], [], []>} : vector<16x512xf32>, vector<512x256xf32>, vector<16x256xf32> -> vector<16x256xf32>
    %14 = arith.addf %11, %13 : vector<16x256xf32>
    %c0_12 = arith.constant 0 : index
    %c0_13 = arith.constant 0 : index
    %15 = vector.load %arg10[%c0_12, %c0_13] : memref<16x256xf32, #tpu.memory_space<vmem>>, vector<16x256xf32>
    tpu.vector_store %arg10[%c0_12, %c0_13], %14 {strides = array<i32>} : memref<16x256xf32, #tpu.memory_space<vmem>>, vector<16x256xf32>,
    %c0_i32_14 = arith.constant 0 : i32
    %16 = arith.cmpi eq, %arg1, %c0_i32_14 : i32
    %17 = arith.extui %16 : i1 to i32
    %c0_i32_15 = arith.constant 0 : i32
    %18 = arith.cmpi ne, %17, %c0_i32_15 : i32
    scf.if %18 {
      %c0_16 = arith.constant 0 : index
      %c0_17 = arith.constant 0 : index
      %19 = vector.load %arg10[%c0_16, %c0_17] : memref<16x256xf32, #tpu.memory_space<vmem>>, vector<16x256xf32>
      %c0_18 = arith.constant 0 : index
      %c0_19 = arith.constant 0 : index
      %20 = vector.load %arg6[%c0_18, %c0_19] : memref<1x256xf32, #tpu.memory_space<vmem>>, vector<1x256xf32>
      %21 = vector.broadcast %20 : vector<1x256xf32> to vector<16x256xf32>
      %22 = arith.addf %19, %21 : vector<16x256xf32>
      %c0_20 = arith.constant 0 : index
      %c0_21 = arith.constant 0 : index
      %23 = vector.load %arg2[%c0_20, %c0_21] : memref<16x256xf32, #tpu.memory_space<vmem>>, vector<16x256xf32>
      %24 = arith.addf %22, %23 : vector<16x256xf32>
      %c0_22 = arith.constant 0 : index
      %c0_23 = arith.constant 0 : index
      %25 = vector.load %arg7[%c0_22, %c0_23] : memref<1x256xf32, #tpu.memory_space<vmem>>, vector<1x256xf32>
      %c0_24 = arith.constant 0 : index
      %c0_25 = arith.constant 0 : index
      %26 = vector.load %arg8[%c0_24, %c0_25] : memref<1x256xf32, #tpu.memory_space<vmem>>, vector<1x256xf32>
      %cst_26 = arith.constant dense<0.000000e+00> : vector<16xf32>
      %27 = vector.multi_reduction <add>, %24, %cst_26 [1] : vector<16x256xf32> to vector<16xf32>
      %28 = vector.shape_cast %27 : vector<16xf32> to vector<16x1xf32>
      %cst_27 = arith.constant 2.560000e+02 : f32
      %29 = vector.broadcast %cst_27 : f32 to vector<16x1xf32>
      %30 = arith.divf %28, %29 : vector<16x1xf32>
      %31 = vector.broadcast %30 : vector<16x1xf32> to vector<16x256xf32>
      %32 = arith.subf %24, %31 : vector<16x256xf32>
      %33 = arith.mulf %32, %32 : vector<16x256xf32>
      %cst_28 = arith.constant dense<0.000000e+00> : vector<16xf32>
      %34 = vector.multi_reduction <add>, %33, %cst_28 [1] : vector<16x256xf32> to vector<16xf32>
      %35 = vector.shape_cast %34 : vector<16xf32> to vector<16x1xf32>
      %cst_29 = arith.constant 2.560000e+02 : f32
      %36 = vector.broadcast %cst_29 : f32 to vector<16x1xf32>
      %37 = arith.divf %35, %36 : vector<16x1xf32>
      %cst_30 = arith.constant 9.99999974E-6 : f32
      %38 = vector.broadcast %cst_30 : f32 to vector<16x1xf32>
      %39 = arith.addf %37, %38 : vector<16x1xf32>
      %40 = math.rsqrt %39 : vector<16x1xf32>
      %41 = vector.broadcast %40 : vector<16x1xf32> to vector<16x256xf32>
      %42 = arith.mulf %32, %41 : vector<16x256xf32>
      %43 = vector.broadcast %25 : vector<1x256xf32> to vector<16x256xf32>
      %44 = arith.mulf %42, %43 : vector<16x256xf32>
      %45 = vector.broadcast %26 : vector<1x256xf32> to vector<16x256xf32>
      %46 = arith.addf %44, %45 : vector<16x256xf32>
      %c0_31 = arith.constant 0 : index
      %c0_32 = arith.constant 0 : index
      %47 = vector.load %arg9[%c0_31, %c0_32] : memref<16x256xf32, #tpu.memory_space<vmem>>, vector<16x256xf32>
      tpu.vector_store %arg9[%c0_31, %c0_32], %46 {strides = array<i32>} : memref<16x256xf32, #tpu.memory_space<vmem>>, vector<16x256xf32>,
    } else {
    }
    return
  }
  func.func @transform_0(%arg0: i32, %arg1: i32) -> (i32, i32) {
    %c0_i32 = arith.constant 0 : i32
    %c0_i32_0 = arith.constant 0 : i32
    return %arg0, %c0_i32 : i32, i32
  }
  func.func @transform_1(%arg0: i32, %arg1: i32) -> (i32, i32) {
    %c0_i32 = arith.constant 0 : i32
    %c0_i32_0 = arith.constant 0 : i32
    return %c0_i32, %arg1 : i32, i32
  }
  func.func @transform_2(%arg0: i32, %arg1: i32) -> (i32, i32) {
    %c0_i32 = arith.constant 0 : i32
    %c0_i32_0 = arith.constant 0 : i32
    return %c0_i32, %arg1 : i32, i32
  }
  func.func @transform_3(%arg0: i32, %arg1: i32) -> (i32, i32) {
    %c0_i32 = arith.constant 0 : i32
    %c0_i32_0 = arith.constant 0 : i32
    return %arg1, %c0_i32 : i32, i32
  }
  func.func @transform_4(%arg0: i32, %arg1: i32) -> (i32, i32) {
    %c0_i32 = arith.constant 0 : i32
    %c0_i32_0 = arith.constant 0 : i32
    %c0_i32_1 = arith.constant 0 : i32
    return %c0_i32, %c0_i32_0 : i32, i32
  }
  func.func @transform_5(%arg0: i32, %arg1: i32) -> (i32, i32) {
    %c0_i32 = arith.constant 0 : i32
    %c0_i32_0 = arith.constant 0 : i32
    %c0_i32_1 = arith.constant 0 : i32
    return %c0_i32, %c0_i32_0 : i32, i32
  }
  func.func @transform_6(%arg0: i32, %arg1: i32) -> (i32, i32) {
    %c0_i32 = arith.constant 0 : i32
    %c0_i32_0 = arith.constant 0 : i32
    %c0_i32_1 = arith.constant 0 : i32
    return %c0_i32, %c0_i32_0 : i32, i32
  }
  func.func @transform_7(%arg0: i32, %arg1: i32) -> (i32, i32) {
    %c0_i32 = arith.constant 0 : i32
    %c0_i32_0 = arith.constant 0 : i32
    return %arg0, %c0_i32 : i32, i32
  }
}

</mosaic_0001>

<llo_original>
// kernel: _lambda_.17
$region0: #{_lambda_.17}
  #allocation0 [shape = 'u32[]', space=smem, size = 0x4, offset = 0x4, fixed_abs, tag = 'smem constant byte address 0x4 - core index']
  #allocation1 [shape = 'u32[144,128]{1,0:T(1,128)}', space=vmem, size = 0x12000, scoped, tag = 'internal scratch']
  #allocation2 [shape = 'f32[8,1]{1,0:T(8,128)}', space=vmem, size = 0x1000, scoped, tag = 'scratch operand']
  #allocation3 [shape = 'f32[8,1]{1,0:T(8,128)}', space=vmem, size = 0x1000, scoped, tag = 'scratch operand']
  #allocation4 [shape = 'f32[8,128]{1,0:T(8,128)}', space=vmem, size = 0x1000, scoped, tag = 'scratch operand']
  %s0 = inlined_call_operand.vmem [shape: f32[2,8,768], index: 0, kind: input, shape index: {}, may-alias: {0,1,2}]
  %s1 = inlined_call_operand.vmem [shape: f32[2,8,768], index: 1, kind: input, shape index: {}, may-alias: {0,1,2}]
  %s2 = inlined_call_operand.vmem [shape: f32[2,8,768], index: 2, kind: input, shape index: {}, may-alias: {0,1,2}]
  %s3 = inlined_call_operand.vmem [shape: f32[2,8,256], index: 3, kind: output, shape index: {}]
  %s4 = sld [smem:[#allocation0]]
  $region57: #{_lambda_.17} parent=0
    _
  %s6 = ssub.s32 1, %s4
  %s7 = scalar_select 0, %s6, %s4
  loop: start=0, step=1, limit=6
  $region2: #{_lambda_.17} parent=0 // loop_pre_header
    _
  $region3: #{_lambda_.17} parent=0 // loop_header
    %s9 = sphi 0, %s13
    %p10 = scmp.ge.s32.totalorder %s9, 6
    %s16 = sphi 0, %s42
    %s17 = sphi 0, %s38
    %s18 = sphi 0, %s34
    %s19 = sphi 0, %s30
    %s20 = sphi 0, %s16
    %s21 = sphi 0, %s17
    %s22 = sphi 0, %s18
    %s23 = sphi 0, %s19
    %s24 = sphi 0, %s20
    %s25 = sphi 0, %s21
    %s26 = sphi 0, %s22
    %s27 = sphi 0, %s23
    %s49 = sphi 0, %s51
    %s52 = sphi 0, %s49
    %s53 = sphi 0, %s52
    %s69 = sphi 0, %s53
    %s81 = sphi 0, %s83
    %s84 = sphi 0, %s81
    %s85 = sphi 0, %s84
    %s101 = sphi 0, %s85
    %s113 = sphi 0, %s115
    %s116 = sphi 0, %s113
    %s117 = sphi 0, %s116
    %s133 = sphi 0, %s117
    %s143 = sphi 0, %s145
    %s146 = sphi 0, %s143
    %s147 = sphi 0, %s146
    %s163 = sphi 0, %s147
  $region4: #{_lambda_.17} parent=0 // loop_header_branch
    %12 = sbr.rel (%p10) target = $region8
  $region5: #{_lambda_.17} parent=0 // loop_body
    %s14 = ssub.s32 %s9, 1
    %s15 = ssub.s32 %s9, 2
    %s28 = sadd.s32 1, %s19
    %p29 = scmp.ge.s32.totalorder %s28, 1
    %s30 = scalar_select %p29, 0, %s28
    %s31 = sadd.s32 1, %s18
    %s32 = scalar_select %p29, %s31, %s18
    %p33 = scmp.ge.s32.totalorder %s32, 1
    %s34 = scalar_select %p33, 0, %s32
    %s35 = sadd.s32 1, %s17
    %s36 = scalar_select %p33, %s35, %s17
    %p37 = scmp.ge.s32.totalorder %s36, 2
    %s38 = scalar_select %p37, 0, %s36
    %s39 = sadd.s32 1, %s16
    %s40 = scalar_select %p37, %s39, %s16
    %p41 = scmp.ge.s32.totalorder %s40, 2
    %s42 = scalar_select %p41, 0, %s40
    %s43 = ssub.s32 %s16, %s42
    %s44 = ssub.s32 %s18, %s34
    %s45 = sor.u32 %s43, %s44
    %s46 = ssub.s32 %s17, %s38
    %s47 = sor.u32 %s45, %s46
    %p48 = scmp.eq.s32.totalorder %s47, 0
    %s50 = sadd.s32 %s49, 1
    %s51 = scalar_select %p48, %s49, %s50
    %p54 = pneg %p48
    %p55 = scmp.eq.s32.totalorder %s9, 3
    %p56 = por %p54, %p55
    %p57 = scmp.ne.s32.totalorder %s49, %s52
    %p58 = scmp.eq.s32.totalorder %s9, 0
    %p59 = por %p57, %p58
    %p60 = scmp.ne.s32.totalorder %s49, %s52
    %p61 = scmp.eq.s32.totalorder %s14, 3
    %p62 = por %p60, %p61
    %p63 = scmp.ne.s32.totalorder %s52, %s53
    %p64 = scmp.eq.s32.totalorder %s14, 0
    %p65 = por %p63, %p64
    %p66 = scmp.ne.s32.totalorder %s52, %s53
    %p67 = scmp.eq.s32.totalorder %s15, 3
    %p68 = por %p66, %p67
    %p70 = scmp.ne.s32.totalorder %s53, %s69
    %p71 = scmp.eq.s32.totalorder %s15, 0
    %p72 = por %p70, %p71
    %s73 = sadd.s32 %s17, 2
    %s74 = sadd.s32 %s38, 2
    %s75 = ssub.s32 %s16, %s42
    %s76 = ssub.s32 %s19, %s30
    %s77 = sor.u32 %s75, %s76
    %s78 = ssub.s32 %s73, %s74
    %s79 = sor.u32 %s77, %s78
    %p80 = scmp.eq.s32.totalorder %s79, 0
    %s82 = sadd.s32 %s81, 1
    %s83 = scalar_select %p80, %s81, %s82
    %p86 = pneg %p80
    %p87 = scmp.eq.s32.totalorder %s9, 3
    %p88 = por %p86, %p87
    %p89 = scmp.ne.s32.totalorder %s81, %s84
    %p90 = scmp.eq.s32.totalorder %s9, 0
    %p91 = por %p89, %p90
    %p92 = scmp.ne.s32.totalorder %s81, %s84
    %p93 = scmp.eq.s32.totalorder %s14, 3
    %p94 = por %p92, %p93
    %p95 = scmp.ne.s32.totalorder %s84, %s85
    %p96 = scmp.eq.s32.totalorder %s14, 0
    %p97 = por %p95, %p96
    %p98 = scmp.ne.s32.totalorder %s84, %s85
    %p99 = scmp.eq.s32.totalorder %s15, 3
    %p100 = por %p98, %p99
    %p102 = scmp.ne.s32.totalorder %s85, %s101
    %p103 = scmp.eq.s32.totalorder %s15, 0
    %p104 = por %p102, %p103
    %s105 = sadd.s32 %s17, 4
    %s106 = sadd.s32 %s38, 4
    %s107 = ssub.s32 %s16, %s42
    %s108 = ssub.s32 %s19, %s30
    %s109 = sor.u32 %s107, %s108
    %s110 = ssub.s32 %s105, %s106
    %s111 = sor.u32 %s109, %s110
    %p112 = scmp.eq.s32.totalorder %s111, 0
    %s114 = sadd.s32 %s113, 1
    %s115 = scalar_select %p112, %s113, %s114
    %p118 = pneg %p112
    %p119 = scmp.eq.s32.totalorder %s9, 3
    %p120 = por %p118, %p119
    %p121 = scmp.ne.s32.totalorder %s113, %s116
    %p122 = scmp.eq.s32.totalorder %s9, 0
    %p123 = por %p121, %p122
    %p124 = scmp.ne.s32.totalorder %s113, %s116
    %p125 = scmp.eq.s32.totalorder %s14, 3
    %p126 = por %p124, %p125
    %p127 = scmp.ne.s32.totalorder %s116, %s117
    %p128 = scmp.eq.s32.totalorder %s14, 0
    %p129 = por %p127, %p128
    %p130 = scmp.ne.s32.totalorder %s116, %s117
    %p131 = scmp.eq.s32.totalorder %s15, 3
    %p132 = por %p130, %p131
    %p134 = scmp.ne.s32.totalorder %s117, %s133
    %p135 = scmp.eq.s32.totalorder %s15, 0
    %p136 = por %p134, %p135
    %s137 = ssub.s32 %s16, %s42
    %s138 = ssub.s32 %s18, %s34
    %s139 = sor.u32 %s137, %s138
    %s140 = ssub.s32 %s17, %s38
    %s141 = sor.u32 %s139, %s140
    %p142 = scmp.eq.s32.totalorder %s141, 0
    %s144 = sadd.s32 %s143, 1
    %s145 = scalar_select %p142, %s143, %s144
    %p148 = pneg %p142
    %p149 = scmp.eq.s32.totalorder %s9, 3
    %p150 = por %p148, %p149
    %p151 = scmp.ne.s32.totalorder %s143, %s146
    %p152 = scmp.eq.s32.totalorder %s9, 0
    %p153 = por %p151, %p152
    %p154 = scmp.ne.s32.totalorder %s143, %s146
    %p155 = scmp.eq.s32.totalorder %s14, 3
    %p156 = por %p154, %p155
    %p157 = scmp.ne.s32.totalorder %s146, %s147
    %p158 = scmp.eq.s32.totalorder %s14, 0
    %p159 = por %p157, %p158
    %p160 = scmp.ne.s32.totalorder %s146, %s147
    %p161 = scmp.eq.s32.totalorder %s15, 3
    %p162 = por %p160, %p161
    %p164 = scmp.ne.s32.totalorder %s147, %s163
    %p165 = scmp.eq.s32.totalorder %s15, 0
    %p166 = por %p164, %p165
    %p167 = scmp.le.s32.totalorder 1, %s9
    %p168 = scmp.lt.s32.totalorder %s9, 5
    %p169 = pnand %p167, %p168
    %p170 = pneg %p169
    // Predicated region
    $region9: #{_lambda_.17} parent=5 // pred_check
      _
    $region10: #{_lambda_.17} parent=5 // pred_check_branch
      %172 = sbr.rel (%p169) target = $region12
    $region11: #{_lambda_.17} parent=5 // pred_region
      %s173 = ssub.s32 %s9, 1
    $region12: #{_lambda_.17} parent=5 // pred_fallthru
      _
    %p174 = scmp.lt.s32.totalorder %s9, 4
    // Predicated region
    $region13: #{_lambda_.17} parent=5 // pred_check
      %p175 = pneg %p174
    $region14: #{_lambda_.17} parent=5 // pred_check_branch
      %177 = sbr.rel (%p175) target = $region16
    $region15: #{_lambda_.17} parent=5 // pred_region
      // Predicated region
      $region17: #{_lambda_.17} parent=15 // pred_check
        %p178 = pneg %p59
      $region18: #{_lambda_.17} parent=15 // pred_check_branch
        %180 = sbr.rel (%p178) target = $region20
      $region19: #{_lambda_.17} parent=15 // pred_region
        %p181 = scmp.lt.s32.totalorder %s16, 1
        %s182 = scalar_select %p181, %s16, 1
        %p183 = scmp.lt.s32.totalorder %s18, 0
        %s184 = scalar_select %p183, %s18, 0
        %p185 = scmp.lt.s32.totalorder %s17, 5
        %s186 = scalar_select %p185, %s17, 5
        %s187 = smul.addr %s184, 6
        %s188 = sadd.s32 %s186, %s187
        %s189 = smul.addr %s182, 6
        %s190 = sadd.s32 %s188, %s189
        %s191 = smul.addr %s190, 8
        %s192 = scalar_lea.vmem %s0, %s191
      $region20: #{_lambda_.17} parent=15 // pred_fallthru
        _
      // Predicated region
      $region21: #{_lambda_.17} parent=15 // pred_check
        %p193 = pneg %p91
      $region22: #{_lambda_.17} parent=15 // pred_check_branch
        %195 = sbr.rel (%p193) target = $region24
      $region23: #{_lambda_.17} parent=15 // pred_region
        %s196 = sadd.s32 %s17, 2
        %p197 = scmp.lt.s32.totalorder %s16, 1
        %s198 = scalar_select %p197, %s16, 1
        %p199 = scmp.lt.s32.totalorder %s19, 0
        %s200 = scalar_select %p199, %s19, 0
        %p201 = scmp.lt.s32.totalorder %s196, 5
        %s202 = scalar_select %p201, %s196, 5
        %s203 = smul.addr %s200, 6
        %s204 = sadd.s32 %s202, %s203
        %s205 = smul.addr %s198, 6
        %s206 = sadd.s32 %s204, %s205
        %s207 = smul.addr %s206, 8
        %s208 = scalar_lea.vmem %s1, %s207
        %s209 = sadd.s32 %s17, 2
      $region24: #{_lambda_.17} parent=15 // pred_fallthru
        _
      // Predicated region
      $region25: #{_lambda_.17} parent=15 // pred_check
        %p210 = pneg %p123
      $region26: #{_lambda_.17} parent=15 // pred_check_branch
        %212 = sbr.rel (%p210) target = $region28
      $region27: #{_lambda_.17} parent=15 // pred_region
        %s213 = sadd.s32 %s17, 4
        %p214 = scmp.lt.s32.totalorder %s16, 1
        %s215 = scalar_select %p214, %s16, 1
        %p216 = scmp.lt.s32.totalorder %s19, 0
        %s217 = scalar_select %p216, %s19, 0
        %p218 = scmp.lt.s32.totalorder %s213, 5
        %s219 = scalar_select %p218, %s213, 5
        %s220 = smul.addr %s217, 6
        %s221 = sadd.s32 %s219, %s220
        %s222 = smul.addr %s215, 6
        %s223 = sadd.s32 %s221, %s222
        %s224 = smul.addr %s223, 8
        %s225 = scalar_lea.vmem %s2, %s224
        %s226 = sadd.s32 %s17, 4
      $region28: #{_lambda_.17} parent=15 // pred_fallthru
        _
    $region16: #{_lambda_.17} parent=5 // pred_fallthru
      _
    %p227 = scmp.le.s32.totalorder 1, %s9
    %p228 = scmp.lt.s32.totalorder %s9, 5
    %p229 = pnand %p227, %p228
    %p230 = pneg %p229
    // Predicated region
    $region29: #{_lambda_.17} parent=5 // pred_check
      _
    $region30: #{_lambda_.17} parent=5 // pred_check_branch
      %232 = sbr.rel (%p229) target = $region32
    $region31: #{_lambda_.17} parent=5 // pred_region
      %s233 = ssub.s32 %s9, 1
      %p234 = scmp.lt.s32.totalorder %s20, 1
      %s235 = scalar_select %p234, %s20, 1
      %p236 = scmp.lt.s32.totalorder %s22, 0
      %s237 = scalar_select %p236, %s22, 0
      %p238 = scmp.lt.s32.totalorder %s21, 5
      %s239 = scalar_select %p238, %s21, 5
      %s240 = smul.addr %s237, 6
      %s241 = sadd.s32 %s239, %s240
      %s242 = smul.addr %s235, 6
      %s243 = sadd.s32 %s241, %s242
      %s244 = smul.addr %s243, 8
      %s245 = scalar_lea.vmem %s0, %s244
      %p246 = pneg %p65
      %p247 = pneg %p62
      %s248 = sadd.s32 %s21, 2
      %p249 = scmp.lt.s32.totalorder %s20, 1
      %s250 = scalar_select %p249, %s20, 1
      %p251 = scmp.lt.s32.totalorder %s23, 0
      %s252 = scalar_select %p251, %s23, 0
      %p253 = scmp.lt.s32.totalorder %s248, 5
      %s254 = scalar_select %p253, %s248, 5
      %s255 = smul.addr %s252, 6
      %s256 = sadd.s32 %s254, %s255
      %s257 = smul.addr %s250, 6
      %s258 = sadd.s32 %s256, %s257
      %s259 = smul.addr %s258, 8
      %s260 = scalar_lea.vmem %s1, %s259
      %p261 = pneg %p97
      %p262 = pneg %p94
      %s263 = sadd.s32 %s21, 4
      %p264 = scmp.lt.s32.totalorder %s20, 1
      %s265 = scalar_select %p264, %s20, 1
      %p266 = scmp.lt.s32.totalorder %s23, 0
      %s267 = scalar_select %p266, %s23, 0
      %p268 = scmp.lt.s32.totalorder %s263, 5
      %s269 = scalar_select %p268, %s263, 5
      %s270 = smul.addr %s267, 6
      %s271 = sadd.s32 %s269, %s270
      %s272 = smul.addr %s265, 6
      %s273 = sadd.s32 %s271, %s272
      %s274 = smul.addr %s273, 8
      %s275 = scalar_lea.vmem %s2, %s274
      %p276 = pneg %p129
      %p277 = pneg %p126
      %p278 = pneg %p159
      %p279 = pneg %p156
      %p280 = scmp.lt.s32.totalorder %s20, 1
      %s281 = scalar_select %p280, %s20, 1
      %p282 = scmp.lt.s32.totalorder %s22, 0
      %s283 = scalar_select %p282, %s22, 0
      %p284 = scmp.lt.s32.totalorder %s21, 1
      %s285 = scalar_select %p284, %s21, 1
      %s286 = smul.addr %s283, 2
      %s287 = sadd.s32 %s285, %s286
      %s288 = smul.addr %s281, 2
      %s289 = sadd.s32 %s287, %s288
      %s290 = smul.addr %s289, 8
      %s291 = scalar_lea.vmem %s3, %s290
      %p292 = scmp.lt.s32.totalorder %s20, 1
      %s293 = scalar_select %p292, %s20, 1
      %p294 = scmp.lt.s32.totalorder %s22, 0
      %s295 = scalar_select %p294, %s22, 0
      %p296 = scmp.lt.s32.totalorder %s21, 5
      %s297 = scalar_select %p296, %s21, 5
      %s298 = smul.addr %s295, 6
      %s299 = sadd.s32 %s297, %s298
      %s300 = smul.addr %s293, 6
      %s301 = sadd.s32 %s299, %s300
      %s302 = smul.addr %s301, 8
      %s303 = scalar_lea.vmem %s0, %s302
      %s304 = sadd.s32 %s21, 2
      %p305 = scmp.lt.s32.totalorder %s20, 1
      %s306 = scalar_select %p305, %s20, 1
      %p307 = scmp.lt.s32.totalorder %s23, 0
      %s308 = scalar_select %p307, %s23, 0
      %p309 = scmp.lt.s32.totalorder %s304, 5
      %s310 = scalar_select %p309, %s304, 5
      %s311 = smul.addr %s308, 6
      %s312 = sadd.s32 %s310, %s311
      %s313 = smul.addr %s306, 6
      %s314 = sadd.s32 %s312, %s313
      %s315 = smul.addr %s314, 8
      %s316 = scalar_lea.vmem %s1, %s315
      %s317 = sadd.s32 %s21, 2
      %s318 = sadd.s32 %s21, 4
      %p319 = scmp.lt.s32.totalorder %s20, 1
      %s320 = scalar_select %p319, %s20, 1
      %p321 = scmp.lt.s32.totalorder %s23, 0
      %s322 = scalar_select %p321, %s23, 0
      %p323 = scmp.lt.s32.totalorder %s318, 5
      %s324 = scalar_select %p323, %s318, 5
      %s325 = smul.addr %s322, 6
      %s326 = sadd.s32 %s324, %s325
      %s327 = smul.addr %s320, 6
      %s328 = sadd.s32 %s326, %s327
      %s329 = smul.addr %s328, 8
      %s330 = scalar_lea.vmem %s2, %s329
      %s331 = sadd.s32 %s21, 4
      %p332 = scmp.lt.s32.totalorder %s20, 1
      %s333 = scalar_select %p332, %s20, 1
      %p334 = scmp.lt.s32.totalorder %s22, 0
      %s335 = scalar_select %p334, %s22, 0
      %p336 = scmp.lt.s32.totalorder %s21, 1
      %s337 = scalar_select %p336, %s21, 1
      %s338 = smul.addr %s335, 2
      %s339 = sadd.s32 %s337, %s338
      %s340 = smul.addr %s333, 2
      %s341 = sadd.s32 %s339, %s340
      %s342 = smul.addr %s341, 8
      %s343 = scalar_lea.vmem %s3, %s342
      %p344 = scmp.eq.s32.totalorder %s23, 0
      // Predicated region
      $region33: #{_lambda_.17} parent=31 // pred_check
        %p345 = pneg %p344
      $region34: #{_lambda_.17} parent=31 // pred_check_branch
        %347 = sbr.rel (%p345) target = $region36
      $region35: #{_lambda_.17} parent=31 // pred_region
        %vm348 = vcmask 7168
        %349 = vst.msk [vmem:[#allocation2] sm:$0xff] %vm348, -inf
        %350 = vst.msk [vmem:[#allocation3] sm:$0xff] %vm348, 0.0
        %351 = vst [vmem:[#allocation4] sm:$0xff] 0.0
      $region36: #{_lambda_.17} parent=31 // pred_fallthru
        _
      %s352 = smul.u32 %s23, 8
      %s353 = smul.u32 %s22, 8
      %s354 = sadd.s32 %s353, 7
      %p355 = scmp.le.s32.totalorder %s352, %s354
      // Predicated region
      $region37: #{_lambda_.17} parent=31 // pred_check
        %p356 = pneg %p355
      $region38: #{_lambda_.17} parent=31 // pred_check_branch
        %358 = sbr.rel (%p356) target = $region40
      $region39: #{_lambda_.17} parent=31 // pred_region
        %v359 = vld [vmem:[%s303] sm:$0xff]
        %v360 = vld [vmem:[%s316] sm:$0xff]
        %361 = vmatprep.subr.mxu0 0.0
        %362 = vmatpush1.xpose.msra.mxu0 %v360
        %363 = vmatprep.subr.mxu0 0.0
        %364 = vmatpush1.xpose.msra.mxu0 0.0
        %365 = vmatprep.subr.mxu0 0.0
        %366 = vmatpush1.xpose.msra.mxu0 0.0
        %367 = vmatprep.subr.mxu0 0.0
        %368 = vmatpush1.xpose.msra.mxu0 0.0
        %369 = vmatprep.subr.mxu0 0.0
        %370 = vmatpush1.xpose.msra.mxu0 0.0
        %371 = vmatprep.subr.mxu0 0.0
        %372 = vmatpush1.xpose.msra.mxu0 0.0
        %373 = vmatprep.subr.mxu0 0.0
        %374 = vmatpush1.xpose.msra.mxu0 0.0
        %375 = vmatprep.subr.mxu0 0.0
        %376 = vmatpush1.xpose.msra.mxu0 0.0
        %377 = vmatprep.subr.mxu0 0.0
        %378 = vmatpush1.xpose.msra.mxu0 0.0
        %379 = vmatprep.subr.mxu0 0.0
        %380 = vmatpush1.xpose.msra.mxu0 0.0
        %381 = vmatprep.subr.mxu0 0.0
        %382 = vmatpush1.xpose.msra.mxu0 0.0
        %383 = vmatprep.subr.mxu0 0.0
        %384 = vmatpush1.xpose.msra.mxu0 0.0
        %385 = vmatprep.subr.mxu0 0.0
        %386 = vmatpush1.xpose.msra.mxu0 0.0
        %387 = vmatprep.subr.mxu0 0.0
        %388 = vmatpush1.xpose.msra.mxu0 0.0
        %389 = vmatprep.subr.mxu0 0.0
        %390 = vmatpush1.xpose.msra.mxu0 0.0
        %391 = vmatprep.subr.mxu0 0.0
        %392 = vmatpush1.xpose.msra.mxu0 0.0
        %393 = vmatprep.subr.mxu0 0.0
        %394 = vmatpush1.xpose.msra.mxu0 0.0
        %395 = vmatprep.subr.mxu0 0.0
        %396 = vmatpush1.xpose.msra.mxu0 0.0
        %397 = vmatprep.subr.mxu0 0.0
        %398 = vmatpush1.xpose.msra.mxu0 0.0
        %399 = vmatprep.subr.mxu0 0.0
        %400 = vmatpush1.xpose.msra.mxu0 0.0
        %401 = vmatprep.subr.mxu0 0.0
        %402 = vmatpush1.xpose.msra.mxu0 0.0
        %403 = vmatprep.subr.mxu0 0.0
        %404 = vmatpush1.xpose.msra.mxu0 0.0
        %405 = vmatprep.subr.mxu0 0.0
        %406 = vmatpush1.xpose.msra.mxu0 0.0
        %407 = vmatprep.subr.mxu0 0.0
        %408 = vmatpush1.xpose.msra.mxu0 0.0
        %409 = vmatprep.subr.mxu0 0.0
        %410 = vmatpush1.xpose.msra.mxu0 0.0
        %411 = vmatprep.subr.mxu0 0.0
        %412 = vmatpush1.xpose.msra.mxu0 0.0
        %413 = vmatprep.subr.mxu0 0.0
        %414 = vmatpush1.xpose.msra.mxu0 0.0
        %415 = vmatprep.subr.mxu0 0.0
        %416 = vmatpush1.xpose.msra.mxu0 0.0
        %417 = vmatprep.subr.mxu0 0.0
        %418 = vmatpush1.xpose.msra.mxu0 0.0
        %419 = vmatprep.subr.mxu0 0.0
        %420 = vmatpush1.xpose.msra.mxu0 0.0
        %421 = vmatprep.subr.mxu0 0.0
        %422 = vmatpush1.xpose.msra.mxu0 0.0
        %423 = vmatprep.subr.mxu0 0.0
        %424 = vmatpush1.xpose.msra.mxu0 0.0
        %425 = vmatprep.mubr.f32.mxu0 0.0
        %426 = vmatmul.mubr.f32.gmra.mrb[0].mxu0 %v359
        %v427 = vpop.f32.mrb[0].mxu0
        %v428 = vadd.f32 0.0, %v427
        %v429 = vpop.f32.mrb[0].mxu0
        %430 = vdwg.mxu0
        %v431 = vmul.f32 %v428, 0.088388346
        %v432 = vlaneseq
        %v433 = vshrl.u32 %v432, 7
        %v434 = vstv %s353
        %v435 = vadd.s32 %v434, %v433
        %v436 = vlaneseq
        %v437 = vand.u32 %v436, 127
        %v438 = vstv %s352
        %v439 = vadd.s32 %v438, %v437
        %vm440 = vcmp.le.s32.totalorder %v439, %v435
        %v441 = vsel %vm440, %v431, -1e+30
        %v442 = vld [vmem:[#allocation2] sm:$0xff]
        %vm443 = vcmask 64512
        %v444 = vsel %vm443, %v441, -inf
        %445 = vmax.xlane.f32.xlu0 %v444
        %v446 = vpop.xlane.xlu0 %445
        %v447 = vmax.f32 %v442, %v446
        %v448 = vsub.f32 %v442, %v447
        %v449 = vmul.f32 %v448, 1.442695
        %v450 = vpow.pop %v449
        %452 = vset.pattern.permute.xlu0 0
        %453 = vperm.xlu0 %452, %v447
        %v454 = vpop.permute.xlu0 %453
        %v456 = vsub.f32 %v441, %v454
        %v457 = vmul.f32 %v456, 1.442695
        %v458 = vpow.pop %v457
        %v459 = vld [vmem:[#allocation3] sm:$0xff]
        %v460 = vmul.f32 %v450, %v459
        %v461 = vsel %vm443, %v458, 0.0
        %462 = vadd.xlane.f32.xlu0 %v461
        %v463 = vpop.xlane.xlu0 %462
        %v464 = vadd.f32 %v460, %v463
        %vm465 = vcmask 7168
        %466 = vst.msk [vmem:[#allocation3] sm:$0xff] %vm465, %v464
        %v467 = vld [vmem:[#allocation4] sm:$0xff]
        %469 = vset.pattern.permute.xlu0 0
        %470 = vperm.xlu0 %469, %v450
        %v471 = vpop.permute.xlu0 %470
        %v473 = vmul.f32 %v471, %v467
        %v474 = vld [vmem:[%s330] sm:$0xff]
        %v476 = vsel %vm443, %v458, 0
        %478 = vmatprep.subr.mxu0 0.0
        %479 = vmatpush1.msra.mxu0 %v474
        %480 = vmatprep.subr.mxu0 0.0
        %481 = vmatpush1.msra.mxu0 0.0
        %482 = vmatprep.subr.mxu0 0.0
        %483 = vmatpush1.msra.mxu0 0.0
        %484 = vmatprep.subr.mxu0 0.0
        %485 = vmatpush1.msra.mxu0 0.0
        %486 = vmatprep.subr.mxu0 0.0
        %487 = vmatpush1.msra.mxu0 0.0
        %488 = vmatprep.subr.mxu0 0.0
        %489 = vmatpush1.msra.mxu0 0.0
        %490 = vmatprep.subr.mxu0 0.0
        %491 = vmatpush1.msra.mxu0 0.0
        %492 = vmatprep.subr.mxu0 0.0
        %493 = vmatpush1.msra.mxu0 0.0
        %494 = vmatprep.subr.mxu0 0.0
        %495 = vmatpush1.msra.mxu0 0.0
        %496 = vmatprep.subr.mxu0 0.0
        %497 = vmatpush1.msra.mxu0 0.0
        %498 = vmatprep.subr.mxu0 0.0
        %499 = vmatpush1.msra.mxu0 0.0
        %500 = vmatprep.subr.mxu0 0.0
        %501 = vmatpush1.msra.mxu0 0.0
        %502 = vmatprep.subr.mxu0 0.0
        %503 = vmatpush1.msra.mxu0 0.0
        %504 = vmatprep.subr.mxu0 0.0
        %505 = vmatpush1.msra.mxu0 0.0
        %506 = vmatprep.subr.mxu0 0.0
        %507 = vmatpush1.msra.mxu0 0.0
        %508 = vmatprep.subr.mxu0 0.0
        %509 = vmatpush1.msra.mxu0 0.0
        %510 = vmatprep.subr.mxu0 0.0
        %511 = vmatpush1.msra.mxu0 0.0
        %512 = vmatprep.subr.mxu0 0.0
        %513 = vmatpush1.msra.mxu0 0.0
        %514 = vmatprep.subr.mxu0 0.0
        %515 = vmatpush1.msra.mxu0 0.0
        %516 = vmatprep.subr.mxu0 0.0
        %517 = vmatpush1.msra.mxu0 0.0
        %518 = vmatprep.subr.mxu0 0.0
        %519 = vmatpush1.msra.mxu0 0.0
        %520 = vmatprep.subr.mxu0 0.0
        %521 = vmatpush1.msra.mxu0 0.0
        %522 = vmatprep.subr.mxu0 0.0
        %523 = vmatpush1.msra.mxu0 0.0
        %524 = vmatprep.subr.mxu0 0.0
        %525 = vmatpush1.msra.mxu0 0.0
        %526 = vmatprep.subr.mxu0 0.0
        %527 = vmatpush1.msra.mxu0 0.0
        %528 = vmatprep.subr.mxu0 0.0
        %529 = vmatpush1.msra.mxu0 0.0
        %530 = vmatprep.subr.mxu0 0.0
        %531 = vmatpush1.msra.mxu0 0.0
        %532 = vmatprep.subr.mxu0 0.0
        %533 = vmatpush1.msra.mxu0 0.0
        %534 = vmatprep.subr.mxu0 0.0
        %535 = vmatpush1.msra.mxu0 0.0
        %536 = vmatprep.subr.mxu0 0.0
        %537 = vmatpush1.msra.mxu0 0.0
        %538 = vmatprep.subr.mxu0 0.0
        %539 = vmatpush1.msra.mxu0 0.0
        %540 = vmatprep.subr.mxu0 0.0
        %541 = vmatpush1.msra.mxu0 0.0
        %542 = vmatprep.mubr.f32.mxu0 0.0
        %543 = vmatmul.mubr.f32.gmra.mrb[0].mxu0 %v476
        %v544 = vpop.f32.mrb[0].mxu0
        %v545 = vadd.f32 0.0, %v544
        %v546 = vpop.f32.mrb[0].mxu0
        %547 = vdwg.mxu0
        %v548 = vadd.f32 %v473, %v545
        %549 = vst [vmem:[#allocation4] sm:$0xff] %v548
        %550 = vst.msk [vmem:[#allocation2] sm:$0xff] %vm465, %v447
      $region40: #{_lambda_.17} parent=31 // pred_fallthru
        _
      // Predicated region
      $region41: #{_lambda_.17} parent=31 // pred_check
        %p551 = pneg %p344
      $region42: #{_lambda_.17} parent=31 // pred_check_branch
        %553 = sbr.rel (%p551) target = $region44
      $region43: #{_lambda_.17} parent=31 // pred_region
        %v554 = vld [vmem:[#allocation3] sm:$0xff]
        %v555 = vrcp.pop %v554
        %v556 = vld [vmem:[#allocation4] sm:$0xff]
        %558 = vset.pattern.permute.xlu0 0
        %559 = vperm.xlu0 %558, %v555
        %v560 = vpop.permute.xlu0 %559
        %v562 = vmul.f32 %v556, %v560
        %563 = vst [vmem:[%s343] sm:$0xff] %v562
      $region44: #{_lambda_.17} parent=31 // pred_fallthru
        _
      %p564 = scmp.lt.s32.totalorder %s20, 1
      %s565 = scalar_select %p564, %s20, 1
      %p566 = scmp.lt.s32.totalorder %s22, 0
      %s567 = scalar_select %p566, %s22, 0
      %p568 = scmp.lt.s32.totalorder %s21, 1
      %s569 = scalar_select %p568, %s21, 1
      %s570 = smul.addr %s567, 2
      %s571 = sadd.s32 %s569, %s570
      %s572 = smul.addr %s565, 2
      %s573 = sadd.s32 %s571, %s572
      %s574 = smul.addr %s573, 8
      %s575 = scalar_lea.vmem %s3, %s574
      // Predicated region
      $region45: #{_lambda_.17} parent=31 // pred_check
        %p576 = pneg %p156
      $region46: #{_lambda_.17} parent=31 // pred_check_branch
        %578 = sbr.rel (%p576) target = $region48
      $region47: #{_lambda_.17} parent=31 // pred_region
        _
      $region48: #{_lambda_.17} parent=31 // pred_fallthru
        _
    $region32: #{_lambda_.17} parent=5 // pred_fallthru
      _
    %p579 = scmp.le.s32.totalorder 2, %s9
    // Predicated region
    $region49: #{_lambda_.17} parent=5 // pred_check
      %p580 = pneg %p579
    $region50: #{_lambda_.17} parent=5 // pred_check_branch
      %582 = sbr.rel (%p580) target = $region52
    $region51: #{_lambda_.17} parent=5 // pred_region
      %s583 = ssub.s32 %s9, 2
      // Predicated region
      $region53: #{_lambda_.17} parent=51 // pred_check
        %p584 = pneg %p162
      $region54: #{_lambda_.17} parent=51 // pred_check_branch
        %586 = sbr.rel (%p584) target = $region56
      $region55: #{_lambda_.17} parent=51 // pred_region
        %p587 = scmp.lt.s32.totalorder %s24, 1
        %s588 = scalar_select %p587, %s24, 1
        %p589 = scmp.lt.s32.totalorder %s26, 0
        %s590 = scalar_select %p589, %s26, 0
        %p591 = scmp.lt.s32.totalorder %s25, 1
        %s592 = scalar_select %p591, %s25, 1
        %s593 = smul.addr %s590, 2
        %s594 = sadd.s32 %s592, %s593
        %s595 = smul.addr %s588, 2
        %s596 = sadd.s32 %s594, %s595
        %s597 = smul.addr %s596, 8
        %s598 = scalar_lea.vmem %s3, %s597
      $region56: #{_lambda_.17} parent=51 // pred_fallthru
        _
    $region52: #{_lambda_.17} parent=5 // pred_fallthru
      _
  $region6: #{_lambda_.17} parent=0 // loop_footer
    %s13 = sadd.s32 1, %s9
  $region7: #{_lambda_.17} parent=0 // loop_footer_branch
    %8 = sbr.rel target = $region3
  $region8: #{_lambda_.17} parent=0 // loop_exit
    _

// kernel: _lambda_.16
$region0: #{_lambda_.16}
  #allocation0 [shape = 'u32[]', space=smem, size = 0x4, offset = 0x4, fixed_abs, tag = 'smem constant byte address 0x4 - core index']
  #allocation1 [shape = 'u32[144,128]{1,0:T(1,128)}', space=vmem, size = 0x12000, scoped, tag = 'internal scratch']
  #allocation2 [shape = 'f32[16,256]{1,0:T(8,128)}', space=vmem, size = 0x4000, scoped, tag = 'scratch operand']
  %s0 = inlined_call_operand.vmem [shape: f32[16,256], index: 0, kind: input, shape index: {}]
  %s1 = inlined_call_operand.hbm [shape: f32[256,768], index: 1, kind: input, shape index: {}]
  %s2 = inlined_call_operand.vmem [shape: f32[1,768], index: 2, kind: input, shape index: {}]
  %s3 = inlined_call_operand.vmem [shape: f32[16,768], index: 3, kind: output, shape index: {}]
  %s4 = sld [smem:[#allocation0]]
  $region76: #{_lambda_.16} parent=0
    _
  %s6 = ssub.s32 1, %s4
  %s7 = scalar_select 0, %s6, %s4
  $region1: #{_lambda_.16} parent=0
    #allocation3 [shape = 'u8[524288]{0}', space=vmem, size = 0x80000, scoped, tag = 'input window, operand 1']
    #allocation4 [shape = 's32[2]{0}', space=sflag, size = 0x8, scoped, tag = 'scoped memory for _lambda_.16']
    #allocation5 [shape = 'u8[32768]{0}', space=vmem, size = 0x8000, scoped, tag = 'output window, operand 0']
    %8 = vsyncpa [#allocation4], 0
    %s9 = scalar_lea.sflag [#allocation4], 1
    %10 = vsyncpa %s9, 0
    loop: start=0, step=1, limit=5
    $region2: #{_lambda_.16} parent=1 // loop_pre_header
      _
    $region3: #{_lambda_.16} parent=1 // loop_header
      %s12 = sphi 0, %s16
      %p13 = scmp.ge.s32.totalorder %s12, 5
      %s19 = sphi 0, %s38
      %s20 = sphi 0, %s34
      %s21 = sphi 0, %s30
      %s22 = sphi 0, %s19
      %s23 = sphi 0, %s20
      %s24 = sphi 0, %s21
      %s25 = sphi 0, %s22
      %s26 = sphi 0, %s23
      %s27 = sphi 0, %s24
      %s43 = sphi 0, %s45
      %s46 = sphi 0, %s43
      %s47 = sphi 0, %s46
      %s63 = sphi 0, %s47
      %s71 = sphi 0, %s73
      %s74 = sphi 0, %s71
      %s75 = sphi 0, %s74
      %s91 = sphi 0, %s75
      %s97 = sphi 0, %s99
      %s100 = sphi 0, %s97
      %s101 = sphi 0, %s100
      %s117 = sphi 0, %s101
      %s125 = sphi 0, %s127
      %s128 = sphi 0, %s125
      %s129 = sphi 0, %s128
      %s145 = sphi 0, %s129
    $region4: #{_lambda_.16} parent=1 // loop_header_branch
      %15 = sbr.rel (%p13) target = $region8
    $region5: #{_lambda_.16} parent=1 // loop_body
      %s17 = ssub.s32 %s12, 1
      %s18 = ssub.s32 %s12, 2
      %s28 = sadd.s32 1, %s21
      %p29 = scmp.ge.s32.totalorder %s28, 1
      %s30 = scalar_select %p29, 0, %s28
      %s31 = sadd.s32 1, %s20
      %s32 = scalar_select %p29, %s31, %s20
      %p33 = scmp.ge.s32.totalorder %s32, 3
      %s34 = scalar_select %p33, 0, %s32
      %s35 = sadd.s32 1, %s19
      %s36 = scalar_select %p33, %s35, %s19
      %p37 = scmp.ge.s32.totalorder %s36, 1
      %s38 = scalar_select %p37, 0, %s36
      %s39 = ssub.s32 %s19, %s38
      %s40 = ssub.s32 %s21, %s30
      %s41 = sor.u32 %s39, %s40
      %p42 = scmp.eq.s32.totalorder %s41, 0
      %s44 = sadd.s32 %s43, 1
      %s45 = scalar_select %p42, %s43, %s44
      %p48 = pneg %p42
      %p49 = scmp.eq.s32.totalorder %s12, 2
      %p50 = por %p48, %p49
      %p51 = scmp.ne.s32.totalorder %s43, %s46
      %p52 = scmp.eq.s32.totalorder %s12, 0
      %p53 = por %p51, %p52
      %p54 = scmp.ne.s32.totalorder %s43, %s46
      %p55 = scmp.eq.s32.totalorder %s17, 2
      %p56 = por %p54, %p55
      %p57 = scmp.ne.s32.totalorder %s46, %s47
      %p58 = scmp.eq.s32.totalorder %s17, 0
      %p59 = por %p57, %p58
      %p60 = scmp.ne.s32.totalorder %s46, %s47
      %p61 = scmp.eq.s32.totalorder %s18, 2
      %p62 = por %p60, %p61
      %p64 = scmp.ne.s32.totalorder %s47, %s63
      %p65 = scmp.eq.s32.totalorder %s18, 0
      %p66 = por %p64, %p65
      %s67 = ssub.s32 %s21, %s30
      %s68 = ssub.s32 %s20, %s34
      %s69 = sor.u32 %s67, %s68
      %p70 = scmp.eq.s32.totalorder %s69, 0
      %s72 = sadd.s32 %s71, 1
      %s73 = scalar_select %p70, %s71, %s72
      %p76 = pneg %p70
      %p77 = scmp.eq.s32.totalorder %s12, 2
      %p78 = por %p76, %p77
      %p79 = scmp.ne.s32.totalorder %s71, %s74
      %p80 = scmp.eq.s32.totalorder %s12, 0
      %p81 = por %p79, %p80
      %p82 = scmp.ne.s32.totalorder %s71, %s74
      %p83 = scmp.eq.s32.totalorder %s17, 2
      %p84 = por %p82, %p83
      %p85 = scmp.ne.s32.totalorder %s74, %s75
      %p86 = scmp.eq.s32.totalorder %s17, 0
      %p87 = por %p85, %p86
      %p88 = scmp.ne.s32.totalorder %s74, %s75
      %p89 = scmp.eq.s32.totalorder %s18, 2
      %p90 = por %p88, %p89
      %p92 = scmp.ne.s32.totalorder %s75, %s91
      %p93 = scmp.eq.s32.totalorder %s18, 0
      %p94 = por %p92, %p93
      %s95 = ssub.s32 %s20, %s34
      %p96 = scmp.eq.s32.totalorder %s95, 0
      %s98 = sadd.s32 %s97, 1
      %s99 = scalar_select %p96, %s97, %s98
      %p102 = pneg %p96
      %p103 = scmp.eq.s32.totalorder %s12, 2
      %p104 = por %p102, %p103
      %p105 = scmp.ne.s32.totalorder %s97, %s100
      %p106 = scmp.eq.s32.totalorder %s12, 0
      %p107 = por %p105, %p106
      %p108 = scmp.ne.s32.totalorder %s97, %s100
      %p109 = scmp.eq.s32.totalorder %s17, 2
      %p110 = por %p108, %p109
      %p111 = scmp.ne.s32.totalorder %s100, %s101
      %p112 = scmp.eq.s32.totalorder %s17, 0
      %p113 = por %p111, %p112
      %p114 = scmp.ne.s32.totalorder %s100, %s101
      %p115 = scmp.eq.s32.totalorder %s18, 2
      %p116 = por %p114, %p115
      %p118 = scmp.ne.s32.totalorder %s101, %s117
      %p119 = scmp.eq.s32.totalorder %s18, 0
      %p120 = por %p118, %p119
      %s121 = ssub.s32 %s19, %s38
      %s122 = ssub.s32 %s20, %s34
      %s123 = sor.u32 %s121, %s122
      %p124 = scmp.eq.s32.totalorder %s123, 0
      %s126 = sadd.s32 %s125, 1
      %s127 = scalar_select %p124, %s125, %s126
      %p130 = pneg %p124
      %p131 = scmp.eq.s32.totalorder %s12, 2
      %p132 = por %p130, %p131
      %p133 = scmp.ne.s32.totalorder %s125, %s128
      %p134 = scmp.eq.s32.totalorder %s12, 0
      %p135 = por %p133, %p134
      %p136 = scmp.ne.s32.totalorder %s125, %s128
      %p137 = scmp.eq.s32.totalorder %s17, 2
      %p138 = por %p136, %p137
      %p139 = scmp.ne.s32.totalorder %s128, %s129
      %p140 = scmp.eq.s32.totalorder %s17, 0
      %p141 = por %p139, %p140
      %p142 = scmp.ne.s32.totalorder %s128, %s129
      %p143 = scmp.eq.s32.totalorder %s18, 2
      %p144 = por %p142, %p143
      %p146 = scmp.ne.s32.totalorder %s129, %s145
      %p147 = scmp.eq.s32.totalorder %s18, 0
      %p148 = por %p146, %p147
      %p149 = scmp.le.s32.totalorder 1, %s12
      %p150 = scmp.lt.s32.totalorder %s12, 4
      %p151 = pnand %p149, %p150
      %p152 = pneg %p151
      // Predicated region
      $region9: #{_lambda_.16} parent=5 // pred_check
        _
      $region10: #{_lambda_.16} parent=5 // pred_check_branch
        %154 = sbr.rel (%p151) target = $region12
      $region11: #{_lambda_.16} parent=5 // pred_region
        %s155 = ssub.s32 %s12, 1
        // Predicated region
        $region13: #{_lambda_.16} parent=11 // pred_check
          %p156 = pneg %p59
        $region14: #{_lambda_.16} parent=11 // pred_check_branch
          %158 = sbr.rel (%p156) target = $region16
        $region15: #{_lambda_.16} parent=11 // pred_region
          %s159 = smul.u32 2, %s22
          %s160 = smul.u32 2, %s24
          %p161 = scmp.lt.s32.totalorder %s159, 1
          %s162 = scalar_select %p161, %s159, 1
          %p163 = scmp.lt.s32.totalorder %s160, 1
          %s164 = scalar_select %p163, %s160, 1
          %s165 = smul.addr %s162, 2
          %s166 = sadd.s32 %s164, %s165
          %s167 = smul.addr %s166, 8
          %s168 = scalar_lea.vmem %s0, %s167
          %s169 = smul.u32 2, %s22
          %s170 = smul.u32 2, %s24
        $region16: #{_lambda_.16} parent=11 // pred_fallthru
          _
      $region12: #{_lambda_.16} parent=5 // pred_fallthru
        _
      %p171 = scmp.lt.s32.totalorder %s12, 3
      // Predicated region
      $region17: #{_lambda_.16} parent=5 // pred_check
        %p172 = pneg %p171
      $region18: #{_lambda_.16} parent=5 // pred_check_branch
        %174 = sbr.rel (%p172) target = $region20
      $region19: #{_lambda_.16} parent=5 // pred_region
        // Predicated region
        $region21: #{_lambda_.16} parent=19 // pred_check
          %p175 = pneg %p81
        $region22: #{_lambda_.16} parent=19 // pred_check_branch
          %177 = sbr.rel (%p175) target = $region24
        $region23: #{_lambda_.16} parent=19 // pred_region
          %s178 = sand.u32 %s71, 1
          %s179 = scalar_lea.sflag [#allocation4], %s178
          %s180 = sand.u32 %s71, 1
          %s181 = smul.addr %s180, 512
          %s182 = scalar_lea.vmem [#allocation3], %s181
          %s183 = smul.u32 32, %s21
          %s184 = smul.u32 2, %s20
          %s186 = ssub.s32 8192, 8192
          %187 = vsyncadd %s179, %s186
          %s188 = smul.addr %s183, 6
          %s189 = sadd.s32 %s184, %s188
          %s190 = smul.addr %s189, 128
          %s191 = scalar_lea.hbm %s1, %s190
          %s192 = sshll.u32 %s182, 4
          %s193 = int_to_ptr.vmem [resolvable:$true] %s192
          %198 = dma.hbm_to_vmem [thread:$0]  %s191, 8192, %s193, %s179, 768, 256, 16
        $region24: #{_lambda_.16} parent=19 // pred_fallthru
          _
        // Predicated region
        $region25: #{_lambda_.16} parent=19 // pred_check
          %p199 = pneg %p107
        $region26: #{_lambda_.16} parent=19 // pred_check_branch
          %201 = sbr.rel (%p199) target = $region28
        $region27: #{_lambda_.16} parent=19 // pred_region
          %s202 = smul.u32 2, %s20
          %p203 = scmp.lt.s32.totalorder %s202, 5
          %s204 = scalar_select %p203, %s202, 5
          %s205 = scalar_lea.vmem %s2, %s204
          %s206 = smul.u32 2, %s20
        $region28: #{_lambda_.16} parent=19 // pred_fallthru
          _
      $region20: #{_lambda_.16} parent=5 // pred_fallthru
        _
      %p207 = scmp.le.s32.totalorder 1, %s12
      %p208 = scmp.lt.s32.totalorder %s12, 4
      %p209 = pnand %p207, %p208
      %p210 = pneg %p209
      // Predicated region
      $region29: #{_lambda_.16} parent=5 // pred_check
        _
      $region30: #{_lambda_.16} parent=5 // pred_check_branch
        %212 = sbr.rel (%p209) target = $region32
      $region31: #{_lambda_.16} parent=5 // pred_region
        %s213 = ssub.s32 %s12, 1
        %s214 = sand.u32 %s74, 1
        %s215 = scalar_lea.sflag [#allocation4], %s214
        %s216 = sand.u32 %s74, 1
        %s217 = smul.addr %s216, 512
        %s218 = scalar_lea.vmem [#allocation3], %s217
        // Predicated region
        $region33: #{_lambda_.16} parent=31 // pred_check
          %p219 = pneg %p87
        $region34: #{_lambda_.16} parent=31 // pred_check_branch
          %221 = sbr.rel (%p219) target = $region36
        $region35: #{_lambda_.16} parent=31 // pred_region
          %222 = dma.done %s215, 8192
        $region36: #{_lambda_.16} parent=31 // pred_fallthru
          _
        %s223 = smul.u32 2, %s22
        %s224 = smul.u32 2, %s24
        %p225 = scmp.lt.s32.totalorder %s223, 1
        %s226 = scalar_select %p225, %s223, 1
        %p227 = scmp.lt.s32.totalorder %s224, 1
        %s228 = scalar_select %p227, %s224, 1
        %s229 = smul.addr %s226, 2
        %s230 = sadd.s32 %s228, %s229
        %s231 = smul.addr %s230, 8
        %s232 = scalar_lea.vmem %s0, %s231
        %p233 = pneg %p59
        %p234 = pneg %p56
        %s235 = sand.u32 %s74, 1
        %s236 = scalar_lea.sflag [#allocation4], %s235
        %s237 = sand.u32 %s74, 1
        %s238 = smul.addr %s237, 512
        %s239 = scalar_lea.vmem [#allocation3], %s238
        %p240 = pneg %p87
        %p241 = pneg %p84
        %s242 = smul.u32 2, %s23
        %p243 = scmp.lt.s32.totalorder %s242, 5
        %s244 = scalar_select %p243, %s242, 5
        %s245 = scalar_lea.vmem %s2, %s244
        %p246 = pneg %p113
        %p247 = pneg %p110
        %p248 = pneg %p141
        %p249 = pneg %p138
        %s250 = sand.u32 %s128, 1
        %s251 = sand.u32 %s128, 1
        %s252 = smul.addr %s251, 32
        %s253 = scalar_lea.vmem [#allocation5], %s252
        %s254 = smul.u32 2, %s22
        %s255 = smul.u32 2, %s24
        %p256 = scmp.lt.s32.totalorder %s254, 1
        %s257 = scalar_select %p256, %s254, 1
        %p258 = scmp.lt.s32.totalorder %s255, 1
        %s259 = scalar_select %p258, %s255, 1
        %s260 = smul.addr %s257, 2
        %s261 = sadd.s32 %s259, %s260
        %s262 = smul.addr %s261, 8
        %s263 = scalar_lea.vmem %s0, %s262
        %s264 = smul.u32 2, %s22
        %s265 = smul.u32 2, %s24
        %s266 = smul.u32 32, %s24
        %s267 = smul.u32 2, %s23
        %s268 = smul.u32 2, %s23
        %p269 = scmp.lt.s32.totalorder %s268, 5
        %s270 = scalar_select %p269, %s268, 5
        %s271 = scalar_lea.vmem %s2, %s270
        %s272 = smul.u32 2, %s23
        %s273 = smul.u32 2, %s22
        %s274 = smul.u32 2, %s23
        %p275 = scmp.eq.s32.totalorder %s24, 0
        // Predicated region
        $region37: #{_lambda_.16} parent=31 // pred_check
          %p276 = pneg %p275
        $region38: #{_lambda_.16} parent=31 // pred_check_branch
          %278 = sbr.rel (%p276) target = $region40
        $region39: #{_lambda_.16} parent=31 // pred_region
          %279 = vst [vmem:[#allocation2] sm:$0xff] 0.0
          %280 = vst [vmem:[#allocation2 + $0x8] sm:$0xff] 0.0
          %281 = vst [vmem:[#allocation2 + $0x10] sm:$0xff] 0.0
          %282 = vst [vmem:[#allocation2 + $0x18] sm:$0xff] 0.0
        $region40: #{_lambda_.16} parent=31 // pred_fallthru
          _
        %v283 = vld [vmem:[#allocation2] sm:$0xff]
        %v284 = vld [vmem:[#allocation2 + $0x8] sm:$0xff]
        %v285 = vld [vmem:[#allocation2 + $0x10] sm:$0xff]
        %v286 = vld [vmem:[#allocation2 + $0x18] sm:$0xff]
        %v287 = vld [vmem:[%s263] sm:$0xff]
        %v288 = vld [vmem:[%s263 + $0x8] sm:$0xff]
        %v289 = vld [vmem:[%s263 + $0x10] sm:$0xff]
        %v290 = vld [vmem:[%s263 + $0x18] sm:$0xff]
        %v291 = vld [vmem:[%s218] sm:$0xff]
        %v292 = vld [vmem:[%s218 + $0x8] sm:$0xff]
        %v293 = vld [vmem:[%s218 + $0x10] sm:$0xff]
        %v294 = vld [vmem:[%s218 + $0x18] sm:$0xff]
        %v295 = vld [vmem:[%s218 + $0x20] sm:$0xff]
        %v296 = vld [vmem:[%s218 + $0x28] sm:$0xff]
        %v297 = vld [vmem:[%s218 + $0x30] sm:$0xff]
        %v298 = vld [vmem:[%s218 + $0x38] sm:$0xff]
        %v299 = vld [vmem:[%s218 + $0x40] sm:$0xff]
        %v300 = vld [vmem:[%s218 + $0x48] sm:$0xff]
        %v301 = vld [vmem:[%s218 + $0x50] sm:$0xff]
        %v302 = vld [vmem:[%s218 + $0x58] sm:$0xff]
        %v303 = vld [vmem:[%s218 + $0x60] sm:$0xff]
        %v304 = vld [vmem:[%s218 + $0x68] sm:$0xff]
        %v305 = vld [vmem:[%s218 + $0x70] sm:$0xff]
        %v306 = vld [vmem:[%s218 + $0x78] sm:$0xff]
        %v307 = vld [vmem:[%s218 + $0x80] sm:$0xff]
        %v308 = vld [vmem:[%s218 + $0x88] sm:$0xff]
        %v309 = vld [vmem:[%s218 + $0x90] sm:$0xff]
        %v310 = vld [vmem:[%s218 + $0x98] sm:$0xff]
        %v311 = vld [vmem:[%s218 + $0xa0] sm:$0xff]
        %v312 = vld [vmem:[%s218 + $0xa8] sm:$0xff]
        %v313 = vld [vmem:[%s218 + $0xb0] sm:$0xff]
        %v314 = vld [vmem:[%s218 + $0xb8] sm:$0xff]
        %v315 = vld [vmem:[%s218 + $0xc0] sm:$0xff]
        %v316 = vld [vmem:[%s218 + $0xc8] sm:$0xff]
        %v317 = vld [vmem:[%s218 + $0xd0] sm:$0xff]
        %v318 = vld [vmem:[%s218 + $0xd8] sm:$0xff]
        %v319 = vld [vmem:[%s218 + $0xe0] sm:$0xff]
        %v320 = vld [vmem:[%s218 + $0xe8] sm:$0xff]
        %v321 = vld [vmem:[%s218 + $0xf0] sm:$0xff]
        %v322 = vld [vmem:[%s218 + $0xf8] sm:$0xff]
        %v323 = vld [vmem:[%s218 + $0x100] sm:$0xff]
        %v324 = vld [vmem:[%s218 + $0x108] sm:$0xff]
        %v325 = vld [vmem:[%s218 + $0x110] sm:$0xff]
        %v326 = vld [vmem:[%s218 + $0x118] sm:$0xff]
        %v327 = vld [vmem:[%s218 + $0x120] sm:$0xff]
        %v328 = vld [vmem:[%s218 + $0x128] sm:$0xff]
        %v329 = vld [vmem:[%s218 + $0x130] sm:$0xff]
        %v330 = vld [vmem:[%s218 + $0x138] sm:$0xff]
        %v331 = vld [vmem:[%s218 + $0x140] sm:$0xff]
        %v332 = vld [vmem:[%s218 + $0x148] sm:$0xff]
        %v333 = vld [vmem:[%s218 + $0x150] sm:$0xff]
        %v334 = vld [vmem:[%s218 + $0x158] sm:$0xff]
        %v335 = vld [vmem:[%s218 + $0x160] sm:$0xff]
        %v336 = vld [vmem:[%s218 + $0x168] sm:$0xff]
        %v337 = vld [vmem:[%s218 + $0x170] sm:$0xff]
        %v338 = vld [vmem:[%s218 + $0x178] sm:$0xff]
        %v339 = vld [vmem:[%s218 + $0x180] sm:$0xff]
        %v340 = vld [vmem:[%s218 + $0x188] sm:$0xff]
        %v341 = vld [vmem:[%s218 + $0x190] sm:$0xff]
        %v342 = vld [vmem:[%s218 + $0x198] sm:$0xff]
        %v343 = vld [vmem:[%s218 + $0x1a0] sm:$0xff]
        %v344 = vld [vmem:[%s218 + $0x1a8] sm:$0xff]
        %v345 = vld [vmem:[%s218 + $0x1b0] sm:$0xff]
        %v346 = vld [vmem:[%s218 + $0x1b8] sm:$0xff]
        %v347 = vld [vmem:[%s218 + $0x1c0] sm:$0xff]
        %v348 = vld [vmem:[%s218 + $0x1c8] sm:$0xff]
        %v349 = vld [vmem:[%s218 + $0x1d0] sm:$0xff]
        %v350 = vld [vmem:[%s218 + $0x1d8] sm:$0xff]
        %v351 = vld [vmem:[%s218 + $0x1e0] sm:$0xff]
        %v352 = vld [vmem:[%s218 + $0x1e8] sm:$0xff]
        %v353 = vld [vmem:[%s218 + $0x1f0] sm:$0xff]
        %v354 = vld [vmem:[%s218 + $0x1f8] sm:$0xff]
        %355 = vmatprep.subr.mxu0 %v292
        %356 = vmatpush1.msra.mxu0 %v291
        %357 = vmatprep.subr.mxu0 %v294
        %358 = vmatpush1.msra.mxu0 %v293
        %359 = vmatprep.subr.mxu0 %v296
        %360 = vmatpush1.msra.mxu0 %v295
        %361 = vmatprep.subr.mxu0 %v298
        %362 = vmatpush1.msra.mxu0 %v297
        %363 = vmatprep.subr.mxu0 %v300
        %364 = vmatpush1.msra.mxu0 %v299
        %365 = vmatprep.subr.mxu0 %v302
        %366 = vmatpush1.msra.mxu0 %v301
        %367 = vmatprep.subr.mxu0 %v304
        %368 = vmatpush1.msra.mxu0 %v303
        %369 = vmatprep.subr.mxu0 %v306
        %370 = vmatpush1.msra.mxu0 %v305
        %371 = vmatprep.subr.mxu0 %v308
        %372 = vmatpush1.msra.mxu0 %v307
        %373 = vmatprep.subr.mxu0 %v310
        %374 = vmatpush1.msra.mxu0 %v309
        %375 = vmatprep.subr.mxu0 %v312
        %376 = vmatpush1.msra.mxu0 %v311
        %377 = vmatprep.subr.mxu0 %v314
        %378 = vmatpush1.msra.mxu0 %v313
        %379 = vmatprep.subr.mxu0 %v316
        %380 = vmatpush1.msra.mxu0 %v315
        %381 = vmatprep.subr.mxu0 %v318
        %382 = vmatpush1.msra.mxu0 %v317
        %383 = vmatprep.subr.mxu0 %v320
        %384 = vmatpush1.msra.mxu0 %v319
        %385 = vmatprep.subr.mxu0 %v322
        %386 = vmatpush1.msra.mxu0 %v321
        %387 = vmatprep.subr.mxu0 %v324
        %388 = vmatpush1.msra.mxu0 %v323
        %389 = vmatprep.subr.mxu0 %v326
        %390 = vmatpush1.msra.mxu0 %v325
        %391 = vmatprep.subr.mxu0 %v328
        %392 = vmatpush1.msra.mxu0 %v327
        %393 = vmatprep.subr.mxu0 %v330
        %394 = vmatpush1.msra.mxu0 %v329
        %395 = vmatprep.subr.mxu0 %v332
        %396 = vmatpush1.msra.mxu0 %v331
        %397 = vmatprep.subr.mxu0 %v334
        %398 = vmatpush1.msra.mxu0 %v333
        %399 = vmatprep.subr.mxu0 %v336
        %400 = vmatpush1.msra.mxu0 %v335
        %401 = vmatprep.subr.mxu0 %v338
        %402 = vmatpush1.msra.mxu0 %v337
        %403 = vmatprep.subr.mxu0 %v340
        %404 = vmatpush1.msra.mxu0 %v339
        %405 = vmatprep.subr.mxu0 %v342
        %406 = vmatpush1.msra.mxu0 %v341
        %407 = vmatprep.subr.mxu0 %v344
        %408 = vmatpush1.msra.mxu0 %v343
        %409 = vmatprep.subr.mxu0 %v346
        %410 = vmatpush1.msra.mxu0 %v345
        %411 = vmatprep.subr.mxu0 %v348
        %412 = vmatpush1.msra.mxu0 %v347
        %413 = vmatprep.subr.mxu0 %v350
        %414 = vmatpush1.msra.mxu0 %v349
        %415 = vmatprep.subr.mxu0 %v352
        %416 = vmatpush1.msra.mxu0 %v351
        %417 = vmatprep.subr.mxu0 %v354
        %418 = vmatpush1.msra.mxu0 %v353
        %419 = vmatprep.mubr.f32.mxu0 %v288
        %420 = vmatmul.mubr.f32.gmra.mrb[0].mxu0 %v287
        %v421 = vpop.f32.mrb[0].mxu0
        %v422 = vadd.f32 0.0, %v421
        %v423 = vpop.f32.mrb[0].mxu0
        %v424 = vadd.f32 0.0, %v423
        %425 = vmatprep.mubr.f32.mxu0 %v290
        %426 = vmatmul.mubr.f32.gmra.mrb[0].mxu0 %v289
        %v427 = vpop.f32.mrb[0].mxu0
        %v428 = vadd.f32 0.0, %v427
        %v429 = vpop.f32.mrb[0].mxu0
        %v430 = vadd.f32 0.0, %v429
        %431 = vdwg.mxu0
        %v432 = vadd.f32 %v283, %v422
        %v433 = vadd.f32 %v284, %v424
        %v434 = vadd.f32 %v285, %v428
        %v435 = vadd.f32 %v286, %v430
        %436 = vst [vmem:[#allocation2] sm:$0xff] %v432
        %437 = vst [vmem:[#allocation2 + $0x8] sm:$0xff] %v433
        %438 = vst [vmem:[#allocation2 + $0x10] sm:$0xff] %v434
        %439 = vst [vmem:[#allocation2 + $0x18] sm:$0xff] %v435
        // Predicated region
        $region41: #{_lambda_.16} parent=31 // pred_check
          %p440 = pneg %p275
        $region42: #{_lambda_.16} parent=31 // pred_check_branch
          %442 = sbr.rel (%p440) target = $region44
        $region43: #{_lambda_.16} parent=31 // pred_region
          %v443 = vld [vmem:[#allocation2] sm:$0xff]
          %v444 = vld [vmem:[#allocation2 + $0x8] sm:$0xff]
          %v445 = vld [vmem:[#allocation2 + $0x10] sm:$0xff]
          %v446 = vld [vmem:[#allocation2 + $0x18] sm:$0xff]
          %v447 = vld [vmem:[%s271] sm:$0x3]
          %v449 = vlaneseq
          %v450 = vshrl.u32 %v449, 7
          %v451 = vsub.s32 0, %v450
          %v452 = vrot.slane %v447, %v451
          %v453 = vlaneseq
          %v454 = vshrl.u32 %v453, 7
          %v455 = vsub.s32 1, %v454
          %v456 = vrot.slane %v447, %v455
          %v459 = vadd.f32 %v443, %v452
          %v460 = vadd.f32 %v444, %v456
          %v461 = vadd.f32 %v445, %v452
          %v462 = vadd.f32 %v446, %v456
          %463 = vst [vmem:[%s253] sm:$0xff] %v459
          %464 = vst [vmem:[%s253 + $0x8] sm:$0xff] %v460
          %465 = vst [vmem:[%s253 + $0x10] sm:$0xff] %v461
          %466 = vst [vmem:[%s253 + $0x18] sm:$0xff] %v462
        $region44: #{_lambda_.16} parent=31 // pred_fallthru
          _
        %s467 = sand.u32 %s128, 1
        %s468 = sand.u32 %s128, 1
        %s469 = smul.addr %s468, 32
        %s470 = scalar_lea.vmem [#allocation5], %s469
        // Predicated region
        $region45: #{_lambda_.16} parent=31 // pred_check
          %p471 = pneg %p138
        $region46: #{_lambda_.16} parent=31 // pred_check_branch
          %473 = sbr.rel (%p471) target = $region48
        $region47: #{_lambda_.16} parent=31 // pred_region
          %s474 = smul.u32 2, %s22
          %s475 = smul.u32 2, %s23
          %s476 = smul.addr %s474, 6
          %s477 = sadd.s32 %s475, %s476
          %s478 = smul.addr %s477, 8
          %s479 = scalar_lea.vmem %s3, %s478
          // Predicated region
          $region49: #{_lambda_.16} parent=47 // pred_check
            _
          $region50: #{_lambda_.16} parent=47 // pred_check_branch
            %481 = sbr.rel (0) target = $region52
          $region51: #{_lambda_.16} parent=47 // pred_region
            // Predicated region
            $region53: #{_lambda_.16} parent=51 // pred_check
              _
            $region54: #{_lambda_.16} parent=51 // pred_check_branch
              %483 = sbr.rel (0) target = $region56
            $region55: #{_lambda_.16} parent=51 // pred_region
              loop: start=0, step=1, limit=1
              $region57: #{_lambda_.16} parent=55 // loop_pre_header
                _
              $region58: #{_lambda_.16} parent=55 // loop_header
                %s485 = sphi 0, %s489
                %p486 = scmp.ge.s32.totalorder %s485, 1
                %s490 = sphi %s470, %s470
                %s491 = sphi %s479, %s479
              $region59: #{_lambda_.16} parent=55 // loop_header_branch
                %488 = sbr.rel (%p486) target = $region63
              $region60: #{_lambda_.16} parent=55 // loop_body
                %v492 = vld [vmem:[%s490] sm:$0xff]
                %493 = vst [vmem:[%s491] sm:$0xff] %v492
                %v494 = vld [vmem:[%s490 + $0x8] sm:$0xff]
                %495 = vst [vmem:[%s491 + $0x8] sm:$0xff] %v494
                %v496 = vld [vmem:[%s490 + $0x10] sm:$0xff]
                %497 = vst [vmem:[%s491 + $0x30] sm:$0xff] %v496
                %v498 = vld [vmem:[%s490 + $0x18] sm:$0xff]
                %499 = vst [vmem:[%s491 + $0x38] sm:$0xff] %v498
              $region61: #{_lambda_.16} parent=55 // loop_footer
                %s489 = sadd.s32 1, %s485
              $region62: #{_lambda_.16} parent=55 // loop_footer_branch
                %484 = sbr.rel target = $region58
              $region63: #{_lambda_.16} parent=55 // loop_exit
                _
            $region56: #{_lambda_.16} parent=51 // pred_fallthru
              _
            // Predicated region
            $region64: #{_lambda_.16} parent=51 // pred_check
              _
            $region65: #{_lambda_.16} parent=51 // pred_check_branch
              %501 = sbr.rel target = $region67
            $region66: #{_lambda_.16} parent=51 // pred_region
              _
            $region67: #{_lambda_.16} parent=51 // pred_fallthru
              _
          $region52: #{_lambda_.16} parent=47 // pred_fallthru
            _
          %502 = vnop
        $region48: #{_lambda_.16} parent=31 // pred_fallthru
          _
      $region32: #{_lambda_.16} parent=5 // pred_fallthru
        _
      %p503 = scmp.le.s32.totalorder 2, %s12
      // Predicated region
      $region68: #{_lambda_.16} parent=5 // pred_check
        %p504 = pneg %p503
      $region69: #{_lambda_.16} parent=5 // pred_check_branch
        %506 = sbr.rel (%p504) target = $region71
      $region70: #{_lambda_.16} parent=5 // pred_region
        %s507 = ssub.s32 %s12, 2
        // Predicated region
        $region72: #{_lambda_.16} parent=70 // pred_check
          %p508 = pneg %p144
        $region73: #{_lambda_.16} parent=70 // pred_check_branch
          %510 = sbr.rel (%p508) target = $region75
        $region74: #{_lambda_.16} parent=70 // pred_region
          %s511 = sand.u32 %s129, 1
          %s512 = sand.u32 %s129, 1
          %s513 = smul.addr %s512, 32
          %s514 = scalar_lea.vmem [#allocation5], %s513
        $region75: #{_lambda_.16} parent=70 // pred_fallthru
          _
      $region71: #{_lambda_.16} parent=5 // pred_fallthru
        _
    $region6: #{_lambda_.16} parent=1 // loop_footer
      %s16 = sadd.s32 1, %s12
    $region7: #{_lambda_.16} parent=1 // loop_footer_branch
      %11 = sbr.rel target = $region3
    $region8: #{_lambda_.16} parent=1 // loop_exit
      _
    %515 = vsyncpa [#allocation4], 1
    %s516 = scalar_lea.sflag [#allocation4], 1
    %517 = vsyncpa %s516, 1

// kernel: _lambda_.18
$region0: #{_lambda_.18}
  #allocation0 [shape = 'u32[]', space=smem, size = 0x4, offset = 0x4, fixed_abs, tag = 'smem constant byte address 0x4 - core index']
  #allocation1 [shape = 'u32[144,128]{1,0:T(1,128)}', space=vmem, size = 0x12000, scoped, tag = 'internal scratch']
  #allocation2 [shape = 'f32[16,256]{1,0:T(8,128)}', space=vmem, size = 0x4000, scoped, tag = 'scratch operand']
  %s0 = inlined_call_operand.vmem [shape: f32[16,256], index: 0, kind: input, shape index: {}]
  %s1 = inlined_call_operand.vmem [shape: f32[256,256], index: 1, kind: input, shape index: {}]
  %s2 = inlined_call_operand.vmem [shape: f32[1,256], index: 2, kind: input, shape index: {}]
  %s3 = inlined_call_operand.vmem [shape: f32[16,256], index: 3, kind: input, shape index: {}]
  %s4 = inlined_call_operand.vmem [shape: f32[1,256], index: 4, kind: input, shape index: {}]
  %s5 = inlined_call_operand.vmem [shape: f32[1,256], index: 5, kind: input, shape index: {}]
  %s6 = inlined_call_operand.vmem [shape: f32[16,256], index: 6, kind: output, shape index: {}]
  %s7 = sld [smem:[#allocation0]]
  $region42: #{_lambda_.18} parent=0
    _
  %s9 = ssub.s32 1, %s7
  %s10 = scalar_select 0, %s9, %s7
  // Predicated region
  $region2: #{_lambda_.18} parent=0 // pred_check
    _
  $region3: #{_lambda_.18} parent=0 // pred_check_branch
    %12 = sbr.rel (0) target = $region5
  $region4: #{_lambda_.18} parent=0 // pred_region
    _
  $region5: #{_lambda_.18} parent=0 // pred_fallthru
    _
  // Predicated region
  $region6: #{_lambda_.18} parent=0 // pred_check
    _
  $region7: #{_lambda_.18} parent=0 // pred_check_branch
    %14 = sbr.rel (0) target = $region9
  $region8: #{_lambda_.18} parent=0 // pred_region
    _
  $region9: #{_lambda_.18} parent=0 // pred_fallthru
    _
  // Predicated region
  $region10: #{_lambda_.18} parent=0 // pred_check
    _
  $region11: #{_lambda_.18} parent=0 // pred_check_branch
    %16 = sbr.rel (0) target = $region13
  $region12: #{_lambda_.18} parent=0 // pred_region
    _
  $region13: #{_lambda_.18} parent=0 // pred_fallthru
    _
  // Predicated region
  $region14: #{_lambda_.18} parent=0 // pred_check
    _
  $region15: #{_lambda_.18} parent=0 // pred_check_branch
    %18 = sbr.rel (0) target = $region17
  $region16: #{_lambda_.18} parent=0 // pred_region
    _
  $region17: #{_lambda_.18} parent=0 // pred_fallthru
    _
  // Predicated region
  $region18: #{_lambda_.18} parent=0 // pred_check
    _
  $region19: #{_lambda_.18} parent=0 // pred_check_branch
    %20 = sbr.rel (0) target = $region21
  $region20: #{_lambda_.18} parent=0 // pred_region
    _
  $region21: #{_lambda_.18} parent=0 // pred_fallthru
    _
  // Predicated region
  $region22: #{_lambda_.18} parent=0 // pred_check
    _
  $region23: #{_lambda_.18} parent=0 // pred_check_branch
    %22 = sbr.rel (0) target = $region25
  $region24: #{_lambda_.18} parent=0 // pred_region
    _
  $region25: #{_lambda_.18} parent=0 // pred_fallthru
    _
  %p23 = scmp.eq.s32.totalorder 0, 0
  // Predicated region
  $region26: #{_lambda_.18} parent=0 // pred_check
    %p24 = pneg %p23
  $region27: #{_lambda_.18} parent=0 // pred_check_branch
    %26 = sbr.rel (%p24) target = $region29
  $region28: #{_lambda_.18} parent=0 // pred_region
    %27 = vst [vmem:[#allocation2] sm:$0xff] 0.0
    %28 = vst [vmem:[#allocation2 + $0x8] sm:$0xff] 0.0
    %29 = vst [vmem:[#allocation2 + $0x10] sm:$0xff] 0.0
    %30 = vst [vmem:[#allocation2 + $0x18] sm:$0xff] 0.0
  $region29: #{_lambda_.18} parent=0 // pred_fallthru
    _
  %v31 = vld [vmem:[#allocation2] sm:$0xff]
  %v32 = vld [vmem:[#allocation2 + $0x8] sm:$0xff]
  %v33 = vld [vmem:[#allocation2 + $0x10] sm:$0xff]
  %v34 = vld [vmem:[#allocation2 + $0x18] sm:$0xff]
  %v35 = vld [vmem:[%s0] sm:$0xff]
  %v36 = vld [vmem:[%s0 + $0x8] sm:$0xff]
  %v37 = vld [vmem:[%s0 + $0x10] sm:$0xff]
  %v38 = vld [vmem:[%s0 + $0x18] sm:$0xff]
  %v39 = vld [vmem:[%s1] sm:$0xff]
  %v40 = vld [vmem:[%s1 + $0x8] sm:$0xff]
  %v41 = vld [vmem:[%s1 + $0x10] sm:$0xff]
  %v42 = vld [vmem:[%s1 + $0x18] sm:$0xff]
  %v43 = vld [vmem:[%s1 + $0x20] sm:$0xff]
  %v44 = vld [vmem:[%s1 + $0x28] sm:$0xff]
  %v45 = vld [vmem:[%s1 + $0x30] sm:$0xff]
  %v46 = vld [vmem:[%s1 + $0x38] sm:$0xff]
  %v47 = vld [vmem:[%s1 + $0x40] sm:$0xff]
  %v48 = vld [vmem:[%s1 + $0x48] sm:$0xff]
  %v49 = vld [vmem:[%s1 + $0x50] sm:$0xff]
  %v50 = vld [vmem:[%s1 + $0x58] sm:$0xff]
  %v51 = vld [vmem:[%s1 + $0x60] sm:$0xff]
  %v52 = vld [vmem:[%s1 + $0x68] sm:$0xff]
  %v53 = vld [vmem:[%s1 + $0x70] sm:$0xff]
  %v54 = vld [vmem:[%s1 + $0x78] sm:$0xff]
  %v55 = vld [vmem:[%s1 + $0x80] sm:$0xff]
  %v56 = vld [vmem:[%s1 + $0x88] sm:$0xff]
  %v57 = vld [vmem:[%s1 + $0x90] sm:$0xff]
  %v58 = vld [vmem:[%s1 + $0x98] sm:$0xff]
  %v59 = vld [vmem:[%s1 + $0xa0] sm:$0xff]
  %v60 = vld [vmem:[%s1 + $0xa8] sm:$0xff]
  %v61 = vld [vmem:[%s1 + $0xb0] sm:$0xff]
  %v62 = vld [vmem:[%s1 + $0xb8] sm:$0xff]
  %v63 = vld [vmem:[%s1 + $0xc0] sm:$0xff]
  %v64 = vld [vmem:[%s1 + $0xc8] sm:$0xff]
  %v65 = vld [vmem:[%s1 + $0xd0] sm:$0xff]
  %v66 = vld [vmem:[%s1 + $0xd8] sm:$0xff]
  %v67 = vld [vmem:[%s1 + $0xe0] sm:$0xff]
  %v68 = vld [vmem:[%s1 + $0xe8] sm:$0xff]
  %v69 = vld [vmem:[%s1 + $0xf0] sm:$0xff]
  %v70 = vld [vmem:[%s1 + $0xf8] sm:$0xff]
  %v71 = vld [vmem:[%s1 + $0x100] sm:$0xff]
  %v72 = vld [vmem:[%s1 + $0x108] sm:$0xff]
  %v73 = vld [vmem:[%s1 + $0x110] sm:$0xff]
  %v74 = vld [vmem:[%s1 + $0x118] sm:$0xff]
  %v75 = vld [vmem:[%s1 + $0x120] sm:$0xff]
  %v76 = vld [vmem:[%s1 + $0x128] sm:$0xff]
  %v77 = vld [vmem:[%s1 + $0x130] sm:$0xff]
  %v78 = vld [vmem:[%s1 + $0x138] sm:$0xff]
  %v79 = vld [vmem:[%s1 + $0x140] sm:$0xff]
  %v80 = vld [vmem:[%s1 + $0x148] sm:$0xff]
  %v81 = vld [vmem:[%s1 + $0x150] sm:$0xff]
  %v82 = vld [vmem:[%s1 + $0x158] sm:$0xff]
  %v83 = vld [vmem:[%s1 + $0x160] sm:$0xff]
  %v84 = vld [vmem:[%s1 + $0x168] sm:$0xff]
  %v85 = vld [vmem:[%s1 + $0x170] sm:$0xff]
  %v86 = vld [vmem:[%s1 + $0x178] sm:$0xff]
  %v87 = vld [vmem:[%s1 + $0x180] sm:$0xff]
  %v88 = vld [vmem:[%s1 + $0x188] sm:$0xff]
  %v89 = vld [vmem:[%s1 + $0x190] sm:$0xff]
  %v90 = vld [vmem:[%s1 + $0x198] sm:$0xff]
  %v91 = vld [vmem:[%s1 + $0x1a0] sm:$0xff]
  %v92 = vld [vmem:[%s1 + $0x1a8] sm:$0xff]
  %v93 = vld [vmem:[%s1 + $0x1b0] sm:$0xff]
  %v94 = vld [vmem:[%s1 + $0x1b8] sm:$0xff]
  %v95 = vld [vmem:[%s1 + $0x1c0] sm:$0xff]
  %v96 = vld [vmem:[%s1 + $0x1c8] sm:$0xff]
  %v97 = vld [vmem:[%s1 + $0x1d0] sm:$0xff]
  %v98 = vld [vmem:[%s1 + $0x1d8] sm:$0xff]
  %v99 = vld [vmem:[%s1 + $0x1e0] sm:$0xff]
  %v100 = vld [vmem:[%s1 + $0x1e8] sm:$0xff]
  %v101 = vld [vmem:[%s1 + $0x1f0] sm:$0xff]
  %v102 = vld [vmem:[%s1 + $0x1f8] sm:$0xff]
  %103 = vmatprep.subr.mxu0 %v40
  %104 = vmatpush1.msra.mxu0 %v39
  %105 = vmatprep.subr.mxu0 %v42
  %106 = vmatpush1.msra.mxu0 %v41
  %107 = vmatprep.subr.mxu0 %v44
  %108 = vmatpush1.msra.mxu0 %v43
  %109 = vmatprep.subr.mxu0 %v46
  %110 = vmatpush1.msra.mxu0 %v45
  %111 = vmatprep.subr.mxu0 %v48
  %112 = vmatpush1.msra.mxu0 %v47
  %113 = vmatprep.subr.mxu0 %v50
  %114 = vmatpush1.msra.mxu0 %v49
  %115 = vmatprep.subr.mxu0 %v52
  %116 = vmatpush1.msra.mxu0 %v51
  %117 = vmatprep.subr.mxu0 %v54
  %118 = vmatpush1.msra.mxu0 %v53
  %119 = vmatprep.subr.mxu0 %v56
  %120 = vmatpush1.msra.mxu0 %v55
  %121 = vmatprep.subr.mxu0 %v58
  %122 = vmatpush1.msra.mxu0 %v57
  %123 = vmatprep.subr.mxu0 %v60
  %124 = vmatpush1.msra.mxu0 %v59
  %125 = vmatprep.subr.mxu0 %v62
  %126 = vmatpush1.msra.mxu0 %v61
  %127 = vmatprep.subr.mxu0 %v64
  %128 = vmatpush1.msra.mxu0 %v63
  %129 = vmatprep.subr.mxu0 %v66
  %130 = vmatpush1.msra.mxu0 %v65
  %131 = vmatprep.subr.mxu0 %v68
  %132 = vmatpush1.msra.mxu0 %v67
  %133 = vmatprep.subr.mxu0 %v70
  %134 = vmatpush1.msra.mxu0 %v69
  %135 = vmatprep.subr.mxu0 %v72
  %136 = vmatpush1.msra.mxu0 %v71
  %137 = vmatprep.subr.mxu0 %v74
  %138 = vmatpush1.msra.mxu0 %v73
  %139 = vmatprep.subr.mxu0 %v76
  %140 = vmatpush1.msra.mxu0 %v75
  %141 = vmatprep.subr.mxu0 %v78
  %142 = vmatpush1.msra.mxu0 %v77
  %143 = vmatprep.subr.mxu0 %v80
  %144 = vmatpush1.msra.mxu0 %v79
  %145 = vmatprep.subr.mxu0 %v82
  %146 = vmatpush1.msra.mxu0 %v81
  %147 = vmatprep.subr.mxu0 %v84
  %148 = vmatpush1.msra.mxu0 %v83
  %149 = vmatprep.subr.mxu0 %v86
  %150 = vmatpush1.msra.mxu0 %v85
  %151 = vmatprep.subr.mxu0 %v88
  %152 = vmatpush1.msra.mxu0 %v87
  %153 = vmatprep.subr.mxu0 %v90
  %154 = vmatpush1.msra.mxu0 %v89
  %155 = vmatprep.subr.mxu0 %v92
  %156 = vmatpush1.msra.mxu0 %v91
  %157 = vmatprep.subr.mxu0 %v94
  %158 = vmatpush1.msra.mxu0 %v93
  %159 = vmatprep.subr.mxu0 %v96
  %160 = vmatpush1.msra.mxu0 %v95
  %161 = vmatprep.subr.mxu0 %v98
  %162 = vmatpush1.msra.mxu0 %v97
  %163 = vmatprep.subr.mxu0 %v100
  %164 = vmatpush1.msra.mxu0 %v99
  %165 = vmatprep.subr.mxu0 %v102
  %166 = vmatpush1.msra.mxu0 %v101
  %167 = vmatprep.mubr.f32.mxu0 %v36
  %168 = vmatmul.mubr.f32.gmra.mrb[0].mxu0 %v35
  %v169 = vpop.f32.mrb[0].mxu0
  %v170 = vadd.f32 0.0, %v169
  %v171 = vpop.f32.mrb[0].mxu0
  %v172 = vadd.f32 0.0, %v171
  %173 = vmatprep.mubr.f32.mxu0 %v38
  %174 = vmatmul.mubr.f32.gmra.mrb[0].mxu0 %v37
  %v175 = vpop.f32.mrb[0].mxu0
  %v176 = vadd.f32 0.0, %v175
  %v177 = vpop.f32.mrb[0].mxu0
  %v178 = vadd.f32 0.0, %v177
  %179 = vdwg.mxu0
  %v180 = vadd.f32 %v31, %v170
  %v181 = vadd.f32 %v32, %v172
  %v182 = vadd.f32 %v33, %v176
  %v183 = vadd.f32 %v34, %v178
  %184 = vst [vmem:[#allocation2] sm:$0xff] %v180
  %185 = vst [vmem:[#allocation2 + $0x8] sm:$0xff] %v181
  %186 = vst [vmem:[#allocation2 + $0x10] sm:$0xff] %v182
  %187 = vst [vmem:[#allocation2 + $0x18] sm:$0xff] %v183
  // Predicated region
  $region30: #{_lambda_.18} parent=0 // pred_check
    %p188 = pneg %p23
  $region31: #{_lambda_.18} parent=0 // pred_check_branch
    %190 = sbr.rel (%p188) target = $region33
  $region32: #{_lambda_.18} parent=0 // pred_region
    %v191 = vld [vmem:[#allocation2] sm:$0xff]
    %v192 = vld [vmem:[#allocation2 + $0x8] sm:$0xff]
    %v193 = vld [vmem:[#allocation2 + $0x10] sm:$0xff]
    %v194 = vld [vmem:[#allocation2 + $0x18] sm:$0xff]
    %v195 = vld [vmem:[%s2] sm:$0x3]
    %v197 = vlaneseq
    %v198 = vshrl.u32 %v197, 7
    %v199 = vsub.s32 0, %v198
    %v200 = vrot.slane %v195, %v199
    %v201 = vlaneseq
    %v202 = vshrl.u32 %v201, 7
    %v203 = vsub.s32 1, %v202
    %v204 = vrot.slane %v195, %v203
    %v207 = vadd.f32 %v191, %v200
    %v208 = vadd.f32 %v192, %v204
    %v209 = vadd.f32 %v193, %v200
    %v210 = vadd.f32 %v194, %v204
    %v211 = vld [vmem:[%s3] sm:$0xff]
    %v212 = vld [vmem:[%s3 + $0x8] sm:$0xff]
    %v213 = vld [vmem:[%s3 + $0x10] sm:$0xff]
    %v214 = vld [vmem:[%s3 + $0x18] sm:$0xff]
    %v215 = vadd.f32 %v207, %v211
    %v216 = vadd.f32 %v208, %v212
    %v217 = vadd.f32 %v209, %v213
    %v218 = vadd.f32 %v210, %v214
    %v219 = vld [vmem:[%s4] sm:$0x3]
    %v220 = vld [vmem:[%s5] sm:$0x3]
    %v221 = vadd.f32 %v215, %v216
    %222 = vadd.xlane.f32.xlu0 %v221
    %v223 = vpop.xlane.xlu0 %222
    %v224 = vadd.f32 %v217, %v218
    %225 = vadd.xlane.f32.xlu0 %v224
    %v226 = vpop.xlane.xlu0 %225
    %v227 = vrcp.pop 256.0
    %v228 = vmul.f32 %v223, %v227
    %v229 = vmul.f32 %v226, %v227
    %v230 = vsub.f32 %v215, %v228
    %v231 = vsub.f32 %v216, %v228
    %v232 = vsub.f32 %v217, %v229
    %v233 = vsub.f32 %v218, %v229
    %v234 = vmul.f32 %v230, %v230
    %v235 = vmul.f32 %v231, %v231
    %v236 = vmul.f32 %v232, %v232
    %v237 = vmul.f32 %v233, %v233
    %v238 = vadd.f32 %v234, %v235
    %239 = vadd.xlane.f32.xlu0 %v238
    %v240 = vpop.xlane.xlu0 %239
    %v241 = vadd.f32 %v236, %v237
    %242 = vadd.xlane.f32.xlu0 %v241
    %v243 = vpop.xlane.xlu0 %242
    %v244 = vmul.f32 %v240, %v227
    %v245 = vmul.f32 %v243, %v227
    %v246 = vadd.f32 %v244, 1e-05
    %v247 = vadd.f32 %v245, 1e-05
    %v248 = vrsqrt.pop %v246
    %v249 = vrsqrt.pop %v247
    %v250 = vmul.f32 %v230, %v248
    %v251 = vmul.f32 %v231, %v248
    %v252 = vmul.f32 %v232, %v249
    %v253 = vmul.f32 %v233, %v249
    %v255 = vlaneseq
    %v256 = vshrl.u32 %v255, 7
    %v257 = vsub.s32 0, %v256
    %v258 = vrot.slane %v219, %v257
    %v259 = vlaneseq
    %v260 = vshrl.u32 %v259, 7
    %v261 = vsub.s32 1, %v260
    %v262 = vrot.slane %v219, %v261
    %v265 = vmul.f32 %v250, %v258
    %v266 = vmul.f32 %v251, %v262
    %v267 = vmul.f32 %v252, %v258
    %v268 = vmul.f32 %v253, %v262
    %v270 = vlaneseq
    %v271 = vshrl.u32 %v270, 7
    %v272 = vsub.s32 0, %v271
    %v273 = vrot.slane %v220, %v272
    %v274 = vlaneseq
    %v275 = vshrl.u32 %v274, 7
    %v276 = vsub.s32 1, %v275
    %v277 = vrot.slane %v220, %v276
    %v280 = vadd.f32 %v265, %v273
    %v281 = vadd.f32 %v266, %v277
    %v282 = vadd.f32 %v267, %v273
    %v283 = vadd.f32 %v268, %v277
    %284 = vst [vmem:[%s6] sm:$0xff] %v280
    %285 = vst [vmem:[%s6 + $0x8] sm:$0xff] %v281
    %286 = vst [vmem:[%s6 + $0x10] sm:$0xff] %v282
    %287 = vst [vmem:[%s6 + $0x18] sm:$0xff] %v283
  $region33: #{_lambda_.18} parent=0 // pred_fallthru
    _
  // Predicated region
  $region34: #{_lambda_.18} parent=0 // pred_check
    _
  $region35: #{_lambda_.18} parent=0 // pred_check_branch
    %289 = sbr.rel (0) target = $region37
  $region36: #{_lambda_.18} parent=0 // pred_region
    _
  $region37: #{_lambda_.18} parent=0 // pred_fallthru
    _
  // Predicated region
  $region38: #{_lambda_.18} parent=0 // pred_check
    _
  $region39: #{_lambda_.18} parent=0 // pred_check_branch
    %291 = sbr.rel (0) target = $region41
  $region40: #{_lambda_.18} parent=0 // pred_region
    _
  $region41: #{_lambda_.18} parent=0 // pred_fallthru
    _

// kernel: _lambda_.19
$region0: #{_lambda_.19}
  #allocation0 [shape = 'u32[]', space=smem, size = 0x4, offset = 0x4, fixed_abs, tag = 'smem constant byte address 0x4 - core index']
  #allocation1 [shape = 'u32[144,128]{1,0:T(1,128)}', space=vmem, size = 0x12000, scoped, tag = 'internal scratch']
  #allocation2 [shape = 'f32[16,256]{1,0:T(8,128)}', space=vmem, size = 0x4000, scoped, tag = 'scratch operand']
  %s0 = inlined_call_operand.vmem [shape: f32[16,256], index: 0, kind: input, shape index: {}]
  %s1 = inlined_call_operand.vmem [shape: f32[256,256], index: 1, kind: input, shape index: {}]
  %s2 = inlined_call_operand.vmem [shape: f32[1,256], index: 2, kind: input, shape index: {}]
  %s3 = inlined_call_operand.vmem [shape: f32[16,256], index: 3, kind: output, shape index: {}]
  %s4 = sld [smem:[#allocation0]]
  $region30: #{_lambda_.19} parent=0
    _
  %s6 = ssub.s32 1, %s4
  %s7 = scalar_select 0, %s6, %s4
  // Predicated region
  $region2: #{_lambda_.19} parent=0 // pred_check
    _
  $region3: #{_lambda_.19} parent=0 // pred_check_branch
    %9 = sbr.rel (0) target = $region5
  $region4: #{_lambda_.19} parent=0 // pred_region
    _
  $region5: #{_lambda_.19} parent=0 // pred_fallthru
    _
  // Predicated region
  $region6: #{_lambda_.19} parent=0 // pred_check
    _
  $region7: #{_lambda_.19} parent=0 // pred_check_branch
    %11 = sbr.rel (0) target = $region9
  $region8: #{_lambda_.19} parent=0 // pred_region
    _
  $region9: #{_lambda_.19} parent=0 // pred_fallthru
    _
  // Predicated region
  $region10: #{_lambda_.19} parent=0 // pred_check
    _
  $region11: #{_lambda_.19} parent=0 // pred_check_branch
    %13 = sbr.rel (0) target = $region13
  $region12: #{_lambda_.19} parent=0 // pred_region
    _
  $region13: #{_lambda_.19} parent=0 // pred_fallthru
    _
  %p14 = scmp.eq.s32.totalorder 0, 0
  // Predicated region
  $region14: #{_lambda_.19} parent=0 // pred_check
    %p15 = pneg %p14
  $region15: #{_lambda_.19} parent=0 // pred_check_branch
    %17 = sbr.rel (%p15) target = $region17
  $region16: #{_lambda_.19} parent=0 // pred_region
    %18 = vst [vmem:[#allocation2] sm:$0xff] 0.0
    %19 = vst [vmem:[#allocation2 + $0x8] sm:$0xff] 0.0
    %20 = vst [vmem:[#allocation2 + $0x10] sm:$0xff] 0.0
    %21 = vst [vmem:[#allocation2 + $0x18] sm:$0xff] 0.0
  $region17: #{_lambda_.19} parent=0 // pred_fallthru
    _
  %v22 = vld [vmem:[#allocation2] sm:$0xff]
  %v23 = vld [vmem:[#allocation2 + $0x8] sm:$0xff]
  %v24 = vld [vmem:[#allocation2 + $0x10] sm:$0xff]
  %v25 = vld [vmem:[#allocation2 + $0x18] sm:$0xff]
  %v26 = vld [vmem:[%s0] sm:$0xff]
  %v27 = vld [vmem:[%s0 + $0x8] sm:$0xff]
  %v28 = vld [vmem:[%s0 + $0x10] sm:$0xff]
  %v29 = vld [vmem:[%s0 + $0x18] sm:$0xff]
  %v30 = vld [vmem:[%s1] sm:$0xff]
  %v31 = vld [vmem:[%s1 + $0x8] sm:$0xff]
  %v32 = vld [vmem:[%s1 + $0x10] sm:$0xff]
  %v33 = vld [vmem:[%s1 + $0x18] sm:$0xff]
  %v34 = vld [vmem:[%s1 + $0x20] sm:$0xff]
  %v35 = vld [vmem:[%s1 + $0x28] sm:$0xff]
  %v36 = vld [vmem:[%s1 + $0x30] sm:$0xff]
  %v37 = vld [vmem:[%s1 + $0x38] sm:$0xff]
  %v38 = vld [vmem:[%s1 + $0x40] sm:$0xff]
  %v39 = vld [vmem:[%s1 + $0x48] sm:$0xff]
  %v40 = vld [vmem:[%s1 + $0x50] sm:$0xff]
  %v41 = vld [vmem:[%s1 + $0x58] sm:$0xff]
  %v42 = vld [vmem:[%s1 + $0x60] sm:$0xff]
  %v43 = vld [vmem:[%s1 + $0x68] sm:$0xff]
  %v44 = vld [vmem:[%s1 + $0x70] sm:$0xff]
  %v45 = vld [vmem:[%s1 + $0x78] sm:$0xff]
  %v46 = vld [vmem:[%s1 + $0x80] sm:$0xff]
  %v47 = vld [vmem:[%s1 + $0x88] sm:$0xff]
  %v48 = vld [vmem:[%s1 + $0x90] sm:$0xff]
  %v49 = vld [vmem:[%s1 + $0x98] sm:$0xff]
  %v50 = vld [vmem:[%s1 + $0xa0] sm:$0xff]
  %v51 = vld [vmem:[%s1 + $0xa8] sm:$0xff]
  %v52 = vld [vmem:[%s1 + $0xb0] sm:$0xff]
  %v53 = vld [vmem:[%s1 + $0xb8] sm:$0xff]
  %v54 = vld [vmem:[%s1 + $0xc0] sm:$0xff]
  %v55 = vld [vmem:[%s1 + $0xc8] sm:$0xff]
  %v56 = vld [vmem:[%s1 + $0xd0] sm:$0xff]
  %v57 = vld [vmem:[%s1 + $0xd8] sm:$0xff]
  %v58 = vld [vmem:[%s1 + $0xe0] sm:$0xff]
  %v59 = vld [vmem:[%s1 + $0xe8] sm:$0xff]
  %v60 = vld [vmem:[%s1 + $0xf0] sm:$0xff]
  %v61 = vld [vmem:[%s1 + $0xf8] sm:$0xff]
  %v62 = vld [vmem:[%s1 + $0x100] sm:$0xff]
  %v63 = vld [vmem:[%s1 + $0x108] sm:$0xff]
  %v64 = vld [vmem:[%s1 + $0x110] sm:$0xff]
  %v65 = vld [vmem:[%s1 + $0x118] sm:$0xff]
  %v66 = vld [vmem:[%s1 + $0x120] sm:$0xff]
  %v67 = vld [vmem:[%s1 + $0x128] sm:$0xff]
  %v68 = vld [vmem:[%s1 + $0x130] sm:$0xff]
  %v69 = vld [vmem:[%s1 + $0x138] sm:$0xff]
  %v70 = vld [vmem:[%s1 + $0x140] sm:$0xff]
  %v71 = vld [vmem:[%s1 + $0x148] sm:$0xff]
  %v72 = vld [vmem:[%s1 + $0x150] sm:$0xff]
  %v73 = vld [vmem:[%s1 + $0x158] sm:$0xff]
  %v74 = vld [vmem:[%s1 + $0x160] sm:$0xff]
  %v75 = vld [vmem:[%s1 + $0x168] sm:$0xff]
  %v76 = vld [vmem:[%s1 + $0x170] sm:$0xff]
  %v77 = vld [vmem:[%s1 + $0x178] sm:$0xff]
  %v78 = vld [vmem:[%s1 + $0x180] sm:$0xff]
  %v79 = vld [vmem:[%s1 + $0x188] sm:$0xff]
  %v80 = vld [vmem:[%s1 + $0x190] sm:$0xff]
  %v81 = vld [vmem:[%s1 + $0x198] sm:$0xff]
  %v82 = vld [vmem:[%s1 + $0x1a0] sm:$0xff]
  %v83 = vld [vmem:[%s1 + $0x1a8] sm:$0xff]
  %v84 = vld [vmem:[%s1 + $0x1b0] sm:$0xff]
  %v85 = vld [vmem:[%s1 + $0x1b8] sm:$0xff]
  %v86 = vld [vmem:[%s1 + $0x1c0] sm:$0xff]
  %v87 = vld [vmem:[%s1 + $0x1c8] sm:$0xff]
  %v88 = vld [vmem:[%s1 + $0x1d0] sm:$0xff]
  %v89 = vld [vmem:[%s1 + $0x1d8] sm:$0xff]
  %v90 = vld [vmem:[%s1 + $0x1e0] sm:$0xff]
  %v91 = vld [vmem:[%s1 + $0x1e8] sm:$0xff]
  %v92 = vld [vmem:[%s1 + $0x1f0] sm:$0xff]
  %v93 = vld [vmem:[%s1 + $0x1f8] sm:$0xff]
  %94 = vmatprep.subr.mxu0 %v31
  %95 = vmatpush1.msra.mxu0 %v30
  %96 = vmatprep.subr.mxu0 %v33
  %97 = vmatpush1.msra.mxu0 %v32
  %98 = vmatprep.subr.mxu0 %v35
  %99 = vmatpush1.msra.mxu0 %v34
  %100 = vmatprep.subr.mxu0 %v37
  %101 = vmatpush1.msra.mxu0 %v36
  %102 = vmatprep.subr.mxu0 %v39
  %103 = vmatpush1.msra.mxu0 %v38
  %104 = vmatprep.subr.mxu0 %v41
  %105 = vmatpush1.msra.mxu0 %v40
  %106 = vmatprep.subr.mxu0 %v43
  %107 = vmatpush1.msra.mxu0 %v42
  %108 = vmatprep.subr.mxu0 %v45
  %109 = vmatpush1.msra.mxu0 %v44
  %110 = vmatprep.subr.mxu0 %v47
  %111 = vmatpush1.msra.mxu0 %v46
  %112 = vmatprep.subr.mxu0 %v49
  %113 = vmatpush1.msra.mxu0 %v48
  %114 = vmatprep.subr.mxu0 %v51
  %115 = vmatpush1.msra.mxu0 %v50
  %116 = vmatprep.subr.mxu0 %v53
  %117 = vmatpush1.msra.mxu0 %v52
  %118 = vmatprep.subr.mxu0 %v55
  %119 = vmatpush1.msra.mxu0 %v54
  %120 = vmatprep.subr.mxu0 %v57
  %121 = vmatpush1.msra.mxu0 %v56
  %122 = vmatprep.subr.mxu0 %v59
  %123 = vmatpush1.msra.mxu0 %v58
  %124 = vmatprep.subr.mxu0 %v61
  %125 = vmatpush1.msra.mxu0 %v60
  %126 = vmatprep.subr.mxu0 %v63
  %127 = vmatpush1.msra.mxu0 %v62
  %128 = vmatprep.subr.mxu0 %v65
  %129 = vmatpush1.msra.mxu0 %v64
  %130 = vmatprep.subr.mxu0 %v67
  %131 = vmatpush1.msra.mxu0 %v66
  %132 = vmatprep.subr.mxu0 %v69
  %133 = vmatpush1.msra.mxu0 %v68
  %134 = vmatprep.subr.mxu0 %v71
  %135 = vmatpush1.msra.mxu0 %v70
  %136 = vmatprep.subr.mxu0 %v73
  %137 = vmatpush1.msra.mxu0 %v72
  %138 = vmatprep.subr.mxu0 %v75
  %139 = vmatpush1.msra.mxu0 %v74
  %140 = vmatprep.subr.mxu0 %v77
  %141 = vmatpush1.msra.mxu0 %v76
  %142 = vmatprep.subr.mxu0 %v79
  %143 = vmatpush1.msra.mxu0 %v78
  %144 = vmatprep.subr.mxu0 %v81
  %145 = vmatpush1.msra.mxu0 %v80
  %146 = vmatprep.subr.mxu0 %v83
  %147 = vmatpush1.msra.mxu0 %v82
  %148 = vmatprep.subr.mxu0 %v85
  %149 = vmatpush1.msra.mxu0 %v84
  %150 = vmatprep.subr.mxu0 %v87
  %151 = vmatpush1.msra.mxu0 %v86
  %152 = vmatprep.subr.mxu0 %v89
  %153 = vmatpush1.msra.mxu0 %v88
  %154 = vmatprep.subr.mxu0 %v91
  %155 = vmatpush1.msra.mxu0 %v90
  %156 = vmatprep.subr.mxu0 %v93
  %157 = vmatpush1.msra.mxu0 %v92
  %158 = vmatprep.mubr.f32.mxu0 %v27
  %159 = vmatmul.mubr.f32.gmra.mrb[0].mxu0 %v26
  %v160 = vpop.f32.mrb[0].mxu0
  %v161 = vadd.f32 0.0, %v160
  %v162 = vpop.f32.mrb[0].mxu0
  %v163 = vadd.f32 0.0, %v162
  %164 = vmatprep.mubr.f32.mxu0 %v29
  %165 = vmatmul.mubr.f32.gmra.mrb[0].mxu0 %v28
  %v166 = vpop.f32.mrb[0].mxu0
  %v167 = vadd.f32 0.0, %v166
  %v168 = vpop.f32.mrb[0].mxu0
  %v169 = vadd.f32 0.0, %v168
  %170 = vdwg.mxu0
  %v171 = vadd.f32 %v22, %v161
  %v172 = vadd.f32 %v23, %v163
  %v173 = vadd.f32 %v24, %v167
  %v174 = vadd.f32 %v25, %v169
  %175 = vst [vmem:[#allocation2] sm:$0xff] %v171
  %176 = vst [vmem:[#allocation2 + $0x8] sm:$0xff] %v172
  %177 = vst [vmem:[#allocation2 + $0x10] sm:$0xff] %v173
  %178 = vst [vmem:[#allocation2 + $0x18] sm:$0xff] %v174
  // Predicated region
  $region18: #{_lambda_.19} parent=0 // pred_check
    %p179 = pneg %p14
  $region19: #{_lambda_.19} parent=0 // pred_check_branch
    %181 = sbr.rel (%p179) target = $region21
  $region20: #{_lambda_.19} parent=0 // pred_region
    %v182 = vld [vmem:[#allocation2] sm:$0xff]
    %v183 = vld [vmem:[#allocation2 + $0x8] sm:$0xff]
    %v184 = vld [vmem:[#allocation2 + $0x10] sm:$0xff]
    %v185 = vld [vmem:[#allocation2 + $0x18] sm:$0xff]
    %v186 = vld [vmem:[%s2] sm:$0x3]
    %v188 = vlaneseq
    %v189 = vshrl.u32 %v188, 7
    %v190 = vsub.s32 0, %v189
    %v191 = vrot.slane %v186, %v190
    %v192 = vlaneseq
    %v193 = vshrl.u32 %v192, 7
    %v194 = vsub.s32 1, %v193
    %v195 = vrot.slane %v186, %v194
    %v198 = vadd.f32 %v182, %v191
    %v199 = vadd.f32 %v183, %v195
    %v200 = vadd.f32 %v184, %v191
    %v201 = vadd.f32 %v185, %v195
    %202 = vst [vmem:[%s3] sm:$0xff] %v198
    %203 = vst [vmem:[%s3 + $0x8] sm:$0xff] %v199
    %204 = vst [vmem:[%s3 + $0x10] sm:$0xff] %v200
    %205 = vst [vmem:[%s3 + $0x18] sm:$0xff] %v201
  $region21: #{_lambda_.19} parent=0 // pred_fallthru
    _
  // Predicated region
  $region22: #{_lambda_.19} parent=0 // pred_check
    _
  $region23: #{_lambda_.19} parent=0 // pred_check_branch
    %207 = sbr.rel (0) target = $region25
  $region24: #{_lambda_.19} parent=0 // pred_region
    _
  $region25: #{_lambda_.19} parent=0 // pred_fallthru
    _
  // Predicated region
  $region26: #{_lambda_.19} parent=0 // pred_check
    _
  $region27: #{_lambda_.19} parent=0 // pred_check_branch
    %209 = sbr.rel (0) target = $region29
  $region28: #{_lambda_.19} parent=0 // pred_region
    _
  $region29: #{_lambda_.19} parent=0 // pred_fallthru
    _

// kernel: _lambda_.21
$region0: #{_lambda_.21}
  #allocation0 [shape = 'u32[]', space=smem, size = 0x4, offset = 0x4, fixed_abs, tag = 'smem constant byte address 0x4 - core index']
  #allocation1 [shape = 'u32[144,128]{1,0:T(1,128)}', space=vmem, size = 0x12000, scoped, tag = 'internal scratch']
  #allocation2 [shape = 'f32[8,1]{1,0:T(8,128)}', space=vmem, size = 0x1000, scoped, tag = 'scratch operand']
  #allocation3 [shape = 'f32[8,1]{1,0:T(8,128)}', space=vmem, size = 0x1000, scoped, tag = 'scratch operand']
  #allocation4 [shape = 'f32[8,128]{1,0:T(8,128)}', space=vmem, size = 0x1000, scoped, tag = 'scratch operand']
  %s0 = inlined_call_operand.vmem [shape: f32[2,8,256], index: 0, kind: input, shape index: {}]
  %s1 = inlined_call_operand.vmem [shape: f32[2,16,512], index: 1, kind: input, shape index: {}, may-alias: {1,2}]
  %s2 = inlined_call_operand.vmem [shape: f32[2,16,512], index: 2, kind: input, shape index: {}, may-alias: {1,2}]
  %s3 = inlined_call_operand.vmem [shape: f32[2,8,256], index: 3, kind: output, shape index: {}]
  %s4 = sld [smem:[#allocation0]]
  $region129: #{_lambda_.21} parent=0
    _
  %s6 = ssub.s32 1, %s4
  %s7 = scalar_select 0, %s6, %s4
  $region1: #{_lambda_.21} parent=0
    #allocation5 [shape = 'u8[16384]{0}', space=vmem, size = 0x4000, scoped, tag = 'input window, operand 1']
    #allocation6 [shape = 'u8[16384]{0}', space=vmem, size = 0x4000, scoped, tag = 'input window, operand 2']
    loop: start=0, step=1, limit=6
    $region2: #{_lambda_.21} parent=1 // loop_pre_header
      _
    $region3: #{_lambda_.21} parent=1 // loop_header
      %s9 = sphi 0, %s13
      %p10 = scmp.ge.s32.totalorder %s9, 6
      %s16 = sphi 0, %s42
      %s17 = sphi 0, %s38
      %s18 = sphi 0, %s34
      %s19 = sphi 0, %s30
      %s20 = sphi 0, %s16
      %s21 = sphi 0, %s17
      %s22 = sphi 0, %s18
      %s23 = sphi 0, %s19
      %s24 = sphi 0, %s20
      %s25 = sphi 0, %s21
      %s26 = sphi 0, %s22
      %s27 = sphi 0, %s23
      %s49 = sphi 0, %s51
      %s52 = sphi 0, %s49
      %s53 = sphi 0, %s52
      %s69 = sphi 0, %s53
      %s79 = sphi 0, %s81
      %s82 = sphi 0, %s79
      %s83 = sphi 0, %s82
      %s99 = sphi 0, %s83
      %s111 = sphi 0, %s113
      %s114 = sphi 0, %s111
      %s115 = sphi 0, %s114
      %s131 = sphi 0, %s115
      %s141 = sphi 0, %s143
      %s144 = sphi 0, %s141
      %s145 = sphi 0, %s144
      %s161 = sphi 0, %s145
    $region4: #{_lambda_.21} parent=1 // loop_header_branch
      %12 = sbr.rel (%p10) target = $region8
    $region5: #{_lambda_.21} parent=1 // loop_body
      %s14 = ssub.s32 %s9, 1
      %s15 = ssub.s32 %s9, 2
      %s28 = sadd.s32 1, %s19
      %p29 = scmp.ge.s32.totalorder %s28, 1
      %s30 = scalar_select %p29, 0, %s28
      %s31 = sadd.s32 1, %s18
      %s32 = scalar_select %p29, %s31, %s18
      %p33 = scmp.ge.s32.totalorder %s32, 1
      %s34 = scalar_select %p33, 0, %s32
      %s35 = sadd.s32 1, %s17
      %s36 = scalar_select %p33, %s35, %s17
      %p37 = scmp.ge.s32.totalorder %s36, 2
      %s38 = scalar_select %p37, 0, %s36
      %s39 = sadd.s32 1, %s16
      %s40 = scalar_select %p37, %s39, %s16
      %p41 = scmp.ge.s32.totalorder %s40, 2
      %s42 = scalar_select %p41, 0, %s40
      %s43 = ssub.s32 %s16, %s42
      %s44 = ssub.s32 %s18, %s34
      %s45 = sor.u32 %s43, %s44
      %s46 = ssub.s32 %s17, %s38
      %s47 = sor.u32 %s45, %s46
      %p48 = scmp.eq.s32.totalorder %s47, 0
      %s50 = sadd.s32 %s49, 1
      %s51 = scalar_select %p48, %s49, %s50
      %p54 = pneg %p48
      %p55 = scmp.eq.s32.totalorder %s9, 3
      %p56 = por %p54, %p55
      %p57 = scmp.ne.s32.totalorder %s49, %s52
      %p58 = scmp.eq.s32.totalorder %s9, 0
      %p59 = por %p57, %p58
      %p60 = scmp.ne.s32.totalorder %s49, %s52
      %p61 = scmp.eq.s32.totalorder %s14, 3
      %p62 = por %p60, %p61
      %p63 = scmp.ne.s32.totalorder %s52, %s53
      %p64 = scmp.eq.s32.totalorder %s14, 0
      %p65 = por %p63, %p64
      %p66 = scmp.ne.s32.totalorder %s52, %s53
      %p67 = scmp.eq.s32.totalorder %s15, 3
      %p68 = por %p66, %p67
      %p70 = scmp.ne.s32.totalorder %s53, %s69
      %p71 = scmp.eq.s32.totalorder %s15, 0
      %p72 = por %p70, %p71
      %s73 = ssub.s32 %s16, %s42
      %s74 = ssub.s32 %s19, %s30
      %s75 = sor.u32 %s73, %s74
      %s76 = ssub.s32 %s17, %s38
      %s77 = sor.u32 %s75, %s76
      %p78 = scmp.eq.s32.totalorder %s77, 0
      %s80 = sadd.s32 %s79, 1
      %s81 = scalar_select %p78, %s79, %s80
      %p84 = pneg %p78
      %p85 = scmp.eq.s32.totalorder %s9, 3
      %p86 = por %p84, %p85
      %p87 = scmp.ne.s32.totalorder %s79, %s82
      %p88 = scmp.eq.s32.totalorder %s9, 0
      %p89 = por %p87, %p88
      %p90 = scmp.ne.s32.totalorder %s79, %s82
      %p91 = scmp.eq.s32.totalorder %s14, 3
      %p92 = por %p90, %p91
      %p93 = scmp.ne.s32.totalorder %s82, %s83
      %p94 = scmp.eq.s32.totalorder %s14, 0
      %p95 = por %p93, %p94
      %p96 = scmp.ne.s32.totalorder %s82, %s83
      %p97 = scmp.eq.s32.totalorder %s15, 3
      %p98 = por %p96, %p97
      %p100 = scmp.ne.s32.totalorder %s83, %s99
      %p101 = scmp.eq.s32.totalorder %s15, 0
      %p102 = por %p100, %p101
      %s103 = sadd.s32 %s17, 2
      %s104 = sadd.s32 %s38, 2
      %s105 = ssub.s32 %s16, %s42
      %s106 = ssub.s32 %s19, %s30
      %s107 = sor.u32 %s105, %s106
      %s108 = ssub.s32 %s103, %s104
      %s109 = sor.u32 %s107, %s108
      %p110 = scmp.eq.s32.totalorder %s109, 0
      %s112 = sadd.s32 %s111, 1
      %s113 = scalar_select %p110, %s111, %s112
      %p116 = pneg %p110
      %p117 = scmp.eq.s32.totalorder %s9, 3
      %p118 = por %p116, %p117
      %p119 = scmp.ne.s32.totalorder %s111, %s114
      %p120 = scmp.eq.s32.totalorder %s9, 0
      %p121 = por %p119, %p120
      %p122 = scmp.ne.s32.totalorder %s111, %s114
      %p123 = scmp.eq.s32.totalorder %s14, 3
      %p124 = por %p122, %p123
      %p125 = scmp.ne.s32.totalorder %s114, %s115
      %p126 = scmp.eq.s32.totalorder %s14, 0
      %p127 = por %p125, %p126
      %p128 = scmp.ne.s32.totalorder %s114, %s115
      %p129 = scmp.eq.s32.totalorder %s15, 3
      %p130 = por %p128, %p129
      %p132 = scmp.ne.s32.totalorder %s115, %s131
      %p133 = scmp.eq.s32.totalorder %s15, 0
      %p134 = por %p132, %p133
      %s135 = ssub.s32 %s16, %s42
      %s136 = ssub.s32 %s18, %s34
      %s137 = sor.u32 %s135, %s136
      %s138 = ssub.s32 %s17, %s38
      %s139 = sor.u32 %s137, %s138
      %p140 = scmp.eq.s32.totalorder %s139, 0
      %s142 = sadd.s32 %s141, 1
      %s143 = scalar_select %p140, %s141, %s142
      %p146 = pneg %p140
      %p147 = scmp.eq.s32.totalorder %s9, 3
      %p148 = por %p146, %p147
      %p149 = scmp.ne.s32.totalorder %s141, %s144
      %p150 = scmp.eq.s32.totalorder %s9, 0
      %p151 = por %p149, %p150
      %p152 = scmp.ne.s32.totalorder %s141, %s144
      %p153 = scmp.eq.s32.totalorder %s14, 3
      %p154 = por %p152, %p153
      %p155 = scmp.ne.s32.totalorder %s144, %s145
      %p156 = scmp.eq.s32.totalorder %s14, 0
      %p157 = por %p155, %p156
      %p158 = scmp.ne.s32.totalorder %s144, %s145
      %p159 = scmp.eq.s32.totalorder %s15, 3
      %p160 = por %p158, %p159
      %p162 = scmp.ne.s32.totalorder %s145, %s161
      %p163 = scmp.eq.s32.totalorder %s15, 0
      %p164 = por %p162, %p163
      %p165 = scmp.le.s32.totalorder 1, %s9
      %p166 = scmp.lt.s32.totalorder %s9, 5
      %p167 = pnand %p165, %p166
      %p168 = pneg %p167
      // Predicated region
      $region9: #{_lambda_.21} parent=5 // pred_check
        _
      $region10: #{_lambda_.21} parent=5 // pred_check_branch
        %170 = sbr.rel (%p167) target = $region12
      $region11: #{_lambda_.21} parent=5 // pred_region
        %s171 = ssub.s32 %s9, 1
      $region12: #{_lambda_.21} parent=5 // pred_fallthru
        _
      %p172 = scmp.lt.s32.totalorder %s9, 4
      // Predicated region
      $region13: #{_lambda_.21} parent=5 // pred_check
        %p173 = pneg %p172
      $region14: #{_lambda_.21} parent=5 // pred_check_branch
        %175 = sbr.rel (%p173) target = $region16
      $region15: #{_lambda_.21} parent=5 // pred_region
        // Predicated region
        $region17: #{_lambda_.21} parent=15 // pred_check
          %p176 = pneg %p59
        $region18: #{_lambda_.21} parent=15 // pred_check_branch
          %178 = sbr.rel (%p176) target = $region20
        $region19: #{_lambda_.21} parent=15 // pred_region
          %p179 = scmp.lt.s32.totalorder %s16, 1
          %s180 = scalar_select %p179, %s16, 1
          %p181 = scmp.lt.s32.totalorder %s18, 0
          %s182 = scalar_select %p181, %s18, 0
          %p183 = scmp.lt.s32.totalorder %s17, 1
          %s184 = scalar_select %p183, %s17, 1
          %s185 = smul.addr %s182, 2
          %s186 = sadd.s32 %s184, %s185
          %s187 = smul.addr %s180, 2
          %s188 = sadd.s32 %s186, %s187
          %s189 = smul.addr %s188, 8
          %s190 = scalar_lea.vmem %s0, %s189
        $region20: #{_lambda_.21} parent=15 // pred_fallthru
          _
        // Predicated region
        $region21: #{_lambda_.21} parent=15 // pred_check
          %p191 = pneg %p89
        $region22: #{_lambda_.21} parent=15 // pred_check_branch
          %193 = sbr.rel (%p191) target = $region24
        $region23: #{_lambda_.21} parent=15 // pred_region
          %s194 = sand.u32 %s79, 1
          %s195 = sand.u32 %s79, 1
          %s196 = smul.addr %s195, 16
          %s197 = scalar_lea.vmem [#allocation5], %s196
          %s198 = smul.u32 2, %s19
          %s199 = smul.addr %s198, 4
          %s200 = sadd.s32 %s17, %s199
          %s201 = smul.addr %s16, 8
          %s202 = sadd.s32 %s200, %s201
          %s203 = smul.addr %s202, 8
          %s204 = scalar_lea.vmem %s1, %s203
          // Predicated region
          $region25: #{_lambda_.21} parent=23 // pred_check
            _
          $region26: #{_lambda_.21} parent=23 // pred_check_branch
            %206 = sbr.rel (0) target = $region28
          $region27: #{_lambda_.21} parent=23 // pred_region
            // Predicated region
            $region29: #{_lambda_.21} parent=27 // pred_check
              _
            $region30: #{_lambda_.21} parent=27 // pred_check_branch
              %208 = sbr.rel (0) target = $region32
            $region31: #{_lambda_.21} parent=27 // pred_region
              // Predicated region
              $region44: #{_lambda_.21} parent=31 // pred_check
                _
              $region45: #{_lambda_.21} parent=31 // pred_check_branch
                %225 = sbr.rel (0) target = $region47
              $region46: #{_lambda_.21} parent=31 // pred_region
                loop: start=0, step=1, limit=1
                $region48: #{_lambda_.21} parent=46 // loop_pre_header
                  _
                $region49: #{_lambda_.21} parent=46 // loop_header
                  %s227 = sphi 0, %s231
                  %p228 = scmp.ge.s32.totalorder %s227, 1
                  %s232 = sphi %s204, %s204
                  %s233 = sphi %s197, %s197
                $region50: #{_lambda_.21} parent=46 // loop_header_branch
                  %230 = sbr.rel (%p228) target = $region54
                $region51: #{_lambda_.21} parent=46 // loop_body
                  %v234 = vld [vmem:[%s232] sm:$0xff]
                  %235 = vst [vmem:[%s233] sm:$0xff] %v234
                  %v236 = vld [vmem:[%s232 + $0x20] sm:$0xff]
                  %237 = vst [vmem:[%s233 + $0x8] sm:$0xff] %v236
                $region52: #{_lambda_.21} parent=46 // loop_footer
                  %s231 = sadd.s32 1, %s227
                $region53: #{_lambda_.21} parent=46 // loop_footer_branch
                  %226 = sbr.rel target = $region49
                $region54: #{_lambda_.21} parent=46 // loop_exit
                  _
              $region47: #{_lambda_.21} parent=31 // pred_fallthru
                _
              // Predicated region
              $region55: #{_lambda_.21} parent=31 // pred_check
                _
              $region56: #{_lambda_.21} parent=31 // pred_check_branch
                %239 = sbr.rel target = $region58
              $region57: #{_lambda_.21} parent=31 // pred_region
                _
              $region58: #{_lambda_.21} parent=31 // pred_fallthru
                _
            $region32: #{_lambda_.21} parent=27 // pred_fallthru
              _
            // Predicated region
            $region33: #{_lambda_.21} parent=27 // pred_check
              _
            $region34: #{_lambda_.21} parent=27 // pred_check_branch
              %210 = sbr.rel target = $region36
            $region35: #{_lambda_.21} parent=27 // pred_region
              loop: start=0, step=1, limit=1
              $region37: #{_lambda_.21} parent=35 // loop_pre_header
                _
              $region38: #{_lambda_.21} parent=35 // loop_header
                %s213 = sphi 0, %s217
                %p214 = scmp.ge.s32.totalorder %s213, 1
                %s218 = sphi %s204, %s204
                %s219 = sphi %s197, %s197
              $region39: #{_lambda_.21} parent=35 // loop_header_branch
                %216 = sbr.rel (%p214) target = $region43
              $region40: #{_lambda_.21} parent=35 // loop_body
                %v220 = vld [vmem:[%s218] sm:$0xff]
                %221 = vst [vmem:[%s219] sm:$0xff] %v220
                %v222 = vld [vmem:[%s218 + $0x20] sm:$0xff]
                %223 = vst [vmem:[%s219 + $0x8] sm:$0xff] %v222
              $region41: #{_lambda_.21} parent=35 // loop_footer
                %s217 = sadd.s32 1, %s213
              $region42: #{_lambda_.21} parent=35 // loop_footer_branch
                %212 = sbr.rel target = $region38
              $region43: #{_lambda_.21} parent=35 // loop_exit
                _
            $region36: #{_lambda_.21} parent=27 // pred_fallthru
              _
          $region28: #{_lambda_.21} parent=23 // pred_fallthru
            _
          %240 = vnop
        $region24: #{_lambda_.21} parent=15 // pred_fallthru
          _
        // Predicated region
        $region59: #{_lambda_.21} parent=15 // pred_check
          %p241 = pneg %p121
        $region60: #{_lambda_.21} parent=15 // pred_check_branch
          %243 = sbr.rel (%p241) target = $region62
        $region61: #{_lambda_.21} parent=15 // pred_region
          %s244 = sand.u32 %s111, 1
          %s245 = sand.u32 %s111, 1
          %s246 = smul.addr %s245, 16
          %s247 = scalar_lea.vmem [#allocation6], %s246
          %s248 = sadd.s32 %s17, 2
          %s249 = smul.u32 2, %s19
          %s250 = smul.addr %s249, 4
          %s251 = sadd.s32 %s248, %s250
          %s252 = smul.addr %s16, 8
          %s253 = sadd.s32 %s251, %s252
          %s254 = smul.addr %s253, 8
          %s255 = scalar_lea.vmem %s2, %s254
          // Predicated region
          $region63: #{_lambda_.21} parent=61 // pred_check
            _
          $region64: #{_lambda_.21} parent=61 // pred_check_branch
            %257 = sbr.rel (0) target = $region66
          $region65: #{_lambda_.21} parent=61 // pred_region
            // Predicated region
            $region67: #{_lambda_.21} parent=65 // pred_check
              _
            $region68: #{_lambda_.21} parent=65 // pred_check_branch
              %259 = sbr.rel (0) target = $region70
            $region69: #{_lambda_.21} parent=65 // pred_region
              // Predicated region
              $region82: #{_lambda_.21} parent=69 // pred_check
                _
              $region83: #{_lambda_.21} parent=69 // pred_check_branch
                %276 = sbr.rel (0) target = $region85
              $region84: #{_lambda_.21} parent=69 // pred_region
                loop: start=0, step=1, limit=1
                $region86: #{_lambda_.21} parent=84 // loop_pre_header
                  _
                $region87: #{_lambda_.21} parent=84 // loop_header
                  %s278 = sphi 0, %s282
                  %p279 = scmp.ge.s32.totalorder %s278, 1
                  %s283 = sphi %s255, %s255
                  %s284 = sphi %s247, %s247
                $region88: #{_lambda_.21} parent=84 // loop_header_branch
                  %281 = sbr.rel (%p279) target = $region92
                $region89: #{_lambda_.21} parent=84 // loop_body
                  %v285 = vld [vmem:[%s283] sm:$0xff]
                  %286 = vst [vmem:[%s284] sm:$0xff] %v285
                  %v287 = vld [vmem:[%s283 + $0x20] sm:$0xff]
                  %288 = vst [vmem:[%s284 + $0x8] sm:$0xff] %v287
                $region90: #{_lambda_.21} parent=84 // loop_footer
                  %s282 = sadd.s32 1, %s278
                $region91: #{_lambda_.21} parent=84 // loop_footer_branch
                  %277 = sbr.rel target = $region87
                $region92: #{_lambda_.21} parent=84 // loop_exit
                  _
              $region85: #{_lambda_.21} parent=69 // pred_fallthru
                _
              // Predicated region
              $region93: #{_lambda_.21} parent=69 // pred_check
                _
              $region94: #{_lambda_.21} parent=69 // pred_check_branch
                %290 = sbr.rel target = $region96
              $region95: #{_lambda_.21} parent=69 // pred_region
                _
              $region96: #{_lambda_.21} parent=69 // pred_fallthru
                _
            $region70: #{_lambda_.21} parent=65 // pred_fallthru
              _
            // Predicated region
            $region71: #{_lambda_.21} parent=65 // pred_check
              _
            $region72: #{_lambda_.21} parent=65 // pred_check_branch
              %261 = sbr.rel target = $region74
            $region73: #{_lambda_.21} parent=65 // pred_region
              loop: start=0, step=1, limit=1
              $region75: #{_lambda_.21} parent=73 // loop_pre_header
                _
              $region76: #{_lambda_.21} parent=73 // loop_header
                %s264 = sphi 0, %s268
                %p265 = scmp.ge.s32.totalorder %s264, 1
                %s269 = sphi %s255, %s255
                %s270 = sphi %s247, %s247
              $region77: #{_lambda_.21} parent=73 // loop_header_branch
                %267 = sbr.rel (%p265) target = $region81
              $region78: #{_lambda_.21} parent=73 // loop_body
                %v271 = vld [vmem:[%s269] sm:$0xff]
                %272 = vst [vmem:[%s270] sm:$0xff] %v271
                %v273 = vld [vmem:[%s269 + $0x20] sm:$0xff]
                %274 = vst [vmem:[%s270 + $0x8] sm:$0xff] %v273
              $region79: #{_lambda_.21} parent=73 // loop_footer
                %s268 = sadd.s32 1, %s264
              $region80: #{_lambda_.21} parent=73 // loop_footer_branch
                %263 = sbr.rel target = $region76
              $region81: #{_lambda_.21} parent=73 // loop_exit
                _
            $region74: #{_lambda_.21} parent=65 // pred_fallthru
              _
          $region66: #{_lambda_.21} parent=61 // pred_fallthru
            _
          %291 = vnop
        $region62: #{_lambda_.21} parent=15 // pred_fallthru
          _
      $region16: #{_lambda_.21} parent=5 // pred_fallthru
        _
      %p292 = scmp.le.s32.totalorder 1, %s9
      %p293 = scmp.lt.s32.totalorder %s9, 5
      %p294 = pnand %p292, %p293
      %p295 = pneg %p294
      // Predicated region
      $region97: #{_lambda_.21} parent=5 // pred_check
        _
      $region98: #{_lambda_.21} parent=5 // pred_check_branch
        %297 = sbr.rel (%p294) target = $region100
      $region99: #{_lambda_.21} parent=5 // pred_region
        %s298 = ssub.s32 %s9, 1
        %s299 = sand.u32 %s82, 1
        %s300 = sand.u32 %s82, 1
        %s301 = smul.addr %s300, 16
        %s302 = scalar_lea.vmem [#allocation5], %s301
        // Predicated region
        $region101: #{_lambda_.21} parent=99 // pred_check
          %p303 = pneg %p95
        $region102: #{_lambda_.21} parent=99 // pred_check_branch
          %305 = sbr.rel (%p303) target = $region104
        $region103: #{_lambda_.21} parent=99 // pred_region
          _
        $region104: #{_lambda_.21} parent=99 // pred_fallthru
          _
        %s306 = sand.u32 %s114, 1
        %s307 = sand.u32 %s114, 1
        %s308 = smul.addr %s307, 16
        %s309 = scalar_lea.vmem [#allocation6], %s308
        // Predicated region
        $region105: #{_lambda_.21} parent=99 // pred_check
          %p310 = pneg %p127
        $region106: #{_lambda_.21} parent=99 // pred_check_branch
          %312 = sbr.rel (%p310) target = $region108
        $region107: #{_lambda_.21} parent=99 // pred_region
          _
        $region108: #{_lambda_.21} parent=99 // pred_fallthru
          _
        %p313 = scmp.lt.s32.totalorder %s20, 1
        %s314 = scalar_select %p313, %s20, 1
        %p315 = scmp.lt.s32.totalorder %s22, 0
        %s316 = scalar_select %p315, %s22, 0
        %p317 = scmp.lt.s32.totalorder %s21, 1
        %s318 = scalar_select %p317, %s21, 1
        %s319 = smul.addr %s316, 2
        %s320 = sadd.s32 %s318, %s319
        %s321 = smul.addr %s314, 2
        %s322 = sadd.s32 %s320, %s321
        %s323 = smul.addr %s322, 8
        %s324 = scalar_lea.vmem %s0, %s323
        %p325 = pneg %p65
        %p326 = pneg %p62
        %s327 = sand.u32 %s82, 1
        %s328 = sand.u32 %s82, 1
        %s329 = smul.addr %s328, 16
        %s330 = scalar_lea.vmem [#allocation5], %s329
        %p331 = pneg %p95
        %p332 = pneg %p92
        %s333 = sand.u32 %s114, 1
        %s334 = sand.u32 %s114, 1
        %s335 = smul.addr %s334, 16
        %s336 = scalar_lea.vmem [#allocation6], %s335
        %p337 = pneg %p127
        %p338 = pneg %p124
        %p339 = pneg %p157
        %p340 = pneg %p154
        %p341 = scmp.lt.s32.totalorder %s20, 1
        %s342 = scalar_select %p341, %s20, 1
        %p343 = scmp.lt.s32.totalorder %s22, 0
        %s344 = scalar_select %p343, %s22, 0
        %p345 = scmp.lt.s32.totalorder %s21, 1
        %s346 = scalar_select %p345, %s21, 1
        %s347 = smul.addr %s344, 2
        %s348 = sadd.s32 %s346, %s347
        %s349 = smul.addr %s342, 2
        %s350 = sadd.s32 %s348, %s349
        %s351 = smul.addr %s350, 8
        %s352 = scalar_lea.vmem %s3, %s351
        %p353 = scmp.lt.s32.totalorder %s20, 1
        %s354 = scalar_select %p353, %s20, 1
        %p355 = scmp.lt.s32.totalorder %s22, 0
        %s356 = scalar_select %p355, %s22, 0
        %p357 = scmp.lt.s32.totalorder %s21, 1
        %s358 = scalar_select %p357, %s21, 1
        %s359 = smul.addr %s356, 2
        %s360 = sadd.s32 %s358, %s359
        %s361 = smul.addr %s354, 2
        %s362 = sadd.s32 %s360, %s361
        %s363 = smul.addr %s362, 8
        %s364 = scalar_lea.vmem %s0, %s363
        %s365 = smul.u32 2, %s23
        %s366 = sadd.s32 %s21, 2
        %s367 = smul.u32 2, %s23
        %p368 = scmp.lt.s32.totalorder %s20, 1
        %s369 = scalar_select %p368, %s20, 1
        %p370 = scmp.lt.s32.totalorder %s22, 0
        %s371 = scalar_select %p370, %s22, 0
        %p372 = scmp.lt.s32.totalorder %s21, 1
        %s373 = scalar_select %p372, %s21, 1
        %s374 = smul.addr %s371, 2
        %s375 = sadd.s32 %s373, %s374
        %s376 = smul.addr %s369, 2
        %s377 = sadd.s32 %s375, %s376
        %s378 = smul.addr %s377, 8
        %s379 = scalar_lea.vmem %s3, %s378
        %p380 = scmp.eq.s32.totalorder %s23, 0
        // Predicated region
        $region109: #{_lambda_.21} parent=99 // pred_check
          %p381 = pneg %p380
        $region110: #{_lambda_.21} parent=99 // pred_check_branch
          %383 = sbr.rel (%p381) target = $region112
        $region111: #{_lambda_.21} parent=99 // pred_region
          %vm384 = vcmask 7168
          %385 = vst.msk [vmem:[#allocation2] sm:$0xff] %vm384, -inf
          %386 = vst.msk [vmem:[#allocation3] sm:$0xff] %vm384, 0.0
          %387 = vst [vmem:[#allocation4] sm:$0xff] 0.0
        $region112: #{_lambda_.21} parent=99 // pred_fallthru
          _
        %v388 = vld [vmem:[%s364] sm:$0xff]
        %v389 = vld [vmem:[%s302] sm:$0xff]
        %v390 = vld [vmem:[%s302 + $0x8] sm:$0xff]
        %391 = vmatprep.subr.mxu0 0.0
        %392 = vmatpush1.xpose.msra.mxu0 %v389
        %393 = vmatprep.subr.mxu0 0.0
        %394 = vmatpush1.xpose.msra.mxu0 %v390
        %395 = vmatprep.subr.mxu0 0.0
        %396 = vmatpush1.xpose.msra.mxu0 0.0
        %397 = vmatprep.subr.mxu0 0.0
        %398 = vmatpush1.xpose.msra.mxu0 0.0
        %399 = vmatprep.subr.mxu0 0.0
        %400 = vmatpush1.xpose.msra.mxu0 0.0
        %401 = vmatprep.subr.mxu0 0.0
        %402 = vmatpush1.xpose.msra.mxu0 0.0
        %403 = vmatprep.subr.mxu0 0.0
        %404 = vmatpush1.xpose.msra.mxu0 0.0
        %405 = vmatprep.subr.mxu0 0.0
        %406 = vmatpush1.xpose.msra.mxu0 0.0
        %407 = vmatprep.subr.mxu0 0.0
        %408 = vmatpush1.xpose.msra.mxu0 0.0
        %409 = vmatprep.subr.mxu0 0.0
        %410 = vmatpush1.xpose.msra.mxu0 0.0
        %411 = vmatprep.subr.mxu0 0.0
        %412 = vmatpush1.xpose.msra.mxu0 0.0
        %413 = vmatprep.subr.mxu0 0.0
        %414 = vmatpush1.xpose.msra.mxu0 0.0
        %415 = vmatprep.subr.mxu0 0.0
        %416 = vmatpush1.xpose.msra.mxu0 0.0
        %417 = vmatprep.subr.mxu0 0.0
        %418 = vmatpush1.xpose.msra.mxu0 0.0
        %419 = vmatprep.subr.mxu0 0.0
        %420 = vmatpush1.xpose.msra.mxu0 0.0
        %421 = vmatprep.subr.mxu0 0.0
        %422 = vmatpush1.xpose.msra.mxu0 0.0
        %423 = vmatprep.subr.mxu0 0.0
        %424 = vmatpush1.xpose.msra.mxu0 0.0
        %425 = vmatprep.subr.mxu0 0.0
        %426 = vmatpush1.xpose.msra.mxu0 0.0
        %427 = vmatprep.subr.mxu0 0.0
        %428 = vmatpush1.xpose.msra.mxu0 0.0
        %429 = vmatprep.subr.mxu0 0.0
        %430 = vmatpush1.xpose.msra.mxu0 0.0
        %431 = vmatprep.subr.mxu0 0.0
        %432 = vmatpush1.xpose.msra.mxu0 0.0
        %433 = vmatprep.subr.mxu0 0.0
        %434 = vmatpush1.xpose.msra.mxu0 0.0
        %435 = vmatprep.subr.mxu0 0.0
        %436 = vmatpush1.xpose.msra.mxu0 0.0
        %437 = vmatprep.subr.mxu0 0.0
        %438 = vmatpush1.xpose.msra.mxu0 0.0
        %439 = vmatprep.subr.mxu0 0.0
        %440 = vmatpush1.xpose.msra.mxu0 0.0
        %441 = vmatprep.subr.mxu0 0.0
        %442 = vmatpush1.xpose.msra.mxu0 0.0
        %443 = vmatprep.subr.mxu0 0.0
        %444 = vmatpush1.xpose.msra.mxu0 0.0
        %445 = vmatprep.subr.mxu0 0.0
        %446 = vmatpush1.xpose.msra.mxu0 0.0
        %447 = vmatprep.subr.mxu0 0.0
        %448 = vmatpush1.xpose.msra.mxu0 0.0
        %449 = vmatprep.subr.mxu0 0.0
        %450 = vmatpush1.xpose.msra.mxu0 0.0
        %451 = vmatprep.subr.mxu0 0.0
        %452 = vmatpush1.xpose.msra.mxu0 0.0
        %453 = vmatprep.subr.mxu0 0.0
        %454 = vmatpush1.xpose.msra.mxu0 0.0
        %455 = vmatprep.mubr.f32.mxu0 0.0
        %456 = vmatmul.mubr.f32.gmra.mrb[0].mxu0 %v388
        %v457 = vpop.f32.mrb[0].mxu0
        %v458 = vadd.f32 0.0, %v457
        %v459 = vpop.f32.mrb[0].mxu0
        %460 = vdwg.mxu0
        %v461 = vmul.f32 %v458, 0.088388346
        %v462 = vld [vmem:[#allocation2] sm:$0xff]
        %vm463 = vcmask 130048
        %v464 = vsel %vm463, %v461, -inf
        %465 = vmax.xlane.f32.xlu0 %v464
        %v466 = vpop.xlane.xlu0 %465
        %v467 = vmax.f32 %v462, %v466
        %v468 = vsub.f32 %v462, %v467
        %v469 = vmul.f32 %v468, 1.442695
        %v470 = vpow.pop %v469
        %472 = vset.pattern.permute.xlu0 0
        %473 = vperm.xlu0 %472, %v467
        %v474 = vpop.permute.xlu0 %473
        %v476 = vsub.f32 %v461, %v474
        %v477 = vmul.f32 %v476, 1.442695
        %v478 = vpow.pop %v477
        %v479 = vld [vmem:[#allocation3] sm:$0xff]
        %v480 = vmul.f32 %v470, %v479
        %v481 = vsel %vm463, %v478, 0.0
        %482 = vadd.xlane.f32.xlu0 %v481
        %v483 = vpop.xlane.xlu0 %482
        %v484 = vadd.f32 %v480, %v483
        %vm485 = vcmask 7168
        %486 = vst.msk [vmem:[#allocation3] sm:$0xff] %vm485, %v484
        %v487 = vld [vmem:[#allocation4] sm:$0xff]
        %489 = vset.pattern.permute.xlu0 0
        %490 = vperm.xlu0 %489, %v470
        %v491 = vpop.permute.xlu0 %490
        %v493 = vmul.f32 %v491, %v487
        %v494 = vld [vmem:[%s309] sm:$0xff]
        %v495 = vld [vmem:[%s309 + $0x8] sm:$0xff]
        %v497 = vsel %vm463, %v478, 0
        %499 = vmatprep.subr.mxu0 0.0
        %500 = vmatpush1.msra.mxu0 %v494
        %501 = vmatprep.subr.mxu0 0.0
        %502 = vmatpush1.msra.mxu0 %v495
        %503 = vmatprep.subr.mxu0 0.0
        %504 = vmatpush1.msra.mxu0 0.0
        %505 = vmatprep.subr.mxu0 0.0
        %506 = vmatpush1.msra.mxu0 0.0
        %507 = vmatprep.subr.mxu0 0.0
        %508 = vmatpush1.msra.mxu0 0.0
        %509 = vmatprep.subr.mxu0 0.0
        %510 = vmatpush1.msra.mxu0 0.0
        %511 = vmatprep.subr.mxu0 0.0
        %512 = vmatpush1.msra.mxu0 0.0
        %513 = vmatprep.subr.mxu0 0.0
        %514 = vmatpush1.msra.mxu0 0.0
        %515 = vmatprep.subr.mxu0 0.0
        %516 = vmatpush1.msra.mxu0 0.0
        %517 = vmatprep.subr.mxu0 0.0
        %518 = vmatpush1.msra.mxu0 0.0
        %519 = vmatprep.subr.mxu0 0.0
        %520 = vmatpush1.msra.mxu0 0.0
        %521 = vmatprep.subr.mxu0 0.0
        %522 = vmatpush1.msra.mxu0 0.0
        %523 = vmatprep.subr.mxu0 0.0
        %524 = vmatpush1.msra.mxu0 0.0
        %525 = vmatprep.subr.mxu0 0.0
        %526 = vmatpush1.msra.mxu0 0.0
        %527 = vmatprep.subr.mxu0 0.0
        %528 = vmatpush1.msra.mxu0 0.0
        %529 = vmatprep.subr.mxu0 0.0
        %530 = vmatpush1.msra.mxu0 0.0
        %531 = vmatprep.subr.mxu0 0.0
        %532 = vmatpush1.msra.mxu0 0.0
        %533 = vmatprep.subr.mxu0 0.0
        %534 = vmatpush1.msra.mxu0 0.0
        %535 = vmatprep.subr.mxu0 0.0
        %536 = vmatpush1.msra.mxu0 0.0
        %537 = vmatprep.subr.mxu0 0.0
        %538 = vmatpush1.msra.mxu0 0.0
        %539 = vmatprep.subr.mxu0 0.0
        %540 = vmatpush1.msra.mxu0 0.0
        %541 = vmatprep.subr.mxu0 0.0
        %542 = vmatpush1.msra.mxu0 0.0
        %543 = vmatprep.subr.mxu0 0.0
        %544 = vmatpush1.msra.mxu0 0.0
        %545 = vmatprep.subr.mxu0 0.0
        %546 = vmatpush1.msra.mxu0 0.0
        %547 = vmatprep.subr.mxu0 0.0
        %548 = vmatpush1.msra.mxu0 0.0
        %549 = vmatprep.subr.mxu0 0.0
        %550 = vmatpush1.msra.mxu0 0.0
        %551 = vmatprep.subr.mxu0 0.0
        %552 = vmatpush1.msra.mxu0 0.0
        %553 = vmatprep.subr.mxu0 0.0
        %554 = vmatpush1.msra.mxu0 0.0
        %555 = vmatprep.subr.mxu0 0.0
        %556 = vmatpush1.msra.mxu0 0.0
        %557 = vmatprep.subr.mxu0 0.0
        %558 = vmatpush1.msra.mxu0 0.0
        %559 = vmatprep.subr.mxu0 0.0
        %560 = vmatpush1.msra.mxu0 0.0
        %561 = vmatprep.subr.mxu0 0.0
        %562 = vmatpush1.msra.mxu0 0.0
        %563 = vmatprep.mubr.f32.mxu0 0.0
        %564 = vmatmul.mubr.f32.gmra.mrb[0].mxu0 %v497
        %v565 = vpop.f32.mrb[0].mxu0
        %v566 = vadd.f32 0.0, %v565
        %v567 = vpop.f32.mrb[0].mxu0
        %568 = vdwg.mxu0
        %v569 = vadd.f32 %v493, %v566
        %570 = vst [vmem:[#allocation4] sm:$0xff] %v569
        %571 = vst.msk [vmem:[#allocation2] sm:$0xff] %vm485, %v467
        // Predicated region
        $region113: #{_lambda_.21} parent=99 // pred_check
          %p572 = pneg %p380
        $region114: #{_lambda_.21} parent=99 // pred_check_branch
          %574 = sbr.rel (%p572) target = $region116
        $region115: #{_lambda_.21} parent=99 // pred_region
          %v575 = vld [vmem:[#allocation3] sm:$0xff]
          %v576 = vrcp.pop %v575
          %v577 = vld [vmem:[#allocation4] sm:$0xff]
          %579 = vset.pattern.permute.xlu0 0
          %580 = vperm.xlu0 %579, %v576
          %v581 = vpop.permute.xlu0 %580
          %v583 = vmul.f32 %v577, %v581
          %584 = vst [vmem:[%s379] sm:$0xff] %v583
        $region116: #{_lambda_.21} parent=99 // pred_fallthru
          _
        %p585 = scmp.lt.s32.totalorder %s20, 1
        %s586 = scalar_select %p585, %s20, 1
        %p587 = scmp.lt.s32.totalorder %s22, 0
        %s588 = scalar_select %p587, %s22, 0
        %p589 = scmp.lt.s32.totalorder %s21, 1
        %s590 = scalar_select %p589, %s21, 1
        %s591 = smul.addr %s588, 2
        %s592 = sadd.s32 %s590, %s591
        %s593 = smul.addr %s586, 2
        %s594 = sadd.s32 %s592, %s593
        %s595 = smul.addr %s594, 8
        %s596 = scalar_lea.vmem %s3, %s595
        // Predicated region
        $region117: #{_lambda_.21} parent=99 // pred_check
          %p597 = pneg %p154
        $region118: #{_lambda_.21} parent=99 // pred_check_branch
          %599 = sbr.rel (%p597) target = $region120
        $region119: #{_lambda_.21} parent=99 // pred_region
          _
        $region120: #{_lambda_.21} parent=99 // pred_fallthru
          _
      $region100: #{_lambda_.21} parent=5 // pred_fallthru
        _
      %p600 = scmp.le.s32.totalorder 2, %s9
      // Predicated region
      $region121: #{_lambda_.21} parent=5 // pred_check
        %p601 = pneg %p600
      $region122: #{_lambda_.21} parent=5 // pred_check_branch
        %603 = sbr.rel (%p601) target = $region124
      $region123: #{_lambda_.21} parent=5 // pred_region
        %s604 = ssub.s32 %s9, 2
        // Predicated region
        $region125: #{_lambda_.21} parent=123 // pred_check
          %p605 = pneg %p160
        $region126: #{_lambda_.21} parent=123 // pred_check_branch
          %607 = sbr.rel (%p605) target = $region128
        $region127: #{_lambda_.21} parent=123 // pred_region
          %p608 = scmp.lt.s32.totalorder %s24, 1
          %s609 = scalar_select %p608, %s24, 1
          %p610 = scmp.lt.s32.totalorder %s26, 0
          %s611 = scalar_select %p610, %s26, 0
          %p612 = scmp.lt.s32.totalorder %s25, 1
          %s613 = scalar_select %p612, %s25, 1
          %s614 = smul.addr %s611, 2
          %s615 = sadd.s32 %s613, %s614
          %s616 = smul.addr %s609, 2
          %s617 = sadd.s32 %s615, %s616
          %s618 = smul.addr %s617, 8
          %s619 = scalar_lea.vmem %s3, %s618
        $region128: #{_lambda_.21} parent=123 // pred_fallthru
          _
      $region124: #{_lambda_.21} parent=5 // pred_fallthru
        _
    $region6: #{_lambda_.21} parent=1 // loop_footer
      %s13 = sadd.s32 1, %s9
    $region7: #{_lambda_.21} parent=1 // loop_footer_branch
      %8 = sbr.rel target = $region3
    $region8: #{_lambda_.21} parent=1 // loop_exit
      _

// kernel: _lambda_.20
$region0: #{_lambda_.20}
  #allocation0 [shape = 'u32[]', space=smem, size = 0x4, offset = 0x4, fixed_abs, tag = 'smem constant byte address 0x4 - core index']
  #allocation1 [shape = 'u32[144,128]{1,0:T(1,128)}', space=vmem, size = 0x12000, scoped, tag = 'internal scratch']
  #allocation2 [shape = 'f32[32,256]{1,0:T(8,128)}', space=vmem, size = 0x8000, scoped, tag = 'scratch operand']
  %s0 = inlined_call_operand.vmem [shape: f32[32,256], index: 0, kind: input, shape index: {}]
  %s1 = inlined_call_operand.vmem [shape: f32[256,512], index: 1, kind: input, shape index: {}]
  %s2 = inlined_call_operand.vmem [shape: f32[1,512], index: 2, kind: input, shape index: {}]
  %s3 = inlined_call_operand.vmem [shape: f32[32,512], index: 3, kind: output, shape index: {}]
  %s4 = sld [smem:[#allocation0]]
  $region95: #{_lambda_.20} parent=0
    _
  %s6 = ssub.s32 1, %s4
  %s7 = scalar_select 0, %s6, %s4
  $region1: #{_lambda_.20} parent=0
    #allocation3 [shape = 'u8[524288]{0}', space=vmem, size = 0x80000, scoped, tag = 'input window, operand 1']
    #allocation4 [shape = 'u8[65536]{0}', space=vmem, size = 0x10000, scoped, tag = 'output window, operand 0']
    loop: start=0, step=1, limit=4
    $region2: #{_lambda_.20} parent=1 // loop_pre_header
      _
    $region3: #{_lambda_.20} parent=1 // loop_header
      %s9 = sphi 0, %s13
      %p10 = scmp.ge.s32.totalorder %s9, 4
      %s16 = sphi 0, %s35
      %s17 = sphi 0, %s31
      %s18 = sphi 0, %s27
      %s19 = sphi 0, %s16
      %s20 = sphi 0, %s17
      %s21 = sphi 0, %s18
      %s22 = sphi 0, %s19
      %s23 = sphi 0, %s20
      %s24 = sphi 0, %s21
      %s40 = sphi 0, %s42
      %s43 = sphi 0, %s40
      %s44 = sphi 0, %s43
      %s60 = sphi 0, %s44
      %s68 = sphi 0, %s70
      %s71 = sphi 0, %s68
      %s72 = sphi 0, %s71
      %s88 = sphi 0, %s72
      %s94 = sphi 0, %s96
      %s97 = sphi 0, %s94
      %s98 = sphi 0, %s97
      %s114 = sphi 0, %s98
      %s122 = sphi 0, %s124
      %s125 = sphi 0, %s122
      %s126 = sphi 0, %s125
      %s142 = sphi 0, %s126
    $region4: #{_lambda_.20} parent=1 // loop_header_branch
      %12 = sbr.rel (%p10) target = $region8
    $region5: #{_lambda_.20} parent=1 // loop_body
      %s14 = ssub.s32 %s9, 1
      %s15 = ssub.s32 %s9, 2
      %s25 = sadd.s32 1, %s18
      %p26 = scmp.ge.s32.totalorder %s25, 1
      %s27 = scalar_select %p26, 0, %s25
      %s28 = sadd.s32 1, %s17
      %s29 = scalar_select %p26, %s28, %s17
      %p30 = scmp.ge.s32.totalorder %s29, 2
      %s31 = scalar_select %p30, 0, %s29
      %s32 = sadd.s32 1, %s16
      %s33 = scalar_select %p30, %s32, %s16
      %p34 = scmp.ge.s32.totalorder %s33, 1
      %s35 = scalar_select %p34, 0, %s33
      %s36 = ssub.s32 %s16, %s35
      %s37 = ssub.s32 %s18, %s27
      %s38 = sor.u32 %s36, %s37
      %p39 = scmp.eq.s32.totalorder %s38, 0
      %s41 = sadd.s32 %s40, 1
      %s42 = scalar_select %p39, %s40, %s41
      %p45 = pneg %p39
      %p46 = scmp.eq.s32.totalorder %s9, 1
      %p47 = por %p45, %p46
      %p48 = scmp.ne.s32.totalorder %s40, %s43
      %p49 = scmp.eq.s32.totalorder %s9, 0
      %p50 = por %p48, %p49
      %p51 = scmp.ne.s32.totalorder %s40, %s43
      %p52 = scmp.eq.s32.totalorder %s14, 1
      %p53 = por %p51, %p52
      %p54 = scmp.ne.s32.totalorder %s43, %s44
      %p55 = scmp.eq.s32.totalorder %s14, 0
      %p56 = por %p54, %p55
      %p57 = scmp.ne.s32.totalorder %s43, %s44
      %p58 = scmp.eq.s32.totalorder %s15, 1
      %p59 = por %p57, %p58
      %p61 = scmp.ne.s32.totalorder %s44, %s60
      %p62 = scmp.eq.s32.totalorder %s15, 0
      %p63 = por %p61, %p62
      %s64 = ssub.s32 %s18, %s27
      %s65 = ssub.s32 %s17, %s31
      %s66 = sor.u32 %s64, %s65
      %p67 = scmp.eq.s32.totalorder %s66, 0
      %s69 = sadd.s32 %s68, 1
      %s70 = scalar_select %p67, %s68, %s69
      %p73 = pneg %p67
      %p74 = scmp.eq.s32.totalorder %s9, 1
      %p75 = por %p73, %p74
      %p76 = scmp.ne.s32.totalorder %s68, %s71
      %p77 = scmp.eq.s32.totalorder %s9, 0
      %p78 = por %p76, %p77
      %p79 = scmp.ne.s32.totalorder %s68, %s71
      %p80 = scmp.eq.s32.totalorder %s14, 1
      %p81 = por %p79, %p80
      %p82 = scmp.ne.s32.totalorder %s71, %s72
      %p83 = scmp.eq.s32.totalorder %s14, 0
      %p84 = por %p82, %p83
      %p85 = scmp.ne.s32.totalorder %s71, %s72
      %p86 = scmp.eq.s32.totalorder %s15, 1
      %p87 = por %p85, %p86
      %p89 = scmp.ne.s32.totalorder %s72, %s88
      %p90 = scmp.eq.s32.totalorder %s15, 0
      %p91 = por %p89, %p90
      %s92 = ssub.s32 %s17, %s31
      %p93 = scmp.eq.s32.totalorder %s92, 0
      %s95 = sadd.s32 %s94, 1
      %s96 = scalar_select %p93, %s94, %s95
      %p99 = pneg %p93
      %p100 = scmp.eq.s32.totalorder %s9, 1
      %p101 = por %p99, %p100
      %p102 = scmp.ne.s32.totalorder %s94, %s97
      %p103 = scmp.eq.s32.totalorder %s9, 0
      %p104 = por %p102, %p103
      %p105 = scmp.ne.s32.totalorder %s94, %s97
      %p106 = scmp.eq.s32.totalorder %s14, 1
      %p107 = por %p105, %p106
      %p108 = scmp.ne.s32.totalorder %s97, %s98
      %p109 = scmp.eq.s32.totalorder %s14, 0
      %p110 = por %p108, %p109
      %p111 = scmp.ne.s32.totalorder %s97, %s98
      %p112 = scmp.eq.s32.totalorder %s15, 1
      %p113 = por %p111, %p112
      %p115 = scmp.ne.s32.totalorder %s98, %s114
      %p116 = scmp.eq.s32.totalorder %s15, 0
      %p117 = por %p115, %p116
      %s118 = ssub.s32 %s16, %s35
      %s119 = ssub.s32 %s17, %s31
      %s120 = sor.u32 %s118, %s119
      %p121 = scmp.eq.s32.totalorder %s120, 0
      %s123 = sadd.s32 %s122, 1
      %s124 = scalar_select %p121, %s122, %s123
      %p127 = pneg %p121
      %p128 = scmp.eq.s32.totalorder %s9, 1
      %p129 = por %p127, %p128
      %p130 = scmp.ne.s32.totalorder %s122, %s125
      %p131 = scmp.eq.s32.totalorder %s9, 0
      %p132 = por %p130, %p131
      %p133 = scmp.ne.s32.totalorder %s122, %s125
      %p134 = scmp.eq.s32.totalorder %s14, 1
      %p135 = por %p133, %p134
      %p136 = scmp.ne.s32.totalorder %s125, %s126
      %p137 = scmp.eq.s32.totalorder %s14, 0
      %p138 = por %p136, %p137
      %p139 = scmp.ne.s32.totalorder %s125, %s126
      %p140 = scmp.eq.s32.totalorder %s15, 1
      %p141 = por %p139, %p140
      %p143 = scmp.ne.s32.totalorder %s126, %s142
      %p144 = scmp.eq.s32.totalorder %s15, 0
      %p145 = por %p143, %p144
      %p146 = scmp.le.s32.totalorder 1, %s9
      %p147 = scmp.lt.s32.totalorder %s9, 3
      %p148 = pnand %p146, %p147
      %p149 = pneg %p148
      // Predicated region
      $region9: #{_lambda_.20} parent=5 // pred_check
        _
      $region10: #{_lambda_.20} parent=5 // pred_check_branch
        %151 = sbr.rel (%p148) target = $region12
      $region11: #{_lambda_.20} parent=5 // pred_region
        %s152 = ssub.s32 %s9, 1
        // Predicated region
        $region13: #{_lambda_.20} parent=11 // pred_check
          %p153 = pneg %p56
        $region14: #{_lambda_.20} parent=11 // pred_check_branch
          %155 = sbr.rel (%p153) target = $region16
        $region15: #{_lambda_.20} parent=11 // pred_region
          %s156 = smul.u32 4, %s19
          %s157 = smul.u32 2, %s21
          %p158 = scmp.lt.s32.totalorder %s156, 3
          %s159 = scalar_select %p158, %s156, 3
          %p160 = scmp.lt.s32.totalorder %s157, 1
          %s161 = scalar_select %p160, %s157, 1
          %s162 = smul.addr %s159, 2
          %s163 = sadd.s32 %s161, %s162
          %s164 = smul.addr %s163, 8
          %s165 = scalar_lea.vmem %s0, %s164
          %s166 = smul.u32 4, %s19
          %s167 = smul.u32 2, %s21
        $region16: #{_lambda_.20} parent=11 // pred_fallthru
          _
      $region12: #{_lambda_.20} parent=5 // pred_fallthru
        _
      %p168 = scmp.lt.s32.totalorder %s9, 2
      // Predicated region
      $region17: #{_lambda_.20} parent=5 // pred_check
        %p169 = pneg %p168
      $region18: #{_lambda_.20} parent=5 // pred_check_branch
        %171 = sbr.rel (%p169) target = $region20
      $region19: #{_lambda_.20} parent=5 // pred_region
        // Predicated region
        $region21: #{_lambda_.20} parent=19 // pred_check
          %p172 = pneg %p78
        $region22: #{_lambda_.20} parent=19 // pred_check_branch
          %174 = sbr.rel (%p172) target = $region24
        $region23: #{_lambda_.20} parent=19 // pred_region
          %s175 = sand.u32 %s68, 1
          %s176 = sand.u32 %s68, 1
          %s177 = smul.addr %s176, 512
          %s178 = scalar_lea.vmem [#allocation3], %s177
          %s179 = smul.u32 32, %s18
          %s180 = smul.u32 2, %s17
          %s181 = smul.addr %s179, 4
          %s182 = sadd.s32 %s180, %s181
          %s183 = smul.addr %s182, 8
          %s184 = scalar_lea.vmem %s1, %s183
          // Predicated region
          $region25: #{_lambda_.20} parent=23 // pred_check
            _
          $region26: #{_lambda_.20} parent=23 // pred_check_branch
            %186 = sbr.rel (0) target = $region28
          $region27: #{_lambda_.20} parent=23 // pred_region
            // Predicated region
            $region29: #{_lambda_.20} parent=27 // pred_check
              _
            $region30: #{_lambda_.20} parent=27 // pred_check_branch
              %188 = sbr.rel (0) target = $region32
            $region31: #{_lambda_.20} parent=27 // pred_region
              loop: start=0, step=1, limit=1
              $region33: #{_lambda_.20} parent=31 // loop_pre_header
                _
              $region34: #{_lambda_.20} parent=31 // loop_header
                %s190 = sphi 0, %s194
                %p191 = scmp.ge.s32.totalorder %s190, 1
                %s195 = sphi %s184, %s184
                %s196 = sphi %s178, %s178
              $region35: #{_lambda_.20} parent=31 // loop_header_branch
                %193 = sbr.rel (%p191) target = $region39
              $region36: #{_lambda_.20} parent=31 // loop_body
                %v197 = vld [vmem:[%s195] sm:$0xff]
                %198 = vst [vmem:[%s196] sm:$0xff] %v197
                %v199 = vld [vmem:[%s195 + $0x8] sm:$0xff]
                %200 = vst [vmem:[%s196 + $0x8] sm:$0xff] %v199
                %v201 = vld [vmem:[%s195 + $0x20] sm:$0xff]
                %202 = vst [vmem:[%s196 + $0x10] sm:$0xff] %v201
                %v203 = vld [vmem:[%s195 + $0x28] sm:$0xff]
                %204 = vst [vmem:[%s196 + $0x18] sm:$0xff] %v203
                %v205 = vld [vmem:[%s195 + $0x40] sm:$0xff]
                %206 = vst [vmem:[%s196 + $0x20] sm:$0xff] %v205
                %v207 = vld [vmem:[%s195 + $0x48] sm:$0xff]
                %208 = vst [vmem:[%s196 + $0x28] sm:$0xff] %v207
                %v209 = vld [vmem:[%s195 + $0x60] sm:$0xff]
                %210 = vst [vmem:[%s196 + $0x30] sm:$0xff] %v209
                %v211 = vld [vmem:[%s195 + $0x68] sm:$0xff]
                %212 = vst [vmem:[%s196 + $0x38] sm:$0xff] %v211
                %v213 = vld [vmem:[%s195 + $0x80] sm:$0xff]
                %214 = vst [vmem:[%s196 + $0x40] sm:$0xff] %v213
                %v215 = vld [vmem:[%s195 + $0x88] sm:$0xff]
                %216 = vst [vmem:[%s196 + $0x48] sm:$0xff] %v215
                %v217 = vld [vmem:[%s195 + $0xa0] sm:$0xff]
                %218 = vst [vmem:[%s196 + $0x50] sm:$0xff] %v217
                %v219 = vld [vmem:[%s195 + $0xa8] sm:$0xff]
                %220 = vst [vmem:[%s196 + $0x58] sm:$0xff] %v219
                %v221 = vld [vmem:[%s195 + $0xc0] sm:$0xff]
                %222 = vst [vmem:[%s196 + $0x60] sm:$0xff] %v221
                %v223 = vld [vmem:[%s195 + $0xc8] sm:$0xff]
                %224 = vst [vmem:[%s196 + $0x68] sm:$0xff] %v223
                %v225 = vld [vmem:[%s195 + $0xe0] sm:$0xff]
                %226 = vst [vmem:[%s196 + $0x70] sm:$0xff] %v225
                %v227 = vld [vmem:[%s195 + $0xe8] sm:$0xff]
                %228 = vst [vmem:[%s196 + $0x78] sm:$0xff] %v227
                %v229 = vld [vmem:[%s195 + $0x100] sm:$0xff]
                %230 = vst [vmem:[%s196 + $0x80] sm:$0xff] %v229
                %v231 = vld [vmem:[%s195 + $0x108] sm:$0xff]
                %232 = vst [vmem:[%s196 + $0x88] sm:$0xff] %v231
                %v233 = vld [vmem:[%s195 + $0x120] sm:$0xff]
                %234 = vst [vmem:[%s196 + $0x90] sm:$0xff] %v233
                %v235 = vld [vmem:[%s195 + $0x128] sm:$0xff]
                %236 = vst [vmem:[%s196 + $0x98] sm:$0xff] %v235
                %v237 = vld [vmem:[%s195 + $0x140] sm:$0xff]
                %238 = vst [vmem:[%s196 + $0xa0] sm:$0xff] %v237
                %v239 = vld [vmem:[%s195 + $0x148] sm:$0xff]
                %240 = vst [vmem:[%s196 + $0xa8] sm:$0xff] %v239
                %v241 = vld [vmem:[%s195 + $0x160] sm:$0xff]
                %242 = vst [vmem:[%s196 + $0xb0] sm:$0xff] %v241
                %v243 = vld [vmem:[%s195 + $0x168] sm:$0xff]
                %244 = vst [vmem:[%s196 + $0xb8] sm:$0xff] %v243
                %v245 = vld [vmem:[%s195 + $0x180] sm:$0xff]
                %246 = vst [vmem:[%s196 + $0xc0] sm:$0xff] %v245
                %v247 = vld [vmem:[%s195 + $0x188] sm:$0xff]
                %248 = vst [vmem:[%s196 + $0xc8] sm:$0xff] %v247
                %v249 = vld [vmem:[%s195 + $0x1a0] sm:$0xff]
                %250 = vst [vmem:[%s196 + $0xd0] sm:$0xff] %v249
                %v251 = vld [vmem:[%s195 + $0x1a8] sm:$0xff]
                %252 = vst [vmem:[%s196 + $0xd8] sm:$0xff] %v251
                %v253 = vld [vmem:[%s195 + $0x1c0] sm:$0xff]
                %254 = vst [vmem:[%s196 + $0xe0] sm:$0xff] %v253
                %v255 = vld [vmem:[%s195 + $0x1c8] sm:$0xff]
                %256 = vst [vmem:[%s196 + $0xe8] sm:$0xff] %v255
                %v257 = vld [vmem:[%s195 + $0x1e0] sm:$0xff]
                %258 = vst [vmem:[%s196 + $0xf0] sm:$0xff] %v257
                %v259 = vld [vmem:[%s195 + $0x1e8] sm:$0xff]
                %260 = vst [vmem:[%s196 + $0xf8] sm:$0xff] %v259
                %v261 = vld [vmem:[%s195 + $0x200] sm:$0xff]
                %262 = vst [vmem:[%s196 + $0x100] sm:$0xff] %v261
                %v263 = vld [vmem:[%s195 + $0x208] sm:$0xff]
                %264 = vst [vmem:[%s196 + $0x108] sm:$0xff] %v263
                %v265 = vld [vmem:[%s195 + $0x220] sm:$0xff]
                %266 = vst [vmem:[%s196 + $0x110] sm:$0xff] %v265
                %v267 = vld [vmem:[%s195 + $0x228] sm:$0xff]
                %268 = vst [vmem:[%s196 + $0x118] sm:$0xff] %v267
                %v269 = vld [vmem:[%s195 + $0x240] sm:$0xff]
                %270 = vst [vmem:[%s196 + $0x120] sm:$0xff] %v269
                %v271 = vld [vmem:[%s195 + $0x248] sm:$0xff]
                %272 = vst [vmem:[%s196 + $0x128] sm:$0xff] %v271
                %v273 = vld [vmem:[%s195 + $0x260] sm:$0xff]
                %274 = vst [vmem:[%s196 + $0x130] sm:$0xff] %v273
                %v275 = vld [vmem:[%s195 + $0x268] sm:$0xff]
                %276 = vst [vmem:[%s196 + $0x138] sm:$0xff] %v275
                %v277 = vld [vmem:[%s195 + $0x280] sm:$0xff]
                %278 = vst [vmem:[%s196 + $0x140] sm:$0xff] %v277
                %v279 = vld [vmem:[%s195 + $0x288] sm:$0xff]
                %280 = vst [vmem:[%s196 + $0x148] sm:$0xff] %v279
                %v281 = vld [vmem:[%s195 + $0x2a0] sm:$0xff]
                %282 = vst [vmem:[%s196 + $0x150] sm:$0xff] %v281
                %v283 = vld [vmem:[%s195 + $0x2a8] sm:$0xff]
                %284 = vst [vmem:[%s196 + $0x158] sm:$0xff] %v283
                %v285 = vld [vmem:[%s195 + $0x2c0] sm:$0xff]
                %286 = vst [vmem:[%s196 + $0x160] sm:$0xff] %v285
                %v287 = vld [vmem:[%s195 + $0x2c8] sm:$0xff]
                %288 = vst [vmem:[%s196 + $0x168] sm:$0xff] %v287
                %v289 = vld [vmem:[%s195 + $0x2e0] sm:$0xff]
                %290 = vst [vmem:[%s196 + $0x170] sm:$0xff] %v289
                %v291 = vld [vmem:[%s195 + $0x2e8] sm:$0xff]
                %292 = vst [vmem:[%s196 + $0x178] sm:$0xff] %v291
                %v293 = vld [vmem:[%s195 + $0x300] sm:$0xff]
                %294 = vst [vmem:[%s196 + $0x180] sm:$0xff] %v293
                %v295 = vld [vmem:[%s195 + $0x308] sm:$0xff]
                %296 = vst [vmem:[%s196 + $0x188] sm:$0xff] %v295
                %v297 = vld [vmem:[%s195 + $0x320] sm:$0xff]
                %298 = vst [vmem:[%s196 + $0x190] sm:$0xff] %v297
                %v299 = vld [vmem:[%s195 + $0x328] sm:$0xff]
                %300 = vst [vmem:[%s196 + $0x198] sm:$0xff] %v299
                %v301 = vld [vmem:[%s195 + $0x340] sm:$0xff]
                %302 = vst [vmem:[%s196 + $0x1a0] sm:$0xff] %v301
                %v303 = vld [vmem:[%s195 + $0x348] sm:$0xff]
                %304 = vst [vmem:[%s196 + $0x1a8] sm:$0xff] %v303
                %v305 = vld [vmem:[%s195 + $0x360] sm:$0xff]
                %306 = vst [vmem:[%s196 + $0x1b0] sm:$0xff] %v305
                %v307 = vld [vmem:[%s195 + $0x368] sm:$0xff]
                %308 = vst [vmem:[%s196 + $0x1b8] sm:$0xff] %v307
                %v309 = vld [vmem:[%s195 + $0x380] sm:$0xff]
                %310 = vst [vmem:[%s196 + $0x1c0] sm:$0xff] %v309
                %v311 = vld [vmem:[%s195 + $0x388] sm:$0xff]
                %312 = vst [vmem:[%s196 + $0x1c8] sm:$0xff] %v311
                %v313 = vld [vmem:[%s195 + $0x3a0] sm:$0xff]
                %314 = vst [vmem:[%s196 + $0x1d0] sm:$0xff] %v313
                %v315 = vld [vmem:[%s195 + $0x3a8] sm:$0xff]
                %316 = vst [vmem:[%s196 + $0x1d8] sm:$0xff] %v315
                %v317 = vld [vmem:[%s195 + $0x3c0] sm:$0xff]
                %318 = vst [vmem:[%s196 + $0x1e0] sm:$0xff] %v317
                %v319 = vld [vmem:[%s195 + $0x3c8] sm:$0xff]
                %320 = vst [vmem:[%s196 + $0x1e8] sm:$0xff] %v319
                %v321 = vld [vmem:[%s195 + $0x3e0] sm:$0xff]
                %322 = vst [vmem:[%s196 + $0x1f0] sm:$0xff] %v321
                %v323 = vld [vmem:[%s195 + $0x3e8] sm:$0xff]
                %324 = vst [vmem:[%s196 + $0x1f8] sm:$0xff] %v323
              $region37: #{_lambda_.20} parent=31 // loop_footer
                %s194 = sadd.s32 1, %s190
              $region38: #{_lambda_.20} parent=31 // loop_footer_branch
                %189 = sbr.rel target = $region34
              $region39: #{_lambda_.20} parent=31 // loop_exit
                _
            $region32: #{_lambda_.20} parent=27 // pred_fallthru
              _
            // Predicated region
            $region40: #{_lambda_.20} parent=27 // pred_check
              _
            $region41: #{_lambda_.20} parent=27 // pred_check_branch
              %326 = sbr.rel target = $region43
            $region42: #{_lambda_.20} parent=27 // pred_region
              _
            $region43: #{_lambda_.20} parent=27 // pred_fallthru
              _
          $region28: #{_lambda_.20} parent=23 // pred_fallthru
            _
          %327 = vnop
        $region24: #{_lambda_.20} parent=19 // pred_fallthru
          _
        // Predicated region
        $region44: #{_lambda_.20} parent=19 // pred_check
          %p328 = pneg %p104
        $region45: #{_lambda_.20} parent=19 // pred_check_branch
          %330 = sbr.rel (%p328) target = $region47
        $region46: #{_lambda_.20} parent=19 // pred_region
          %s331 = smul.u32 2, %s17
          %p332 = scmp.lt.s32.totalorder %s331, 3
          %s333 = scalar_select %p332, %s331, 3
          %s334 = scalar_lea.vmem %s2, %s333
          %s335 = smul.u32 2, %s17
        $region47: #{_lambda_.20} parent=19 // pred_fallthru
          _
      $region20: #{_lambda_.20} parent=5 // pred_fallthru
        _
      %p336 = scmp.le.s32.totalorder 1, %s9
      %p337 = scmp.lt.s32.totalorder %s9, 3
      %p338 = pnand %p336, %p337
      %p339 = pneg %p338
      // Predicated region
      $region48: #{_lambda_.20} parent=5 // pred_check
        _
      $region49: #{_lambda_.20} parent=5 // pred_check_branch
        %341 = sbr.rel (%p338) target = $region51
      $region50: #{_lambda_.20} parent=5 // pred_region
        %s342 = ssub.s32 %s9, 1
        %s343 = sand.u32 %s71, 1
        %s344 = sand.u32 %s71, 1
        %s345 = smul.addr %s344, 512
        %s346 = scalar_lea.vmem [#allocation3], %s345
        // Predicated region
        $region52: #{_lambda_.20} parent=50 // pred_check
          %p347 = pneg %p84
        $region53: #{_lambda_.20} parent=50 // pred_check_branch
          %349 = sbr.rel (%p347) target = $region55
        $region54: #{_lambda_.20} parent=50 // pred_region
          _
        $region55: #{_lambda_.20} parent=50 // pred_fallthru
          _
        %s350 = smul.u32 4, %s19
        %s351 = smul.u32 2, %s21
        %p352 = scmp.lt.s32.totalorder %s350, 3
        %s353 = scalar_select %p352, %s350, 3
        %p354 = scmp.lt.s32.totalorder %s351, 1
        %s355 = scalar_select %p354, %s351, 1
        %s356 = smul.addr %s353, 2
        %s357 = sadd.s32 %s355, %s356
        %s358 = smul.addr %s357, 8
        %s359 = scalar_lea.vmem %s0, %s358
        %p360 = pneg %p56
        %p361 = pneg %p53
        %s362 = sand.u32 %s71, 1
        %s363 = sand.u32 %s71, 1
        %s364 = smul.addr %s363, 512
        %s365 = scalar_lea.vmem [#allocation3], %s364
        %p366 = pneg %p84
        %p367 = pneg %p81
        %s368 = smul.u32 2, %s20
        %p369 = scmp.lt.s32.totalorder %s368, 3
        %s370 = scalar_select %p369, %s368, 3
        %s371 = scalar_lea.vmem %s2, %s370
        %p372 = pneg %p110
        %p373 = pneg %p107
        %p374 = pneg %p138
        %p375 = pneg %p135
        %s376 = sand.u32 %s125, 1
        %s377 = sand.u32 %s125, 1
        %s378 = smul.addr %s377, 64
        %s379 = scalar_lea.vmem [#allocation4], %s378
        %s380 = smul.u32 4, %s19
        %s381 = smul.u32 2, %s21
        %p382 = scmp.lt.s32.totalorder %s380, 3
        %s383 = scalar_select %p382, %s380, 3
        %p384 = scmp.lt.s32.totalorder %s381, 1
        %s385 = scalar_select %p384, %s381, 1
        %s386 = smul.addr %s383, 2
        %s387 = sadd.s32 %s385, %s386
        %s388 = smul.addr %s387, 8
        %s389 = scalar_lea.vmem %s0, %s388
        %s390 = smul.u32 4, %s19
        %s391 = smul.u32 2, %s21
        %s392 = smul.u32 32, %s21
        %s393 = smul.u32 2, %s20
        %s394 = smul.u32 2, %s20
        %p395 = scmp.lt.s32.totalorder %s394, 3
        %s396 = scalar_select %p395, %s394, 3
        %s397 = scalar_lea.vmem %s2, %s396
        %s398 = smul.u32 2, %s20
        %s399 = smul.u32 4, %s19
        %s400 = smul.u32 2, %s20
        %p401 = scmp.eq.s32.totalorder %s21, 0
        // Predicated region
        $region56: #{_lambda_.20} parent=50 // pred_check
          %p402 = pneg %p401
        $region57: #{_lambda_.20} parent=50 // pred_check_branch
          %404 = sbr.rel (%p402) target = $region59
        $region58: #{_lambda_.20} parent=50 // pred_region
          %405 = vst [vmem:[#allocation2] sm:$0xff] 0.0
          %406 = vst [vmem:[#allocation2 + $0x8] sm:$0xff] 0.0
          %407 = vst [vmem:[#allocation2 + $0x10] sm:$0xff] 0.0
          %408 = vst [vmem:[#allocation2 + $0x18] sm:$0xff] 0.0
          %409 = vst [vmem:[#allocation2 + $0x20] sm:$0xff] 0.0
          %410 = vst [vmem:[#allocation2 + $0x28] sm:$0xff] 0.0
          %411 = vst [vmem:[#allocation2 + $0x30] sm:$0xff] 0.0
          %412 = vst [vmem:[#allocation2 + $0x38] sm:$0xff] 0.0
        $region59: #{_lambda_.20} parent=50 // pred_fallthru
          _
        %v413 = vld [vmem:[#allocation2] sm:$0xff]
        %v414 = vld [vmem:[#allocation2 + $0x8] sm:$0xff]
        %v415 = vld [vmem:[#allocation2 + $0x10] sm:$0xff]
        %v416 = vld [vmem:[#allocation2 + $0x18] sm:$0xff]
        %v417 = vld [vmem:[#allocation2 + $0x20] sm:$0xff]
        %v418 = vld [vmem:[#allocation2 + $0x28] sm:$0xff]
        %v419 = vld [vmem:[#allocation2 + $0x30] sm:$0xff]
        %v420 = vld [vmem:[#allocation2 + $0x38] sm:$0xff]
        %v421 = vld [vmem:[%s389] sm:$0xff]
        %v422 = vld [vmem:[%s389 + $0x8] sm:$0xff]
        %v423 = vld [vmem:[%s389 + $0x10] sm:$0xff]
        %v424 = vld [vmem:[%s389 + $0x18] sm:$0xff]
        %v425 = vld [vmem:[%s389 + $0x20] sm:$0xff]
        %v426 = vld [vmem:[%s389 + $0x28] sm:$0xff]
        %v427 = vld [vmem:[%s389 + $0x30] sm:$0xff]
        %v428 = vld [vmem:[%s389 + $0x38] sm:$0xff]
        %v429 = vld [vmem:[%s346] sm:$0xff]
        %v430 = vld [vmem:[%s346 + $0x8] sm:$0xff]
        %v431 = vld [vmem:[%s346 + $0x10] sm:$0xff]
        %v432 = vld [vmem:[%s346 + $0x18] sm:$0xff]
        %v433 = vld [vmem:[%s346 + $0x20] sm:$0xff]
        %v434 = vld [vmem:[%s346 + $0x28] sm:$0xff]
        %v435 = vld [vmem:[%s346 + $0x30] sm:$0xff]
        %v436 = vld [vmem:[%s346 + $0x38] sm:$0xff]
        %v437 = vld [vmem:[%s346 + $0x40] sm:$0xff]
        %v438 = vld [vmem:[%s346 + $0x48] sm:$0xff]
        %v439 = vld [vmem:[%s346 + $0x50] sm:$0xff]
        %v440 = vld [vmem:[%s346 + $0x58] sm:$0xff]
        %v441 = vld [vmem:[%s346 + $0x60] sm:$0xff]
        %v442 = vld [vmem:[%s346 + $0x68] sm:$0xff]
        %v443 = vld [vmem:[%s346 + $0x70] sm:$0xff]
        %v444 = vld [vmem:[%s346 + $0x78] sm:$0xff]
        %v445 = vld [vmem:[%s346 + $0x80] sm:$0xff]
        %v446 = vld [vmem:[%s346 + $0x88] sm:$0xff]
        %v447 = vld [vmem:[%s346 + $0x90] sm:$0xff]
        %v448 = vld [vmem:[%s346 + $0x98] sm:$0xff]
        %v449 = vld [vmem:[%s346 + $0xa0] sm:$0xff]
        %v450 = vld [vmem:[%s346 + $0xa8] sm:$0xff]
        %v451 = vld [vmem:[%s346 + $0xb0] sm:$0xff]
        %v452 = vld [vmem:[%s346 + $0xb8] sm:$0xff]
        %v453 = vld [vmem:[%s346 + $0xc0] sm:$0xff]
        %v454 = vld [vmem:[%s346 + $0xc8] sm:$0xff]
        %v455 = vld [vmem:[%s346 + $0xd0] sm:$0xff]
        %v456 = vld [vmem:[%s346 + $0xd8] sm:$0xff]
        %v457 = vld [vmem:[%s346 + $0xe0] sm:$0xff]
        %v458 = vld [vmem:[%s346 + $0xe8] sm:$0xff]
        %v459 = vld [vmem:[%s346 + $0xf0] sm:$0xff]
        %v460 = vld [vmem:[%s346 + $0xf8] sm:$0xff]
        %v461 = vld [vmem:[%s346 + $0x100] sm:$0xff]
        %v462 = vld [vmem:[%s346 + $0x108] sm:$0xff]
        %v463 = vld [vmem:[%s346 + $0x110] sm:$0xff]
        %v464 = vld [vmem:[%s346 + $0x118] sm:$0xff]
        %v465 = vld [vmem:[%s346 + $0x120] sm:$0xff]
        %v466 = vld [vmem:[%s346 + $0x128] sm:$0xff]
        %v467 = vld [vmem:[%s346 + $0x130] sm:$0xff]
        %v468 = vld [vmem:[%s346 + $0x138] sm:$0xff]
        %v469 = vld [vmem:[%s346 + $0x140] sm:$0xff]
        %v470 = vld [vmem:[%s346 + $0x148] sm:$0xff]
        %v471 = vld [vmem:[%s346 + $0x150] sm:$0xff]
        %v472 = vld [vmem:[%s346 + $0x158] sm:$0xff]
        %v473 = vld [vmem:[%s346 + $0x160] sm:$0xff]
        %v474 = vld [vmem:[%s346 + $0x168] sm:$0xff]
        %v475 = vld [vmem:[%s346 + $0x170] sm:$0xff]
        %v476 = vld [vmem:[%s346 + $0x178] sm:$0xff]
        %v477 = vld [vmem:[%s346 + $0x180] sm:$0xff]
        %v478 = vld [vmem:[%s346 + $0x188] sm:$0xff]
        %v479 = vld [vmem:[%s346 + $0x190] sm:$0xff]
        %v480 = vld [vmem:[%s346 + $0x198] sm:$0xff]
        %v481 = vld [vmem:[%s346 + $0x1a0] sm:$0xff]
        %v482 = vld [vmem:[%s346 + $0x1a8] sm:$0xff]
        %v483 = vld [vmem:[%s346 + $0x1b0] sm:$0xff]
        %v484 = vld [vmem:[%s346 + $0x1b8] sm:$0xff]
        %v485 = vld [vmem:[%s346 + $0x1c0] sm:$0xff]
        %v486 = vld [vmem:[%s346 + $0x1c8] sm:$0xff]
        %v487 = vld [vmem:[%s346 + $0x1d0] sm:$0xff]
        %v488 = vld [vmem:[%s346 + $0x1d8] sm:$0xff]
        %v489 = vld [vmem:[%s346 + $0x1e0] sm:$0xff]
        %v490 = vld [vmem:[%s346 + $0x1e8] sm:$0xff]
        %v491 = vld [vmem:[%s346 + $0x1f0] sm:$0xff]
        %v492 = vld [vmem:[%s346 + $0x1f8] sm:$0xff]
        %493 = vmatprep.subr.mxu0 %v430
        %494 = vmatpush1.msra.mxu0 %v429
        %495 = vmatprep.subr.mxu0 %v432
        %496 = vmatpush1.msra.mxu0 %v431
        %497 = vmatprep.subr.mxu0 %v434
        %498 = vmatpush1.msra.mxu0 %v433
        %499 = vmatprep.subr.mxu0 %v436
        %500 = vmatpush1.msra.mxu0 %v435
        %501 = vmatprep.subr.mxu0 %v438
        %502 = vmatpush1.msra.mxu0 %v437
        %503 = vmatprep.subr.mxu0 %v440
        %504 = vmatpush1.msra.mxu0 %v439
        %505 = vmatprep.subr.mxu0 %v442
        %506 = vmatpush1.msra.mxu0 %v441
        %507 = vmatprep.subr.mxu0 %v444
        %508 = vmatpush1.msra.mxu0 %v443
        %509 = vmatprep.subr.mxu0 %v446
        %510 = vmatpush1.msra.mxu0 %v445
        %511 = vmatprep.subr.mxu0 %v448
        %512 = vmatpush1.msra.mxu0 %v447
        %513 = vmatprep.subr.mxu0 %v450
        %514 = vmatpush1.msra.mxu0 %v449
        %515 = vmatprep.subr.mxu0 %v452
        %516 = vmatpush1.msra.mxu0 %v451
        %517 = vmatprep.subr.mxu0 %v454
        %518 = vmatpush1.msra.mxu0 %v453
        %519 = vmatprep.subr.mxu0 %v456
        %520 = vmatpush1.msra.mxu0 %v455
        %521 = vmatprep.subr.mxu0 %v458
        %522 = vmatpush1.msra.mxu0 %v457
        %523 = vmatprep.subr.mxu0 %v460
        %524 = vmatpush1.msra.mxu0 %v459
        %525 = vmatprep.subr.mxu0 %v462
        %526 = vmatpush1.msra.mxu0 %v461
        %527 = vmatprep.subr.mxu0 %v464
        %528 = vmatpush1.msra.mxu0 %v463
        %529 = vmatprep.subr.mxu0 %v466
        %530 = vmatpush1.msra.mxu0 %v465
        %531 = vmatprep.subr.mxu0 %v468
        %532 = vmatpush1.msra.mxu0 %v467
        %533 = vmatprep.subr.mxu0 %v470
        %534 = vmatpush1.msra.mxu0 %v469
        %535 = vmatprep.subr.mxu0 %v472
        %536 = vmatpush1.msra.mxu0 %v471
        %537 = vmatprep.subr.mxu0 %v474
        %538 = vmatpush1.msra.mxu0 %v473
        %539 = vmatprep.subr.mxu0 %v476
        %540 = vmatpush1.msra.mxu0 %v475
        %541 = vmatprep.subr.mxu0 %v478
        %542 = vmatpush1.msra.mxu0 %v477
        %543 = vmatprep.subr.mxu0 %v480
        %544 = vmatpush1.msra.mxu0 %v479
        %545 = vmatprep.subr.mxu0 %v482
        %546 = vmatpush1.msra.mxu0 %v481
        %547 = vmatprep.subr.mxu0 %v484
        %548 = vmatpush1.msra.mxu0 %v483
        %549 = vmatprep.subr.mxu0 %v486
        %550 = vmatpush1.msra.mxu0 %v485
        %551 = vmatprep.subr.mxu0 %v488
        %552 = vmatpush1.msra.mxu0 %v487
        %553 = vmatprep.subr.mxu0 %v490
        %554 = vmatpush1.msra.mxu0 %v489
        %555 = vmatprep.subr.mxu0 %v492
        %556 = vmatpush1.msra.mxu0 %v491
        %557 = vmatprep.mubr.f32.mxu0 %v422
        %558 = vmatmul.mubr.f32.gmra.mrb[0].mxu0 %v421
        %v559 = vpop.f32.mrb[0].mxu0
        %v560 = vadd.f32 0.0, %v559
        %v561 = vpop.f32.mrb[0].mxu0
        %v562 = vadd.f32 0.0, %v561
        %563 = vmatprep.mubr.f32.mxu0 %v424
        %564 = vmatmul.mubr.f32.gmra.mrb[0].mxu0 %v423
        %v565 = vpop.f32.mrb[0].mxu0
        %v566 = vadd.f32 0.0, %v565
        %v567 = vpop.f32.mrb[0].mxu0
        %v568 = vadd.f32 0.0, %v567
        %569 = vmatprep.mubr.f32.mxu0 %v426
        %570 = vmatmul.mubr.f32.gmra.mrb[0].mxu0 %v425
        %v571 = vpop.f32.mrb[0].mxu0
        %v572 = vadd.f32 0.0, %v571
        %v573 = vpop.f32.mrb[0].mxu0
        %v574 = vadd.f32 0.0, %v573
        %575 = vmatprep.mubr.f32.mxu0 %v428
        %576 = vmatmul.mubr.f32.gmra.mrb[0].mxu0 %v427
        %v577 = vpop.f32.mrb[0].mxu0
        %v578 = vadd.f32 0.0, %v577
        %v579 = vpop.f32.mrb[0].mxu0
        %v580 = vadd.f32 0.0, %v579
        %581 = vdwg.mxu0
        %v582 = vadd.f32 %v413, %v560
        %v583 = vadd.f32 %v414, %v562
        %v584 = vadd.f32 %v415, %v566
        %v585 = vadd.f32 %v416, %v568
        %v586 = vadd.f32 %v417, %v572
        %v587 = vadd.f32 %v418, %v574
        %v588 = vadd.f32 %v419, %v578
        %v589 = vadd.f32 %v420, %v580
        %590 = vst [vmem:[#allocation2] sm:$0xff] %v582
        %591 = vst [vmem:[#allocation2 + $0x8] sm:$0xff] %v583
        %592 = vst [vmem:[#allocation2 + $0x10] sm:$0xff] %v584
        %593 = vst [vmem:[#allocation2 + $0x18] sm:$0xff] %v585
        %594 = vst [vmem:[#allocation2 + $0x20] sm:$0xff] %v586
        %595 = vst [vmem:[#allocation2 + $0x28] sm:$0xff] %v587
        %596 = vst [vmem:[#allocation2 + $0x30] sm:$0xff] %v588
        %597 = vst [vmem:[#allocation2 + $0x38] sm:$0xff] %v589
        // Predicated region
        $region60: #{_lambda_.20} parent=50 // pred_check
          %p598 = pneg %p401
        $region61: #{_lambda_.20} parent=50 // pred_check_branch
          %600 = sbr.rel (%p598) target = $region63
        $region62: #{_lambda_.20} parent=50 // pred_region
          %v601 = vld [vmem:[#allocation2] sm:$0xff]
          %v602 = vld [vmem:[#allocation2 + $0x8] sm:$0xff]
          %v603 = vld [vmem:[#allocation2 + $0x10] sm:$0xff]
          %v604 = vld [vmem:[#allocation2 + $0x18] sm:$0xff]
          %v605 = vld [vmem:[#allocation2 + $0x20] sm:$0xff]
          %v606 = vld [vmem:[#allocation2 + $0x28] sm:$0xff]
          %v607 = vld [vmem:[#allocation2 + $0x30] sm:$0xff]
          %v608 = vld [vmem:[#allocation2 + $0x38] sm:$0xff]
          %v609 = vld [vmem:[%s397] sm:$0x3]
          %v611 = vlaneseq
          %v612 = vshrl.u32 %v611, 7
          %v613 = vsub.s32 0, %v612
          %v614 = vrot.slane %v609, %v613
          %v615 = vlaneseq
          %v616 = vshrl.u32 %v615, 7
          %v617 = vsub.s32 1, %v616
          %v618 = vrot.slane %v609, %v617
          %v621 = vadd.f32 %v601, %v614
          %v622 = vadd.f32 %v602, %v618
          %v623 = vadd.f32 %v603, %v614
          %v624 = vadd.f32 %v604, %v618
          %v625 = vadd.f32 %v605, %v614
          %v626 = vadd.f32 %v606, %v618
          %v627 = vadd.f32 %v607, %v614
          %v628 = vadd.f32 %v608, %v618
          %629 = vst [vmem:[%s379] sm:$0xff] %v621
          %630 = vst [vmem:[%s379 + $0x8] sm:$0xff] %v622
          %631 = vst [vmem:[%s379 + $0x10] sm:$0xff] %v623
          %632 = vst [vmem:[%s379 + $0x18] sm:$0xff] %v624
          %633 = vst [vmem:[%s379 + $0x20] sm:$0xff] %v625
          %634 = vst [vmem:[%s379 + $0x28] sm:$0xff] %v626
          %635 = vst [vmem:[%s379 + $0x30] sm:$0xff] %v627
          %636 = vst [vmem:[%s379 + $0x38] sm:$0xff] %v628
        $region63: #{_lambda_.20} parent=50 // pred_fallthru
          _
        %s637 = sand.u32 %s125, 1
        %s638 = sand.u32 %s125, 1
        %s639 = smul.addr %s638, 64
        %s640 = scalar_lea.vmem [#allocation4], %s639
        // Predicated region
        $region64: #{_lambda_.20} parent=50 // pred_check
          %p641 = pneg %p135
        $region65: #{_lambda_.20} parent=50 // pred_check_branch
          %643 = sbr.rel (%p641) target = $region67
        $region66: #{_lambda_.20} parent=50 // pred_region
          %s644 = smul.u32 4, %s19
          %s645 = smul.u32 2, %s20
          %s646 = smul.addr %s644, 4
          %s647 = sadd.s32 %s645, %s646
          %s648 = smul.addr %s647, 8
          %s649 = scalar_lea.vmem %s3, %s648
          // Predicated region
          $region68: #{_lambda_.20} parent=66 // pred_check
            _
          $region69: #{_lambda_.20} parent=66 // pred_check_branch
            %651 = sbr.rel (0) target = $region71
          $region70: #{_lambda_.20} parent=66 // pred_region
            // Predicated region
            $region72: #{_lambda_.20} parent=70 // pred_check
              _
            $region73: #{_lambda_.20} parent=70 // pred_check_branch
              %653 = sbr.rel (0) target = $region75
            $region74: #{_lambda_.20} parent=70 // pred_region
              loop: start=0, step=1, limit=1
              $region76: #{_lambda_.20} parent=74 // loop_pre_header
                _
              $region77: #{_lambda_.20} parent=74 // loop_header
                %s655 = sphi 0, %s659
                %p656 = scmp.ge.s32.totalorder %s655, 1
                %s660 = sphi %s640, %s640
                %s661 = sphi %s649, %s649
              $region78: #{_lambda_.20} parent=74 // loop_header_branch
                %658 = sbr.rel (%p656) target = $region82
              $region79: #{_lambda_.20} parent=74 // loop_body
                %v662 = vld [vmem:[%s660] sm:$0xff]
                %663 = vst [vmem:[%s661] sm:$0xff] %v662
                %v664 = vld [vmem:[%s660 + $0x8] sm:$0xff]
                %665 = vst [vmem:[%s661 + $0x8] sm:$0xff] %v664
                %v666 = vld [vmem:[%s660 + $0x10] sm:$0xff]
                %667 = vst [vmem:[%s661 + $0x20] sm:$0xff] %v666
                %v668 = vld [vmem:[%s660 + $0x18] sm:$0xff]
                %669 = vst [vmem:[%s661 + $0x28] sm:$0xff] %v668
                %v670 = vld [vmem:[%s660 + $0x20] sm:$0xff]
                %671 = vst [vmem:[%s661 + $0x40] sm:$0xff] %v670
                %v672 = vld [vmem:[%s660 + $0x28] sm:$0xff]
                %673 = vst [vmem:[%s661 + $0x48] sm:$0xff] %v672
                %v674 = vld [vmem:[%s660 + $0x30] sm:$0xff]
                %675 = vst [vmem:[%s661 + $0x60] sm:$0xff] %v674
                %v676 = vld [vmem:[%s660 + $0x38] sm:$0xff]
                %677 = vst [vmem:[%s661 + $0x68] sm:$0xff] %v676
              $region80: #{_lambda_.20} parent=74 // loop_footer
                %s659 = sadd.s32 1, %s655
              $region81: #{_lambda_.20} parent=74 // loop_footer_branch
                %654 = sbr.rel target = $region77
              $region82: #{_lambda_.20} parent=74 // loop_exit
                _
            $region75: #{_lambda_.20} parent=70 // pred_fallthru
              _
            // Predicated region
            $region83: #{_lambda_.20} parent=70 // pred_check
              _
            $region84: #{_lambda_.20} parent=70 // pred_check_branch
              %679 = sbr.rel target = $region86
            $region85: #{_lambda_.20} parent=70 // pred_region
              _
            $region86: #{_lambda_.20} parent=70 // pred_fallthru
              _
          $region71: #{_lambda_.20} parent=66 // pred_fallthru
            _
          %680 = vnop
        $region67: #{_lambda_.20} parent=50 // pred_fallthru
          _
      $region51: #{_lambda_.20} parent=5 // pred_fallthru
        _
      %p681 = scmp.le.s32.totalorder 2, %s9
      // Predicated region
      $region87: #{_lambda_.20} parent=5 // pred_check
        %p682 = pneg %p681
      $region88: #{_lambda_.20} parent=5 // pred_check_branch
        %684 = sbr.rel (%p682) target = $region90
      $region89: #{_lambda_.20} parent=5 // pred_region
        %s685 = ssub.s32 %s9, 2
        // Predicated region
        $region91: #{_lambda_.20} parent=89 // pred_check
          %p686 = pneg %p141
        $region92: #{_lambda_.20} parent=89 // pred_check_branch
          %688 = sbr.rel (%p686) target = $region94
        $region93: #{_lambda_.20} parent=89 // pred_region
          %s689 = sand.u32 %s126, 1
          %s690 = sand.u32 %s126, 1
          %s691 = smul.addr %s690, 64
          %s692 = scalar_lea.vmem [#allocation4], %s691
        $region94: #{_lambda_.20} parent=89 // pred_fallthru
          _
      $region90: #{_lambda_.20} parent=5 // pred_fallthru
        _
    $region6: #{_lambda_.20} parent=1 // loop_footer
      %s13 = sadd.s32 1, %s9
    $region7: #{_lambda_.20} parent=1 // loop_footer_branch
      %8 = sbr.rel target = $region3
    $region8: #{_lambda_.20} parent=1 // loop_exit
      _

// kernel: _lambda_.24
$region0: #{_lambda_.24}
  #allocation0 [shape = 'u32[]', space=smem, size = 0x4, offset = 0x4, fixed_abs, tag = 'smem constant byte address 0x4 - core index']
  #allocation1 [shape = 'u32[144,128]{1,0:T(1,128)}', space=vmem, size = 0x12000, scoped, tag = 'internal scratch']
  #allocation2 [shape = 'f32[16,256]{1,0:T(8,128)}', space=vmem, size = 0x4000, scoped, tag = 'scratch operand']
  %s0 = inlined_call_operand.vmem [shape: f32[16,256], index: 0, kind: input, shape index: {}]
  %s1 = inlined_call_operand.vmem [shape: f32[256,768], index: 1, kind: input, shape index: {}]
  %s2 = inlined_call_operand.vmem [shape: f32[1,768], index: 2, kind: input, shape index: {}]
  %s3 = inlined_call_operand.vmem [shape: f32[16,768], index: 3, kind: output, shape index: {}]
  %s4 = sld [smem:[#allocation0]]
  $region95: #{_lambda_.24} parent=0
    _
  %s6 = ssub.s32 1, %s4
  %s7 = scalar_select 0, %s6, %s4
  $region1: #{_lambda_.24} parent=0
    #allocation3 [shape = 'u8[524288]{0}', space=vmem, size = 0x80000, scoped, tag = 'input window, operand 1']
    #allocation4 [shape = 'u8[32768]{0}', space=vmem, size = 0x8000, scoped, tag = 'output window, operand 0']
    loop: start=0, step=1, limit=5
    $region2: #{_lambda_.24} parent=1 // loop_pre_header
      _
    $region3: #{_lambda_.24} parent=1 // loop_header
      %s9 = sphi 0, %s13
      %p10 = scmp.ge.s32.totalorder %s9, 5
      %s16 = sphi 0, %s35
      %s17 = sphi 0, %s31
      %s18 = sphi 0, %s27
      %s19 = sphi 0, %s16
      %s20 = sphi 0, %s17
      %s21 = sphi 0, %s18
      %s22 = sphi 0, %s19
      %s23 = sphi 0, %s20
      %s24 = sphi 0, %s21
      %s40 = sphi 0, %s42
      %s43 = sphi 0, %s40
      %s44 = sphi 0, %s43
      %s60 = sphi 0, %s44
      %s68 = sphi 0, %s70
      %s71 = sphi 0, %s68
      %s72 = sphi 0, %s71
      %s88 = sphi 0, %s72
      %s94 = sphi 0, %s96
      %s97 = sphi 0, %s94
      %s98 = sphi 0, %s97
      %s114 = sphi 0, %s98
      %s122 = sphi 0, %s124
      %s125 = sphi 0, %s122
      %s126 = sphi 0, %s125
      %s142 = sphi 0, %s126
    $region4: #{_lambda_.24} parent=1 // loop_header_branch
      %12 = sbr.rel (%p10) target = $region8
    $region5: #{_lambda_.24} parent=1 // loop_body
      %s14 = ssub.s32 %s9, 1
      %s15 = ssub.s32 %s9, 2
      %s25 = sadd.s32 1, %s18
      %p26 = scmp.ge.s32.totalorder %s25, 1
      %s27 = scalar_select %p26, 0, %s25
      %s28 = sadd.s32 1, %s17
      %s29 = scalar_select %p26, %s28, %s17
      %p30 = scmp.ge.s32.totalorder %s29, 3
      %s31 = scalar_select %p30, 0, %s29
      %s32 = sadd.s32 1, %s16
      %s33 = scalar_select %p30, %s32, %s16
      %p34 = scmp.ge.s32.totalorder %s33, 1
      %s35 = scalar_select %p34, 0, %s33
      %s36 = ssub.s32 %s16, %s35
      %s37 = ssub.s32 %s18, %s27
      %s38 = sor.u32 %s36, %s37
      %p39 = scmp.eq.s32.totalorder %s38, 0
      %s41 = sadd.s32 %s40, 1
      %s42 = scalar_select %p39, %s40, %s41
      %p45 = pneg %p39
      %p46 = scmp.eq.s32.totalorder %s9, 2
      %p47 = por %p45, %p46
      %p48 = scmp.ne.s32.totalorder %s40, %s43
      %p49 = scmp.eq.s32.totalorder %s9, 0
      %p50 = por %p48, %p49
      %p51 = scmp.ne.s32.totalorder %s40, %s43
      %p52 = scmp.eq.s32.totalorder %s14, 2
      %p53 = por %p51, %p52
      %p54 = scmp.ne.s32.totalorder %s43, %s44
      %p55 = scmp.eq.s32.totalorder %s14, 0
      %p56 = por %p54, %p55
      %p57 = scmp.ne.s32.totalorder %s43, %s44
      %p58 = scmp.eq.s32.totalorder %s15, 2
      %p59 = por %p57, %p58
      %p61 = scmp.ne.s32.totalorder %s44, %s60
      %p62 = scmp.eq.s32.totalorder %s15, 0
      %p63 = por %p61, %p62
      %s64 = ssub.s32 %s18, %s27
      %s65 = ssub.s32 %s17, %s31
      %s66 = sor.u32 %s64, %s65
      %p67 = scmp.eq.s32.totalorder %s66, 0
      %s69 = sadd.s32 %s68, 1
      %s70 = scalar_select %p67, %s68, %s69
      %p73 = pneg %p67
      %p74 = scmp.eq.s32.totalorder %s9, 2
      %p75 = por %p73, %p74
      %p76 = scmp.ne.s32.totalorder %s68, %s71
      %p77 = scmp.eq.s32.totalorder %s9, 0
      %p78 = por %p76, %p77
      %p79 = scmp.ne.s32.totalorder %s68, %s71
      %p80 = scmp.eq.s32.totalorder %s14, 2
      %p81 = por %p79, %p80
      %p82 = scmp.ne.s32.totalorder %s71, %s72
      %p83 = scmp.eq.s32.totalorder %s14, 0
      %p84 = por %p82, %p83
      %p85 = scmp.ne.s32.totalorder %s71, %s72
      %p86 = scmp.eq.s32.totalorder %s15, 2
      %p87 = por %p85, %p86
      %p89 = scmp.ne.s32.totalorder %s72, %s88
      %p90 = scmp.eq.s32.totalorder %s15, 0
      %p91 = por %p89, %p90
      %s92 = ssub.s32 %s17, %s31
      %p93 = scmp.eq.s32.totalorder %s92, 0
      %s95 = sadd.s32 %s94, 1
      %s96 = scalar_select %p93, %s94, %s95
      %p99 = pneg %p93
      %p100 = scmp.eq.s32.totalorder %s9, 2
      %p101 = por %p99, %p100
      %p102 = scmp.ne.s32.totalorder %s94, %s97
      %p103 = scmp.eq.s32.totalorder %s9, 0
      %p104 = por %p102, %p103
      %p105 = scmp.ne.s32.totalorder %s94, %s97
      %p106 = scmp.eq.s32.totalorder %s14, 2
      %p107 = por %p105, %p106
      %p108 = scmp.ne.s32.totalorder %s97, %s98
      %p109 = scmp.eq.s32.totalorder %s14, 0
      %p110 = por %p108, %p109
      %p111 = scmp.ne.s32.totalorder %s97, %s98
      %p112 = scmp.eq.s32.totalorder %s15, 2
      %p113 = por %p111, %p112
      %p115 = scmp.ne.s32.totalorder %s98, %s114
      %p116 = scmp.eq.s32.totalorder %s15, 0
      %p117 = por %p115, %p116
      %s118 = ssub.s32 %s16, %s35
      %s119 = ssub.s32 %s17, %s31
      %s120 = sor.u32 %s118, %s119
      %p121 = scmp.eq.s32.totalorder %s120, 0
      %s123 = sadd.s32 %s122, 1
      %s124 = scalar_select %p121, %s122, %s123
      %p127 = pneg %p121
      %p128 = scmp.eq.s32.totalorder %s9, 2
      %p129 = por %p127, %p128
      %p130 = scmp.ne.s32.totalorder %s122, %s125
      %p131 = scmp.eq.s32.totalorder %s9, 0
      %p132 = por %p130, %p131
      %p133 = scmp.ne.s32.totalorder %s122, %s125
      %p134 = scmp.eq.s32.totalorder %s14, 2
      %p135 = por %p133, %p134
      %p136 = scmp.ne.s32.totalorder %s125, %s126
      %p137 = scmp.eq.s32.totalorder %s14, 0
      %p138 = por %p136, %p137
      %p139 = scmp.ne.s32.totalorder %s125, %s126
      %p140 = scmp.eq.s32.totalorder %s15, 2
      %p141 = por %p139, %p140
      %p143 = scmp.ne.s32.totalorder %s126, %s142
      %p144 = scmp.eq.s32.totalorder %s15, 0
      %p145 = por %p143, %p144
      %p146 = scmp.le.s32.totalorder 1, %s9
      %p147 = scmp.lt.s32.totalorder %s9, 4
      %p148 = pnand %p146, %p147
      %p149 = pneg %p148
      // Predicated region
      $region9: #{_lambda_.24} parent=5 // pred_check
        _
      $region10: #{_lambda_.24} parent=5 // pred_check_branch
        %151 = sbr.rel (%p148) target = $region12
      $region11: #{_lambda_.24} parent=5 // pred_region
        %s152 = ssub.s32 %s9, 1
        // Predicated region
        $region13: #{_lambda_.24} parent=11 // pred_check
          %p153 = pneg %p56
        $region14: #{_lambda_.24} parent=11 // pred_check_branch
          %155 = sbr.rel (%p153) target = $region16
        $region15: #{_lambda_.24} parent=11 // pred_region
          %s156 = smul.u32 2, %s19
          %s157 = smul.u32 2, %s21
          %p158 = scmp.lt.s32.totalorder %s156, 1
          %s159 = scalar_select %p158, %s156, 1
          %p160 = scmp.lt.s32.totalorder %s157, 1
          %s161 = scalar_select %p160, %s157, 1
          %s162 = smul.addr %s159, 2
          %s163 = sadd.s32 %s161, %s162
          %s164 = smul.addr %s163, 8
          %s165 = scalar_lea.vmem %s0, %s164
          %s166 = smul.u32 2, %s19
          %s167 = smul.u32 2, %s21
        $region16: #{_lambda_.24} parent=11 // pred_fallthru
          _
      $region12: #{_lambda_.24} parent=5 // pred_fallthru
        _
      %p168 = scmp.lt.s32.totalorder %s9, 3
      // Predicated region
      $region17: #{_lambda_.24} parent=5 // pred_check
        %p169 = pneg %p168
      $region18: #{_lambda_.24} parent=5 // pred_check_branch
        %171 = sbr.rel (%p169) target = $region20
      $region19: #{_lambda_.24} parent=5 // pred_region
        // Predicated region
        $region21: #{_lambda_.24} parent=19 // pred_check
          %p172 = pneg %p78
        $region22: #{_lambda_.24} parent=19 // pred_check_branch
          %174 = sbr.rel (%p172) target = $region24
        $region23: #{_lambda_.24} parent=19 // pred_region
          %s175 = sand.u32 %s68, 1
          %s176 = sand.u32 %s68, 1
          %s177 = smul.addr %s176, 512
          %s178 = scalar_lea.vmem [#allocation3], %s177
          %s179 = smul.u32 32, %s18
          %s180 = smul.u32 2, %s17
          %s181 = smul.addr %s179, 6
          %s182 = sadd.s32 %s180, %s181
          %s183 = smul.addr %s182, 8
          %s184 = scalar_lea.vmem %s1, %s183
          // Predicated region
          $region25: #{_lambda_.24} parent=23 // pred_check
            _
          $region26: #{_lambda_.24} parent=23 // pred_check_branch
            %186 = sbr.rel (0) target = $region28
          $region27: #{_lambda_.24} parent=23 // pred_region
            // Predicated region
            $region29: #{_lambda_.24} parent=27 // pred_check
              _
            $region30: #{_lambda_.24} parent=27 // pred_check_branch
              %188 = sbr.rel (0) target = $region32
            $region31: #{_lambda_.24} parent=27 // pred_region
              loop: start=0, step=1, limit=1
              $region33: #{_lambda_.24} parent=31 // loop_pre_header
                _
              $region34: #{_lambda_.24} parent=31 // loop_header
                %s190 = sphi 0, %s194
                %p191 = scmp.ge.s32.totalorder %s190, 1
                %s195 = sphi %s184, %s184
                %s196 = sphi %s178, %s178
              $region35: #{_lambda_.24} parent=31 // loop_header_branch
                %193 = sbr.rel (%p191) target = $region39
              $region36: #{_lambda_.24} parent=31 // loop_body
                %v197 = vld [vmem:[%s195] sm:$0xff]
                %198 = vst [vmem:[%s196] sm:$0xff] %v197
                %v199 = vld [vmem:[%s195 + $0x8] sm:$0xff]
                %200 = vst [vmem:[%s196 + $0x8] sm:$0xff] %v199
                %v201 = vld [vmem:[%s195 + $0x30] sm:$0xff]
                %202 = vst [vmem:[%s196 + $0x10] sm:$0xff] %v201
                %v203 = vld [vmem:[%s195 + $0x38] sm:$0xff]
                %204 = vst [vmem:[%s196 + $0x18] sm:$0xff] %v203
                %v205 = vld [vmem:[%s195 + $0x60] sm:$0xff]
                %206 = vst [vmem:[%s196 + $0x20] sm:$0xff] %v205
                %v207 = vld [vmem:[%s195 + $0x68] sm:$0xff]
                %208 = vst [vmem:[%s196 + $0x28] sm:$0xff] %v207
                %v209 = vld [vmem:[%s195 + $0x90] sm:$0xff]
                %210 = vst [vmem:[%s196 + $0x30] sm:$0xff] %v209
                %v211 = vld [vmem:[%s195 + $0x98] sm:$0xff]
                %212 = vst [vmem:[%s196 + $0x38] sm:$0xff] %v211
                %v213 = vld [vmem:[%s195 + $0xc0] sm:$0xff]
                %214 = vst [vmem:[%s196 + $0x40] sm:$0xff] %v213
                %v215 = vld [vmem:[%s195 + $0xc8] sm:$0xff]
                %216 = vst [vmem:[%s196 + $0x48] sm:$0xff] %v215
                %v217 = vld [vmem:[%s195 + $0xf0] sm:$0xff]
                %218 = vst [vmem:[%s196 + $0x50] sm:$0xff] %v217
                %v219 = vld [vmem:[%s195 + $0xf8] sm:$0xff]
                %220 = vst [vmem:[%s196 + $0x58] sm:$0xff] %v219
                %v221 = vld [vmem:[%s195 + $0x120] sm:$0xff]
                %222 = vst [vmem:[%s196 + $0x60] sm:$0xff] %v221
                %v223 = vld [vmem:[%s195 + $0x128] sm:$0xff]
                %224 = vst [vmem:[%s196 + $0x68] sm:$0xff] %v223
                %v225 = vld [vmem:[%s195 + $0x150] sm:$0xff]
                %226 = vst [vmem:[%s196 + $0x70] sm:$0xff] %v225
                %v227 = vld [vmem:[%s195 + $0x158] sm:$0xff]
                %228 = vst [vmem:[%s196 + $0x78] sm:$0xff] %v227
                %v229 = vld [vmem:[%s195 + $0x180] sm:$0xff]
                %230 = vst [vmem:[%s196 + $0x80] sm:$0xff] %v229
                %v231 = vld [vmem:[%s195 + $0x188] sm:$0xff]
                %232 = vst [vmem:[%s196 + $0x88] sm:$0xff] %v231
                %v233 = vld [vmem:[%s195 + $0x1b0] sm:$0xff]
                %234 = vst [vmem:[%s196 + $0x90] sm:$0xff] %v233
                %v235 = vld [vmem:[%s195 + $0x1b8] sm:$0xff]
                %236 = vst [vmem:[%s196 + $0x98] sm:$0xff] %v235
                %v237 = vld [vmem:[%s195 + $0x1e0] sm:$0xff]
                %238 = vst [vmem:[%s196 + $0xa0] sm:$0xff] %v237
                %v239 = vld [vmem:[%s195 + $0x1e8] sm:$0xff]
                %240 = vst [vmem:[%s196 + $0xa8] sm:$0xff] %v239
                %v241 = vld [vmem:[%s195 + $0x210] sm:$0xff]
                %242 = vst [vmem:[%s196 + $0xb0] sm:$0xff] %v241
                %v243 = vld [vmem:[%s195 + $0x218] sm:$0xff]
                %244 = vst [vmem:[%s196 + $0xb8] sm:$0xff] %v243
                %v245 = vld [vmem:[%s195 + $0x240] sm:$0xff]
                %246 = vst [vmem:[%s196 + $0xc0] sm:$0xff] %v245
                %v247 = vld [vmem:[%s195 + $0x248] sm:$0xff]
                %248 = vst [vmem:[%s196 + $0xc8] sm:$0xff] %v247
                %v249 = vld [vmem:[%s195 + $0x270] sm:$0xff]
                %250 = vst [vmem:[%s196 + $0xd0] sm:$0xff] %v249
                %v251 = vld [vmem:[%s195 + $0x278] sm:$0xff]
                %252 = vst [vmem:[%s196 + $0xd8] sm:$0xff] %v251
                %v253 = vld [vmem:[%s195 + $0x2a0] sm:$0xff]
                %254 = vst [vmem:[%s196 + $0xe0] sm:$0xff] %v253
                %v255 = vld [vmem:[%s195 + $0x2a8] sm:$0xff]
                %256 = vst [vmem:[%s196 + $0xe8] sm:$0xff] %v255
                %v257 = vld [vmem:[%s195 + $0x2d0] sm:$0xff]
                %258 = vst [vmem:[%s196 + $0xf0] sm:$0xff] %v257
                %v259 = vld [vmem:[%s195 + $0x2d8] sm:$0xff]
                %260 = vst [vmem:[%s196 + $0xf8] sm:$0xff] %v259
                %v261 = vld [vmem:[%s195 + $0x300] sm:$0xff]
                %262 = vst [vmem:[%s196 + $0x100] sm:$0xff] %v261
                %v263 = vld [vmem:[%s195 + $0x308] sm:$0xff]
                %264 = vst [vmem:[%s196 + $0x108] sm:$0xff] %v263
                %v265 = vld [vmem:[%s195 + $0x330] sm:$0xff]
                %266 = vst [vmem:[%s196 + $0x110] sm:$0xff] %v265
                %v267 = vld [vmem:[%s195 + $0x338] sm:$0xff]
                %268 = vst [vmem:[%s196 + $0x118] sm:$0xff] %v267
                %v269 = vld [vmem:[%s195 + $0x360] sm:$0xff]
                %270 = vst [vmem:[%s196 + $0x120] sm:$0xff] %v269
                %v271 = vld [vmem:[%s195 + $0x368] sm:$0xff]
                %272 = vst [vmem:[%s196 + $0x128] sm:$0xff] %v271
                %v273 = vld [vmem:[%s195 + $0x390] sm:$0xff]
                %274 = vst [vmem:[%s196 + $0x130] sm:$0xff] %v273
                %v275 = vld [vmem:[%s195 + $0x398] sm:$0xff]
                %276 = vst [vmem:[%s196 + $0x138] sm:$0xff] %v275
                %v277 = vld [vmem:[%s195 + $0x3c0] sm:$0xff]
                %278 = vst [vmem:[%s196 + $0x140] sm:$0xff] %v277
                %v279 = vld [vmem:[%s195 + $0x3c8] sm:$0xff]
                %280 = vst [vmem:[%s196 + $0x148] sm:$0xff] %v279
                %v281 = vld [vmem:[%s195 + $0x3f0] sm:$0xff]
                %282 = vst [vmem:[%s196 + $0x150] sm:$0xff] %v281
                %v283 = vld [vmem:[%s195 + $0x3f8] sm:$0xff]
                %284 = vst [vmem:[%s196 + $0x158] sm:$0xff] %v283
                %v285 = vld [vmem:[%s195 + $0x420] sm:$0xff]
                %286 = vst [vmem:[%s196 + $0x160] sm:$0xff] %v285
                %v287 = vld [vmem:[%s195 + $0x428] sm:$0xff]
                %288 = vst [vmem:[%s196 + $0x168] sm:$0xff] %v287
                %v289 = vld [vmem:[%s195 + $0x450] sm:$0xff]
                %290 = vst [vmem:[%s196 + $0x170] sm:$0xff] %v289
                %v291 = vld [vmem:[%s195 + $0x458] sm:$0xff]
                %292 = vst [vmem:[%s196 + $0x178] sm:$0xff] %v291
                %v293 = vld [vmem:[%s195 + $0x480] sm:$0xff]
                %294 = vst [vmem:[%s196 + $0x180] sm:$0xff] %v293
                %v295 = vld [vmem:[%s195 + $0x488] sm:$0xff]
                %296 = vst [vmem:[%s196 + $0x188] sm:$0xff] %v295
                %v297 = vld [vmem:[%s195 + $0x4b0] sm:$0xff]
                %298 = vst [vmem:[%s196 + $0x190] sm:$0xff] %v297
                %v299 = vld [vmem:[%s195 + $0x4b8] sm:$0xff]
                %300 = vst [vmem:[%s196 + $0x198] sm:$0xff] %v299
                %v301 = vld [vmem:[%s195 + $0x4e0] sm:$0xff]
                %302 = vst [vmem:[%s196 + $0x1a0] sm:$0xff] %v301
                %v303 = vld [vmem:[%s195 + $0x4e8] sm:$0xff]
                %304 = vst [vmem:[%s196 + $0x1a8] sm:$0xff] %v303
                %v305 = vld [vmem:[%s195 + $0x510] sm:$0xff]
                %306 = vst [vmem:[%s196 + $0x1b0] sm:$0xff] %v305
                %v307 = vld [vmem:[%s195 + $0x518] sm:$0xff]
                %308 = vst [vmem:[%s196 + $0x1b8] sm:$0xff] %v307
                %v309 = vld [vmem:[%s195 + $0x540] sm:$0xff]
                %310 = vst [vmem:[%s196 + $0x1c0] sm:$0xff] %v309
                %v311 = vld [vmem:[%s195 + $0x548] sm:$0xff]
                %312 = vst [vmem:[%s196 + $0x1c8] sm:$0xff] %v311
                %v313 = vld [vmem:[%s195 + $0x570] sm:$0xff]
                %314 = vst [vmem:[%s196 + $0x1d0] sm:$0xff] %v313
                %v315 = vld [vmem:[%s195 + $0x578] sm:$0xff]
                %316 = vst [vmem:[%s196 + $0x1d8] sm:$0xff] %v315
                %v317 = vld [vmem:[%s195 + $0x5a0] sm:$0xff]
                %318 = vst [vmem:[%s196 + $0x1e0] sm:$0xff] %v317
                %v319 = vld [vmem:[%s195 + $0x5a8] sm:$0xff]
                %320 = vst [vmem:[%s196 + $0x1e8] sm:$0xff] %v319
                %v321 = vld [vmem:[%s195 + $0x5d0] sm:$0xff]
                %322 = vst [vmem:[%s196 + $0x1f0] sm:$0xff] %v321
                %v323 = vld [vmem:[%s195 + $0x5d8] sm:$0xff]
                %324 = vst [vmem:[%s196 + $0x1f8] sm:$0xff] %v323
              $region37: #{_lambda_.24} parent=31 // loop_footer
                %s194 = sadd.s32 1, %s190
              $region38: #{_lambda_.24} parent=31 // loop_footer_branch
                %189 = sbr.rel target = $region34
              $region39: #{_lambda_.24} parent=31 // loop_exit
                _
            $region32: #{_lambda_.24} parent=27 // pred_fallthru
              _
            // Predicated region
            $region40: #{_lambda_.24} parent=27 // pred_check
              _
            $region41: #{_lambda_.24} parent=27 // pred_check_branch
              %326 = sbr.rel target = $region43
            $region42: #{_lambda_.24} parent=27 // pred_region
              _
            $region43: #{_lambda_.24} parent=27 // pred_fallthru
              _
          $region28: #{_lambda_.24} parent=23 // pred_fallthru
            _
          %327 = vnop
        $region24: #{_lambda_.24} parent=19 // pred_fallthru
          _
        // Predicated region
        $region44: #{_lambda_.24} parent=19 // pred_check
          %p328 = pneg %p104
        $region45: #{_lambda_.24} parent=19 // pred_check_branch
          %330 = sbr.rel (%p328) target = $region47
        $region46: #{_lambda_.24} parent=19 // pred_region
          %s331 = smul.u32 2, %s17
          %p332 = scmp.lt.s32.totalorder %s331, 5
          %s333 = scalar_select %p332, %s331, 5
          %s334 = scalar_lea.vmem %s2, %s333
          %s335 = smul.u32 2, %s17
        $region47: #{_lambda_.24} parent=19 // pred_fallthru
          _
      $region20: #{_lambda_.24} parent=5 // pred_fallthru
        _
      %p336 = scmp.le.s32.totalorder 1, %s9
      %p337 = scmp.lt.s32.totalorder %s9, 4
      %p338 = pnand %p336, %p337
      %p339 = pneg %p338
      // Predicated region
      $region48: #{_lambda_.24} parent=5 // pred_check
        _
      $region49: #{_lambda_.24} parent=5 // pred_check_branch
        %341 = sbr.rel (%p338) target = $region51
      $region50: #{_lambda_.24} parent=5 // pred_region
        %s342 = ssub.s32 %s9, 1
        %s343 = sand.u32 %s71, 1
        %s344 = sand.u32 %s71, 1
        %s345 = smul.addr %s344, 512
        %s346 = scalar_lea.vmem [#allocation3], %s345
        // Predicated region
        $region52: #{_lambda_.24} parent=50 // pred_check
          %p347 = pneg %p84
        $region53: #{_lambda_.24} parent=50 // pred_check_branch
          %349 = sbr.rel (%p347) target = $region55
        $region54: #{_lambda_.24} parent=50 // pred_region
          _
        $region55: #{_lambda_.24} parent=50 // pred_fallthru
          _
        %s350 = smul.u32 2, %s19
        %s351 = smul.u32 2, %s21
        %p352 = scmp.lt.s32.totalorder %s350, 1
        %s353 = scalar_select %p352, %s350, 1
        %p354 = scmp.lt.s32.totalorder %s351, 1
        %s355 = scalar_select %p354, %s351, 1
        %s356 = smul.addr %s353, 2
        %s357 = sadd.s32 %s355, %s356
        %s358 = smul.addr %s357, 8
        %s359 = scalar_lea.vmem %s0, %s358
        %p360 = pneg %p56
        %p361 = pneg %p53
        %s362 = sand.u32 %s71, 1
        %s363 = sand.u32 %s71, 1
        %s364 = smul.addr %s363, 512
        %s365 = scalar_lea.vmem [#allocation3], %s364
        %p366 = pneg %p84
        %p367 = pneg %p81
        %s368 = smul.u32 2, %s20
        %p369 = scmp.lt.s32.totalorder %s368, 5
        %s370 = scalar_select %p369, %s368, 5
        %s371 = scalar_lea.vmem %s2, %s370
        %p372 = pneg %p110
        %p373 = pneg %p107
        %p374 = pneg %p138
        %p375 = pneg %p135
        %s376 = sand.u32 %s125, 1
        %s377 = sand.u32 %s125, 1
        %s378 = smul.addr %s377, 32
        %s379 = scalar_lea.vmem [#allocation4], %s378
        %s380 = smul.u32 2, %s19
        %s381 = smul.u32 2, %s21
        %p382 = scmp.lt.s32.totalorder %s380, 1
        %s383 = scalar_select %p382, %s380, 1
        %p384 = scmp.lt.s32.totalorder %s381, 1
        %s385 = scalar_select %p384, %s381, 1
        %s386 = smul.addr %s383, 2
        %s387 = sadd.s32 %s385, %s386
        %s388 = smul.addr %s387, 8
        %s389 = scalar_lea.vmem %s0, %s388
        %s390 = smul.u32 2, %s19
        %s391 = smul.u32 2, %s21
        %s392 = smul.u32 32, %s21
        %s393 = smul.u32 2, %s20
        %s394 = smul.u32 2, %s20
        %p395 = scmp.lt.s32.totalorder %s394, 5
        %s396 = scalar_select %p395, %s394, 5
        %s397 = scalar_lea.vmem %s2, %s396
        %s398 = smul.u32 2, %s20
        %s399 = smul.u32 2, %s19
        %s400 = smul.u32 2, %s20
        %p401 = scmp.eq.s32.totalorder %s21, 0
        // Predicated region
        $region56: #{_lambda_.24} parent=50 // pred_check
          %p402 = pneg %p401
        $region57: #{_lambda_.24} parent=50 // pred_check_branch
          %404 = sbr.rel (%p402) target = $region59
        $region58: #{_lambda_.24} parent=50 // pred_region
          %405 = vst [vmem:[#allocation2] sm:$0xff] 0.0
          %406 = vst [vmem:[#allocation2 + $0x8] sm:$0xff] 0.0
          %407 = vst [vmem:[#allocation2 + $0x10] sm:$0xff] 0.0
          %408 = vst [vmem:[#allocation2 + $0x18] sm:$0xff] 0.0
        $region59: #{_lambda_.24} parent=50 // pred_fallthru
          _
        %v409 = vld [vmem:[#allocation2] sm:$0xff]
        %v410 = vld [vmem:[#allocation2 + $0x8] sm:$0xff]
        %v411 = vld [vmem:[#allocation2 + $0x10] sm:$0xff]
        %v412 = vld [vmem:[#allocation2 + $0x18] sm:$0xff]
        %v413 = vld [vmem:[%s389] sm:$0xff]
        %v414 = vld [vmem:[%s389 + $0x8] sm:$0xff]
        %v415 = vld [vmem:[%s389 + $0x10] sm:$0xff]
        %v416 = vld [vmem:[%s389 + $0x18] sm:$0xff]
        %v417 = vld [vmem:[%s346] sm:$0xff]
        %v418 = vld [vmem:[%s346 + $0x8] sm:$0xff]
        %v419 = vld [vmem:[%s346 + $0x10] sm:$0xff]
        %v420 = vld [vmem:[%s346 + $0x18] sm:$0xff]
        %v421 = vld [vmem:[%s346 + $0x20] sm:$0xff]
        %v422 = vld [vmem:[%s346 + $0x28] sm:$0xff]
        %v423 = vld [vmem:[%s346 + $0x30] sm:$0xff]
        %v424 = vld [vmem:[%s346 + $0x38] sm:$0xff]
        %v425 = vld [vmem:[%s346 + $0x40] sm:$0xff]
        %v426 = vld [vmem:[%s346 + $0x48] sm:$0xff]
        %v427 = vld [vmem:[%s346 + $0x50] sm:$0xff]
        %v428 = vld [vmem:[%s346 + $0x58] sm:$0xff]
        %v429 = vld [vmem:[%s346 + $0x60] sm:$0xff]
        %v430 = vld [vmem:[%s346 + $0x68] sm:$0xff]
        %v431 = vld [vmem:[%s346 + $0x70] sm:$0xff]
        %v432 = vld [vmem:[%s346 + $0x78] sm:$0xff]
        %v433 = vld [vmem:[%s346 + $0x80] sm:$0xff]
        %v434 = vld [vmem:[%s346 + $0x88] sm:$0xff]
        %v435 = vld [vmem:[%s346 + $0x90] sm:$0xff]
        %v436 = vld [vmem:[%s346 + $0x98] sm:$0xff]
        %v437 = vld [vmem:[%s346 + $0xa0] sm:$0xff]
        %v438 = vld [vmem:[%s346 + $0xa8] sm:$0xff]
        %v439 = vld [vmem:[%s346 + $0xb0] sm:$0xff]
        %v440 = vld [vmem:[%s346 + $0xb8] sm:$0xff]
        %v441 = vld [vmem:[%s346 + $0xc0] sm:$0xff]
        %v442 = vld [vmem:[%s346 + $0xc8] sm:$0xff]
        %v443 = vld [vmem:[%s346 + $0xd0] sm:$0xff]
        %v444 = vld [vmem:[%s346 + $0xd8] sm:$0xff]
        %v445 = vld [vmem:[%s346 + $0xe0] sm:$0xff]
        %v446 = vld [vmem:[%s346 + $0xe8] sm:$0xff]
        %v447 = vld [vmem:[%s346 + $0xf0] sm:$0xff]
        %v448 = vld [vmem:[%s346 + $0xf8] sm:$0xff]
        %v449 = vld [vmem:[%s346 + $0x100] sm:$0xff]
        %v450 = vld [vmem:[%s346 + $0x108] sm:$0xff]
        %v451 = vld [vmem:[%s346 + $0x110] sm:$0xff]
        %v452 = vld [vmem:[%s346 + $0x118] sm:$0xff]
        %v453 = vld [vmem:[%s346 + $0x120] sm:$0xff]
        %v454 = vld [vmem:[%s346 + $0x128] sm:$0xff]
        %v455 = vld [vmem:[%s346 + $0x130] sm:$0xff]
        %v456 = vld [vmem:[%s346 + $0x138] sm:$0xff]
        %v457 = vld [vmem:[%s346 + $0x140] sm:$0xff]
        %v458 = vld [vmem:[%s346 + $0x148] sm:$0xff]
        %v459 = vld [vmem:[%s346 + $0x150] sm:$0xff]
        %v460 = vld [vmem:[%s346 + $0x158] sm:$0xff]
        %v461 = vld [vmem:[%s346 + $0x160] sm:$0xff]
        %v462 = vld [vmem:[%s346 + $0x168] sm:$0xff]
        %v463 = vld [vmem:[%s346 + $0x170] sm:$0xff]
        %v464 = vld [vmem:[%s346 + $0x178] sm:$0xff]
        %v465 = vld [vmem:[%s346 + $0x180] sm:$0xff]
        %v466 = vld [vmem:[%s346 + $0x188] sm:$0xff]
        %v467 = vld [vmem:[%s346 + $0x190] sm:$0xff]
        %v468 = vld [vmem:[%s346 + $0x198] sm:$0xff]
        %v469 = vld [vmem:[%s346 + $0x1a0] sm:$0xff]
        %v470 = vld [vmem:[%s346 + $0x1a8] sm:$0xff]
        %v471 = vld [vmem:[%s346 + $0x1b0] sm:$0xff]
        %v472 = vld [vmem:[%s346 + $0x1b8] sm:$0xff]
        %v473 = vld [vmem:[%s346 + $0x1c0] sm:$0xff]
        %v474 = vld [vmem:[%s346 + $0x1c8] sm:$0xff]
        %v475 = vld [vmem:[%s346 + $0x1d0] sm:$0xff]
        %v476 = vld [vmem:[%s346 + $0x1d8] sm:$0xff]
        %v477 = vld [vmem:[%s346 + $0x1e0] sm:$0xff]
        %v478 = vld [vmem:[%s346 + $0x1e8] sm:$0xff]
        %v479 = vld [vmem:[%s346 + $0x1f0] sm:$0xff]
        %v480 = vld [vmem:[%s346 + $0x1f8] sm:$0xff]
        %481 = vmatprep.subr.mxu0 %v418
        %482 = vmatpush1.msra.mxu0 %v417
        %483 = vmatprep.subr.mxu0 %v420
        %484 = vmatpush1.msra.mxu0 %v419
        %485 = vmatprep.subr.mxu0 %v422
        %486 = vmatpush1.msra.mxu0 %v421
        %487 = vmatprep.subr.mxu0 %v424
        %488 = vmatpush1.msra.mxu0 %v423
        %489 = vmatprep.subr.mxu0 %v426
        %490 = vmatpush1.msra.mxu0 %v425
        %491 = vmatprep.subr.mxu0 %v428
        %492 = vmatpush1.msra.mxu0 %v427
        %493 = vmatprep.subr.mxu0 %v430
        %494 = vmatpush1.msra.mxu0 %v429
        %495 = vmatprep.subr.mxu0 %v432
        %496 = vmatpush1.msra.mxu0 %v431
        %497 = vmatprep.subr.mxu0 %v434
        %498 = vmatpush1.msra.mxu0 %v433
        %499 = vmatprep.subr.mxu0 %v436
        %500 = vmatpush1.msra.mxu0 %v435
        %501 = vmatprep.subr.mxu0 %v438
        %502 = vmatpush1.msra.mxu0 %v437
        %503 = vmatprep.subr.mxu0 %v440
        %504 = vmatpush1.msra.mxu0 %v439
        %505 = vmatprep.subr.mxu0 %v442
        %506 = vmatpush1.msra.mxu0 %v441
        %507 = vmatprep.subr.mxu0 %v444
        %508 = vmatpush1.msra.mxu0 %v443
        %509 = vmatprep.subr.mxu0 %v446
        %510 = vmatpush1.msra.mxu0 %v445
        %511 = vmatprep.subr.mxu0 %v448
        %512 = vmatpush1.msra.mxu0 %v447
        %513 = vmatprep.subr.mxu0 %v450
        %514 = vmatpush1.msra.mxu0 %v449
        %515 = vmatprep.subr.mxu0 %v452
        %516 = vmatpush1.msra.mxu0 %v451
        %517 = vmatprep.subr.mxu0 %v454
        %518 = vmatpush1.msra.mxu0 %v453
        %519 = vmatprep.subr.mxu0 %v456
        %520 = vmatpush1.msra.mxu0 %v455
        %521 = vmatprep.subr.mxu0 %v458
        %522 = vmatpush1.msra.mxu0 %v457
        %523 = vmatprep.subr.mxu0 %v460
        %524 = vmatpush1.msra.mxu0 %v459
        %525 = vmatprep.subr.mxu0 %v462
        %526 = vmatpush1.msra.mxu0 %v461
        %527 = vmatprep.subr.mxu0 %v464
        %528 = vmatpush1.msra.mxu0 %v463
        %529 = vmatprep.subr.mxu0 %v466
        %530 = vmatpush1.msra.mxu0 %v465
        %531 = vmatprep.subr.mxu0 %v468
        %532 = vmatpush1.msra.mxu0 %v467
        %533 = vmatprep.subr.mxu0 %v470
        %534 = vmatpush1.msra.mxu0 %v469
        %535 = vmatprep.subr.mxu0 %v472
        %536 = vmatpush1.msra.mxu0 %v471
        %537 = vmatprep.subr.mxu0 %v474
        %538 = vmatpush1.msra.mxu0 %v473
        %539 = vmatprep.subr.mxu0 %v476
        %540 = vmatpush1.msra.mxu0 %v475
        %541 = vmatprep.subr.mxu0 %v478
        %542 = vmatpush1.msra.mxu0 %v477
        %543 = vmatprep.subr.mxu0 %v480
        %544 = vmatpush1.msra.mxu0 %v479
        %545 = vmatprep.mubr.f32.mxu0 %v414
        %546 = vmatmul.mubr.f32.gmra.mrb[0].mxu0 %v413
        %v547 = vpop.f32.mrb[0].mxu0
        %v548 = vadd.f32 0.0, %v547
        %v549 = vpop.f32.mrb[0].mxu0
        %v550 = vadd.f32 0.0, %v549
        %551 = vmatprep.mubr.f32.mxu0 %v416
        %552 = vmatmul.mubr.f32.gmra.mrb[0].mxu0 %v415
        %v553 = vpop.f32.mrb[0].mxu0
        %v554 = vadd.f32 0.0, %v553
        %v555 = vpop.f32.mrb[0].mxu0
        %v556 = vadd.f32 0.0, %v555
        %557 = vdwg.mxu0
        %v558 = vadd.f32 %v409, %v548
        %v559 = vadd.f32 %v410, %v550
        %v560 = vadd.f32 %v411, %v554
        %v561 = vadd.f32 %v412, %v556
        %562 = vst [vmem:[#allocation2] sm:$0xff] %v558
        %563 = vst [vmem:[#allocation2 + $0x8] sm:$0xff] %v559
        %564 = vst [vmem:[#allocation2 + $0x10] sm:$0xff] %v560
        %565 = vst [vmem:[#allocation2 + $0x18] sm:$0xff] %v561
        // Predicated region
        $region60: #{_lambda_.24} parent=50 // pred_check
          %p566 = pneg %p401
        $region61: #{_lambda_.24} parent=50 // pred_check_branch
          %568 = sbr.rel (%p566) target = $region63
        $region62: #{_lambda_.24} parent=50 // pred_region
          %v569 = vld [vmem:[#allocation2] sm:$0xff]
          %v570 = vld [vmem:[#allocation2 + $0x8] sm:$0xff]
          %v571 = vld [vmem:[#allocation2 + $0x10] sm:$0xff]
          %v572 = vld [vmem:[#allocation2 + $0x18] sm:$0xff]
          %v573 = vld [vmem:[%s397] sm:$0x3]
          %v575 = vlaneseq
          %v576 = vshrl.u32 %v575, 7
          %v577 = vsub.s32 0, %v576
          %v578 = vrot.slane %v573, %v577
          %v579 = vlaneseq
          %v580 = vshrl.u32 %v579, 7
          %v581 = vsub.s32 1, %v580
          %v582 = vrot.slane %v573, %v581
          %v585 = vadd.f32 %v569, %v578
          %v586 = vadd.f32 %v570, %v582
          %v587 = vadd.f32 %v571, %v578
          %v588 = vadd.f32 %v572, %v582
          %589 = vst [vmem:[%s379] sm:$0xff] %v585
          %590 = vst [vmem:[%s379 + $0x8] sm:$0xff] %v586
          %591 = vst [vmem:[%s379 + $0x10] sm:$0xff] %v587
          %592 = vst [vmem:[%s379 + $0x18] sm:$0xff] %v588
        $region63: #{_lambda_.24} parent=50 // pred_fallthru
          _
        %s593 = sand.u32 %s125, 1
        %s594 = sand.u32 %s125, 1
        %s595 = smul.addr %s594, 32
        %s596 = scalar_lea.vmem [#allocation4], %s595
        // Predicated region
        $region64: #{_lambda_.24} parent=50 // pred_check
          %p597 = pneg %p135
        $region65: #{_lambda_.24} parent=50 // pred_check_branch
          %599 = sbr.rel (%p597) target = $region67
        $region66: #{_lambda_.24} parent=50 // pred_region
          %s600 = smul.u32 2, %s19
          %s601 = smul.u32 2, %s20
          %s602 = smul.addr %s600, 6
          %s603 = sadd.s32 %s601, %s602
          %s604 = smul.addr %s603, 8
          %s605 = scalar_lea.vmem %s3, %s604
          // Predicated region
          $region68: #{_lambda_.24} parent=66 // pred_check
            _
          $region69: #{_lambda_.24} parent=66 // pred_check_branch
            %607 = sbr.rel (0) target = $region71
          $region70: #{_lambda_.24} parent=66 // pred_region
            // Predicated region
            $region72: #{_lambda_.24} parent=70 // pred_check
              _
            $region73: #{_lambda_.24} parent=70 // pred_check_branch
              %609 = sbr.rel (0) target = $region75
            $region74: #{_lambda_.24} parent=70 // pred_region
              loop: start=0, step=1, limit=1
              $region76: #{_lambda_.24} parent=74 // loop_pre_header
                _
              $region77: #{_lambda_.24} parent=74 // loop_header
                %s611 = sphi 0, %s615
                %p612 = scmp.ge.s32.totalorder %s611, 1
                %s616 = sphi %s596, %s596
                %s617 = sphi %s605, %s605
              $region78: #{_lambda_.24} parent=74 // loop_header_branch
                %614 = sbr.rel (%p612) target = $region82
              $region79: #{_lambda_.24} parent=74 // loop_body
                %v618 = vld [vmem:[%s616] sm:$0xff]
                %619 = vst [vmem:[%s617] sm:$0xff] %v618
                %v620 = vld [vmem:[%s616 + $0x8] sm:$0xff]
                %621 = vst [vmem:[%s617 + $0x8] sm:$0xff] %v620
                %v622 = vld [vmem:[%s616 + $0x10] sm:$0xff]
                %623 = vst [vmem:[%s617 + $0x30] sm:$0xff] %v622
                %v624 = vld [vmem:[%s616 + $0x18] sm:$0xff]
                %625 = vst [vmem:[%s617 + $0x38] sm:$0xff] %v624
              $region80: #{_lambda_.24} parent=74 // loop_footer
                %s615 = sadd.s32 1, %s611
              $region81: #{_lambda_.24} parent=74 // loop_footer_branch
                %610 = sbr.rel target = $region77
              $region82: #{_lambda_.24} parent=74 // loop_exit
                _
            $region75: #{_lambda_.24} parent=70 // pred_fallthru
              _
            // Predicated region
            $region83: #{_lambda_.24} parent=70 // pred_check
              _
            $region84: #{_lambda_.24} parent=70 // pred_check_branch
              %627 = sbr.rel target = $region86
            $region85: #{_lambda_.24} parent=70 // pred_region
              _
            $region86: #{_lambda_.24} parent=70 // pred_fallthru
              _
          $region71: #{_lambda_.24} parent=66 // pred_fallthru
            _
          %628 = vnop
        $region67: #{_lambda_.24} parent=50 // pred_fallthru
          _
      $region51: #{_lambda_.24} parent=5 // pred_fallthru
        _
      %p629 = scmp.le.s32.totalorder 2, %s9
      // Predicated region
      $region87: #{_lambda_.24} parent=5 // pred_check
        %p630 = pneg %p629
      $region88: #{_lambda_.24} parent=5 // pred_check_branch
        %632 = sbr.rel (%p630) target = $region90
      $region89: #{_lambda_.24} parent=5 // pred_region
        %s633 = ssub.s32 %s9, 2
        // Predicated region
        $region91: #{_lambda_.24} parent=89 // pred_check
          %p634 = pneg %p141
        $region92: #{_lambda_.24} parent=89 // pred_check_branch
          %636 = sbr.rel (%p634) target = $region94
        $region93: #{_lambda_.24} parent=89 // pred_region
          %s637 = sand.u32 %s126, 1
          %s638 = sand.u32 %s126, 1
          %s639 = smul.addr %s638, 32
          %s640 = scalar_lea.vmem [#allocation4], %s639
        $region94: #{_lambda_.24} parent=89 // pred_fallthru
          _
      $region90: #{_lambda_.24} parent=5 // pred_fallthru
        _
    $region6: #{_lambda_.24} parent=1 // loop_footer
      %s13 = sadd.s32 1, %s9
    $region7: #{_lambda_.24} parent=1 // loop_footer_branch
      %8 = sbr.rel target = $region3
    $region8: #{_lambda_.24} parent=1 // loop_exit
      _

// kernel: _lambda_.23
$region0: #{_lambda_.23}
  #allocation0 [shape = 'u32[]', space=smem, size = 0x4, offset = 0x4, fixed_abs, tag = 'smem constant byte address 0x4 - core index']
  #allocation1 [shape = 'u32[144,128]{1,0:T(1,128)}', space=vmem, size = 0x12000, scoped, tag = 'internal scratch']
  #allocation2 [shape = 'f32[16,256]{1,0:T(8,128)}', space=vmem, size = 0x4000, scoped, tag = 'scratch operand']
  %s0 = inlined_call_operand.vmem [shape: f32[16,256], index: 0, kind: input, shape index: {}]
  %s1 = inlined_call_operand.vmem [shape: f32[256,512], index: 1, kind: input, shape index: {}]
  %s2 = inlined_call_operand.vmem [shape: f32[1,512], index: 2, kind: input, shape index: {}]
  %s3 = inlined_call_operand.vmem [shape: f32[512,256], index: 3, kind: input, shape index: {}]
  %s4 = inlined_call_operand.vmem [shape: f32[1,256], index: 4, kind: input, shape index: {}]
  %s5 = inlined_call_operand.vmem [shape: f32[1,256], index: 5, kind: input, shape index: {}]
  %s6 = inlined_call_operand.vmem [shape: f32[1,256], index: 6, kind: input, shape index: {}]
  %s7 = inlined_call_operand.vmem [shape: f32[16,256], index: 7, kind: output, shape index: {}]
  %s8 = sld [smem:[#allocation0]]
  $region46: #{_lambda_.23} parent=0
    _
  %s10 = ssub.s32 1, %s8
  %s11 = scalar_select 0, %s10, %s8
  // Predicated region
  $region2: #{_lambda_.23} parent=0 // pred_check
    _
  $region3: #{_lambda_.23} parent=0 // pred_check_branch
    %13 = sbr.rel (0) target = $region5
  $region4: #{_lambda_.23} parent=0 // pred_region
    _
  $region5: #{_lambda_.23} parent=0 // pred_fallthru
    _
  // Predicated region
  $region6: #{_lambda_.23} parent=0 // pred_check
    _
  $region7: #{_lambda_.23} parent=0 // pred_check_branch
    %15 = sbr.rel (0) target = $region9
  $region8: #{_lambda_.23} parent=0 // pred_region
    _
  $region9: #{_lambda_.23} parent=0 // pred_fallthru
    _
  // Predicated region
  $region10: #{_lambda_.23} parent=0 // pred_check
    _
  $region11: #{_lambda_.23} parent=0 // pred_check_branch
    %17 = sbr.rel (0) target = $region13
  $region12: #{_lambda_.23} parent=0 // pred_region
    _
  $region13: #{_lambda_.23} parent=0 // pred_fallthru
    _
  // Predicated region
  $region14: #{_lambda_.23} parent=0 // pred_check
    _
  $region15: #{_lambda_.23} parent=0 // pred_check_branch
    %19 = sbr.rel (0) target = $region17
  $region16: #{_lambda_.23} parent=0 // pred_region
    _
  $region17: #{_lambda_.23} parent=0 // pred_fallthru
    _
  // Predicated region
  $region18: #{_lambda_.23} parent=0 // pred_check
    _
  $region19: #{_lambda_.23} parent=0 // pred_check_branch
    %21 = sbr.rel (0) target = $region21
  $region20: #{_lambda_.23} parent=0 // pred_region
    _
  $region21: #{_lambda_.23} parent=0 // pred_fallthru
    _
  // Predicated region
  $region22: #{_lambda_.23} parent=0 // pred_check
    _
  $region23: #{_lambda_.23} parent=0 // pred_check_branch
    %23 = sbr.rel (0) target = $region25
  $region24: #{_lambda_.23} parent=0 // pred_region
    _
  $region25: #{_lambda_.23} parent=0 // pred_fallthru
    _
  // Predicated region
  $region26: #{_lambda_.23} parent=0 // pred_check
    _
  $region27: #{_lambda_.23} parent=0 // pred_check_branch
    %25 = sbr.rel (0) target = $region29
  $region28: #{_lambda_.23} parent=0 // pred_region
    _
  $region29: #{_lambda_.23} parent=0 // pred_fallthru
    _
  %p26 = scmp.eq.s32.totalorder 0, 0
  // Predicated region
  $region30: #{_lambda_.23} parent=0 // pred_check
    %p27 = pneg %p26
  $region31: #{_lambda_.23} parent=0 // pred_check_branch
    %29 = sbr.rel (%p27) target = $region33
  $region32: #{_lambda_.23} parent=0 // pred_region
    %30 = vst [vmem:[#allocation2] sm:$0xff] 0.0
    %31 = vst [vmem:[#allocation2 + $0x8] sm:$0xff] 0.0
    %32 = vst [vmem:[#allocation2 + $0x10] sm:$0xff] 0.0
    %33 = vst [vmem:[#allocation2 + $0x18] sm:$0xff] 0.0
  $region33: #{_lambda_.23} parent=0 // pred_fallthru
    _
  %v34 = vld [vmem:[%s0] sm:$0xff]
  %v35 = vld [vmem:[%s0 + $0x8] sm:$0xff]
  %v36 = vld [vmem:[%s0 + $0x10] sm:$0xff]
  %v37 = vld [vmem:[%s0 + $0x18] sm:$0xff]
  %v38 = vld [vmem:[%s1] sm:$0xff]
  %v39 = vld [vmem:[%s1 + $0x8] sm:$0xff]
  %v40 = vld [vmem:[%s1 + $0x10] sm:$0xff]
  %v41 = vld [vmem:[%s1 + $0x18] sm:$0xff]
  %v42 = vld [vmem:[%s1 + $0x20] sm:$0xff]
  %v43 = vld [vmem:[%s1 + $0x28] sm:$0xff]
  %v44 = vld [vmem:[%s1 + $0x30] sm:$0xff]
  %v45 = vld [vmem:[%s1 + $0x38] sm:$0xff]
  %v46 = vld [vmem:[%s1 + $0x40] sm:$0xff]
  %v47 = vld [vmem:[%s1 + $0x48] sm:$0xff]
  %v48 = vld [vmem:[%s1 + $0x50] sm:$0xff]
  %v49 = vld [vmem:[%s1 + $0x58] sm:$0xff]
  %v50 = vld [vmem:[%s1 + $0x60] sm:$0xff]
  %v51 = vld [vmem:[%s1 + $0x68] sm:$0xff]
  %v52 = vld [vmem:[%s1 + $0x70] sm:$0xff]
  %v53 = vld [vmem:[%s1 + $0x78] sm:$0xff]
  %v54 = vld [vmem:[%s1 + $0x80] sm:$0xff]
  %v55 = vld [vmem:[%s1 + $0x88] sm:$0xff]
  %v56 = vld [vmem:[%s1 + $0x90] sm:$0xff]
  %v57 = vld [vmem:[%s1 + $0x98] sm:$0xff]
  %v58 = vld [vmem:[%s1 + $0xa0] sm:$0xff]
  %v59 = vld [vmem:[%s1 + $0xa8] sm:$0xff]
  %v60 = vld [vmem:[%s1 + $0xb0] sm:$0xff]
  %v61 = vld [vmem:[%s1 + $0xb8] sm:$0xff]
  %v62 = vld [vmem:[%s1 + $0xc0] sm:$0xff]
  %v63 = vld [vmem:[%s1 + $0xc8] sm:$0xff]
  %v64 = vld [vmem:[%s1 + $0xd0] sm:$0xff]
  %v65 = vld [vmem:[%s1 + $0xd8] sm:$0xff]
  %v66 = vld [vmem:[%s1 + $0xe0] sm:$0xff]
  %v67 = vld [vmem:[%s1 + $0xe8] sm:$0xff]
  %v68 = vld [vmem:[%s1 + $0xf0] sm:$0xff]
  %v69 = vld [vmem:[%s1 + $0xf8] sm:$0xff]
  %v70 = vld [vmem:[%s1 + $0x100] sm:$0xff]
  %v71 = vld [vmem:[%s1 + $0x108] sm:$0xff]
  %v72 = vld [vmem:[%s1 + $0x110] sm:$0xff]
  %v73 = vld [vmem:[%s1 + $0x118] sm:$0xff]
  %v74 = vld [vmem:[%s1 + $0x120] sm:$0xff]
  %v75 = vld [vmem:[%s1 + $0x128] sm:$0xff]
  %v76 = vld [vmem:[%s1 + $0x130] sm:$0xff]
  %v77 = vld [vmem:[%s1 + $0x138] sm:$0xff]
  %v78 = vld [vmem:[%s1 + $0x140] sm:$0xff]
  %v79 = vld [vmem:[%s1 + $0x148] sm:$0xff]
  %v80 = vld [vmem:[%s1 + $0x150] sm:$0xff]
  %v81 = vld [vmem:[%s1 + $0x158] sm:$0xff]
  %v82 = vld [vmem:[%s1 + $0x160] sm:$0xff]
  %v83 = vld [vmem:[%s1 + $0x168] sm:$0xff]
  %v84 = vld [vmem:[%s1 + $0x170] sm:$0xff]
  %v85 = vld [vmem:[%s1 + $0x178] sm:$0xff]
  %v86 = vld [vmem:[%s1 + $0x180] sm:$0xff]
  %v87 = vld [vmem:[%s1 + $0x188] sm:$0xff]
  %v88 = vld [vmem:[%s1 + $0x190] sm:$0xff]
  %v89 = vld [vmem:[%s1 + $0x198] sm:$0xff]
  %v90 = vld [vmem:[%s1 + $0x1a0] sm:$0xff]
  %v91 = vld [vmem:[%s1 + $0x1a8] sm:$0xff]
  %v92 = vld [vmem:[%s1 + $0x1b0] sm:$0xff]
  %v93 = vld [vmem:[%s1 + $0x1b8] sm:$0xff]
  %v94 = vld [vmem:[%s1 + $0x1c0] sm:$0xff]
  %v95 = vld [vmem:[%s1 + $0x1c8] sm:$0xff]
  %v96 = vld [vmem:[%s1 + $0x1d0] sm:$0xff]
  %v97 = vld [vmem:[%s1 + $0x1d8] sm:$0xff]
  %v98 = vld [vmem:[%s1 + $0x1e0] sm:$0xff]
  %v99 = vld [vmem:[%s1 + $0x1e8] sm:$0xff]
  %v100 = vld [vmem:[%s1 + $0x1f0] sm:$0xff]
  %v101 = vld [vmem:[%s1 + $0x1f8] sm:$0xff]
  %v102 = vld [vmem:[%s1 + $0x200] sm:$0xff]
  %v103 = vld [vmem:[%s1 + $0x208] sm:$0xff]
  %v104 = vld [vmem:[%s1 + $0x210] sm:$0xff]
  %v105 = vld [vmem:[%s1 + $0x218] sm:$0xff]
  %v106 = vld [vmem:[%s1 + $0x220] sm:$0xff]
  %v107 = vld [vmem:[%s1 + $0x228] sm:$0xff]
  %v108 = vld [vmem:[%s1 + $0x230] sm:$0xff]
  %v109 = vld [vmem:[%s1 + $0x238] sm:$0xff]
  %v110 = vld [vmem:[%s1 + $0x240] sm:$0xff]
  %v111 = vld [vmem:[%s1 + $0x248] sm:$0xff]
  %v112 = vld [vmem:[%s1 + $0x250] sm:$0xff]
  %v113 = vld [vmem:[%s1 + $0x258] sm:$0xff]
  %v114 = vld [vmem:[%s1 + $0x260] sm:$0xff]
  %v115 = vld [vmem:[%s1 + $0x268] sm:$0xff]
  %v116 = vld [vmem:[%s1 + $0x270] sm:$0xff]
  %v117 = vld [vmem:[%s1 + $0x278] sm:$0xff]
  %v118 = vld [vmem:[%s1 + $0x280] sm:$0xff]
  %v119 = vld [vmem:[%s1 + $0x288] sm:$0xff]
  %v120 = vld [vmem:[%s1 + $0x290] sm:$0xff]
  %v121 = vld [vmem:[%s1 + $0x298] sm:$0xff]
  %v122 = vld [vmem:[%s1 + $0x2a0] sm:$0xff]
  %v123 = vld [vmem:[%s1 + $0x2a8] sm:$0xff]
  %v124 = vld [vmem:[%s1 + $0x2b0] sm:$0xff]
  %v125 = vld [vmem:[%s1 + $0x2b8] sm:$0xff]
  %v126 = vld [vmem:[%s1 + $0x2c0] sm:$0xff]
  %v127 = vld [vmem:[%s1 + $0x2c8] sm:$0xff]
  %v128 = vld [vmem:[%s1 + $0x2d0] sm:$0xff]
  %v129 = vld [vmem:[%s1 + $0x2d8] sm:$0xff]
  %v130 = vld [vmem:[%s1 + $0x2e0] sm:$0xff]
  %v131 = vld [vmem:[%s1 + $0x2e8] sm:$0xff]
  %v132 = vld [vmem:[%s1 + $0x2f0] sm:$0xff]
  %v133 = vld [vmem:[%s1 + $0x2f8] sm:$0xff]
  %v134 = vld [vmem:[%s1 + $0x300] sm:$0xff]
  %v135 = vld [vmem:[%s1 + $0x308] sm:$0xff]
  %v136 = vld [vmem:[%s1 + $0x310] sm:$0xff]
  %v137 = vld [vmem:[%s1 + $0x318] sm:$0xff]
  %v138 = vld [vmem:[%s1 + $0x320] sm:$0xff]
  %v139 = vld [vmem:[%s1 + $0x328] sm:$0xff]
  %v140 = vld [vmem:[%s1 + $0x330] sm:$0xff]
  %v141 = vld [vmem:[%s1 + $0x338] sm:$0xff]
  %v142 = vld [vmem:[%s1 + $0x340] sm:$0xff]
  %v143 = vld [vmem:[%s1 + $0x348] sm:$0xff]
  %v144 = vld [vmem:[%s1 + $0x350] sm:$0xff]
  %v145 = vld [vmem:[%s1 + $0x358] sm:$0xff]
  %v146 = vld [vmem:[%s1 + $0x360] sm:$0xff]
  %v147 = vld [vmem:[%s1 + $0x368] sm:$0xff]
  %v148 = vld [vmem:[%s1 + $0x370] sm:$0xff]
  %v149 = vld [vmem:[%s1 + $0x378] sm:$0xff]
  %v150 = vld [vmem:[%s1 + $0x380] sm:$0xff]
  %v151 = vld [vmem:[%s1 + $0x388] sm:$0xff]
  %v152 = vld [vmem:[%s1 + $0x390] sm:$0xff]
  %v153 = vld [vmem:[%s1 + $0x398] sm:$0xff]
  %v154 = vld [vmem:[%s1 + $0x3a0] sm:$0xff]
  %v155 = vld [vmem:[%s1 + $0x3a8] sm:$0xff]
  %v156 = vld [vmem:[%s1 + $0x3b0] sm:$0xff]
  %v157 = vld [vmem:[%s1 + $0x3b8] sm:$0xff]
  %v158 = vld [vmem:[%s1 + $0x3c0] sm:$0xff]
  %v159 = vld [vmem:[%s1 + $0x3c8] sm:$0xff]
  %v160 = vld [vmem:[%s1 + $0x3d0] sm:$0xff]
  %v161 = vld [vmem:[%s1 + $0x3d8] sm:$0xff]
  %v162 = vld [vmem:[%s1 + $0x3e0] sm:$0xff]
  %v163 = vld [vmem:[%s1 + $0x3e8] sm:$0xff]
  %v164 = vld [vmem:[%s1 + $0x3f0] sm:$0xff]
  %v165 = vld [vmem:[%s1 + $0x3f8] sm:$0xff]
  %v166 = vld [vmem:[%s2] sm:$0xf]
  %v168 = vlaneseq
  %v169 = vshrl.u32 %v168, 7
  %v170 = vsub.s32 0, %v169
  %v171 = vrot.slane %v166, %v170
  %v172 = vlaneseq
  %v173 = vshrl.u32 %v172, 7
  %v174 = vsub.s32 1, %v173
  %v175 = vrot.slane %v166, %v174
  %v176 = vlaneseq
  %v177 = vshrl.u32 %v176, 7
  %v178 = vsub.s32 2, %v177
  %v179 = vrot.slane %v166, %v178
  %v180 = vlaneseq
  %v181 = vshrl.u32 %v180, 7
  %v182 = vsub.s32 3, %v181
  %v183 = vrot.slane %v166, %v182
  %188 = vmatprep.subr.mxu0 %v39
  %189 = vmatpush1.msra.mxu0 %v38
  %190 = vmatprep.subr.mxu0 %v43
  %191 = vmatpush1.msra.mxu0 %v42
  %192 = vmatprep.subr.mxu0 %v47
  %193 = vmatpush1.msra.mxu0 %v46
  %194 = vmatprep.subr.mxu0 %v51
  %195 = vmatpush1.msra.mxu0 %v50
  %196 = vmatprep.subr.mxu0 %v55
  %197 = vmatpush1.msra.mxu0 %v54
  %198 = vmatprep.subr.mxu0 %v59
  %199 = vmatpush1.msra.mxu0 %v58
  %200 = vmatprep.subr.mxu0 %v63
  %201 = vmatpush1.msra.mxu0 %v62
  %202 = vmatprep.subr.mxu0 %v67
  %203 = vmatpush1.msra.mxu0 %v66
  %204 = vmatprep.subr.mxu0 %v71
  %205 = vmatpush1.msra.mxu0 %v70
  %206 = vmatprep.subr.mxu0 %v75
  %207 = vmatpush1.msra.mxu0 %v74
  %208 = vmatprep.subr.mxu0 %v79
  %209 = vmatpush1.msra.mxu0 %v78
  %210 = vmatprep.subr.mxu0 %v83
  %211 = vmatpush1.msra.mxu0 %v82
  %212 = vmatprep.subr.mxu0 %v87
  %213 = vmatpush1.msra.mxu0 %v86
  %214 = vmatprep.subr.mxu0 %v91
  %215 = vmatpush1.msra.mxu0 %v90
  %216 = vmatprep.subr.mxu0 %v95
  %217 = vmatpush1.msra.mxu0 %v94
  %218 = vmatprep.subr.mxu0 %v99
  %219 = vmatpush1.msra.mxu0 %v98
  %220 = vmatprep.subr.mxu0 %v103
  %221 = vmatpush1.msra.mxu0 %v102
  %222 = vmatprep.subr.mxu0 %v107
  %223 = vmatpush1.msra.mxu0 %v106
  %224 = vmatprep.subr.mxu0 %v111
  %225 = vmatpush1.msra.mxu0 %v110
  %226 = vmatprep.subr.mxu0 %v115
  %227 = vmatpush1.msra.mxu0 %v114
  %228 = vmatprep.subr.mxu0 %v119
  %229 = vmatpush1.msra.mxu0 %v118
  %230 = vmatprep.subr.mxu0 %v123
  %231 = vmatpush1.msra.mxu0 %v122
  %232 = vmatprep.subr.mxu0 %v127
  %233 = vmatpush1.msra.mxu0 %v126
  %234 = vmatprep.subr.mxu0 %v131
  %235 = vmatpush1.msra.mxu0 %v130
  %236 = vmatprep.subr.mxu0 %v135
  %237 = vmatpush1.msra.mxu0 %v134
  %238 = vmatprep.subr.mxu0 %v139
  %239 = vmatpush1.msra.mxu0 %v138
  %240 = vmatprep.subr.mxu0 %v143
  %241 = vmatpush1.msra.mxu0 %v142
  %242 = vmatprep.subr.mxu0 %v147
  %243 = vmatpush1.msra.mxu0 %v146
  %244 = vmatprep.subr.mxu0 %v151
  %245 = vmatpush1.msra.mxu0 %v150
  %246 = vmatprep.subr.mxu0 %v155
  %247 = vmatpush1.msra.mxu0 %v154
  %248 = vmatprep.subr.mxu0 %v159
  %249 = vmatpush1.msra.mxu0 %v158
  %250 = vmatprep.subr.mxu0 %v163
  %251 = vmatpush1.msra.mxu0 %v162
  %252 = vmatprep.mubr.f32.mxu0 %v35
  %253 = vmatmul.mubr.f32.gmra.mrb[0].mxu0 %v34
  %v254 = vpop.f32.mrb[0].mxu0
  %v255 = vadd.f32 %v171, %v254
  %v256 = vpop.f32.mrb[0].mxu0
  %v257 = vadd.f32 %v175, %v256
  %258 = vmatprep.mubr.f32.mxu0 %v37
  %259 = vmatmul.mubr.f32.gmra.mrb[0].mxu0 %v36
  %v260 = vpop.f32.mrb[0].mxu0
  %v261 = vadd.f32 %v171, %v260
  %v262 = vpop.f32.mrb[0].mxu0
  %v263 = vadd.f32 %v175, %v262
  %264 = vdwg.mxu0
  %265 = vmatprep.subr.mxu0 %v41
  %266 = vmatpush1.msra.mxu0 %v40
  %267 = vmatprep.subr.mxu0 %v45
  %268 = vmatpush1.msra.mxu0 %v44
  %269 = vmatprep.subr.mxu0 %v49
  %270 = vmatpush1.msra.mxu0 %v48
  %271 = vmatprep.subr.mxu0 %v53
  %272 = vmatpush1.msra.mxu0 %v52
  %273 = vmatprep.subr.mxu0 %v57
  %274 = vmatpush1.msra.mxu0 %v56
  %275 = vmatprep.subr.mxu0 %v61
  %276 = vmatpush1.msra.mxu0 %v60
  %277 = vmatprep.subr.mxu0 %v65
  %278 = vmatpush1.msra.mxu0 %v64
  %279 = vmatprep.subr.mxu0 %v69
  %280 = vmatpush1.msra.mxu0 %v68
  %281 = vmatprep.subr.mxu0 %v73
  %282 = vmatpush1.msra.mxu0 %v72
  %283 = vmatprep.subr.mxu0 %v77
  %284 = vmatpush1.msra.mxu0 %v76
  %285 = vmatprep.subr.mxu0 %v81
  %286 = vmatpush1.msra.mxu0 %v80
  %287 = vmatprep.subr.mxu0 %v85
  %288 = vmatpush1.msra.mxu0 %v84
  %289 = vmatprep.subr.mxu0 %v89
  %290 = vmatpush1.msra.mxu0 %v88
  %291 = vmatprep.subr.mxu0 %v93
  %292 = vmatpush1.msra.mxu0 %v92
  %293 = vmatprep.subr.mxu0 %v97
  %294 = vmatpush1.msra.mxu0 %v96
  %295 = vmatprep.subr.mxu0 %v101
  %296 = vmatpush1.msra.mxu0 %v100
  %297 = vmatprep.subr.mxu0 %v105
  %298 = vmatpush1.msra.mxu0 %v104
  %299 = vmatprep.subr.mxu0 %v109
  %300 = vmatpush1.msra.mxu0 %v108
  %301 = vmatprep.subr.mxu0 %v113
  %302 = vmatpush1.msra.mxu0 %v112
  %303 = vmatprep.subr.mxu0 %v117
  %304 = vmatpush1.msra.mxu0 %v116
  %305 = vmatprep.subr.mxu0 %v121
  %306 = vmatpush1.msra.mxu0 %v120
  %307 = vmatprep.subr.mxu0 %v125
  %308 = vmatpush1.msra.mxu0 %v124
  %309 = vmatprep.subr.mxu0 %v129
  %310 = vmatpush1.msra.mxu0 %v128
  %311 = vmatprep.subr.mxu0 %v133
  %312 = vmatpush1.msra.mxu0 %v132
  %313 = vmatprep.subr.mxu0 %v137
  %314 = vmatpush1.msra.mxu0 %v136
  %315 = vmatprep.subr.mxu0 %v141
  %316 = vmatpush1.msra.mxu0 %v140
  %317 = vmatprep.subr.mxu0 %v145
  %318 = vmatpush1.msra.mxu0 %v144
  %319 = vmatprep.subr.mxu0 %v149
  %320 = vmatpush1.msra.mxu0 %v148
  %321 = vmatprep.subr.mxu0 %v153
  %322 = vmatpush1.msra.mxu0 %v152
  %323 = vmatprep.subr.mxu0 %v157
  %324 = vmatpush1.msra.mxu0 %v156
  %325 = vmatprep.subr.mxu0 %v161
  %326 = vmatpush1.msra.mxu0 %v160
  %327 = vmatprep.subr.mxu0 %v165
  %328 = vmatpush1.msra.mxu0 %v164
  %329 = vmatprep.mubr.f32.mxu0 %v35
  %330 = vmatmul.mubr.f32.gmra.mrb[0].mxu0 %v34
  %v331 = vpop.f32.mrb[0].mxu0
  %v332 = vadd.f32 %v179, %v331
  %v333 = vpop.f32.mrb[0].mxu0
  %v334 = vadd.f32 %v183, %v333
  %335 = vmatprep.mubr.f32.mxu0 %v37
  %336 = vmatmul.mubr.f32.gmra.mrb[0].mxu0 %v36
  %v337 = vpop.f32.mrb[0].mxu0
  %v338 = vadd.f32 %v179, %v337
  %v339 = vpop.f32.mrb[0].mxu0
  %v340 = vadd.f32 %v183, %v339
  %341 = vdwg.mxu0
  %v342 = vmax.f32 %v255, 0.0
  %v343 = vmax.f32 %v257, 0.0
  %v344 = vmax.f32 %v332, 0.0
  %v345 = vmax.f32 %v334, 0.0
  %v346 = vmax.f32 %v261, 0.0
  %v347 = vmax.f32 %v263, 0.0
  %v348 = vmax.f32 %v338, 0.0
  %v349 = vmax.f32 %v340, 0.0
  %v350 = vld [vmem:[#allocation2] sm:$0xff]
  %v351 = vld [vmem:[#allocation2 + $0x8] sm:$0xff]
  %v352 = vld [vmem:[#allocation2 + $0x10] sm:$0xff]
  %v353 = vld [vmem:[#allocation2 + $0x18] sm:$0xff]
  %v354 = vld [vmem:[%s3] sm:$0xff]
  %v355 = vld [vmem:[%s3 + $0x8] sm:$0xff]
  %v356 = vld [vmem:[%s3 + $0x10] sm:$0xff]
  %v357 = vld [vmem:[%s3 + $0x18] sm:$0xff]
  %v358 = vld [vmem:[%s3 + $0x20] sm:$0xff]
  %v359 = vld [vmem:[%s3 + $0x28] sm:$0xff]
  %v360 = vld [vmem:[%s3 + $0x30] sm:$0xff]
  %v361 = vld [vmem:[%s3 + $0x38] sm:$0xff]
  %v362 = vld [vmem:[%s3 + $0x40] sm:$0xff]
  %v363 = vld [vmem:[%s3 + $0x48] sm:$0xff]
  %v364 = vld [vmem:[%s3 + $0x50] sm:$0xff]
  %v365 = vld [vmem:[%s3 + $0x58] sm:$0xff]
  %v366 = vld [vmem:[%s3 + $0x60] sm:$0xff]
  %v367 = vld [vmem:[%s3 + $0x68] sm:$0xff]
  %v368 = vld [vmem:[%s3 + $0x70] sm:$0xff]
  %v369 = vld [vmem:[%s3 + $0x78] sm:$0xff]
  %v370 = vld [vmem:[%s3 + $0x80] sm:$0xff]
  %v371 = vld [vmem:[%s3 + $0x88] sm:$0xff]
  %v372 = vld [vmem:[%s3 + $0x90] sm:$0xff]
  %v373 = vld [vmem:[%s3 + $0x98] sm:$0xff]
  %v374 = vld [vmem:[%s3 + $0xa0] sm:$0xff]
  %v375 = vld [vmem:[%s3 + $0xa8] sm:$0xff]
  %v376 = vld [vmem:[%s3 + $0xb0] sm:$0xff]
  %v377 = vld [vmem:[%s3 + $0xb8] sm:$0xff]
  %v378 = vld [vmem:[%s3 + $0xc0] sm:$0xff]
  %v379 = vld [vmem:[%s3 + $0xc8] sm:$0xff]
  %v380 = vld [vmem:[%s3 + $0xd0] sm:$0xff]
  %v381 = vld [vmem:[%s3 + $0xd8] sm:$0xff]
  %v382 = vld [vmem:[%s3 + $0xe0] sm:$0xff]
  %v383 = vld [vmem:[%s3 + $0xe8] sm:$0xff]
  %v384 = vld [vmem:[%s3 + $0xf0] sm:$0xff]
  %v385 = vld [vmem:[%s3 + $0xf8] sm:$0xff]
  %v386 = vld [vmem:[%s3 + $0x100] sm:$0xff]
  %v387 = vld [vmem:[%s3 + $0x108] sm:$0xff]
  %v388 = vld [vmem:[%s3 + $0x110] sm:$0xff]
  %v389 = vld [vmem:[%s3 + $0x118] sm:$0xff]
  %v390 = vld [vmem:[%s3 + $0x120] sm:$0xff]
  %v391 = vld [vmem:[%s3 + $0x128] sm:$0xff]
  %v392 = vld [vmem:[%s3 + $0x130] sm:$0xff]
  %v393 = vld [vmem:[%s3 + $0x138] sm:$0xff]
  %v394 = vld [vmem:[%s3 + $0x140] sm:$0xff]
  %v395 = vld [vmem:[%s3 + $0x148] sm:$0xff]
  %v396 = vld [vmem:[%s3 + $0x150] sm:$0xff]
  %v397 = vld [vmem:[%s3 + $0x158] sm:$0xff]
  %v398 = vld [vmem:[%s3 + $0x160] sm:$0xff]
  %v399 = vld [vmem:[%s3 + $0x168] sm:$0xff]
  %v400 = vld [vmem:[%s3 + $0x170] sm:$0xff]
  %v401 = vld [vmem:[%s3 + $0x178] sm:$0xff]
  %v402 = vld [vmem:[%s3 + $0x180] sm:$0xff]
  %v403 = vld [vmem:[%s3 + $0x188] sm:$0xff]
  %v404 = vld [vmem:[%s3 + $0x190] sm:$0xff]
  %v405 = vld [vmem:[%s3 + $0x198] sm:$0xff]
  %v406 = vld [vmem:[%s3 + $0x1a0] sm:$0xff]
  %v407 = vld [vmem:[%s3 + $0x1a8] sm:$0xff]
  %v408 = vld [vmem:[%s3 + $0x1b0] sm:$0xff]
  %v409 = vld [vmem:[%s3 + $0x1b8] sm:$0xff]
  %v410 = vld [vmem:[%s3 + $0x1c0] sm:$0xff]
  %v411 = vld [vmem:[%s3 + $0x1c8] sm:$0xff]
  %v412 = vld [vmem:[%s3 + $0x1d0] sm:$0xff]
  %v413 = vld [vmem:[%s3 + $0x1d8] sm:$0xff]
  %v414 = vld [vmem:[%s3 + $0x1e0] sm:$0xff]
  %v415 = vld [vmem:[%s3 + $0x1e8] sm:$0xff]
  %v416 = vld [vmem:[%s3 + $0x1f0] sm:$0xff]
  %v417 = vld [vmem:[%s3 + $0x1f8] sm:$0xff]
  %v418 = vld [vmem:[%s3 + $0x200] sm:$0xff]
  %v419 = vld [vmem:[%s3 + $0x208] sm:$0xff]
  %v420 = vld [vmem:[%s3 + $0x210] sm:$0xff]
  %v421 = vld [vmem:[%s3 + $0x218] sm:$0xff]
  %v422 = vld [vmem:[%s3 + $0x220] sm:$0xff]
  %v423 = vld [vmem:[%s3 + $0x228] sm:$0xff]
  %v424 = vld [vmem:[%s3 + $0x230] sm:$0xff]
  %v425 = vld [vmem:[%s3 + $0x238] sm:$0xff]
  %v426 = vld [vmem:[%s3 + $0x240] sm:$0xff]
  %v427 = vld [vmem:[%s3 + $0x248] sm:$0xff]
  %v428 = vld [vmem:[%s3 + $0x250] sm:$0xff]
  %v429 = vld [vmem:[%s3 + $0x258] sm:$0xff]
  %v430 = vld [vmem:[%s3 + $0x260] sm:$0xff]
  %v431 = vld [vmem:[%s3 + $0x268] sm:$0xff]
  %v432 = vld [vmem:[%s3 + $0x270] sm:$0xff]
  %v433 = vld [vmem:[%s3 + $0x278] sm:$0xff]
  %v434 = vld [vmem:[%s3 + $0x280] sm:$0xff]
  %v435 = vld [vmem:[%s3 + $0x288] sm:$0xff]
  %v436 = vld [vmem:[%s3 + $0x290] sm:$0xff]
  %v437 = vld [vmem:[%s3 + $0x298] sm:$0xff]
  %v438 = vld [vmem:[%s3 + $0x2a0] sm:$0xff]
  %v439 = vld [vmem:[%s3 + $0x2a8] sm:$0xff]
  %v440 = vld [vmem:[%s3 + $0x2b0] sm:$0xff]
  %v441 = vld [vmem:[%s3 + $0x2b8] sm:$0xff]
  %v442 = vld [vmem:[%s3 + $0x2c0] sm:$0xff]
  %v443 = vld [vmem:[%s3 + $0x2c8] sm:$0xff]
  %v444 = vld [vmem:[%s3 + $0x2d0] sm:$0xff]
  %v445 = vld [vmem:[%s3 + $0x2d8] sm:$0xff]
  %v446 = vld [vmem:[%s3 + $0x2e0] sm:$0xff]
  %v447 = vld [vmem:[%s3 + $0x2e8] sm:$0xff]
  %v448 = vld [vmem:[%s3 + $0x2f0] sm:$0xff]
  %v449 = vld [vmem:[%s3 + $0x2f8] sm:$0xff]
  %v450 = vld [vmem:[%s3 + $0x300] sm:$0xff]
  %v451 = vld [vmem:[%s3 + $0x308] sm:$0xff]
  %v452 = vld [vmem:[%s3 + $0x310] sm:$0xff]
  %v453 = vld [vmem:[%s3 + $0x318] sm:$0xff]
  %v454 = vld [vmem:[%s3 + $0x320] sm:$0xff]
  %v455 = vld [vmem:[%s3 + $0x328] sm:$0xff]
  %v456 = vld [vmem:[%s3 + $0x330] sm:$0xff]
  %v457 = vld [vmem:[%s3 + $0x338] sm:$0xff]
  %v458 = vld [vmem:[%s3 + $0x340] sm:$0xff]
  %v459 = vld [vmem:[%s3 + $0x348] sm:$0xff]
  %v460 = vld [vmem:[%s3 + $0x350] sm:$0xff]
  %v461 = vld [vmem:[%s3 + $0x358] sm:$0xff]
  %v462 = vld [vmem:[%s3 + $0x360] sm:$0xff]
  %v463 = vld [vmem:[%s3 + $0x368] sm:$0xff]
  %v464 = vld [vmem:[%s3 + $0x370] sm:$0xff]
  %v465 = vld [vmem:[%s3 + $0x378] sm:$0xff]
  %v466 = vld [vmem:[%s3 + $0x380] sm:$0xff]
  %v467 = vld [vmem:[%s3 + $0x388] sm:$0xff]
  %v468 = vld [vmem:[%s3 + $0x390] sm:$0xff]
  %v469 = vld [vmem:[%s3 + $0x398] sm:$0xff]
  %v470 = vld [vmem:[%s3 + $0x3a0] sm:$0xff]
  %v471 = vld [vmem:[%s3 + $0x3a8] sm:$0xff]
  %v472 = vld [vmem:[%s3 + $0x3b0] sm:$0xff]
  %v473 = vld [vmem:[%s3 + $0x3b8] sm:$0xff]
  %v474 = vld [vmem:[%s3 + $0x3c0] sm:$0xff]
  %v475 = vld [vmem:[%s3 + $0x3c8] sm:$0xff]
  %v476 = vld [vmem:[%s3 + $0x3d0] sm:$0xff]
  %v477 = vld [vmem:[%s3 + $0x3d8] sm:$0xff]
  %v478 = vld [vmem:[%s3 + $0x3e0] sm:$0xff]
  %v479 = vld [vmem:[%s3 + $0x3e8] sm:$0xff]
  %v480 = vld [vmem:[%s3 + $0x3f0] sm:$0xff]
  %v481 = vld [vmem:[%s3 + $0x3f8] sm:$0xff]
  %482 = vmatprep.subr.mxu0 %v355
  %483 = vmatpush1.msra.mxu0 %v354
  %484 = vmatprep.subr.mxu0 %v357
  %485 = vmatpush1.msra.mxu0 %v356
  %486 = vmatprep.subr.mxu0 %v359
  %487 = vmatpush1.msra.mxu0 %v358
  %488 = vmatprep.subr.mxu0 %v361
  %489 = vmatpush1.msra.mxu0 %v360
  %490 = vmatprep.subr.mxu0 %v363
  %491 = vmatpush1.msra.mxu0 %v362
  %492 = vmatprep.subr.mxu0 %v365
  %493 = vmatpush1.msra.mxu0 %v364
  %494 = vmatprep.subr.mxu0 %v367
  %495 = vmatpush1.msra.mxu0 %v366
  %496 = vmatprep.subr.mxu0 %v369
  %497 = vmatpush1.msra.mxu0 %v368
  %498 = vmatprep.subr.mxu0 %v371
  %499 = vmatpush1.msra.mxu0 %v370
  %500 = vmatprep.subr.mxu0 %v373
  %501 = vmatpush1.msra.mxu0 %v372
  %502 = vmatprep.subr.mxu0 %v375
  %503 = vmatpush1.msra.mxu0 %v374
  %504 = vmatprep.subr.mxu0 %v377
  %505 = vmatpush1.msra.mxu0 %v376
  %506 = vmatprep.subr.mxu0 %v379
  %507 = vmatpush1.msra.mxu0 %v378
  %508 = vmatprep.subr.mxu0 %v381
  %509 = vmatpush1.msra.mxu0 %v380
  %510 = vmatprep.subr.mxu0 %v383
  %511 = vmatpush1.msra.mxu0 %v382
  %512 = vmatprep.subr.mxu0 %v385
  %513 = vmatpush1.msra.mxu0 %v384
  %514 = vmatprep.subr.mxu0 %v387
  %515 = vmatpush1.msra.mxu0 %v386
  %516 = vmatprep.subr.mxu0 %v389
  %517 = vmatpush1.msra.mxu0 %v388
  %518 = vmatprep.subr.mxu0 %v391
  %519 = vmatpush1.msra.mxu0 %v390
  %520 = vmatprep.subr.mxu0 %v393
  %521 = vmatpush1.msra.mxu0 %v392
  %522 = vmatprep.subr.mxu0 %v395
  %523 = vmatpush1.msra.mxu0 %v394
  %524 = vmatprep.subr.mxu0 %v397
  %525 = vmatpush1.msra.mxu0 %v396
  %526 = vmatprep.subr.mxu0 %v399
  %527 = vmatpush1.msra.mxu0 %v398
  %528 = vmatprep.subr.mxu0 %v401
  %529 = vmatpush1.msra.mxu0 %v400
  %530 = vmatprep.subr.mxu0 %v403
  %531 = vmatpush1.msra.mxu0 %v402
  %532 = vmatprep.subr.mxu0 %v405
  %533 = vmatpush1.msra.mxu0 %v404
  %534 = vmatprep.subr.mxu0 %v407
  %535 = vmatpush1.msra.mxu0 %v406
  %536 = vmatprep.subr.mxu0 %v409
  %537 = vmatpush1.msra.mxu0 %v408
  %538 = vmatprep.subr.mxu0 %v411
  %539 = vmatpush1.msra.mxu0 %v410
  %540 = vmatprep.subr.mxu0 %v413
  %541 = vmatpush1.msra.mxu0 %v412
  %542 = vmatprep.subr.mxu0 %v415
  %543 = vmatpush1.msra.mxu0 %v414
  %544 = vmatprep.subr.mxu0 %v417
  %545 = vmatpush1.msra.mxu0 %v416
  %546 = vmatprep.mubr.f32.mxu0 %v343
  %547 = vmatmul.mubr.f32.gmra.mrb[0].mxu0 %v342
  %v548 = vpop.f32.mrb[0].mxu0
  %v549 = vadd.f32 0.0, %v548
  %v550 = vpop.f32.mrb[0].mxu0
  %v551 = vadd.f32 0.0, %v550
  %552 = vmatprep.mubr.f32.mxu0 %v347
  %553 = vmatmul.mubr.f32.gmra.mrb[0].mxu0 %v346
  %v554 = vpop.f32.mrb[0].mxu0
  %v555 = vadd.f32 0.0, %v554
  %v556 = vpop.f32.mrb[0].mxu0
  %v557 = vadd.f32 0.0, %v556
  %558 = vdwg.mxu0
  %559 = vmatprep.subr.mxu0 %v419
  %560 = vmatpush1.msra.mxu0 %v418
  %561 = vmatprep.subr.mxu0 %v421
  %562 = vmatpush1.msra.mxu0 %v420
  %563 = vmatprep.subr.mxu0 %v423
  %564 = vmatpush1.msra.mxu0 %v422
  %565 = vmatprep.subr.mxu0 %v425
  %566 = vmatpush1.msra.mxu0 %v424
  %567 = vmatprep.subr.mxu0 %v427
  %568 = vmatpush1.msra.mxu0 %v426
  %569 = vmatprep.subr.mxu0 %v429
  %570 = vmatpush1.msra.mxu0 %v428
  %571 = vmatprep.subr.mxu0 %v431
  %572 = vmatpush1.msra.mxu0 %v430
  %573 = vmatprep.subr.mxu0 %v433
  %574 = vmatpush1.msra.mxu0 %v432
  %575 = vmatprep.subr.mxu0 %v435
  %576 = vmatpush1.msra.mxu0 %v434
  %577 = vmatprep.subr.mxu0 %v437
  %578 = vmatpush1.msra.mxu0 %v436
  %579 = vmatprep.subr.mxu0 %v439
  %580 = vmatpush1.msra.mxu0 %v438
  %581 = vmatprep.subr.mxu0 %v441
  %582 = vmatpush1.msra.mxu0 %v440
  %583 = vmatprep.subr.mxu0 %v443
  %584 = vmatpush1.msra.mxu0 %v442
  %585 = vmatprep.subr.mxu0 %v445
  %586 = vmatpush1.msra.mxu0 %v444
  %587 = vmatprep.subr.mxu0 %v447
  %588 = vmatpush1.msra.mxu0 %v446
  %589 = vmatprep.subr.mxu0 %v449
  %590 = vmatpush1.msra.mxu0 %v448
  %591 = vmatprep.subr.mxu0 %v451
  %592 = vmatpush1.msra.mxu0 %v450
  %593 = vmatprep.subr.mxu0 %v453
  %594 = vmatpush1.msra.mxu0 %v452
  %595 = vmatprep.subr.mxu0 %v455
  %596 = vmatpush1.msra.mxu0 %v454
  %597 = vmatprep.subr.mxu0 %v457
  %598 = vmatpush1.msra.mxu0 %v456
  %599 = vmatprep.subr.mxu0 %v459
  %600 = vmatpush1.msra.mxu0 %v458
  %601 = vmatprep.subr.mxu0 %v461
  %602 = vmatpush1.msra.mxu0 %v460
  %603 = vmatprep.subr.mxu0 %v463
  %604 = vmatpush1.msra.mxu0 %v462
  %605 = vmatprep.subr.mxu0 %v465
  %606 = vmatpush1.msra.mxu0 %v464
  %607 = vmatprep.subr.mxu0 %v467
  %608 = vmatpush1.msra.mxu0 %v466
  %609 = vmatprep.subr.mxu0 %v469
  %610 = vmatpush1.msra.mxu0 %v468
  %611 = vmatprep.subr.mxu0 %v471
  %612 = vmatpush1.msra.mxu0 %v470
  %613 = vmatprep.subr.mxu0 %v473
  %614 = vmatpush1.msra.mxu0 %v472
  %615 = vmatprep.subr.mxu0 %v475
  %616 = vmatpush1.msra.mxu0 %v474
  %617 = vmatprep.subr.mxu0 %v477
  %618 = vmatpush1.msra.mxu0 %v476
  %619 = vmatprep.subr.mxu0 %v479
  %620 = vmatpush1.msra.mxu0 %v478
  %621 = vmatprep.subr.mxu0 %v481
  %622 = vmatpush1.msra.mxu0 %v480
  %623 = vmatprep.mubr.f32.mxu0 %v345
  %624 = vmatmul.mubr.f32.gmra.mrb[0].mxu0 %v344
  %v625 = vpop.f32.mrb[0].mxu0
  %v626 = vadd.f32 %v549, %v625
  %v627 = vpop.f32.mrb[0].mxu0
  %v628 = vadd.f32 %v551, %v627
  %629 = vmatprep.mubr.f32.mxu0 %v349
  %630 = vmatmul.mubr.f32.gmra.mrb[0].mxu0 %v348
  %v631 = vpop.f32.mrb[0].mxu0
  %v632 = vadd.f32 %v555, %v631
  %v633 = vpop.f32.mrb[0].mxu0
  %v634 = vadd.f32 %v557, %v633
  %635 = vdwg.mxu0
  %v636 = vadd.f32 %v350, %v626
  %v637 = vadd.f32 %v351, %v628
  %v638 = vadd.f32 %v352, %v632
  %v639 = vadd.f32 %v353, %v634
  %640 = vst [vmem:[#allocation2] sm:$0xff] %v636
  %641 = vst [vmem:[#allocation2 + $0x8] sm:$0xff] %v637
  %642 = vst [vmem:[#allocation2 + $0x10] sm:$0xff] %v638
  %643 = vst [vmem:[#allocation2 + $0x18] sm:$0xff] %v639
  // Predicated region
  $region34: #{_lambda_.23} parent=0 // pred_check
    %p644 = pneg %p26
  $region35: #{_lambda_.23} parent=0 // pred_check_branch
    %646 = sbr.rel (%p644) target = $region37
  $region36: #{_lambda_.23} parent=0 // pred_region
    %v647 = vld [vmem:[#allocation2] sm:$0xff]
    %v648 = vld [vmem:[#allocation2 + $0x8] sm:$0xff]
    %v649 = vld [vmem:[#allocation2 + $0x10] sm:$0xff]
    %v650 = vld [vmem:[#allocation2 + $0x18] sm:$0xff]
    %v651 = vld [vmem:[%s4] sm:$0x3]
    %v653 = vlaneseq
    %v654 = vshrl.u32 %v653, 7
    %v655 = vsub.s32 0, %v654
    %v656 = vrot.slane %v651, %v655
    %v657 = vlaneseq
    %v658 = vshrl.u32 %v657, 7
    %v659 = vsub.s32 1, %v658
    %v660 = vrot.slane %v651, %v659
    %v663 = vadd.f32 %v647, %v656
    %v664 = vadd.f32 %v648, %v660
    %v665 = vadd.f32 %v649, %v656
    %v666 = vadd.f32 %v650, %v660
    %v667 = vld [vmem:[%s0] sm:$0xff]
    %v668 = vld [vmem:[%s0 + $0x8] sm:$0xff]
    %v669 = vld [vmem:[%s0 + $0x10] sm:$0xff]
    %v670 = vld [vmem:[%s0 + $0x18] sm:$0xff]
    %v671 = vadd.f32 %v663, %v667
    %v672 = vadd.f32 %v664, %v668
    %v673 = vadd.f32 %v665, %v669
    %v674 = vadd.f32 %v666, %v670
    %v675 = vld [vmem:[%s5] sm:$0x3]
    %v676 = vld [vmem:[%s6] sm:$0x3]
    %v677 = vadd.f32 %v671, %v672
    %678 = vadd.xlane.f32.xlu0 %v677
    %v679 = vpop.xlane.xlu0 %678
    %v680 = vadd.f32 %v673, %v674
    %681 = vadd.xlane.f32.xlu0 %v680
    %v682 = vpop.xlane.xlu0 %681
    %v683 = vrcp.pop 256.0
    %v684 = vmul.f32 %v679, %v683
    %v685 = vmul.f32 %v682, %v683
    %v686 = vsub.f32 %v671, %v684
    %v687 = vsub.f32 %v672, %v684
    %v688 = vsub.f32 %v673, %v685
    %v689 = vsub.f32 %v674, %v685
    %v690 = vmul.f32 %v686, %v686
    %v691 = vmul.f32 %v687, %v687
    %v692 = vmul.f32 %v688, %v688
    %v693 = vmul.f32 %v689, %v689
    %v694 = vadd.f32 %v690, %v691
    %695 = vadd.xlane.f32.xlu0 %v694
    %v696 = vpop.xlane.xlu0 %695
    %v697 = vadd.f32 %v692, %v693
    %698 = vadd.xlane.f32.xlu0 %v697
    %v699 = vpop.xlane.xlu0 %698
    %v700 = vmul.f32 %v696, %v683
    %v701 = vmul.f32 %v699, %v683
    %v702 = vadd.f32 %v700, 1e-05
    %v703 = vadd.f32 %v701, 1e-05
    %v704 = vrsqrt.pop %v702
    %v705 = vrsqrt.pop %v703
    %v706 = vmul.f32 %v686, %v704
    %v707 = vmul.f32 %v687, %v704
    %v708 = vmul.f32 %v688, %v705
    %v709 = vmul.f32 %v689, %v705
    %v711 = vlaneseq
    %v712 = vshrl.u32 %v711, 7
    %v713 = vsub.s32 0, %v712
    %v714 = vrot.slane %v675, %v713
    %v715 = vlaneseq
    %v716 = vshrl.u32 %v715, 7
    %v717 = vsub.s32 1, %v716
    %v718 = vrot.slane %v675, %v717
    %v721 = vmul.f32 %v706, %v714
    %v722 = vmul.f32 %v707, %v718
    %v723 = vmul.f32 %v708, %v714
    %v724 = vmul.f32 %v709, %v718
    %v726 = vlaneseq
    %v727 = vshrl.u32 %v726, 7
    %v728 = vsub.s32 0, %v727
    %v729 = vrot.slane %v676, %v728
    %v730 = vlaneseq
    %v731 = vshrl.u32 %v730, 7
    %v732 = vsub.s32 1, %v731
    %v733 = vrot.slane %v676, %v732
    %v736 = vadd.f32 %v721, %v729
    %v737 = vadd.f32 %v722, %v733
    %v738 = vadd.f32 %v723, %v729
    %v739 = vadd.f32 %v724, %v733
    %740 = vst [vmem:[%s7] sm:$0xff] %v736
    %741 = vst [vmem:[%s7 + $0x8] sm:$0xff] %v737
    %742 = vst [vmem:[%s7 + $0x10] sm:$0xff] %v738
    %743 = vst [vmem:[%s7 + $0x18] sm:$0xff] %v739
  $region37: #{_lambda_.23} parent=0 // pred_fallthru
    _
  // Predicated region
  $region38: #{_lambda_.23} parent=0 // pred_check
    _
  $region39: #{_lambda_.23} parent=0 // pred_check_branch
    %745 = sbr.rel (0) target = $region41
  $region40: #{_lambda_.23} parent=0 // pred_region
    _
  $region41: #{_lambda_.23} parent=0 // pred_fallthru
    _
  // Predicated region
  $region42: #{_lambda_.23} parent=0 // pred_check
    _
  $region43: #{_lambda_.23} parent=0 // pred_check_branch
    %747 = sbr.rel (0) target = $region45
  $region44: #{_lambda_.23} parent=0 // pred_region
    _
  $region45: #{_lambda_.23} parent=0 // pred_fallthru
    _

// kernel: _lambda_.31
$region0: #{_lambda_.31}
  #allocation0 [shape = 'u32[]', space=smem, size = 0x4, offset = 0x4, fixed_abs, tag = 'smem constant byte address 0x4 - core index']
  #allocation1 [shape = 'u32[144,128]{1,0:T(1,128)}', space=vmem, size = 0x12000, scoped, tag = 'internal scratch']
  #allocation2 [shape = 'f32[16,256]{1,0:T(8,128)}', space=vmem, size = 0x4000, scoped, tag = 'scratch operand']
  %s0 = inlined_call_operand.vmem [shape: f32[16,256], index: 0, kind: input, shape index: {}]
  %s1 = inlined_call_operand.vmem [shape: f32[256,512], index: 1, kind: input, shape index: {}]
  %s2 = inlined_call_operand.vmem [shape: f32[1,512], index: 2, kind: input, shape index: {}]
  %s3 = inlined_call_operand.vmem [shape: f32[512,256], index: 3, kind: input, shape index: {}]
  %s4 = inlined_call_operand.vmem [shape: f32[1,256], index: 4, kind: input, shape index: {}]
  %s5 = inlined_call_operand.vmem [shape: f32[1,256], index: 5, kind: input, shape index: {}]
  %s6 = inlined_call_operand.vmem [shape: f32[1,256], index: 6, kind: input, shape index: {}]
  %s7 = inlined_call_operand.hbm [shape: f32[16,256], index: 7, kind: output, shape index: {}]
  %s8 = sld [smem:[#allocation0]]
  $region46: #{_lambda_.31} parent=0
    _
  %s10 = ssub.s32 1, %s8
  %s11 = scalar_select 0, %s10, %s8
  $region1: #{_lambda_.31} parent=0
    #allocation3 [shape = 'u8[16384]{0}', space=vmem, size = 0x4000, scoped, tag = 'output window, operand 0, single buffered']
    #allocation4 [shape = 's32[1]{0}', space=sflag, size = 0x4, scoped, tag = 'scoped memory for _lambda_.31']
    %12 = vsyncpa [#allocation4], 0
    // Predicated region
    $region2: #{_lambda_.31} parent=1 // pred_check
      _
    $region3: #{_lambda_.31} parent=1 // pred_check_branch
      %14 = sbr.rel (0) target = $region5
    $region4: #{_lambda_.31} parent=1 // pred_region
      _
    $region5: #{_lambda_.31} parent=1 // pred_fallthru
      _
    // Predicated region
    $region6: #{_lambda_.31} parent=1 // pred_check
      _
    $region7: #{_lambda_.31} parent=1 // pred_check_branch
      %16 = sbr.rel (0) target = $region9
    $region8: #{_lambda_.31} parent=1 // pred_region
      _
    $region9: #{_lambda_.31} parent=1 // pred_fallthru
      _
    // Predicated region
    $region10: #{_lambda_.31} parent=1 // pred_check
      _
    $region11: #{_lambda_.31} parent=1 // pred_check_branch
      %18 = sbr.rel (0) target = $region13
    $region12: #{_lambda_.31} parent=1 // pred_region
      _
    $region13: #{_lambda_.31} parent=1 // pred_fallthru
      _
    // Predicated region
    $region14: #{_lambda_.31} parent=1 // pred_check
      _
    $region15: #{_lambda_.31} parent=1 // pred_check_branch
      %20 = sbr.rel (0) target = $region17
    $region16: #{_lambda_.31} parent=1 // pred_region
      _
    $region17: #{_lambda_.31} parent=1 // pred_fallthru
      _
    // Predicated region
    $region18: #{_lambda_.31} parent=1 // pred_check
      _
    $region19: #{_lambda_.31} parent=1 // pred_check_branch
      %22 = sbr.rel (0) target = $region21
    $region20: #{_lambda_.31} parent=1 // pred_region
      _
    $region21: #{_lambda_.31} parent=1 // pred_fallthru
      _
    // Predicated region
    $region22: #{_lambda_.31} parent=1 // pred_check
      _
    $region23: #{_lambda_.31} parent=1 // pred_check_branch
      %24 = sbr.rel (0) target = $region25
    $region24: #{_lambda_.31} parent=1 // pred_region
      _
    $region25: #{_lambda_.31} parent=1 // pred_fallthru
      _
    // Predicated region
    $region26: #{_lambda_.31} parent=1 // pred_check
      _
    $region27: #{_lambda_.31} parent=1 // pred_check_branch
      %26 = sbr.rel (0) target = $region29
    $region28: #{_lambda_.31} parent=1 // pred_region
      _
    $region29: #{_lambda_.31} parent=1 // pred_fallthru
      _
    %p27 = scmp.eq.s32.totalorder 0, 0
    // Predicated region
    $region30: #{_lambda_.31} parent=1 // pred_check
      %p28 = pneg %p27
    $region31: #{_lambda_.31} parent=1 // pred_check_branch
      %30 = sbr.rel (%p28) target = $region33
    $region32: #{_lambda_.31} parent=1 // pred_region
      %31 = vst [vmem:[#allocation2] sm:$0xff] 0.0
      %32 = vst [vmem:[#allocation2 + $0x8] sm:$0xff] 0.0
      %33 = vst [vmem:[#allocation2 + $0x10] sm:$0xff] 0.0
      %34 = vst [vmem:[#allocation2 + $0x18] sm:$0xff] 0.0
    $region33: #{_lambda_.31} parent=1 // pred_fallthru
      _
    %v35 = vld [vmem:[%s0] sm:$0xff]
    %v36 = vld [vmem:[%s0 + $0x8] sm:$0xff]
    %v37 = vld [vmem:[%s0 + $0x10] sm:$0xff]
    %v38 = vld [vmem:[%s0 + $0x18] sm:$0xff]
    %v39 = vld [vmem:[%s1] sm:$0xff]
    %v40 = vld [vmem:[%s1 + $0x8] sm:$0xff]
    %v41 = vld [vmem:[%s1 + $0x10] sm:$0xff]
    %v42 = vld [vmem:[%s1 + $0x18] sm:$0xff]
    %v43 = vld [vmem:[%s1 + $0x20] sm:$0xff]
    %v44 = vld [vmem:[%s1 + $0x28] sm:$0xff]
    %v45 = vld [vmem:[%s1 + $0x30] sm:$0xff]
    %v46 = vld [vmem:[%s1 + $0x38] sm:$0xff]
    %v47 = vld [vmem:[%s1 + $0x40] sm:$0xff]
    %v48 = vld [vmem:[%s1 + $0x48] sm:$0xff]
    %v49 = vld [vmem:[%s1 + $0x50] sm:$0xff]
    %v50 = vld [vmem:[%s1 + $0x58] sm:$0xff]
    %v51 = vld [vmem:[%s1 + $0x60] sm:$0xff]
    %v52 = vld [vmem:[%s1 + $0x68] sm:$0xff]
    %v53 = vld [vmem:[%s1 + $0x70] sm:$0xff]
    %v54 = vld [vmem:[%s1 + $0x78] sm:$0xff]
    %v55 = vld [vmem:[%s1 + $0x80] sm:$0xff]
    %v56 = vld [vmem:[%s1 + $0x88] sm:$0xff]
    %v57 = vld [vmem:[%s1 + $0x90] sm:$0xff]
    %v58 = vld [vmem:[%s1 + $0x98] sm:$0xff]
    %v59 = vld [vmem:[%s1 + $0xa0] sm:$0xff]
    %v60 = vld [vmem:[%s1 + $0xa8] sm:$0xff]
    %v61 = vld [vmem:[%s1 + $0xb0] sm:$0xff]
    %v62 = vld [vmem:[%s1 + $0xb8] sm:$0xff]
    %v63 = vld [vmem:[%s1 + $0xc0] sm:$0xff]
    %v64 = vld [vmem:[%s1 + $0xc8] sm:$0xff]
    %v65 = vld [vmem:[%s1 + $0xd0] sm:$0xff]
    %v66 = vld [vmem:[%s1 + $0xd8] sm:$0xff]
    %v67 = vld [vmem:[%s1 + $0xe0] sm:$0xff]
    %v68 = vld [vmem:[%s1 + $0xe8] sm:$0xff]
    %v69 = vld [vmem:[%s1 + $0xf0] sm:$0xff]
    %v70 = vld [vmem:[%s1 + $0xf8] sm:$0xff]
    %v71 = vld [vmem:[%s1 + $0x100] sm:$0xff]
    %v72 = vld [vmem:[%s1 + $0x108] sm:$0xff]
    %v73 = vld [vmem:[%s1 + $0x110] sm:$0xff]
    %v74 = vld [vmem:[%s1 + $0x118] sm:$0xff]
    %v75 = vld [vmem:[%s1 + $0x120] sm:$0xff]
    %v76 = vld [vmem:[%s1 + $0x128] sm:$0xff]
    %v77 = vld [vmem:[%s1 + $0x130] sm:$0xff]
    %v78 = vld [vmem:[%s1 + $0x138] sm:$0xff]
    %v79 = vld [vmem:[%s1 + $0x140] sm:$0xff]
    %v80 = vld [vmem:[%s1 + $0x148] sm:$0xff]
    %v81 = vld [vmem:[%s1 + $0x150] sm:$0xff]
    %v82 = vld [vmem:[%s1 + $0x158] sm:$0xff]
    %v83 = vld [vmem:[%s1 + $0x160] sm:$0xff]
    %v84 = vld [vmem:[%s1 + $0x168] sm:$0xff]
    %v85 = vld [vmem:[%s1 + $0x170] sm:$0xff]
    %v86 = vld [vmem:[%s1 + $0x178] sm:$0xff]
    %v87 = vld [vmem:[%s1 + $0x180] sm:$0xff]
    %v88 = vld [vmem:[%s1 + $0x188] sm:$0xff]
    %v89 = vld [vmem:[%s1 + $0x190] sm:$0xff]
    %v90 = vld [vmem:[%s1 + $0x198] sm:$0xff]
    %v91 = vld [vmem:[%s1 + $0x1a0] sm:$0xff]
    %v92 = vld [vmem:[%s1 + $0x1a8] sm:$0xff]
    %v93 = vld [vmem:[%s1 + $0x1b0] sm:$0xff]
    %v94 = vld [vmem:[%s1 + $0x1b8] sm:$0xff]
    %v95 = vld [vmem:[%s1 + $0x1c0] sm:$0xff]
    %v96 = vld [vmem:[%s1 + $0x1c8] sm:$0xff]
    %v97 = vld [vmem:[%s1 + $0x1d0] sm:$0xff]
    %v98 = vld [vmem:[%s1 + $0x1d8] sm:$0xff]
    %v99 = vld [vmem:[%s1 + $0x1e0] sm:$0xff]
    %v100 = vld [vmem:[%s1 + $0x1e8] sm:$0xff]
    %v101 = vld [vmem:[%s1 + $0x1f0] sm:$0xff]
    %v102 = vld [vmem:[%s1 + $0x1f8] sm:$0xff]
    %v103 = vld [vmem:[%s1 + $0x200] sm:$0xff]
    %v104 = vld [vmem:[%s1 + $0x208] sm:$0xff]
    %v105 = vld [vmem:[%s1 + $0x210] sm:$0xff]
    %v106 = vld [vmem:[%s1 + $0x218] sm:$0xff]
    %v107 = vld [vmem:[%s1 + $0x220] sm:$0xff]
    %v108 = vld [vmem:[%s1 + $0x228] sm:$0xff]
    %v109 = vld [vmem:[%s1 + $0x230] sm:$0xff]
    %v110 = vld [vmem:[%s1 + $0x238] sm:$0xff]
    %v111 = vld [vmem:[%s1 + $0x240] sm:$0xff]
    %v112 = vld [vmem:[%s1 + $0x248] sm:$0xff]
    %v113 = vld [vmem:[%s1 + $0x250] sm:$0xff]
    %v114 = vld [vmem:[%s1 + $0x258] sm:$0xff]
    %v115 = vld [vmem:[%s1 + $0x260] sm:$0xff]
    %v116 = vld [vmem:[%s1 + $0x268] sm:$0xff]
    %v117 = vld [vmem:[%s1 + $0x270] sm:$0xff]
    %v118 = vld [vmem:[%s1 + $0x278] sm:$0xff]
    %v119 = vld [vmem:[%s1 + $0x280] sm:$0xff]
    %v120 = vld [vmem:[%s1 + $0x288] sm:$0xff]
    %v121 = vld [vmem:[%s1 + $0x290] sm:$0xff]
    %v122 = vld [vmem:[%s1 + $0x298] sm:$0xff]
    %v123 = vld [vmem:[%s1 + $0x2a0] sm:$0xff]
    %v124 = vld [vmem:[%s1 + $0x2a8] sm:$0xff]
    %v125 = vld [vmem:[%s1 + $0x2b0] sm:$0xff]
    %v126 = vld [vmem:[%s1 + $0x2b8] sm:$0xff]
    %v127 = vld [vmem:[%s1 + $0x2c0] sm:$0xff]
    %v128 = vld [vmem:[%s1 + $0x2c8] sm:$0xff]
    %v129 = vld [vmem:[%s1 + $0x2d0] sm:$0xff]
    %v130 = vld [vmem:[%s1 + $0x2d8] sm:$0xff]
    %v131 = vld [vmem:[%s1 + $0x2e0] sm:$0xff]
    %v132 = vld [vmem:[%s1 + $0x2e8] sm:$0xff]
    %v133 = vld [vmem:[%s1 + $0x2f0] sm:$0xff]
    %v134 = vld [vmem:[%s1 + $0x2f8] sm:$0xff]
    %v135 = vld [vmem:[%s1 + $0x300] sm:$0xff]
    %v136 = vld [vmem:[%s1 + $0x308] sm:$0xff]
    %v137 = vld [vmem:[%s1 + $0x310] sm:$0xff]
    %v138 = vld [vmem:[%s1 + $0x318] sm:$0xff]
    %v139 = vld [vmem:[%s1 + $0x320] sm:$0xff]
    %v140 = vld [vmem:[%s1 + $0x328] sm:$0xff]
    %v141 = vld [vmem:[%s1 + $0x330] sm:$0xff]
    %v142 = vld [vmem:[%s1 + $0x338] sm:$0xff]
    %v143 = vld [vmem:[%s1 + $0x340] sm:$0xff]
    %v144 = vld [vmem:[%s1 + $0x348] sm:$0xff]
    %v145 = vld [vmem:[%s1 + $0x350] sm:$0xff]
    %v146 = vld [vmem:[%s1 + $0x358] sm:$0xff]
    %v147 = vld [vmem:[%s1 + $0x360] sm:$0xff]
    %v148 = vld [vmem:[%s1 + $0x368] sm:$0xff]
    %v149 = vld [vmem:[%s1 + $0x370] sm:$0xff]
    %v150 = vld [vmem:[%s1 + $0x378] sm:$0xff]
    %v151 = vld [vmem:[%s1 + $0x380] sm:$0xff]
    %v152 = vld [vmem:[%s1 + $0x388] sm:$0xff]
    %v153 = vld [vmem:[%s1 + $0x390] sm:$0xff]
    %v154 = vld [vmem:[%s1 + $0x398] sm:$0xff]
    %v155 = vld [vmem:[%s1 + $0x3a0] sm:$0xff]
    %v156 = vld [vmem:[%s1 + $0x3a8] sm:$0xff]
    %v157 = vld [vmem:[%s1 + $0x3b0] sm:$0xff]
    %v158 = vld [vmem:[%s1 + $0x3b8] sm:$0xff]
    %v159 = vld [vmem:[%s1 + $0x3c0] sm:$0xff]
    %v160 = vld [vmem:[%s1 + $0x3c8] sm:$0xff]
    %v161 = vld [vmem:[%s1 + $0x3d0] sm:$0xff]
    %v162 = vld [vmem:[%s1 + $0x3d8] sm:$0xff]
    %v163 = vld [vmem:[%s1 + $0x3e0] sm:$0xff]
    %v164 = vld [vmem:[%s1 + $0x3e8] sm:$0xff]
    %v165 = vld [vmem:[%s1 + $0x3f0] sm:$0xff]
    %v166 = vld [vmem:[%s1 + $0x3f8] sm:$0xff]
    %v167 = vld [vmem:[%s2] sm:$0xf]
    %v169 = vlaneseq
    %v170 = vshrl.u32 %v169, 7
    %v171 = vsub.s32 0, %v170
    %v172 = vrot.slane %v167, %v171
    %v173 = vlaneseq
    %v174 = vshrl.u32 %v173, 7
    %v175 = vsub.s32 1, %v174
    %v176 = vrot.slane %v167, %v175
    %v177 = vlaneseq
    %v178 = vshrl.u32 %v177, 7
    %v179 = vsub.s32 2, %v178
    %v180 = vrot.slane %v167, %v179
    %v181 = vlaneseq
    %v182 = vshrl.u32 %v181, 7
    %v183 = vsub.s32 3, %v182
    %v184 = vrot.slane %v167, %v183
    %189 = vmatprep.subr.mxu0 %v40
    %190 = vmatpush1.msra.mxu0 %v39
    %191 = vmatprep.subr.mxu0 %v44
    %192 = vmatpush1.msra.mxu0 %v43
    %193 = vmatprep.subr.mxu0 %v48
    %194 = vmatpush1.msra.mxu0 %v47
    %195 = vmatprep.subr.mxu0 %v52
    %196 = vmatpush1.msra.mxu0 %v51
    %197 = vmatprep.subr.mxu0 %v56
    %198 = vmatpush1.msra.mxu0 %v55
    %199 = vmatprep.subr.mxu0 %v60
    %200 = vmatpush1.msra.mxu0 %v59
    %201 = vmatprep.subr.mxu0 %v64
    %202 = vmatpush1.msra.mxu0 %v63
    %203 = vmatprep.subr.mxu0 %v68
    %204 = vmatpush1.msra.mxu0 %v67
    %205 = vmatprep.subr.mxu0 %v72
    %206 = vmatpush1.msra.mxu0 %v71
    %207 = vmatprep.subr.mxu0 %v76
    %208 = vmatpush1.msra.mxu0 %v75
    %209 = vmatprep.subr.mxu0 %v80
    %210 = vmatpush1.msra.mxu0 %v79
    %211 = vmatprep.subr.mxu0 %v84
    %212 = vmatpush1.msra.mxu0 %v83
    %213 = vmatprep.subr.mxu0 %v88
    %214 = vmatpush1.msra.mxu0 %v87
    %215 = vmatprep.subr.mxu0 %v92
    %216 = vmatpush1.msra.mxu0 %v91
    %217 = vmatprep.subr.mxu0 %v96
    %218 = vmatpush1.msra.mxu0 %v95
    %219 = vmatprep.subr.mxu0 %v100
    %220 = vmatpush1.msra.mxu0 %v99
    %221 = vmatprep.subr.mxu0 %v104
    %222 = vmatpush1.msra.mxu0 %v103
    %223 = vmatprep.subr.mxu0 %v108
    %224 = vmatpush1.msra.mxu0 %v107
    %225 = vmatprep.subr.mxu0 %v112
    %226 = vmatpush1.msra.mxu0 %v111
    %227 = vmatprep.subr.mxu0 %v116
    %228 = vmatpush1.msra.mxu0 %v115
    %229 = vmatprep.subr.mxu0 %v120
    %230 = vmatpush1.msra.mxu0 %v119
    %231 = vmatprep.subr.mxu0 %v124
    %232 = vmatpush1.msra.mxu0 %v123
    %233 = vmatprep.subr.mxu0 %v128
    %234 = vmatpush1.msra.mxu0 %v127
    %235 = vmatprep.subr.mxu0 %v132
    %236 = vmatpush1.msra.mxu0 %v131
    %237 = vmatprep.subr.mxu0 %v136
    %238 = vmatpush1.msra.mxu0 %v135
    %239 = vmatprep.subr.mxu0 %v140
    %240 = vmatpush1.msra.mxu0 %v139
    %241 = vmatprep.subr.mxu0 %v144
    %242 = vmatpush1.msra.mxu0 %v143
    %243 = vmatprep.subr.mxu0 %v148
    %244 = vmatpush1.msra.mxu0 %v147
    %245 = vmatprep.subr.mxu0 %v152
    %246 = vmatpush1.msra.mxu0 %v151
    %247 = vmatprep.subr.mxu0 %v156
    %248 = vmatpush1.msra.mxu0 %v155
    %249 = vmatprep.subr.mxu0 %v160
    %250 = vmatpush1.msra.mxu0 %v159
    %251 = vmatprep.subr.mxu0 %v164
    %252 = vmatpush1.msra.mxu0 %v163
    %253 = vmatprep.mubr.f32.mxu0 %v36
    %254 = vmatmul.mubr.f32.gmra.mrb[0].mxu0 %v35
    %v255 = vpop.f32.mrb[0].mxu0
    %v256 = vadd.f32 %v172, %v255
    %v257 = vpop.f32.mrb[0].mxu0
    %v258 = vadd.f32 %v176, %v257
    %259 = vmatprep.mubr.f32.mxu0 %v38
    %260 = vmatmul.mubr.f32.gmra.mrb[0].mxu0 %v37
    %v261 = vpop.f32.mrb[0].mxu0
    %v262 = vadd.f32 %v172, %v261
    %v263 = vpop.f32.mrb[0].mxu0
    %v264 = vadd.f32 %v176, %v263
    %265 = vdwg.mxu0
    %266 = vmatprep.subr.mxu0 %v42
    %267 = vmatpush1.msra.mxu0 %v41
    %268 = vmatprep.subr.mxu0 %v46
    %269 = vmatpush1.msra.mxu0 %v45
    %270 = vmatprep.subr.mxu0 %v50
    %271 = vmatpush1.msra.mxu0 %v49
    %272 = vmatprep.subr.mxu0 %v54
    %273 = vmatpush1.msra.mxu0 %v53
    %274 = vmatprep.subr.mxu0 %v58
    %275 = vmatpush1.msra.mxu0 %v57
    %276 = vmatprep.subr.mxu0 %v62
    %277 = vmatpush1.msra.mxu0 %v61
    %278 = vmatprep.subr.mxu0 %v66
    %279 = vmatpush1.msra.mxu0 %v65
    %280 = vmatprep.subr.mxu0 %v70
    %281 = vmatpush1.msra.mxu0 %v69
    %282 = vmatprep.subr.mxu0 %v74
    %283 = vmatpush1.msra.mxu0 %v73
    %284 = vmatprep.subr.mxu0 %v78
    %285 = vmatpush1.msra.mxu0 %v77
    %286 = vmatprep.subr.mxu0 %v82
    %287 = vmatpush1.msra.mxu0 %v81
    %288 = vmatprep.subr.mxu0 %v86
    %289 = vmatpush1.msra.mxu0 %v85
    %290 = vmatprep.subr.mxu0 %v90
    %291 = vmatpush1.msra.mxu0 %v89
    %292 = vmatprep.subr.mxu0 %v94
    %293 = vmatpush1.msra.mxu0 %v93
    %294 = vmatprep.subr.mxu0 %v98
    %295 = vmatpush1.msra.mxu0 %v97
    %296 = vmatprep.subr.mxu0 %v102
    %297 = vmatpush1.msra.mxu0 %v101
    %298 = vmatprep.subr.mxu0 %v106
    %299 = vmatpush1.msra.mxu0 %v105
    %300 = vmatprep.subr.mxu0 %v110
    %301 = vmatpush1.msra.mxu0 %v109
    %302 = vmatprep.subr.mxu0 %v114
    %303 = vmatpush1.msra.mxu0 %v113
    %304 = vmatprep.subr.mxu0 %v118
    %305 = vmatpush1.msra.mxu0 %v117
    %306 = vmatprep.subr.mxu0 %v122
    %307 = vmatpush1.msra.mxu0 %v121
    %308 = vmatprep.subr.mxu0 %v126
    %309 = vmatpush1.msra.mxu0 %v125
    %310 = vmatprep.subr.mxu0 %v130
    %311 = vmatpush1.msra.mxu0 %v129
    %312 = vmatprep.subr.mxu0 %v134
    %313 = vmatpush1.msra.mxu0 %v133
    %314 = vmatprep.subr.mxu0 %v138
    %315 = vmatpush1.msra.mxu0 %v137
    %316 = vmatprep.subr.mxu0 %v142
    %317 = vmatpush1.msra.mxu0 %v141
    %318 = vmatprep.subr.mxu0 %v146
    %319 = vmatpush1.msra.mxu0 %v145
    %320 = vmatprep.subr.mxu0 %v150
    %321 = vmatpush1.msra.mxu0 %v149
    %322 = vmatprep.subr.mxu0 %v154
    %323 = vmatpush1.msra.mxu0 %v153
    %324 = vmatprep.subr.mxu0 %v158
    %325 = vmatpush1.msra.mxu0 %v157
    %326 = vmatprep.subr.mxu0 %v162
    %327 = vmatpush1.msra.mxu0 %v161
    %328 = vmatprep.subr.mxu0 %v166
    %329 = vmatpush1.msra.mxu0 %v165
    %330 = vmatprep.mubr.f32.mxu0 %v36
    %331 = vmatmul.mubr.f32.gmra.mrb[0].mxu0 %v35
    %v332 = vpop.f32.mrb[0].mxu0
    %v333 = vadd.f32 %v180, %v332
    %v334 = vpop.f32.mrb[0].mxu0
    %v335 = vadd.f32 %v184, %v334
    %336 = vmatprep.mubr.f32.mxu0 %v38
    %337 = vmatmul.mubr.f32.gmra.mrb[0].mxu0 %v37
    %v338 = vpop.f32.mrb[0].mxu0
    %v339 = vadd.f32 %v180, %v338
    %v340 = vpop.f32.mrb[0].mxu0
    %v341 = vadd.f32 %v184, %v340
    %342 = vdwg.mxu0
    %v343 = vmax.f32 %v256, 0.0
    %v344 = vmax.f32 %v258, 0.0
    %v345 = vmax.f32 %v333, 0.0
    %v346 = vmax.f32 %v335, 0.0
    %v347 = vmax.f32 %v262, 0.0
    %v348 = vmax.f32 %v264, 0.0
    %v349 = vmax.f32 %v339, 0.0
    %v350 = vmax.f32 %v341, 0.0
    %v351 = vld [vmem:[#allocation2] sm:$0xff]
    %v352 = vld [vmem:[#allocation2 + $0x8] sm:$0xff]
    %v353 = vld [vmem:[#allocation2 + $0x10] sm:$0xff]
    %v354 = vld [vmem:[#allocation2 + $0x18] sm:$0xff]
    %v355 = vld [vmem:[%s3] sm:$0xff]
    %v356 = vld [vmem:[%s3 + $0x8] sm:$0xff]
    %v357 = vld [vmem:[%s3 + $0x10] sm:$0xff]
    %v358 = vld [vmem:[%s3 + $0x18] sm:$0xff]
    %v359 = vld [vmem:[%s3 + $0x20] sm:$0xff]
    %v360 = vld [vmem:[%s3 + $0x28] sm:$0xff]
    %v361 = vld [vmem:[%s3 + $0x30] sm:$0xff]
    %v362 = vld [vmem:[%s3 + $0x38] sm:$0xff]
    %v363 = vld [vmem:[%s3 + $0x40] sm:$0xff]
    %v364 = vld [vmem:[%s3 + $0x48] sm:$0xff]
    %v365 = vld [vmem:[%s3 + $0x50] sm:$0xff]
    %v366 = vld [vmem:[%s3 + $0x58] sm:$0xff]
    %v367 = vld [vmem:[%s3 + $0x60] sm:$0xff]
    %v368 = vld [vmem:[%s3 + $0x68] sm:$0xff]
    %v369 = vld [vmem:[%s3 + $0x70] sm:$0xff]
    %v370 = vld [vmem:[%s3 + $0x78] sm:$0xff]
    %v371 = vld [vmem:[%s3 + $0x80] sm:$0xff]
    %v372 = vld [vmem:[%s3 + $0x88] sm:$0xff]
    %v373 = vld [vmem:[%s3 + $0x90] sm:$0xff]
    %v374 = vld [vmem:[%s3 + $0x98] sm:$0xff]
    %v375 = vld [vmem:[%s3 + $0xa0] sm:$0xff]
    %v376 = vld [vmem:[%s3 + $0xa8] sm:$0xff]
    %v377 = vld [vmem:[%s3 + $0xb0] sm:$0xff]
    %v378 = vld [vmem:[%s3 + $0xb8] sm:$0xff]
    %v379 = vld [vmem:[%s3 + $0xc0] sm:$0xff]
    %v380 = vld [vmem:[%s3 + $0xc8] sm:$0xff]
    %v381 = vld [vmem:[%s3 + $0xd0] sm:$0xff]
    %v382 = vld [vmem:[%s3 + $0xd8] sm:$0xff]
    %v383 = vld [vmem:[%s3 + $0xe0] sm:$0xff]
    %v384 = vld [vmem:[%s3 + $0xe8] sm:$0xff]
    %v385 = vld [vmem:[%s3 + $0xf0] sm:$0xff]
    %v386 = vld [vmem:[%s3 + $0xf8] sm:$0xff]
    %v387 = vld [vmem:[%s3 + $0x100] sm:$0xff]
    %v388 = vld [vmem:[%s3 + $0x108] sm:$0xff]
    %v389 = vld [vmem:[%s3 + $0x110] sm:$0xff]
    %v390 = vld [vmem:[%s3 + $0x118] sm:$0xff]
    %v391 = vld [vmem:[%s3 + $0x120] sm:$0xff]
    %v392 = vld [vmem:[%s3 + $0x128] sm:$0xff]
    %v393 = vld [vmem:[%s3 + $0x130] sm:$0xff]
    %v394 = vld [vmem:[%s3 + $0x138] sm:$0xff]
    %v395 = vld [vmem:[%s3 + $0x140] sm:$0xff]
    %v396 = vld [vmem:[%s3 + $0x148] sm:$0xff]
    %v397 = vld [vmem:[%s3 + $0x150] sm:$0xff]
    %v398 = vld [vmem:[%s3 + $0x158] sm:$0xff]
    %v399 = vld [vmem:[%s3 + $0x160] sm:$0xff]
    %v400 = vld [vmem:[%s3 + $0x168] sm:$0xff]
    %v401 = vld [vmem:[%s3 + $0x170] sm:$0xff]
    %v402 = vld [vmem:[%s3 + $0x178] sm:$0xff]
    %v403 = vld [vmem:[%s3 + $0x180] sm:$0xff]
    %v404 = vld [vmem:[%s3 + $0x188] sm:$0xff]
    %v405 = vld [vmem:[%s3 + $0x190] sm:$0xff]
    %v406 = vld [vmem:[%s3 + $0x198] sm:$0xff]
    %v407 = vld [vmem:[%s3 + $0x1a0] sm:$0xff]
    %v408 = vld [vmem:[%s3 + $0x1a8] sm:$0xff]
    %v409 = vld [vmem:[%s3 + $0x1b0] sm:$0xff]
    %v410 = vld [vmem:[%s3 + $0x1b8] sm:$0xff]
    %v411 = vld [vmem:[%s3 + $0x1c0] sm:$0xff]
    %v412 = vld [vmem:[%s3 + $0x1c8] sm:$0xff]
    %v413 = vld [vmem:[%s3 + $0x1d0] sm:$0xff]
    %v414 = vld [vmem:[%s3 + $0x1d8] sm:$0xff]
    %v415 = vld [vmem:[%s3 + $0x1e0] sm:$0xff]
    %v416 = vld [vmem:[%s3 + $0x1e8] sm:$0xff]
    %v417 = vld [vmem:[%s3 + $0x1f0] sm:$0xff]
    %v418 = vld [vmem:[%s3 + $0x1f8] sm:$0xff]
    %v419 = vld [vmem:[%s3 + $0x200] sm:$0xff]
    %v420 = vld [vmem:[%s3 + $0x208] sm:$0xff]
    %v421 = vld [vmem:[%s3 + $0x210] sm:$0xff]
    %v422 = vld [vmem:[%s3 + $0x218] sm:$0xff]
    %v423 = vld [vmem:[%s3 + $0x220] sm:$0xff]
    %v424 = vld [vmem:[%s3 + $0x228] sm:$0xff]
    %v425 = vld [vmem:[%s3 + $0x230] sm:$0xff]
    %v426 = vld [vmem:[%s3 + $0x238] sm:$0xff]
    %v427 = vld [vmem:[%s3 + $0x240] sm:$0xff]
    %v428 = vld [vmem:[%s3 + $0x248] sm:$0xff]
    %v429 = vld [vmem:[%s3 + $0x250] sm:$0xff]
    %v430 = vld [vmem:[%s3 + $0x258] sm:$0xff]
    %v431 = vld [vmem:[%s3 + $0x260] sm:$0xff]
    %v432 = vld [vmem:[%s3 + $0x268] sm:$0xff]
    %v433 = vld [vmem:[%s3 + $0x270] sm:$0xff]
    %v434 = vld [vmem:[%s3 + $0x278] sm:$0xff]
    %v435 = vld [vmem:[%s3 + $0x280] sm:$0xff]
    %v436 = vld [vmem:[%s3 + $0x288] sm:$0xff]
    %v437 = vld [vmem:[%s3 + $0x290] sm:$0xff]
    %v438 = vld [vmem:[%s3 + $0x298] sm:$0xff]
    %v439 = vld [vmem:[%s3 + $0x2a0] sm:$0xff]
    %v440 = vld [vmem:[%s3 + $0x2a8] sm:$0xff]
    %v441 = vld [vmem:[%s3 + $0x2b0] sm:$0xff]
    %v442 = vld [vmem:[%s3 + $0x2b8] sm:$0xff]
    %v443 = vld [vmem:[%s3 + $0x2c0] sm:$0xff]
    %v444 = vld [vmem:[%s3 + $0x2c8] sm:$0xff]
    %v445 = vld [vmem:[%s3 + $0x2d0] sm:$0xff]
    %v446 = vld [vmem:[%s3 + $0x2d8] sm:$0xff]
    %v447 = vld [vmem:[%s3 + $0x2e0] sm:$0xff]
    %v448 = vld [vmem:[%s3 + $0x2e8] sm:$0xff]
    %v449 = vld [vmem:[%s3 + $0x2f0] sm:$0xff]
    %v450 = vld [vmem:[%s3 + $0x2f8] sm:$0xff]
    %v451 = vld [vmem:[%s3 + $0x300] sm:$0xff]
    %v452 = vld [vmem:[%s3 + $0x308] sm:$0xff]
    %v453 = vld [vmem:[%s3 + $0x310] sm:$0xff]
    %v454 = vld [vmem:[%s3 + $0x318] sm:$0xff]
    %v455 = vld [vmem:[%s3 + $0x320] sm:$0xff]
    %v456 = vld [vmem:[%s3 + $0x328] sm:$0xff]
    %v457 = vld [vmem:[%s3 + $0x330] sm:$0xff]
    %v458 = vld [vmem:[%s3 + $0x338] sm:$0xff]
    %v459 = vld [vmem:[%s3 + $0x340] sm:$0xff]
    %v460 = vld [vmem:[%s3 + $0x348] sm:$0xff]
    %v461 = vld [vmem:[%s3 + $0x350] sm:$0xff]
    %v462 = vld [vmem:[%s3 + $0x358] sm:$0xff]
    %v463 = vld [vmem:[%s3 + $0x360] sm:$0xff]
    %v464 = vld [vmem:[%s3 + $0x368] sm:$0xff]
    %v465 = vld [vmem:[%s3 + $0x370] sm:$0xff]
    %v466 = vld [vmem:[%s3 + $0x378] sm:$0xff]
    %v467 = vld [vmem:[%s3 + $0x380] sm:$0xff]
    %v468 = vld [vmem:[%s3 + $0x388] sm:$0xff]
    %v469 = vld [vmem:[%s3 + $0x390] sm:$0xff]
    %v470 = vld [vmem:[%s3 + $0x398] sm:$0xff]
    %v471 = vld [vmem:[%s3 + $0x3a0] sm:$0xff]
    %v472 = vld [vmem:[%s3 + $0x3a8] sm:$0xff]
    %v473 = vld [vmem:[%s3 + $0x3b0] sm:$0xff]
    %v474 = vld [vmem:[%s3 + $0x3b8] sm:$0xff]
    %v475 = vld [vmem:[%s3 + $0x3c0] sm:$0xff]
    %v476 = vld [vmem:[%s3 + $0x3c8] sm:$0xff]
    %v477 = vld [vmem:[%s3 + $0x3d0] sm:$0xff]
    %v478 = vld [vmem:[%s3 + $0x3d8] sm:$0xff]
    %v479 = vld [vmem:[%s3 + $0x3e0] sm:$0xff]
    %v480 = vld [vmem:[%s3 + $0x3e8] sm:$0xff]
    %v481 = vld [vmem:[%s3 + $0x3f0] sm:$0xff]
    %v482 = vld [vmem:[%s3 + $0x3f8] sm:$0xff]
    %483 = vmatprep.subr.mxu0 %v356
    %484 = vmatpush1.msra.mxu0 %v355
    %485 = vmatprep.subr.mxu0 %v358
    %486 = vmatpush1.msra.mxu0 %v357
    %487 = vmatprep.subr.mxu0 %v360
    %488 = vmatpush1.msra.mxu0 %v359
    %489 = vmatprep.subr.mxu0 %v362
    %490 = vmatpush1.msra.mxu0 %v361
    %491 = vmatprep.subr.mxu0 %v364
    %492 = vmatpush1.msra.mxu0 %v363
    %493 = vmatprep.subr.mxu0 %v366
    %494 = vmatpush1.msra.mxu0 %v365
    %495 = vmatprep.subr.mxu0 %v368
    %496 = vmatpush1.msra.mxu0 %v367
    %497 = vmatprep.subr.mxu0 %v370
    %498 = vmatpush1.msra.mxu0 %v369
    %499 = vmatprep.subr.mxu0 %v372
    %500 = vmatpush1.msra.mxu0 %v371
    %501 = vmatprep.subr.mxu0 %v374
    %502 = vmatpush1.msra.mxu0 %v373
    %503 = vmatprep.subr.mxu0 %v376
    %504 = vmatpush1.msra.mxu0 %v375
    %505 = vmatprep.subr.mxu0 %v378
    %506 = vmatpush1.msra.mxu0 %v377
    %507 = vmatprep.subr.mxu0 %v380
    %508 = vmatpush1.msra.mxu0 %v379
    %509 = vmatprep.subr.mxu0 %v382
    %510 = vmatpush1.msra.mxu0 %v381
    %511 = vmatprep.subr.mxu0 %v384
    %512 = vmatpush1.msra.mxu0 %v383
    %513 = vmatprep.subr.mxu0 %v386
    %514 = vmatpush1.msra.mxu0 %v385
    %515 = vmatprep.subr.mxu0 %v388
    %516 = vmatpush1.msra.mxu0 %v387
    %517 = vmatprep.subr.mxu0 %v390
    %518 = vmatpush1.msra.mxu0 %v389
    %519 = vmatprep.subr.mxu0 %v392
    %520 = vmatpush1.msra.mxu0 %v391
    %521 = vmatprep.subr.mxu0 %v394
    %522 = vmatpush1.msra.mxu0 %v393
    %523 = vmatprep.subr.mxu0 %v396
    %524 = vmatpush1.msra.mxu0 %v395
    %525 = vmatprep.subr.mxu0 %v398
    %526 = vmatpush1.msra.mxu0 %v397
    %527 = vmatprep.subr.mxu0 %v400
    %528 = vmatpush1.msra.mxu0 %v399
    %529 = vmatprep.subr.mxu0 %v402
    %530 = vmatpush1.msra.mxu0 %v401
    %531 = vmatprep.subr.mxu0 %v404
    %532 = vmatpush1.msra.mxu0 %v403
    %533 = vmatprep.subr.mxu0 %v406
    %534 = vmatpush1.msra.mxu0 %v405
    %535 = vmatprep.subr.mxu0 %v408
    %536 = vmatpush1.msra.mxu0 %v407
    %537 = vmatprep.subr.mxu0 %v410
    %538 = vmatpush1.msra.mxu0 %v409
    %539 = vmatprep.subr.mxu0 %v412
    %540 = vmatpush1.msra.mxu0 %v411
    %541 = vmatprep.subr.mxu0 %v414
    %542 = vmatpush1.msra.mxu0 %v413
    %543 = vmatprep.subr.mxu0 %v416
    %544 = vmatpush1.msra.mxu0 %v415
    %545 = vmatprep.subr.mxu0 %v418
    %546 = vmatpush1.msra.mxu0 %v417
    %547 = vmatprep.mubr.f32.mxu0 %v344
    %548 = vmatmul.mubr.f32.gmra.mrb[0].mxu0 %v343
    %v549 = vpop.f32.mrb[0].mxu0
    %v550 = vadd.f32 0.0, %v549
    %v551 = vpop.f32.mrb[0].mxu0
    %v552 = vadd.f32 0.0, %v551
    %553 = vmatprep.mubr.f32.mxu0 %v348
    %554 = vmatmul.mubr.f32.gmra.mrb[0].mxu0 %v347
    %v555 = vpop.f32.mrb[0].mxu0
    %v556 = vadd.f32 0.0, %v555
    %v557 = vpop.f32.mrb[0].mxu0
    %v558 = vadd.f32 0.0, %v557
    %559 = vdwg.mxu0
    %560 = vmatprep.subr.mxu0 %v420
    %561 = vmatpush1.msra.mxu0 %v419
    %562 = vmatprep.subr.mxu0 %v422
    %563 = vmatpush1.msra.mxu0 %v421
    %564 = vmatprep.subr.mxu0 %v424
    %565 = vmatpush1.msra.mxu0 %v423
    %566 = vmatprep.subr.mxu0 %v426
    %567 = vmatpush1.msra.mxu0 %v425
    %568 = vmatprep.subr.mxu0 %v428
    %569 = vmatpush1.msra.mxu0 %v427
    %570 = vmatprep.subr.mxu0 %v430
    %571 = vmatpush1.msra.mxu0 %v429
    %572 = vmatprep.subr.mxu0 %v432
    %573 = vmatpush1.msra.mxu0 %v431
    %574 = vmatprep.subr.mxu0 %v434
    %575 = vmatpush1.msra.mxu0 %v433
    %576 = vmatprep.subr.mxu0 %v436
    %577 = vmatpush1.msra.mxu0 %v435
    %578 = vmatprep.subr.mxu0 %v438
    %579 = vmatpush1.msra.mxu0 %v437
    %580 = vmatprep.subr.mxu0 %v440
    %581 = vmatpush1.msra.mxu0 %v439
    %582 = vmatprep.subr.mxu0 %v442
    %583 = vmatpush1.msra.mxu0 %v441
    %584 = vmatprep.subr.mxu0 %v444
    %585 = vmatpush1.msra.mxu0 %v443
    %586 = vmatprep.subr.mxu0 %v446
    %587 = vmatpush1.msra.mxu0 %v445
    %588 = vmatprep.subr.mxu0 %v448
    %589 = vmatpush1.msra.mxu0 %v447
    %590 = vmatprep.subr.mxu0 %v450
    %591 = vmatpush1.msra.mxu0 %v449
    %592 = vmatprep.subr.mxu0 %v452
    %593 = vmatpush1.msra.mxu0 %v451
    %594 = vmatprep.subr.mxu0 %v454
    %595 = vmatpush1.msra.mxu0 %v453
    %596 = vmatprep.subr.mxu0 %v456
    %597 = vmatpush1.msra.mxu0 %v455
    %598 = vmatprep.subr.mxu0 %v458
    %599 = vmatpush1.msra.mxu0 %v457
    %600 = vmatprep.subr.mxu0 %v460
    %601 = vmatpush1.msra.mxu0 %v459
    %602 = vmatprep.subr.mxu0 %v462
    %603 = vmatpush1.msra.mxu0 %v461
    %604 = vmatprep.subr.mxu0 %v464
    %605 = vmatpush1.msra.mxu0 %v463
    %606 = vmatprep.subr.mxu0 %v466
    %607 = vmatpush1.msra.mxu0 %v465
    %608 = vmatprep.subr.mxu0 %v468
    %609 = vmatpush1.msra.mxu0 %v467
    %610 = vmatprep.subr.mxu0 %v470
    %611 = vmatpush1.msra.mxu0 %v469
    %612 = vmatprep.subr.mxu0 %v472
    %613 = vmatpush1.msra.mxu0 %v471
    %614 = vmatprep.subr.mxu0 %v474
    %615 = vmatpush1.msra.mxu0 %v473
    %616 = vmatprep.subr.mxu0 %v476
    %617 = vmatpush1.msra.mxu0 %v475
    %618 = vmatprep.subr.mxu0 %v478
    %619 = vmatpush1.msra.mxu0 %v477
    %620 = vmatprep.subr.mxu0 %v480
    %621 = vmatpush1.msra.mxu0 %v479
    %622 = vmatprep.subr.mxu0 %v482
    %623 = vmatpush1.msra.mxu0 %v481
    %624 = vmatprep.mubr.f32.mxu0 %v346
    %625 = vmatmul.mubr.f32.gmra.mrb[0].mxu0 %v345
    %v626 = vpop.f32.mrb[0].mxu0
    %v627 = vadd.f32 %v550, %v626
    %v628 = vpop.f32.mrb[0].mxu0
    %v629 = vadd.f32 %v552, %v628
    %630 = vmatprep.mubr.f32.mxu0 %v350
    %631 = vmatmul.mubr.f32.gmra.mrb[0].mxu0 %v349
    %v632 = vpop.f32.mrb[0].mxu0
    %v633 = vadd.f32 %v556, %v632
    %v634 = vpop.f32.mrb[0].mxu0
    %v635 = vadd.f32 %v558, %v634
    %636 = vdwg.mxu0
    %v637 = vadd.f32 %v351, %v627
    %v638 = vadd.f32 %v352, %v629
    %v639 = vadd.f32 %v353, %v633
    %v640 = vadd.f32 %v354, %v635
    %641 = vst [vmem:[#allocation2] sm:$0xff] %v637
    %642 = vst [vmem:[#allocation2 + $0x8] sm:$0xff] %v638
    %643 = vst [vmem:[#allocation2 + $0x10] sm:$0xff] %v639
    %644 = vst [vmem:[#allocation2 + $0x18] sm:$0xff] %v640
    // Predicated region
    $region34: #{_lambda_.31} parent=1 // pred_check
      %p645 = pneg %p27
    $region35: #{_lambda_.31} parent=1 // pred_check_branch
      %647 = sbr.rel (%p645) target = $region37
    $region36: #{_lambda_.31} parent=1 // pred_region
      %v648 = vld [vmem:[#allocation2] sm:$0xff]
      %v649 = vld [vmem:[#allocation2 + $0x8] sm:$0xff]
      %v650 = vld [vmem:[#allocation2 + $0x10] sm:$0xff]
      %v651 = vld [vmem:[#allocation2 + $0x18] sm:$0xff]
      %v652 = vld [vmem:[%s4] sm:$0x3]
      %v654 = vlaneseq
      %v655 = vshrl.u32 %v654, 7
      %v656 = vsub.s32 0, %v655
      %v657 = vrot.slane %v652, %v656
      %v658 = vlaneseq
      %v659 = vshrl.u32 %v658, 7
      %v660 = vsub.s32 1, %v659
      %v661 = vrot.slane %v652, %v660
      %v664 = vadd.f32 %v648, %v657
      %v665 = vadd.f32 %v649, %v661
      %v666 = vadd.f32 %v650, %v657
      %v667 = vadd.f32 %v651, %v661
      %v668 = vld [vmem:[%s0] sm:$0xff]
      %v669 = vld [vmem:[%s0 + $0x8] sm:$0xff]
      %v670 = vld [vmem:[%s0 + $0x10] sm:$0xff]
      %v671 = vld [vmem:[%s0 + $0x18] sm:$0xff]
      %v672 = vadd.f32 %v664, %v668
      %v673 = vadd.f32 %v665, %v669
      %v674 = vadd.f32 %v666, %v670
      %v675 = vadd.f32 %v667, %v671
      %v676 = vld [vmem:[%s5] sm:$0x3]
      %v677 = vld [vmem:[%s6] sm:$0x3]
      %v678 = vadd.f32 %v672, %v673
      %679 = vadd.xlane.f32.xlu0 %v678
      %v680 = vpop.xlane.xlu0 %679
      %v681 = vadd.f32 %v674, %v675
      %682 = vadd.xlane.f32.xlu0 %v681
      %v683 = vpop.xlane.xlu0 %682
      %v684 = vrcp.pop 256.0
      %v685 = vmul.f32 %v680, %v684
      %v686 = vmul.f32 %v683, %v684
      %v687 = vsub.f32 %v672, %v685
      %v688 = vsub.f32 %v673, %v685
      %v689 = vsub.f32 %v674, %v686
      %v690 = vsub.f32 %v675, %v686
      %v691 = vmul.f32 %v687, %v687
      %v692 = vmul.f32 %v688, %v688
      %v693 = vmul.f32 %v689, %v689
      %v694 = vmul.f32 %v690, %v690
      %v695 = vadd.f32 %v691, %v692
      %696 = vadd.xlane.f32.xlu0 %v695
      %v697 = vpop.xlane.xlu0 %696
      %v698 = vadd.f32 %v693, %v694
      %699 = vadd.xlane.f32.xlu0 %v698
      %v700 = vpop.xlane.xlu0 %699
      %v701 = vmul.f32 %v697, %v684
      %v702 = vmul.f32 %v700, %v684
      %v703 = vadd.f32 %v701, 1e-05
      %v704 = vadd.f32 %v702, 1e-05
      %v705 = vrsqrt.pop %v703
      %v706 = vrsqrt.pop %v704
      %v707 = vmul.f32 %v687, %v705
      %v708 = vmul.f32 %v688, %v705
      %v709 = vmul.f32 %v689, %v706
      %v710 = vmul.f32 %v690, %v706
      %v712 = vlaneseq
      %v713 = vshrl.u32 %v712, 7
      %v714 = vsub.s32 0, %v713
      %v715 = vrot.slane %v676, %v714
      %v716 = vlaneseq
      %v717 = vshrl.u32 %v716, 7
      %v718 = vsub.s32 1, %v717
      %v719 = vrot.slane %v676, %v718
      %v722 = vmul.f32 %v707, %v715
      %v723 = vmul.f32 %v708, %v719
      %v724 = vmul.f32 %v709, %v715
      %v725 = vmul.f32 %v710, %v719
      %v727 = vlaneseq
      %v728 = vshrl.u32 %v727, 7
      %v729 = vsub.s32 0, %v728
      %v730 = vrot.slane %v677, %v729
      %v731 = vlaneseq
      %v732 = vshrl.u32 %v731, 7
      %v733 = vsub.s32 1, %v732
      %v734 = vrot.slane %v677, %v733
      %v737 = vadd.f32 %v722, %v730
      %v738 = vadd.f32 %v723, %v734
      %v739 = vadd.f32 %v724, %v730
      %v740 = vadd.f32 %v725, %v734
      %741 = vst [vmem:[#allocation3] sm:$0xff] %v737
      %742 = vst [vmem:[#allocation3 + $0x8] sm:$0xff] %v738
      %743 = vst [vmem:[#allocation3 + $0x10] sm:$0xff] %v739
      %744 = vst [vmem:[#allocation3 + $0x18] sm:$0xff] %v740
    $region37: #{_lambda_.31} parent=1 // pred_fallthru
      _
    // Predicated region
    $region38: #{_lambda_.31} parent=1 // pred_check
      _
    $region39: #{_lambda_.31} parent=1 // pred_check_branch
      %746 = sbr.rel (0) target = $region41
    $region40: #{_lambda_.31} parent=1 // pred_region
      %s748 = ssub.s32 512, 512
      %749 = vsyncadd [#allocation4], %s748
      %s750 = sshll.u32 [#allocation3], 4
      %s751 = int_to_ptr.vmem [resolvable:$true] %s750
      %756 = dma.vmem_to_hbm [thread:$0]  %s751, 512, %s7, [#allocation4], 256, 256, 16
    $region41: #{_lambda_.31} parent=1 // pred_fallthru
      _
    // Predicated region
    $region42: #{_lambda_.31} parent=1 // pred_check
      _
    $region43: #{_lambda_.31} parent=1 // pred_check_branch
      %758 = sbr.rel (0) target = $region45
    $region44: #{_lambda_.31} parent=1 // pred_region
      %759 = dma.done [#allocation4], 512
    $region45: #{_lambda_.31} parent=1 // pred_fallthru
      _
    %760 = vsyncpa [#allocation4], 1

</llo_original>
